<compile_context>
chip_gen: v7x
topology: tpu7x:2x2x1
jax: 0.10.0
libtpu: 0.0.40
codegen_flags: <defaults>
</compile_context>

<pallas_src>
import functools

import numpy as np
import jax
import jax.numpy as jnp
from jax import lax
from jax.experimental import pallas as pl
from jax.experimental.pallas import tpu as pltpu


# Fixed channel widths from the PyTorch module.
C_IN, C1, C2 = 14, 8, 4        # encoder: 14 -> 8 -> 4
C3, C_OUT = 8, 14              # decoder: 4 -> 8 -> 14
TPAD = 16                      # t_conv2 tap row-block padded to 2 sublane tiles


# ---------------------------------------------------------------------------
# Static geometry + one-hot gather/scatter matrices (trace-time numpy)
# ---------------------------------------------------------------------------

@functools.lru_cache(maxsize=None)
def _geometry(D, H, W):
    """Static index geometry for one (D, H, W) input resolution."""
    assert D % 4 == 0 and H % 4 == 0 and W % 4 == 0, "spatial dims must be /4"
    g = {}
    Dp, Hp, Wp = D + 2, H + 2, W + 2
    g["pad1_flat"] = Dp * Hp * Wp
    g["s1"] = (Hp * Wp, Wp, 1)                        # flat strides, padded vol 1
    g["L1"] = (D - 1) * Hp * Wp + (H - 1) * Wp + W    # conv1 accumulator width
    D2, H2, W2 = D // 2, H // 2, W // 2
    Dp2, Hp2, Wp2 = D2 + 2, H2 + 2, W2 + 2
    g["pad2_flat"] = Dp2 * Hp2 * Wp2
    g["s2"] = (Hp2 * Wp2, Wp2, 1)
    g["L2"] = (D2 - 1) * Hp2 * Wp2 + (H2 - 1) * Wp2 + W2
    g["dims1"] = (D, H, W)
    g["dims2"] = (D2, H2, W2)
    g["dims4"] = (D // 4, H // 4, W // 4)
    g["S1"] = D * H * W
    g["S2"] = D2 * H2 * W2
    g["S4"] = (D // 4) * (H // 4) * (W // 4)
    return g


def _pool_gather(dims, strides):
    """(L, 8*S_out) one-hot gather: column tap*S_out+dst selects the conv
    accumulator column holding window element `tap` of pooled voxel `dst`.
    Taps merged onto the lane axis so the pool is ONE matmul + a max tree."""
    D, H, W = dims
    sd, sh, sw = strides
    L = (D - 1) * sd + (H - 1) * sh + W
    D2, H2, W2 = D // 2, H // 2, W // 2
    S = D2 * H2 * W2
    out = np.zeros((L, 8 * S), np.float32)
    t = 0
    for i in (0, 1):
        for j in (0, 1):
            for k in (0, 1):
                for d in range(D2):
                    for h in range(H2):
                        for w in range(W2):
                            src = (2 * d + i) * sd + (2 * h + j) * sh + (2 * w + k) * sw
                            out[src, t * S + (d * H2 + h) * W2 + w] = 1.0
                t += 1
    return out


def _pad_embed_shifted(dims):
    """(3, S, pad_flat) one-hots: plane kw scatters dense voxel s to padded flat
    index - kw, i.e. plane kw's output is the padded volume shifted left by kw
    (used to build conv2's kw-stacked RHS without any in-kernel roll)."""
    D, H, W = dims
    Hp, Wp = H + 2, W + 2
    Pf = (D + 2) * Hp * Wp
    out = np.zeros((3, D * H * W, Pf), np.float32)
    for kw in range(3):
        for d in range(D):
            for h in range(H):
                for w in range(W):
                    s = (d * H + h) * W + w
                    out[kw, s, ((d + 1) * Hp + (h + 1)) * Wp + (w + 1) - kw] = 1.0
    return out


def _tconv_scatter(dims):
    """(8, S_in, S_out) one-hots for the stride-2 scatter of a k=2 transposed
    conv: tap (i,j,k) sends input (d,h,w) to output (2d+i, 2h+j, 2w+k)."""
    D, H, W = dims
    Ho, Wo = 2 * H, 2 * W
    out = np.zeros((8, D * H * W, 8 * D * H * W), np.float32)
    t = 0
    for i in (0, 1):
        for j in (0, 1):
            for k in (0, 1):
                for d in range(D):
                    for h in range(H):
                        for w in range(W):
                            src = (d * H + h) * W + w
                            dst = ((2 * d + i) * Ho + (2 * h + j)) * Wo + (2 * w + k)
                            out[t, src, dst] = 1.0
                t += 1
    return out


# ---------------------------------------------------------------------------
# The fused Pallas kernel (one grid step == one batch element)
# ---------------------------------------------------------------------------

def _fused_ae_kernel(x_ref, w1_ref, b1_ref, g1_ref, e1_ref,
                     w2_ref, b2_ref, g2_ref,
                     u1_ref, c1_ref, p1_ref,
                     u2_ref, c2_ref, p2_ref,
                     o_ref, *, geo):
    dot = functools.partial(jnp.dot, preferred_element_type=jnp.float32)
    L1, L2 = geo["L1"], geo["L2"]
    S1, S2, S4 = geo["S1"], geo["S2"], geo["S4"]

    def conv3(w_ref, b_ref, src, strides, width, cout):
        """3x3x3 conv (pad=1), kw folded into K: 9 matmuls (Cout,3Cin)x(3Cin,width).
        NOTE: accumulator columns that do not map to a valid output voxel hold
        shifted-read garbage; the pool gather below never selects them, so the
        bias/ReLU applied to those columns is harmless by construction."""
        sd, sh, _ = strides
        acc = jnp.zeros((cout, width), jnp.float32)
        for kd in range(3):
            for kh in range(3):
                acc = acc + dot(w_ref[kd * 3 + kh], src(kd * sd + kh * sh, width))
        return jnp.maximum(acc + b_ref[...], 0.0)

    def pool_max(r, s_out):
        """r: (C, 8*s_out) with column tap*s_out+dst -> (C, s_out) max over taps."""
        r = jnp.maximum(r[:, :4 * s_out], r[:, 4 * s_out:])
        r = jnp.maximum(r[:, :2 * s_out], r[:, 2 * s_out:])
        return jnp.maximum(r[:, :s_out], r[:, s_out:])

    # -------- conv1 (14 -> 8) + ReLU: input arrives kw-stacked (3*C_IN, pad1) --
    h1 = conv3(w1_ref, b1_ref, lambda b, L: x_ref[0, :, b:b + L],
               geo["s1"], L1, C1)                                   # (8, L1)

    # -------- maxpool1: single lane-dense gather matmul + 3-step VPU max tree -
    pooled = pool_max(dot(h1, g1_ref[...]), S2)                     # (8, S2)

    # -------- embed into the padded 6^3 volume, kw-stacked along sublanes -----
    hs2 = jnp.concatenate([dot(pooled, e1_ref[kw]) for kw in range(3)],
                          axis=0)                                   # (24, pad2)

    # -------- conv2 (8 -> 4) + ReLU -------------------------------------------
    h2 = conv3(w2_ref, b2_ref, lambda b, L: hs2[:, b:b + L],
               geo["s2"], L2, C2)                                   # (4, L2)

    # -------- maxpool2 --------------------------------------------------------
    z = pool_max(dot(h2, g2_ref[...]), S4)                          # (4, S4)

    # -------- t_conv1 (4 -> 8, k=2, s=2) + ReLU: stacked-M weights + scatters -
    y1 = dot(u1_ref[...], z)                                        # (8*C3, S4)
    acc1 = jnp.zeros((C3, S2), jnp.float32)
    for t in range(8):
        acc1 = acc1 + dot(y1[t * C3:(t + 1) * C3, :], p1_ref[t])    # (8, S2)
    y = jnp.maximum(acc1 + c1_ref[...], 0.0)

    # -------- t_conv2 (8 -> 14) + sigmoid: M=128 stacked weights + scatters ---
    y2 = dot(u2_ref[...], y)                                        # (8*TPAD, S2)
    acc2 = jnp.zeros((TPAD, S1), jnp.float32)
    for t in range(8):
        acc2 = acc2 + dot(y2[t * TPAD:(t + 1) * TPAD, :], p2_ref[t])  # (TPAD, S1)
    out = acc2[:C_OUT, :] + c2_ref[...]
    # numerically stable sigmoid on the EUP: sigmoid(x) = 0.5*(tanh(x/2)+1)
    o_ref[0] = 0.5 * (jnp.tanh(0.5 * out) + 1.0)


# ---------------------------------------------------------------------------
# Public forward (NCDHW in / NCDHW out) and parameter init
# ---------------------------------------------------------------------------

@jax.jit
def conv_ae_forward(params, x_ncdhw):
    n, cin, D, H, W = x_ncdhw.shape
    assert cin == C_IN
    geo = _geometry(D, H, W)
    f32 = jnp.float32

    w1, b1 = params["conv1"]
    w2, b2 = params["conv2"]
    wt1, bt1 = params["t_conv1"]
    wt2, bt2 = params["t_conv2"]

    # Per-(kd,kh) weight slabs with kw folded into K:  [kd*3+kh, cout, kw*Cin+cin]
    w1p = jnp.transpose(w1, (2, 3, 0, 4, 1)).reshape(9, C1, 3 * C_IN).astype(f32)
    w2p = jnp.transpose(w2, (2, 3, 0, 4, 1)).reshape(9, C2, 3 * C1).astype(f32)
    # Transposed-conv weights stacked along M (tap-major row blocks).
    u1p = jnp.transpose(wt1, (2, 3, 4, 1, 0)).reshape(8 * C3, C2).astype(f32)
    u2b = jnp.transpose(wt2, (2, 3, 4, 1, 0)).astype(f32).reshape(8, C_OUT, C3)
    u2p = jnp.pad(u2b, ((0, 0), (0, TPAD - C_OUT), (0, 0))).reshape(8 * TPAD, C3)
    b1c = b1.reshape(C1, 1).astype(f32)
    b2c = b2.reshape(C2, 1).astype(f32)
    c1c = bt1.reshape(C3, 1).astype(f32)
    c2c = bt2.reshape(C_OUT, 1).astype(f32)

    # Structural one-hot matrices (compile-time constants).
    g1d = jnp.asarray(_pool_gather(geo["dims1"], geo["s1"]))        # (L1, 8*S2)
    e1k = jnp.asarray(_pad_embed_shifted(geo["dims2"]))             # (3, S2, pad2)
    g2d = jnp.asarray(_pool_gather(geo["dims2"], geo["s2"]))        # (L2, 8*S4)
    p1s = jnp.asarray(_tconv_scatter(geo["dims4"]))                 # (8, S4, S2)
    p2s = jnp.asarray(_tconv_scatter(geo["dims2"]))                 # (8, S2, S1)

    # Zero-pad D/H/W by 1, flatten spatial onto lanes, and hoist the three
    # kw-shifted copies ONCE (stacked along the channel/sublane axis).
    P1 = geo["pad1_flat"]
    xp = jnp.pad(x_ncdhw.astype(f32), ((0, 0), (0, 0), (1, 1), (1, 1), (1, 1)))
    xp = jnp.pad(xp.reshape(n, C_IN, P1), ((0, 0), (0, 0), (0, 2)))
    xs = jnp.concatenate([xp[:, :, 0:P1], xp[:, :, 1:P1 + 1], xp[:, :, 2:P1 + 2]],
                         axis=1)                                    # (n, 3*C_IN, P1)

    def _const_spec(arr):
        nd = arr.ndim
        return pl.BlockSpec(arr.shape, lambda i, nd=nd: (0,) * nd)

    consts = (w1p, b1c, g1d, e1k, w2p, b2c, g2d, u1p, c1c, p1s, u2p, c2c, p2s)
    const_bytes = sum(int(np.prod(c.shape)) * 4 for c in consts)
    L1, L2, S1, S2, S4 = geo["L1"], geo["L2"], geo["S1"], geo["S2"], geo["S4"]
    flops_per = (9 * 2 * C1 * 3 * C_IN * L1 + 2 * C1 * L1 * 8 * S2
                 + 3 * 2 * C1 * S2 * geo["pad2_flat"] + 9 * 2 * C2 * 3 * C1 * L2
                 + 2 * C2 * L2 * 8 * S4 + 2 * 8 * C3 * C2 * S4
                 + 8 * 2 * C3 * S4 * S2 + 2 * 8 * TPAD * C3 * S2
                 + 8 * 2 * TPAD * S2 * S1)
    cost = pl.CostEstimate(
        flops=n * flops_per,
        transcendentals=n * C_OUT * S1,
        bytes_accessed=int(xs.size * 4 + n * C_OUT * S1 * 4 + const_bytes))

    out = pl.pallas_call(
        functools.partial(_fused_ae_kernel, geo=geo),
        out_shape=jax.ShapeDtypeStruct((n, C_OUT, S1), f32),
        grid=(n,),
        in_specs=[pl.BlockSpec((1, 3 * C_IN, P1), lambda i: (i, 0, 0))]
                 + [_const_spec(c) for c in consts],
        out_specs=pl.BlockSpec((1, C_OUT, S1), lambda i: (i, 0, 0)),
        compiler_params=pltpu.CompilerParams(
            dimension_semantics=("parallel",),      # batch -> both TCs on v7x
            vmem_limit_bytes=32 * 1024 * 1024,
        ),
        cost_estimate=cost,
    )(xs, *consts)

    return out.reshape(n, C_OUT, D, H, W)


def _uniform_init(key, shape, fan_in):
    bound = 1.0 / (fan_in ** 0.5)
    return jax.random.uniform(key, shape, jnp.float32, -bound, bound)


def init_params(key):
    k1, k2, k3, k4 = jax.random.split(key, 4)

    def conv(key, cout, cin, k):
        kw, kb = jax.random.split(key)
        fan = cin * k ** 3
        return (_uniform_init(kw, (cout, cin, k, k, k), fan),
                _uniform_init(kb, (cout,), fan))

    def tconv(key, cin, cout, k):
        kw, kb = jax.random.split(key)
        fan = cin * k ** 3
        return (_uniform_init(kw, (cin, cout, k, k, k), fan),
                _uniform_init(kb, (cout,), fan))

    return {
        "conv1": conv(k1, 8, 14, 3),      # Conv3d(14 -> 8, k=3, pad=1)
        "conv2": conv(k2, 4, 8, 3),       # Conv3d(8 -> 4, k=3, pad=1)
        "t_conv1": tconv(k3, 4, 8, 2),    # ConvTranspose3d(4 -> 8, k=2, s=2)
        "t_conv2": tconv(k4, 8, 14, 2),   # ConvTranspose3d(8 -> 14, k=2, s=2)
    }


# ---------------------------------------------------------------------------
# Pure-JAX reference (XLA ops only) used for an in-script correctness check
# ---------------------------------------------------------------------------

def _reference_forward(params, x):
    w1, b1 = params["conv1"]
    w2, b2 = params["conv2"]
    wt1, bt1 = params["t_conv1"]
    wt2, bt2 = params["t_conv2"]
    dn = ("NCDHW", "OIDHW", "NCDHW")

    def conv(h, w, b):
        y = lax.conv_general_dilated(h, w, (1, 1, 1), [(1, 1)] * 3,
                                     dimension_numbers=dn,
                                     precision=lax.Precision.HIGHEST)
        return jax.nn.relu(y + b[None, :, None, None, None])

    def pool(h):
        return lax.reduce_window(h, -jnp.inf, lax.max,
                                 (1, 1, 2, 2, 2), (1, 1, 2, 2, 2), "VALID")

    def tconv(h, w, b):
        y = jnp.einsum("ncdhw,coijk->nodihjwk", h, w,
                       precision=lax.Precision.HIGHEST)
        n_, co, d, _, hh, _, ww, _ = y.shape
        y = y.reshape(n_, co, 2 * d, 2 * hh, 2 * ww)
        return y + b[None, :, None, None, None]

    h = conv(x, w1, b1)
    h = pool(h)
    h = conv(h, w2, b2)
    h = pool(h)
    h = jax.nn.relu(tconv(h, wt1, bt1))
    return jax.nn.sigmoid(tconv(h, wt2, bt2))


if __name__ == "__main__":
    key = jax.random.PRNGKey(0)
    pkey, xkey = jax.random.split(key)
    params = init_params(pkey)
    # PyTorch-convention input: (N, C, D, H, W) = (2, 14, 8, 8, 8)
    x = jax.random.normal(xkey, (2, C_IN, 8, 8, 8), jnp.float32)

    y = conv_ae_forward(params, x)
    jax.block_until_ready(y)
    assert y.shape == x.shape

    y_ref = _reference_forward(params, x)
    err = float(jnp.max(jnp.abs(y - y_ref)))
    assert err < 1e-2, f"kernel/reference mismatch: max abs err = {err}"
    print("KERNEL_OK")
</pallas_src>

<mosaic_0001>
module attributes {stable_mosaic.version = 11 : i64} {
  func.func @_fused_ae_kernel(%arg0: i32, %arg1: memref<1x42x1000xf32, #tpu.memory_space<vmem>>, %arg2: memref<9x8x42xf32, #tpu.memory_space<vmem>>, %arg3: memref<8x1xf32, #tpu.memory_space<vmem>>, %arg4: memref<778x512xf32, #tpu.memory_space<vmem>>, %arg5: memref<3x64x216xf32, #tpu.memory_space<vmem>>, %arg6: memref<9x4x24xf32, #tpu.memory_space<vmem>>, %arg7: memref<4x1xf32, #tpu.memory_space<vmem>>, %arg8: memref<130x64xf32, #tpu.memory_space<vmem>>, %arg9: memref<64x4xf32, #tpu.memory_space<vmem>>, %arg10: memref<8x1xf32, #tpu.memory_space<vmem>>, %arg11: memref<8x8x64xf32, #tpu.memory_space<vmem>>, %arg12: memref<128x8xf32, #tpu.memory_space<vmem>>, %arg13: memref<14x1xf32, #tpu.memory_space<vmem>>, %arg14: memref<8x64x512xf32, #tpu.memory_space<vmem>>, %arg15: memref<1x14x512xf32, #tpu.memory_space<vmem>>) attributes {dimension_semantics = [#tpu.dimension_semantics<parallel>], iteration_bounds = array<i64: 2>, scalar_prefetch = 0 : i64, scratch_operands = 0 : i64, tpu.core_type = #tpu.core_type<tc>, window_params = [{transform_indices = @transform_0, window_bounds = array<i64: 1, 42, 1000>}, {pipeline_mode = #tpu.pipeline_mode<synchronous>, transform_indices = @transform_1, window_bounds = array<i64: 9, 8, 42>}, {pipeline_mode = #tpu.pipeline_mode<synchronous>, transform_indices = @transform_2, window_bounds = array<i64: 8, 1>}, {pipeline_mode = #tpu.pipeline_mode<synchronous>, transform_indices = @transform_3, window_bounds = array<i64: 778, 512>}, {pipeline_mode = #tpu.pipeline_mode<synchronous>, transform_indices = @transform_4, window_bounds = array<i64: 3, 64, 216>}, {pipeline_mode = #tpu.pipeline_mode<synchronous>, transform_indices = @transform_5, window_bounds = array<i64: 9, 4, 24>}, {pipeline_mode = #tpu.pipeline_mode<synchronous>, transform_indices = @transform_6, window_bounds = array<i64: 4, 1>}, {pipeline_mode = #tpu.pipeline_mode<synchronous>, transform_indices = @transform_7, window_bounds = array<i64: 130, 64>}, {pipeline_mode = #tpu.pipeline_mode<synchronous>, transform_indices = @transform_8, window_bounds = array<i64: 64, 4>}, {pipeline_mode = #tpu.pipeline_mode<synchronous>, transform_indices = @transform_9, window_bounds = array<i64: 8, 1>}, {pipeline_mode = #tpu.pipeline_mode<synchronous>, transform_indices = @transform_10, window_bounds = array<i64: 8, 8, 64>}, {pipeline_mode = #tpu.pipeline_mode<synchronous>, transform_indices = @transform_11, window_bounds = array<i64: 128, 8>}, {pipeline_mode = #tpu.pipeline_mode<synchronous>, transform_indices = @transform_12, window_bounds = array<i64: 14, 1>}, {pipeline_mode = #tpu.pipeline_mode<synchronous>, transform_indices = @transform_13, window_bounds = array<i64: 8, 64, 512>}, {transform_indices = @transform_14, window_bounds = array<i64: 1, 14, 512>}]} {
    %cst = arith.constant 0.000000e+00 : f32
    %0 = vector.broadcast %cst : f32 to vector<8x778xf32>
    %c0 = arith.constant 0 : index
    %c0_0 = arith.constant 0 : index
    %c0_1 = arith.constant 0 : index
    %1 = vector.load %arg2[%c0, %c0_0, %c0_1] : memref<9x8x42xf32, #tpu.memory_space<vmem>>, vector<1x8x42xf32>
    %2 = vector.shape_cast %1 : vector<1x8x42xf32> to vector<8x42xf32>
    %c0_2 = arith.constant 0 : index
    %c0_3 = arith.constant 0 : index
    %c0_4 = arith.constant 0 : index
    %3 = vector.load %arg1[%c0_2, %c0_3, %c0_4] : memref<1x42x1000xf32, #tpu.memory_space<vmem>>, vector<1x42x778xf32>
    %4 = vector.shape_cast %3 : vector<1x42x778xf32> to vector<42x778xf32>
    %cst_5 = arith.constant dense<0.000000e+00> : vector<8x778xf32>
    %5 = tpu.matmul %2, %4, %cst_5 {dimension_numbers = #tpu.dot_dimension_numbers<[1], [0], [0], [1], [0, 0, 1, 1], [], []>} : vector<8x42xf32>, vector<42x778xf32>, vector<8x778xf32> -> vector<8x778xf32>
    %6 = arith.addf %0, %5 : vector<8x778xf32>
    %c1 = arith.constant 1 : index
    %c0_6 = arith.constant 0 : index
    %c0_7 = arith.constant 0 : index
    %7 = vector.load %arg2[%c1, %c0_6, %c0_7] : memref<9x8x42xf32, #tpu.memory_space<vmem>>, vector<1x8x42xf32>
    %8 = vector.shape_cast %7 : vector<1x8x42xf32> to vector<8x42xf32>
    %c0_8 = arith.constant 0 : index
    %c0_9 = arith.constant 0 : index
    %c10 = arith.constant 10 : index
    %9 = vector.load %arg1[%c0_8, %c0_9, %c10] : memref<1x42x1000xf32, #tpu.memory_space<vmem>>, vector<1x42x778xf32>
    %10 = vector.shape_cast %9 : vector<1x42x778xf32> to vector<42x778xf32>
    %cst_10 = arith.constant dense<0.000000e+00> : vector<8x778xf32>
    %11 = tpu.matmul %8, %10, %cst_10 {dimension_numbers = #tpu.dot_dimension_numbers<[1], [0], [0], [1], [0, 0, 1, 1], [], []>} : vector<8x42xf32>, vector<42x778xf32>, vector<8x778xf32> -> vector<8x778xf32>
    %12 = arith.addf %6, %11 : vector<8x778xf32>
    %c2 = arith.constant 2 : index
    %c0_11 = arith.constant 0 : index
    %c0_12 = arith.constant 0 : index
    %13 = vector.load %arg2[%c2, %c0_11, %c0_12] : memref<9x8x42xf32, #tpu.memory_space<vmem>>, vector<1x8x42xf32>
    %14 = vector.shape_cast %13 : vector<1x8x42xf32> to vector<8x42xf32>
    %c0_13 = arith.constant 0 : index
    %c0_14 = arith.constant 0 : index
    %c20 = arith.constant 20 : index
    %15 = vector.load %arg1[%c0_13, %c0_14, %c20] : memref<1x42x1000xf32, #tpu.memory_space<vmem>>, vector<1x42x778xf32>
    %16 = vector.shape_cast %15 : vector<1x42x778xf32> to vector<42x778xf32>
    %cst_15 = arith.constant dense<0.000000e+00> : vector<8x778xf32>
    %17 = tpu.matmul %14, %16, %cst_15 {dimension_numbers = #tpu.dot_dimension_numbers<[1], [0], [0], [1], [0, 0, 1, 1], [], []>} : vector<8x42xf32>, vector<42x778xf32>, vector<8x778xf32> -> vector<8x778xf32>
    %18 = arith.addf %12, %17 : vector<8x778xf32>
    %c3 = arith.constant 3 : index
    %c0_16 = arith.constant 0 : index
    %c0_17 = arith.constant 0 : index
    %19 = vector.load %arg2[%c3, %c0_16, %c0_17] : memref<9x8x42xf32, #tpu.memory_space<vmem>>, vector<1x8x42xf32>
    %20 = vector.shape_cast %19 : vector<1x8x42xf32> to vector<8x42xf32>
    %c0_18 = arith.constant 0 : index
    %c0_19 = arith.constant 0 : index
    %c100 = arith.constant 100 : index
    %21 = vector.load %arg1[%c0_18, %c0_19, %c100] : memref<1x42x1000xf32, #tpu.memory_space<vmem>>, vector<1x42x778xf32>
    %22 = vector.shape_cast %21 : vector<1x42x778xf32> to vector<42x778xf32>
    %cst_20 = arith.constant dense<0.000000e+00> : vector<8x778xf32>
    %23 = tpu.matmul %20, %22, %cst_20 {dimension_numbers = #tpu.dot_dimension_numbers<[1], [0], [0], [1], [0, 0, 1, 1], [], []>} : vector<8x42xf32>, vector<42x778xf32>, vector<8x778xf32> -> vector<8x778xf32>
    %24 = arith.addf %18, %23 : vector<8x778xf32>
    %c4 = arith.constant 4 : index
    %c0_21 = arith.constant 0 : index
    %c0_22 = arith.constant 0 : index
    %25 = vector.load %arg2[%c4, %c0_21, %c0_22] : memref<9x8x42xf32, #tpu.memory_space<vmem>>, vector<1x8x42xf32>
    %26 = vector.shape_cast %25 : vector<1x8x42xf32> to vector<8x42xf32>
    %c0_23 = arith.constant 0 : index
    %c0_24 = arith.constant 0 : index
    %c110 = arith.constant 110 : index
    %27 = vector.load %arg1[%c0_23, %c0_24, %c110] : memref<1x42x1000xf32, #tpu.memory_space<vmem>>, vector<1x42x778xf32>
    %28 = vector.shape_cast %27 : vector<1x42x778xf32> to vector<42x778xf32>
    %cst_25 = arith.constant dense<0.000000e+00> : vector<8x778xf32>
    %29 = tpu.matmul %26, %28, %cst_25 {dimension_numbers = #tpu.dot_dimension_numbers<[1], [0], [0], [1], [0, 0, 1, 1], [], []>} : vector<8x42xf32>, vector<42x778xf32>, vector<8x778xf32> -> vector<8x778xf32>
    %30 = arith.addf %24, %29 : vector<8x778xf32>
    %c5 = arith.constant 5 : index
    %c0_26 = arith.constant 0 : index
    %c0_27 = arith.constant 0 : index
    %31 = vector.load %arg2[%c5, %c0_26, %c0_27] : memref<9x8x42xf32, #tpu.memory_space<vmem>>, vector<1x8x42xf32>
    %32 = vector.shape_cast %31 : vector<1x8x42xf32> to vector<8x42xf32>
    %c0_28 = arith.constant 0 : index
    %c0_29 = arith.constant 0 : index
    %c120 = arith.constant 120 : index
    %33 = vector.load %arg1[%c0_28, %c0_29, %c120] : memref<1x42x1000xf32, #tpu.memory_space<vmem>>, vector<1x42x778xf32>
    %34 = vector.shape_cast %33 : vector<1x42x778xf32> to vector<42x778xf32>
    %cst_30 = arith.constant dense<0.000000e+00> : vector<8x778xf32>
    %35 = tpu.matmul %32, %34, %cst_30 {dimension_numbers = #tpu.dot_dimension_numbers<[1], [0], [0], [1], [0, 0, 1, 1], [], []>} : vector<8x42xf32>, vector<42x778xf32>, vector<8x778xf32> -> vector<8x778xf32>
    %36 = arith.addf %30, %35 : vector<8x778xf32>
    %c6 = arith.constant 6 : index
    %c0_31 = arith.constant 0 : index
    %c0_32 = arith.constant 0 : index
    %37 = vector.load %arg2[%c6, %c0_31, %c0_32] : memref<9x8x42xf32, #tpu.memory_space<vmem>>, vector<1x8x42xf32>
    %38 = vector.shape_cast %37 : vector<1x8x42xf32> to vector<8x42xf32>
    %c0_33 = arith.constant 0 : index
    %c0_34 = arith.constant 0 : index
    %c200 = arith.constant 200 : index
    %39 = vector.load %arg1[%c0_33, %c0_34, %c200] : memref<1x42x1000xf32, #tpu.memory_space<vmem>>, vector<1x42x778xf32>
    %40 = vector.shape_cast %39 : vector<1x42x778xf32> to vector<42x778xf32>
    %cst_35 = arith.constant dense<0.000000e+00> : vector<8x778xf32>
    %41 = tpu.matmul %38, %40, %cst_35 {dimension_numbers = #tpu.dot_dimension_numbers<[1], [0], [0], [1], [0, 0, 1, 1], [], []>} : vector<8x42xf32>, vector<42x778xf32>, vector<8x778xf32> -> vector<8x778xf32>
    %42 = arith.addf %36, %41 : vector<8x778xf32>
    %c7 = arith.constant 7 : index
    %c0_36 = arith.constant 0 : index
    %c0_37 = arith.constant 0 : index
    %43 = vector.load %arg2[%c7, %c0_36, %c0_37] : memref<9x8x42xf32, #tpu.memory_space<vmem>>, vector<1x8x42xf32>
    %44 = vector.shape_cast %43 : vector<1x8x42xf32> to vector<8x42xf32>
    %c0_38 = arith.constant 0 : index
    %c0_39 = arith.constant 0 : index
    %c210 = arith.constant 210 : index
    %45 = vector.load %arg1[%c0_38, %c0_39, %c210] : memref<1x42x1000xf32, #tpu.memory_space<vmem>>, vector<1x42x778xf32>
    %46 = vector.shape_cast %45 : vector<1x42x778xf32> to vector<42x778xf32>
    %cst_40 = arith.constant dense<0.000000e+00> : vector<8x778xf32>
    %47 = tpu.matmul %44, %46, %cst_40 {dimension_numbers = #tpu.dot_dimension_numbers<[1], [0], [0], [1], [0, 0, 1, 1], [], []>} : vector<8x42xf32>, vector<42x778xf32>, vector<8x778xf32> -> vector<8x778xf32>
    %48 = arith.addf %42, %47 : vector<8x778xf32>
    %c8 = arith.constant 8 : index
    %c0_41 = arith.constant 0 : index
    %c0_42 = arith.constant 0 : index
    %49 = vector.load %arg2[%c8, %c0_41, %c0_42] : memref<9x8x42xf32, #tpu.memory_space<vmem>>, vector<1x8x42xf32>
    %50 = vector.shape_cast %49 : vector<1x8x42xf32> to vector<8x42xf32>
    %c0_43 = arith.constant 0 : index
    %c0_44 = arith.constant 0 : index
    %c220 = arith.constant 220 : index
    %51 = vector.load %arg1[%c0_43, %c0_44, %c220] : memref<1x42x1000xf32, #tpu.memory_space<vmem>>, vector<1x42x778xf32>
    %52 = vector.shape_cast %51 : vector<1x42x778xf32> to vector<42x778xf32>
    %cst_45 = arith.constant dense<0.000000e+00> : vector<8x778xf32>
    %53 = tpu.matmul %50, %52, %cst_45 {dimension_numbers = #tpu.dot_dimension_numbers<[1], [0], [0], [1], [0, 0, 1, 1], [], []>} : vector<8x42xf32>, vector<42x778xf32>, vector<8x778xf32> -> vector<8x778xf32>
    %54 = arith.addf %48, %53 : vector<8x778xf32>
    %c0_46 = arith.constant 0 : index
    %c0_47 = arith.constant 0 : index
    %55 = vector.load %arg3[%c0_46, %c0_47] : memref<8x1xf32, #tpu.memory_space<vmem>>, vector<8x1xf32>
    %56 = vector.broadcast %55 : vector<8x1xf32> to vector<8x778xf32>
    %57 = arith.addf %54, %56 : vector<8x778xf32>
    %cst_48 = arith.constant 0.000000e+00 : f32
    %58 = vector.broadcast %cst_48 : f32 to vector<8x778xf32>
    %59 = arith.maximumf %57, %58 : vector<8x778xf32>
    %c0_49 = arith.constant 0 : index
    %c0_50 = arith.constant 0 : index
    %60 = vector.load %arg4[%c0_49, %c0_50] : memref<778x512xf32, #tpu.memory_space<vmem>>, vector<778x512xf32>
    %cst_51 = arith.constant dense<0.000000e+00> : vector<8x512xf32>
    %61 = tpu.matmul %59, %60, %cst_51 {dimension_numbers = #tpu.dot_dimension_numbers<[1], [0], [0], [1], [0, 0, 1, 1], [], []>} : vector<8x778xf32>, vector<778x512xf32>, vector<8x512xf32> -> vector<8x512xf32>
    %62 = vector.extract_strided_slice %61 {offsets = [0, 0], sizes = [8, 256], strides = [1, 1]} : vector<8x512xf32> to vector<8x256xf32>
    %63 = vector.extract_strided_slice %61 {offsets = [0, 256], sizes = [8, 256], strides = [1, 1]} : vector<8x512xf32> to vector<8x256xf32>
    %64 = arith.maximumf %62, %63 : vector<8x256xf32>
    %65 = vector.extract_strided_slice %64 {offsets = [0, 0], sizes = [8, 128], strides = [1, 1]} : vector<8x256xf32> to vector<8x128xf32>
    %66 = vector.extract_strided_slice %64 {offsets = [0, 128], sizes = [8, 128], strides = [1, 1]} : vector<8x256xf32> to vector<8x128xf32>
    %67 = arith.maximumf %65, %66 : vector<8x128xf32>
    %68 = vector.extract_strided_slice %67 {offsets = [0, 0], sizes = [8, 64], strides = [1, 1]} : vector<8x128xf32> to vector<8x64xf32>
    %69 = vector.extract_strided_slice %67 {offsets = [0, 64], sizes = [8, 64], strides = [1, 1]} : vector<8x128xf32> to vector<8x64xf32>
    %70 = arith.maximumf %68, %69 : vector<8x64xf32>
    %c0_52 = arith.constant 0 : index
    %c0_53 = arith.constant 0 : index
    %c0_54 = arith.constant 0 : index
    %71 = vector.load %arg5[%c0_52, %c0_53, %c0_54] : memref<3x64x216xf32, #tpu.memory_space<vmem>>, vector<1x64x216xf32>
    %72 = vector.shape_cast %71 : vector<1x64x216xf32> to vector<64x216xf32>
    %cst_55 = arith.constant dense<0.000000e+00> : vector<8x216xf32>
    %73 = tpu.matmul %70, %72, %cst_55 {dimension_numbers = #tpu.dot_dimension_numbers<[1], [0], [0], [1], [0, 0, 1, 1], [], []>} : vector<8x64xf32>, vector<64x216xf32>, vector<8x216xf32> -> vector<8x216xf32>
    %c1_56 = arith.constant 1 : index
    %c0_57 = arith.constant 0 : index
    %c0_58 = arith.constant 0 : index
    %74 = vector.load %arg5[%c1_56, %c0_57, %c0_58] : memref<3x64x216xf32, #tpu.memory_space<vmem>>, vector<1x64x216xf32>
    %75 = vector.shape_cast %74 : vector<1x64x216xf32> to vector<64x216xf32>
    %cst_59 = arith.constant dense<0.000000e+00> : vector<8x216xf32>
    %76 = tpu.matmul %70, %75, %cst_59 {dimension_numbers = #tpu.dot_dimension_numbers<[1], [0], [0], [1], [0, 0, 1, 1], [], []>} : vector<8x64xf32>, vector<64x216xf32>, vector<8x216xf32> -> vector<8x216xf32>
    %c2_60 = arith.constant 2 : index
    %c0_61 = arith.constant 0 : index
    %c0_62 = arith.constant 0 : index
    %77 = vector.load %arg5[%c2_60, %c0_61, %c0_62] : memref<3x64x216xf32, #tpu.memory_space<vmem>>, vector<1x64x216xf32>
    %78 = vector.shape_cast %77 : vector<1x64x216xf32> to vector<64x216xf32>
    %cst_63 = arith.constant dense<0.000000e+00> : vector<8x216xf32>
    %79 = tpu.matmul %70, %78, %cst_63 {dimension_numbers = #tpu.dot_dimension_numbers<[1], [0], [0], [1], [0, 0, 1, 1], [], []>} : vector<8x64xf32>, vector<64x216xf32>, vector<8x216xf32> -> vector<8x216xf32>
    %80 = tpu.concatenate %73, %76, %79 in 0 : vector<8x216xf32>, vector<8x216xf32>, vector<8x216xf32> -> vector<24x216xf32>
    %cst_64 = arith.constant 0.000000e+00 : f32
    %81 = vector.broadcast %cst_64 : f32 to vector<4x130xf32>
    %c0_65 = arith.constant 0 : index
    %c0_66 = arith.constant 0 : index
    %c0_67 = arith.constant 0 : index
    %82 = vector.load %arg6[%c0_65, %c0_66, %c0_67] : memref<9x4x24xf32, #tpu.memory_space<vmem>>, vector<1x4x24xf32>
    %83 = vector.shape_cast %82 : vector<1x4x24xf32> to vector<4x24xf32>
    %84 = vector.extract_strided_slice %80 {offsets = [0, 0], sizes = [24, 130], strides = [1, 1]} : vector<24x216xf32> to vector<24x130xf32>
    %cst_68 = arith.constant dense<0.000000e+00> : vector<4x130xf32>
    %85 = tpu.matmul %83, %84, %cst_68 {dimension_numbers = #tpu.dot_dimension_numbers<[1], [0], [0], [1], [0, 0, 1, 1], [], []>} : vector<4x24xf32>, vector<24x130xf32>, vector<4x130xf32> -> vector<4x130xf32>
    %86 = arith.addf %81, %85 : vector<4x130xf32>
    %c1_69 = arith.constant 1 : index
    %c0_70 = arith.constant 0 : index
    %c0_71 = arith.constant 0 : index
    %87 = vector.load %arg6[%c1_69, %c0_70, %c0_71] : memref<9x4x24xf32, #tpu.memory_space<vmem>>, vector<1x4x24xf32>
    %88 = vector.shape_cast %87 : vector<1x4x24xf32> to vector<4x24xf32>
    %89 = vector.extract_strided_slice %80 {offsets = [0, 6], sizes = [24, 130], strides = [1, 1]} : vector<24x216xf32> to vector<24x130xf32>
    %cst_72 = arith.constant dense<0.000000e+00> : vector<4x130xf32>
    %90 = tpu.matmul %88, %89, %cst_72 {dimension_numbers = #tpu.dot_dimension_numbers<[1], [0], [0], [1], [0, 0, 1, 1], [], []>} : vector<4x24xf32>, vector<24x130xf32>, vector<4x130xf32> -> vector<4x130xf32>
    %91 = arith.addf %86, %90 : vector<4x130xf32>
    %c2_73 = arith.constant 2 : index
    %c0_74 = arith.constant 0 : index
    %c0_75 = arith.constant 0 : index
    %92 = vector.load %arg6[%c2_73, %c0_74, %c0_75] : memref<9x4x24xf32, #tpu.memory_space<vmem>>, vector<1x4x24xf32>
    %93 = vector.shape_cast %92 : vector<1x4x24xf32> to vector<4x24xf32>
    %94 = vector.extract_strided_slice %80 {offsets = [0, 12], sizes = [24, 130], strides = [1, 1]} : vector<24x216xf32> to vector<24x130xf32>
    %cst_76 = arith.constant dense<0.000000e+00> : vector<4x130xf32>
    %95 = tpu.matmul %93, %94, %cst_76 {dimension_numbers = #tpu.dot_dimension_numbers<[1], [0], [0], [1], [0, 0, 1, 1], [], []>} : vector<4x24xf32>, vector<24x130xf32>, vector<4x130xf32> -> vector<4x130xf32>
    %96 = arith.addf %91, %95 : vector<4x130xf32>
    %c3_77 = arith.constant 3 : index
    %c0_78 = arith.constant 0 : index
    %c0_79 = arith.constant 0 : index
    %97 = vector.load %arg6[%c3_77, %c0_78, %c0_79] : memref<9x4x24xf32, #tpu.memory_space<vmem>>, vector<1x4x24xf32>
    %98 = vector.shape_cast %97 : vector<1x4x24xf32> to vector<4x24xf32>
    %99 = vector.extract_strided_slice %80 {offsets = [0, 36], sizes = [24, 130], strides = [1, 1]} : vector<24x216xf32> to vector<24x130xf32>
    %cst_80 = arith.constant dense<0.000000e+00> : vector<4x130xf32>
    %100 = tpu.matmul %98, %99, %cst_80 {dimension_numbers = #tpu.dot_dimension_numbers<[1], [0], [0], [1], [0, 0, 1, 1], [], []>} : vector<4x24xf32>, vector<24x130xf32>, vector<4x130xf32> -> vector<4x130xf32>
    %101 = arith.addf %96, %100 : vector<4x130xf32>
    %c4_81 = arith.constant 4 : index
    %c0_82 = arith.constant 0 : index
    %c0_83 = arith.constant 0 : index
    %102 = vector.load %arg6[%c4_81, %c0_82, %c0_83] : memref<9x4x24xf32, #tpu.memory_space<vmem>>, vector<1x4x24xf32>
    %103 = vector.shape_cast %102 : vector<1x4x24xf32> to vector<4x24xf32>
    %104 = vector.extract_strided_slice %80 {offsets = [0, 42], sizes = [24, 130], strides = [1, 1]} : vector<24x216xf32> to vector<24x130xf32>
    %cst_84 = arith.constant dense<0.000000e+00> : vector<4x130xf32>
    %105 = tpu.matmul %103, %104, %cst_84 {dimension_numbers = #tpu.dot_dimension_numbers<[1], [0], [0], [1], [0, 0, 1, 1], [], []>} : vector<4x24xf32>, vector<24x130xf32>, vector<4x130xf32> -> vector<4x130xf32>
    %106 = arith.addf %101, %105 : vector<4x130xf32>
    %c5_85 = arith.constant 5 : index
    %c0_86 = arith.constant 0 : index
    %c0_87 = arith.constant 0 : index
    %107 = vector.load %arg6[%c5_85, %c0_86, %c0_87] : memref<9x4x24xf32, #tpu.memory_space<vmem>>, vector<1x4x24xf32>
    %108 = vector.shape_cast %107 : vector<1x4x24xf32> to vector<4x24xf32>
    %109 = vector.extract_strided_slice %80 {offsets = [0, 48], sizes = [24, 130], strides = [1, 1]} : vector<24x216xf32> to vector<24x130xf32>
    %cst_88 = arith.constant dense<0.000000e+00> : vector<4x130xf32>
    %110 = tpu.matmul %108, %109, %cst_88 {dimension_numbers = #tpu.dot_dimension_numbers<[1], [0], [0], [1], [0, 0, 1, 1], [], []>} : vector<4x24xf32>, vector<24x130xf32>, vector<4x130xf32> -> vector<4x130xf32>
    %111 = arith.addf %106, %110 : vector<4x130xf32>
    %c6_89 = arith.constant 6 : index
    %c0_90 = arith.constant 0 : index
    %c0_91 = arith.constant 0 : index
    %112 = vector.load %arg6[%c6_89, %c0_90, %c0_91] : memref<9x4x24xf32, #tpu.memory_space<vmem>>, vector<1x4x24xf32>
    %113 = vector.shape_cast %112 : vector<1x4x24xf32> to vector<4x24xf32>
    %114 = vector.extract_strided_slice %80 {offsets = [0, 72], sizes = [24, 130], strides = [1, 1]} : vector<24x216xf32> to vector<24x130xf32>
    %cst_92 = arith.constant dense<0.000000e+00> : vector<4x130xf32>
    %115 = tpu.matmul %113, %114, %cst_92 {dimension_numbers = #tpu.dot_dimension_numbers<[1], [0], [0], [1], [0, 0, 1, 1], [], []>} : vector<4x24xf32>, vector<24x130xf32>, vector<4x130xf32> -> vector<4x130xf32>
    %116 = arith.addf %111, %115 : vector<4x130xf32>
    %c7_93 = arith.constant 7 : index
    %c0_94 = arith.constant 0 : index
    %c0_95 = arith.constant 0 : index
    %117 = vector.load %arg6[%c7_93, %c0_94, %c0_95] : memref<9x4x24xf32, #tpu.memory_space<vmem>>, vector<1x4x24xf32>
    %118 = vector.shape_cast %117 : vector<1x4x24xf32> to vector<4x24xf32>
    %119 = vector.extract_strided_slice %80 {offsets = [0, 78], sizes = [24, 130], strides = [1, 1]} : vector<24x216xf32> to vector<24x130xf32>
    %cst_96 = arith.constant dense<0.000000e+00> : vector<4x130xf32>
    %120 = tpu.matmul %118, %119, %cst_96 {dimension_numbers = #tpu.dot_dimension_numbers<[1], [0], [0], [1], [0, 0, 1, 1], [], []>} : vector<4x24xf32>, vector<24x130xf32>, vector<4x130xf32> -> vector<4x130xf32>
    %121 = arith.addf %116, %120 : vector<4x130xf32>
    %c8_97 = arith.constant 8 : index
    %c0_98 = arith.constant 0 : index
    %c0_99 = arith.constant 0 : index
    %122 = vector.load %arg6[%c8_97, %c0_98, %c0_99] : memref<9x4x24xf32, #tpu.memory_space<vmem>>, vector<1x4x24xf32>
    %123 = vector.shape_cast %122 : vector<1x4x24xf32> to vector<4x24xf32>
    %124 = vector.extract_strided_slice %80 {offsets = [0, 84], sizes = [24, 130], strides = [1, 1]} : vector<24x216xf32> to vector<24x130xf32>
    %cst_100 = arith.constant dense<0.000000e+00> : vector<4x130xf32>
    %125 = tpu.matmul %123, %124, %cst_100 {dimension_numbers = #tpu.dot_dimension_numbers<[1], [0], [0], [1], [0, 0, 1, 1], [], []>} : vector<4x24xf32>, vector<24x130xf32>, vector<4x130xf32> -> vector<4x130xf32>
    %126 = arith.addf %121, %125 : vector<4x130xf32>
    %c0_101 = arith.constant 0 : index
    %c0_102 = arith.constant 0 : index
    %127 = vector.load %arg7[%c0_101, %c0_102] : memref<4x1xf32, #tpu.memory_space<vmem>>, vector<4x1xf32>
    %128 = vector.broadcast %127 : vector<4x1xf32> to vector<4x130xf32>
    %129 = arith.addf %126, %128 : vector<4x130xf32>
    %cst_103 = arith.constant 0.000000e+00 : f32
    %130 = vector.broadcast %cst_103 : f32 to vector<4x130xf32>
    %131 = arith.maximumf %129, %130 : vector<4x130xf32>
    %c0_104 = arith.constant 0 : index
    %c0_105 = arith.constant 0 : index
    %132 = vector.load %arg8[%c0_104, %c0_105] : memref<130x64xf32, #tpu.memory_space<vmem>>, vector<130x64xf32>
    %cst_106 = arith.constant dense<0.000000e+00> : vector<4x64xf32>
    %133 = tpu.matmul %131, %132, %cst_106 {dimension_numbers = #tpu.dot_dimension_numbers<[1], [0], [0], [1], [0, 0, 1, 1], [], []>} : vector<4x130xf32>, vector<130x64xf32>, vector<4x64xf32> -> vector<4x64xf32>
    %134 = vector.extract_strided_slice %133 {offsets = [0, 0], sizes = [4, 32], strides = [1, 1]} : vector<4x64xf32> to vector<4x32xf32>
    %135 = vector.extract_strided_slice %133 {offsets = [0, 32], sizes = [4, 32], strides = [1, 1]} : vector<4x64xf32> to vector<4x32xf32>
    %136 = arith.maximumf %134, %135 : vector<4x32xf32>
    %137 = vector.extract_strided_slice %136 {offsets = [0, 0], sizes = [4, 16], strides = [1, 1]} : vector<4x32xf32> to vector<4x16xf32>
    %138 = vector.extract_strided_slice %136 {offsets = [0, 16], sizes = [4, 16], strides = [1, 1]} : vector<4x32xf32> to vector<4x16xf32>
    %139 = arith.maximumf %137, %138 : vector<4x16xf32>
    %140 = vector.extract_strided_slice %139 {offsets = [0, 0], sizes = [4, 8], strides = [1, 1]} : vector<4x16xf32> to vector<4x8xf32>
    %141 = vector.extract_strided_slice %139 {offsets = [0, 8], sizes = [4, 8], strides = [1, 1]} : vector<4x16xf32> to vector<4x8xf32>
    %142 = arith.maximumf %140, %141 : vector<4x8xf32>
    %c0_107 = arith.constant 0 : index
    %c0_108 = arith.constant 0 : index
    %143 = vector.load %arg9[%c0_107, %c0_108] : memref<64x4xf32, #tpu.memory_space<vmem>>, vector<64x4xf32>
    %cst_109 = arith.constant dense<0.000000e+00> : vector<64x8xf32>
    %144 = tpu.matmul %143, %142, %cst_109 {dimension_numbers = #tpu.dot_dimension_numbers<[1], [0], [0], [1], [0, 0, 1, 1], [], []>} : vector<64x4xf32>, vector<4x8xf32>, vector<64x8xf32> -> vector<64x8xf32>
    %cst_110 = arith.constant 0.000000e+00 : f32
    %145 = vector.broadcast %cst_110 : f32 to vector<8x64xf32>
    %146 = vector.extract_strided_slice %144 {offsets = [0, 0], sizes = [8, 8], strides = [1, 1]} : vector<64x8xf32> to vector<8x8xf32>
    %c0_111 = arith.constant 0 : index
    %c0_112 = arith.constant 0 : index
    %c0_113 = arith.constant 0 : index
    %147 = vector.load %arg11[%c0_111, %c0_112, %c0_113] : memref<8x8x64xf32, #tpu.memory_space<vmem>>, vector<1x8x64xf32>
    %148 = vector.shape_cast %147 : vector<1x8x64xf32> to vector<8x64xf32>
    %cst_114 = arith.constant dense<0.000000e+00> : vector<8x64xf32>
    %149 = tpu.matmul %146, %148, %cst_114 {dimension_numbers = #tpu.dot_dimension_numbers<[1], [0], [0], [1], [0, 0, 1, 1], [], []>} : vector<8x8xf32>, vector<8x64xf32>, vector<8x64xf32> -> vector<8x64xf32>
    %150 = arith.addf %145, %149 : vector<8x64xf32>
    %151 = vector.extract_strided_slice %144 {offsets = [8, 0], sizes = [8, 8], strides = [1, 1]} : vector<64x8xf32> to vector<8x8xf32>
    %c1_115 = arith.constant 1 : index
    %c0_116 = arith.constant 0 : index
    %c0_117 = arith.constant 0 : index
    %152 = vector.load %arg11[%c1_115, %c0_116, %c0_117] : memref<8x8x64xf32, #tpu.memory_space<vmem>>, vector<1x8x64xf32>
    %153 = vector.shape_cast %152 : vector<1x8x64xf32> to vector<8x64xf32>
    %cst_118 = arith.constant dense<0.000000e+00> : vector<8x64xf32>
    %154 = tpu.matmul %151, %153, %cst_118 {dimension_numbers = #tpu.dot_dimension_numbers<[1], [0], [0], [1], [0, 0, 1, 1], [], []>} : vector<8x8xf32>, vector<8x64xf32>, vector<8x64xf32> -> vector<8x64xf32>
    %155 = arith.addf %150, %154 : vector<8x64xf32>
    %156 = vector.extract_strided_slice %144 {offsets = [16, 0], sizes = [8, 8], strides = [1, 1]} : vector<64x8xf32> to vector<8x8xf32>
    %c2_119 = arith.constant 2 : index
    %c0_120 = arith.constant 0 : index
    %c0_121 = arith.constant 0 : index
    %157 = vector.load %arg11[%c2_119, %c0_120, %c0_121] : memref<8x8x64xf32, #tpu.memory_space<vmem>>, vector<1x8x64xf32>
    %158 = vector.shape_cast %157 : vector<1x8x64xf32> to vector<8x64xf32>
    %cst_122 = arith.constant dense<0.000000e+00> : vector<8x64xf32>
    %159 = tpu.matmul %156, %158, %cst_122 {dimension_numbers = #tpu.dot_dimension_numbers<[1], [0], [0], [1], [0, 0, 1, 1], [], []>} : vector<8x8xf32>, vector<8x64xf32>, vector<8x64xf32> -> vector<8x64xf32>
    %160 = arith.addf %155, %159 : vector<8x64xf32>
    %161 = vector.extract_strided_slice %144 {offsets = [24, 0], sizes = [8, 8], strides = [1, 1]} : vector<64x8xf32> to vector<8x8xf32>
    %c3_123 = arith.constant 3 : index
    %c0_124 = arith.constant 0 : index
    %c0_125 = arith.constant 0 : index
    %162 = vector.load %arg11[%c3_123, %c0_124, %c0_125] : memref<8x8x64xf32, #tpu.memory_space<vmem>>, vector<1x8x64xf32>
    %163 = vector.shape_cast %162 : vector<1x8x64xf32> to vector<8x64xf32>
    %cst_126 = arith.constant dense<0.000000e+00> : vector<8x64xf32>
    %164 = tpu.matmul %161, %163, %cst_126 {dimension_numbers = #tpu.dot_dimension_numbers<[1], [0], [0], [1], [0, 0, 1, 1], [], []>} : vector<8x8xf32>, vector<8x64xf32>, vector<8x64xf32> -> vector<8x64xf32>
    %165 = arith.addf %160, %164 : vector<8x64xf32>
    %166 = vector.extract_strided_slice %144 {offsets = [32, 0], sizes = [8, 8], strides = [1, 1]} : vector<64x8xf32> to vector<8x8xf32>
    %c4_127 = arith.constant 4 : index
    %c0_128 = arith.constant 0 : index
    %c0_129 = arith.constant 0 : index
    %167 = vector.load %arg11[%c4_127, %c0_128, %c0_129] : memref<8x8x64xf32, #tpu.memory_space<vmem>>, vector<1x8x64xf32>
    %168 = vector.shape_cast %167 : vector<1x8x64xf32> to vector<8x64xf32>
    %cst_130 = arith.constant dense<0.000000e+00> : vector<8x64xf32>
    %169 = tpu.matmul %166, %168, %cst_130 {dimension_numbers = #tpu.dot_dimension_numbers<[1], [0], [0], [1], [0, 0, 1, 1], [], []>} : vector<8x8xf32>, vector<8x64xf32>, vector<8x64xf32> -> vector<8x64xf32>
    %170 = arith.addf %165, %169 : vector<8x64xf32>
    %171 = vector.extract_strided_slice %144 {offsets = [40, 0], sizes = [8, 8], strides = [1, 1]} : vector<64x8xf32> to vector<8x8xf32>
    %c5_131 = arith.constant 5 : index
    %c0_132 = arith.constant 0 : index
    %c0_133 = arith.constant 0 : index
    %172 = vector.load %arg11[%c5_131, %c0_132, %c0_133] : memref<8x8x64xf32, #tpu.memory_space<vmem>>, vector<1x8x64xf32>
    %173 = vector.shape_cast %172 : vector<1x8x64xf32> to vector<8x64xf32>
    %cst_134 = arith.constant dense<0.000000e+00> : vector<8x64xf32>
    %174 = tpu.matmul %171, %173, %cst_134 {dimension_numbers = #tpu.dot_dimension_numbers<[1], [0], [0], [1], [0, 0, 1, 1], [], []>} : vector<8x8xf32>, vector<8x64xf32>, vector<8x64xf32> -> vector<8x64xf32>
    %175 = arith.addf %170, %174 : vector<8x64xf32>
    %176 = vector.extract_strided_slice %144 {offsets = [48, 0], sizes = [8, 8], strides = [1, 1]} : vector<64x8xf32> to vector<8x8xf32>
    %c6_135 = arith.constant 6 : index
    %c0_136 = arith.constant 0 : index
    %c0_137 = arith.constant 0 : index
    %177 = vector.load %arg11[%c6_135, %c0_136, %c0_137] : memref<8x8x64xf32, #tpu.memory_space<vmem>>, vector<1x8x64xf32>
    %178 = vector.shape_cast %177 : vector<1x8x64xf32> to vector<8x64xf32>
    %cst_138 = arith.constant dense<0.000000e+00> : vector<8x64xf32>
    %179 = tpu.matmul %176, %178, %cst_138 {dimension_numbers = #tpu.dot_dimension_numbers<[1], [0], [0], [1], [0, 0, 1, 1], [], []>} : vector<8x8xf32>, vector<8x64xf32>, vector<8x64xf32> -> vector<8x64xf32>
    %180 = arith.addf %175, %179 : vector<8x64xf32>
    %181 = vector.extract_strided_slice %144 {offsets = [56, 0], sizes = [8, 8], strides = [1, 1]} : vector<64x8xf32> to vector<8x8xf32>
    %c7_139 = arith.constant 7 : index
    %c0_140 = arith.constant 0 : index
    %c0_141 = arith.constant 0 : index
    %182 = vector.load %arg11[%c7_139, %c0_140, %c0_141] : memref<8x8x64xf32, #tpu.memory_space<vmem>>, vector<1x8x64xf32>
    %183 = vector.shape_cast %182 : vector<1x8x64xf32> to vector<8x64xf32>
    %cst_142 = arith.constant dense<0.000000e+00> : vector<8x64xf32>
    %184 = tpu.matmul %181, %183, %cst_142 {dimension_numbers = #tpu.dot_dimension_numbers<[1], [0], [0], [1], [0, 0, 1, 1], [], []>} : vector<8x8xf32>, vector<8x64xf32>, vector<8x64xf32> -> vector<8x64xf32>
    %185 = arith.addf %180, %184 : vector<8x64xf32>
    %c0_143 = arith.constant 0 : index
    %c0_144 = arith.constant 0 : index
    %186 = vector.load %arg10[%c0_143, %c0_144] : memref<8x1xf32, #tpu.memory_space<vmem>>, vector<8x1xf32>
    %187 = vector.broadcast %186 : vector<8x1xf32> to vector<8x64xf32>
    %188 = arith.addf %185, %187 : vector<8x64xf32>
    %cst_145 = arith.constant 0.000000e+00 : f32
    %189 = vector.broadcast %cst_145 : f32 to vector<8x64xf32>
    %190 = arith.maximumf %188, %189 : vector<8x64xf32>
    %c0_146 = arith.constant 0 : index
    %c0_147 = arith.constant 0 : index
    %191 = vector.load %arg12[%c0_146, %c0_147] : memref<128x8xf32, #tpu.memory_space<vmem>>, vector<128x8xf32>
    %cst_148 = arith.constant dense<0.000000e+00> : vector<128x64xf32>
    %192 = tpu.matmul %191, %190, %cst_148 {dimension_numbers = #tpu.dot_dimension_numbers<[1], [0], [0], [1], [0, 0, 1, 1], [], []>} : vector<128x8xf32>, vector<8x64xf32>, vector<128x64xf32> -> vector<128x64xf32>
    %cst_149 = arith.constant 0.000000e+00 : f32
    %193 = vector.broadcast %cst_149 : f32 to vector<16x512xf32>
    %194 = vector.extract_strided_slice %192 {offsets = [0, 0], sizes = [16, 64], strides = [1, 1]} : vector<128x64xf32> to vector<16x64xf32>
    %c0_150 = arith.constant 0 : index
    %c0_151 = arith.constant 0 : index
    %c0_152 = arith.constant 0 : index
    %195 = vector.load %arg14[%c0_150, %c0_151, %c0_152] : memref<8x64x512xf32, #tpu.memory_space<vmem>>, vector<1x64x512xf32>
    %196 = vector.shape_cast %195 : vector<1x64x512xf32> to vector<64x512xf32>
    %cst_153 = arith.constant dense<0.000000e+00> : vector<16x512xf32>
    %197 = tpu.matmul %194, %196, %cst_153 {dimension_numbers = #tpu.dot_dimension_numbers<[1], [0], [0], [1], [0, 0, 1, 1], [], []>} : vector<16x64xf32>, vector<64x512xf32>, vector<16x512xf32> -> vector<16x512xf32>
    %198 = arith.addf %193, %197 : vector<16x512xf32>
    %199 = vector.extract_strided_slice %192 {offsets = [16, 0], sizes = [16, 64], strides = [1, 1]} : vector<128x64xf32> to vector<16x64xf32>
    %c1_154 = arith.constant 1 : index
    %c0_155 = arith.constant 0 : index
    %c0_156 = arith.constant 0 : index
    %200 = vector.load %arg14[%c1_154, %c0_155, %c0_156] : memref<8x64x512xf32, #tpu.memory_space<vmem>>, vector<1x64x512xf32>
    %201 = vector.shape_cast %200 : vector<1x64x512xf32> to vector<64x512xf32>
    %cst_157 = arith.constant dense<0.000000e+00> : vector<16x512xf32>
    %202 = tpu.matmul %199, %201, %cst_157 {dimension_numbers = #tpu.dot_dimension_numbers<[1], [0], [0], [1], [0, 0, 1, 1], [], []>} : vector<16x64xf32>, vector<64x512xf32>, vector<16x512xf32> -> vector<16x512xf32>
    %203 = arith.addf %198, %202 : vector<16x512xf32>
    %204 = vector.extract_strided_slice %192 {offsets = [32, 0], sizes = [16, 64], strides = [1, 1]} : vector<128x64xf32> to vector<16x64xf32>
    %c2_158 = arith.constant 2 : index
    %c0_159 = arith.constant 0 : index
    %c0_160 = arith.constant 0 : index
    %205 = vector.load %arg14[%c2_158, %c0_159, %c0_160] : memref<8x64x512xf32, #tpu.memory_space<vmem>>, vector<1x64x512xf32>
    %206 = vector.shape_cast %205 : vector<1x64x512xf32> to vector<64x512xf32>
    %cst_161 = arith.constant dense<0.000000e+00> : vector<16x512xf32>
    %207 = tpu.matmul %204, %206, %cst_161 {dimension_numbers = #tpu.dot_dimension_numbers<[1], [0], [0], [1], [0, 0, 1, 1], [], []>} : vector<16x64xf32>, vector<64x512xf32>, vector<16x512xf32> -> vector<16x512xf32>
    %208 = arith.addf %203, %207 : vector<16x512xf32>
    %209 = vector.extract_strided_slice %192 {offsets = [48, 0], sizes = [16, 64], strides = [1, 1]} : vector<128x64xf32> to vector<16x64xf32>
    %c3_162 = arith.constant 3 : index
    %c0_163 = arith.constant 0 : index
    %c0_164 = arith.constant 0 : index
    %210 = vector.load %arg14[%c3_162, %c0_163, %c0_164] : memref<8x64x512xf32, #tpu.memory_space<vmem>>, vector<1x64x512xf32>
    %211 = vector.shape_cast %210 : vector<1x64x512xf32> to vector<64x512xf32>
    %cst_165 = arith.constant dense<0.000000e+00> : vector<16x512xf32>
    %212 = tpu.matmul %209, %211, %cst_165 {dimension_numbers = #tpu.dot_dimension_numbers<[1], [0], [0], [1], [0, 0, 1, 1], [], []>} : vector<16x64xf32>, vector<64x512xf32>, vector<16x512xf32> -> vector<16x512xf32>
    %213 = arith.addf %208, %212 : vector<16x512xf32>
    %214 = vector.extract_strided_slice %192 {offsets = [64, 0], sizes = [16, 64], strides = [1, 1]} : vector<128x64xf32> to vector<16x64xf32>
    %c4_166 = arith.constant 4 : index
    %c0_167 = arith.constant 0 : index
    %c0_168 = arith.constant 0 : index
    %215 = vector.load %arg14[%c4_166, %c0_167, %c0_168] : memref<8x64x512xf32, #tpu.memory_space<vmem>>, vector<1x64x512xf32>
    %216 = vector.shape_cast %215 : vector<1x64x512xf32> to vector<64x512xf32>
    %cst_169 = arith.constant dense<0.000000e+00> : vector<16x512xf32>
    %217 = tpu.matmul %214, %216, %cst_169 {dimension_numbers = #tpu.dot_dimension_numbers<[1], [0], [0], [1], [0, 0, 1, 1], [], []>} : vector<16x64xf32>, vector<64x512xf32>, vector<16x512xf32> -> vector<16x512xf32>
    %218 = arith.addf %213, %217 : vector<16x512xf32>
    %219 = vector.extract_strided_slice %192 {offsets = [80, 0], sizes = [16, 64], strides = [1, 1]} : vector<128x64xf32> to vector<16x64xf32>
    %c5_170 = arith.constant 5 : index
    %c0_171 = arith.constant 0 : index
    %c0_172 = arith.constant 0 : index
    %220 = vector.load %arg14[%c5_170, %c0_171, %c0_172] : memref<8x64x512xf32, #tpu.memory_space<vmem>>, vector<1x64x512xf32>
    %221 = vector.shape_cast %220 : vector<1x64x512xf32> to vector<64x512xf32>
    %cst_173 = arith.constant dense<0.000000e+00> : vector<16x512xf32>
    %222 = tpu.matmul %219, %221, %cst_173 {dimension_numbers = #tpu.dot_dimension_numbers<[1], [0], [0], [1], [0, 0, 1, 1], [], []>} : vector<16x64xf32>, vector<64x512xf32>, vector<16x512xf32> -> vector<16x512xf32>
    %223 = arith.addf %218, %222 : vector<16x512xf32>
    %224 = vector.extract_strided_slice %192 {offsets = [96, 0], sizes = [16, 64], strides = [1, 1]} : vector<128x64xf32> to vector<16x64xf32>
    %c6_174 = arith.constant 6 : index
    %c0_175 = arith.constant 0 : index
    %c0_176 = arith.constant 0 : index
    %225 = vector.load %arg14[%c6_174, %c0_175, %c0_176] : memref<8x64x512xf32, #tpu.memory_space<vmem>>, vector<1x64x512xf32>
    %226 = vector.shape_cast %225 : vector<1x64x512xf32> to vector<64x512xf32>
    %cst_177 = arith.constant dense<0.000000e+00> : vector<16x512xf32>
    %227 = tpu.matmul %224, %226, %cst_177 {dimension_numbers = #tpu.dot_dimension_numbers<[1], [0], [0], [1], [0, 0, 1, 1], [], []>} : vector<16x64xf32>, vector<64x512xf32>, vector<16x512xf32> -> vector<16x512xf32>
    %228 = arith.addf %223, %227 : vector<16x512xf32>
    %229 = vector.extract_strided_slice %192 {offsets = [112, 0], sizes = [16, 64], strides = [1, 1]} : vector<128x64xf32> to vector<16x64xf32>
    %c7_178 = arith.constant 7 : index
    %c0_179 = arith.constant 0 : index
    %c0_180 = arith.constant 0 : index
    %230 = vector.load %arg14[%c7_178, %c0_179, %c0_180] : memref<8x64x512xf32, #tpu.memory_space<vmem>>, vector<1x64x512xf32>
    %231 = vector.shape_cast %230 : vector<1x64x512xf32> to vector<64x512xf32>
    %cst_181 = arith.constant dense<0.000000e+00> : vector<16x512xf32>
    %232 = tpu.matmul %229, %231, %cst_181 {dimension_numbers = #tpu.dot_dimension_numbers<[1], [0], [0], [1], [0, 0, 1, 1], [], []>} : vector<16x64xf32>, vector<64x512xf32>, vector<16x512xf32> -> vector<16x512xf32>
    %233 = arith.addf %228, %232 : vector<16x512xf32>
    %234 = vector.extract_strided_slice %233 {offsets = [0, 0], sizes = [14, 512], strides = [1, 1]} : vector<16x512xf32> to vector<14x512xf32>
    %c0_182 = arith.constant 0 : index
    %c0_183 = arith.constant 0 : index
    %235 = vector.load %arg13[%c0_182, %c0_183] : memref<14x1xf32, #tpu.memory_space<vmem>>, vector<14x1xf32>
    %236 = vector.broadcast %235 : vector<14x1xf32> to vector<14x512xf32>
    %237 = arith.addf %234, %236 : vector<14x512xf32>
    %cst_184 = arith.constant 5.000000e-01 : f32
    %238 = vector.broadcast %cst_184 : f32 to vector<14x512xf32>
    %239 = arith.mulf %238, %237 : vector<14x512xf32>
    %240 = math.tanh %239 : vector<14x512xf32>
    %cst_185 = arith.constant 1.000000e+00 : f32
    %241 = vector.broadcast %cst_185 : f32 to vector<14x512xf32>
    %242 = arith.addf %240, %241 : vector<14x512xf32>
    %cst_186 = arith.constant 5.000000e-01 : f32
    %243 = vector.broadcast %cst_186 : f32 to vector<14x512xf32>
    %244 = arith.mulf %243, %242 : vector<14x512xf32>
    %c0_187 = arith.constant 0 : index
    %c0_188 = arith.constant 0 : index
    %c0_189 = arith.constant 0 : index
    %245 = vector.load %arg15[%c0_187, %c0_188, %c0_189] : memref<1x14x512xf32, #tpu.memory_space<vmem>>, vector<1x14x512xf32>
    %246 = vector.shape_cast %245 : vector<1x14x512xf32> to vector<14x512xf32>
    %247 = vector.shape_cast %244 : vector<14x512xf32> to vector<1x14x512xf32>
    tpu.vector_store %arg15[%c0_187, %c0_188, %c0_189], %247 {strides = array<i32>} : memref<1x14x512xf32, #tpu.memory_space<vmem>>, vector<1x14x512xf32>,
    return
  }
  func.func @transform_0(%arg0: i32) -> (i32, i32, i32) {
    %c0_i32 = arith.constant 0 : i32
    %c0_i32_0 = arith.constant 0 : i32
    %c0_i32_1 = arith.constant 0 : i32
    return %arg0, %c0_i32, %c0_i32_0 : i32, i32, i32
  }
  func.func @transform_1(%arg0: i32) -> (i32, i32, i32) {
    %c0_i32 = arith.constant 0 : i32
    %c0_i32_0 = arith.constant 0 : i32
    %c0_i32_1 = arith.constant 0 : i32
    %c0_i32_2 = arith.constant 0 : i32
    return %c0_i32, %c0_i32_0, %c0_i32_1 : i32, i32, i32
  }
  func.func @transform_2(%arg0: i32) -> (i32, i32) {
    %c0_i32 = arith.constant 0 : i32
    %c0_i32_0 = arith.constant 0 : i32
    %c0_i32_1 = arith.constant 0 : i32
    return %c0_i32, %c0_i32_0 : i32, i32
  }
  func.func @transform_3(%arg0: i32) -> (i32, i32) {
    %c0_i32 = arith.constant 0 : i32
    %c0_i32_0 = arith.constant 0 : i32
    %c0_i32_1 = arith.constant 0 : i32
    return %c0_i32, %c0_i32_0 : i32, i32
  }
  func.func @transform_4(%arg0: i32) -> (i32, i32, i32) {
    %c0_i32 = arith.constant 0 : i32
    %c0_i32_0 = arith.constant 0 : i32
    %c0_i32_1 = arith.constant 0 : i32
    %c0_i32_2 = arith.constant 0 : i32
    return %c0_i32, %c0_i32_0, %c0_i32_1 : i32, i32, i32
  }
  func.func @transform_5(%arg0: i32) -> (i32, i32, i32) {
    %c0_i32 = arith.constant 0 : i32
    %c0_i32_0 = arith.constant 0 : i32
    %c0_i32_1 = arith.constant 0 : i32
    %c0_i32_2 = arith.constant 0 : i32
    return %c0_i32, %c0_i32_0, %c0_i32_1 : i32, i32, i32
  }
  func.func @transform_6(%arg0: i32) -> (i32, i32) {
    %c0_i32 = arith.constant 0 : i32
    %c0_i32_0 = arith.constant 0 : i32
    %c0_i32_1 = arith.constant 0 : i32
    return %c0_i32, %c0_i32_0 : i32, i32
  }
  func.func @transform_7(%arg0: i32) -> (i32, i32) {
    %c0_i32 = arith.constant 0 : i32
    %c0_i32_0 = arith.constant 0 : i32
    %c0_i32_1 = arith.constant 0 : i32
    return %c0_i32, %c0_i32_0 : i32, i32
  }
  func.func @transform_8(%arg0: i32) -> (i32, i32) {
    %c0_i32 = arith.constant 0 : i32
    %c0_i32_0 = arith.constant 0 : i32
    %c0_i32_1 = arith.constant 0 : i32
    return %c0_i32, %c0_i32_0 : i32, i32
  }
  func.func @transform_9(%arg0: i32) -> (i32, i32) {
    %c0_i32 = arith.constant 0 : i32
    %c0_i32_0 = arith.constant 0 : i32
    %c0_i32_1 = arith.constant 0 : i32
    return %c0_i32, %c0_i32_0 : i32, i32
  }
  func.func @transform_10(%arg0: i32) -> (i32, i32, i32) {
    %c0_i32 = arith.constant 0 : i32
    %c0_i32_0 = arith.constant 0 : i32
    %c0_i32_1 = arith.constant 0 : i32
    %c0_i32_2 = arith.constant 0 : i32
    return %c0_i32, %c0_i32_0, %c0_i32_1 : i32, i32, i32
  }
  func.func @transform_11(%arg0: i32) -> (i32, i32) {
    %c0_i32 = arith.constant 0 : i32
    %c0_i32_0 = arith.constant 0 : i32
    %c0_i32_1 = arith.constant 0 : i32
    return %c0_i32, %c0_i32_0 : i32, i32
  }
  func.func @transform_12(%arg0: i32) -> (i32, i32) {
    %c0_i32 = arith.constant 0 : i32
    %c0_i32_0 = arith.constant 0 : i32
    %c0_i32_1 = arith.constant 0 : i32
    return %c0_i32, %c0_i32_0 : i32, i32
  }
  func.func @transform_13(%arg0: i32) -> (i32, i32, i32) {
    %c0_i32 = arith.constant 0 : i32
    %c0_i32_0 = arith.constant 0 : i32
    %c0_i32_1 = arith.constant 0 : i32
    %c0_i32_2 = arith.constant 0 : i32
    return %c0_i32, %c0_i32_0, %c0_i32_1 : i32, i32, i32
  }
  func.func @transform_14(%arg0: i32) -> (i32, i32, i32) {
    %c0_i32 = arith.constant 0 : i32
    %c0_i32_0 = arith.constant 0 : i32
    %c0_i32_1 = arith.constant 0 : i32
    return %arg0, %c0_i32, %c0_i32_0 : i32, i32, i32
  }
}

</mosaic_0001>

<llo_original>
// kernel: conv_ae_forward.1
$region0: #{conv_ae_forward.1}
  #allocation0 [shape = 'u32[]', space=smem, size = 0x4, offset = 0x4, fixed_abs, tag = 'smem constant byte address 0x4 - core index']
  #allocation1 [shape = 'u32[144,128]{1,0:T(1,128)}', space=vmem, size = 0x12000, scoped, tag = 'internal scratch']
  %s0 = inlined_call_operand.vmem [shape: f32[2,42,1000], index: 0, kind: input, shape index: {}]
  %s1 = inlined_call_operand.vmem [shape: f32[9,8,42], index: 1, kind: input, shape index: {}]
  %s2 = inlined_call_operand.vmem [shape: f32[8,1], index: 2, kind: input, shape index: {}]
  %s3 = inlined_call_operand.vmem [shape: f32[778,512], index: 3, kind: input, shape index: {}]
  %s4 = inlined_call_operand.vmem [shape: f32[3,64,216], index: 4, kind: input, shape index: {}]
  %s5 = inlined_call_operand.vmem [shape: f32[9,4,24], index: 5, kind: input, shape index: {}]
  %s6 = inlined_call_operand.vmem [shape: f32[4,1], index: 6, kind: input, shape index: {}]
  %s7 = inlined_call_operand.vmem [shape: f32[130,64], index: 7, kind: input, shape index: {}]
  %s8 = inlined_call_operand.vmem [shape: f32[64,4], index: 8, kind: input, shape index: {}]
  %s9 = inlined_call_operand.vmem [shape: f32[8,1], index: 9, kind: input, shape index: {}]
  %s10 = inlined_call_operand.vmem [shape: f32[8,8,64], index: 10, kind: input, shape index: {}]
  %s11 = inlined_call_operand.vmem [shape: f32[128,8], index: 11, kind: input, shape index: {}]
  %s12 = inlined_call_operand.vmem [shape: f32[14,1], index: 12, kind: input, shape index: {}]
  %s13 = inlined_call_operand.vmem [shape: f32[8,64,512], index: 13, kind: input, shape index: {}]
  %s14 = inlined_call_operand.vmem [shape: f32[2,14,512], index: 14, kind: output, shape index: {}]
  %s15 = sld [smem:[#allocation0]]
  $region89: #{conv_ae_forward.1} parent=0
    _
  %s17 = ssub.s32 1, %s15
  %s18 = scalar_select 0, %s17, %s15
  loop: start=0, step=1, limit=4
  $region2: #{conv_ae_forward.1} parent=0 // loop_pre_header
    _
  $region3: #{conv_ae_forward.1} parent=0 // loop_header
    %s20 = sphi 0, %s24
    %p21 = scmp.ge.s32.totalorder %s20, 4
    %s30 = sphi 0, %s32
    %s33 = sphi 0, %s30
    %s34 = sphi 0, %s33
    %s50 = sphi 0, %s34
    %s54 = sphi 0, %s54
    %s56 = sphi 0, %s54
    %s57 = sphi 0, %s56
    %s71 = sphi 0, %s57
    %s75 = sphi 0, %s75
    %s77 = sphi 0, %s75
    %s78 = sphi 0, %s77
    %s92 = sphi 0, %s78
    %s96 = sphi 0, %s96
    %s98 = sphi 0, %s96
    %s99 = sphi 0, %s98
    %s113 = sphi 0, %s99
    %s117 = sphi 0, %s117
    %s119 = sphi 0, %s117
    %s120 = sphi 0, %s119
    %s134 = sphi 0, %s120
    %s138 = sphi 0, %s138
    %s140 = sphi 0, %s138
    %s141 = sphi 0, %s140
    %s155 = sphi 0, %s141
    %s159 = sphi 0, %s159
    %s161 = sphi 0, %s159
    %s162 = sphi 0, %s161
    %s176 = sphi 0, %s162
    %s180 = sphi 0, %s180
    %s182 = sphi 0, %s180
    %s183 = sphi 0, %s182
    %s197 = sphi 0, %s183
    %s201 = sphi 0, %s201
    %s203 = sphi 0, %s201
    %s204 = sphi 0, %s203
    %s218 = sphi 0, %s204
    %s222 = sphi 0, %s222
    %s224 = sphi 0, %s222
    %s225 = sphi 0, %s224
    %s239 = sphi 0, %s225
    %s243 = sphi 0, %s243
    %s245 = sphi 0, %s243
    %s246 = sphi 0, %s245
    %s260 = sphi 0, %s246
    %s264 = sphi 0, %s264
    %s266 = sphi 0, %s264
    %s267 = sphi 0, %s266
    %s281 = sphi 0, %s267
    %s285 = sphi 0, %s285
    %s287 = sphi 0, %s285
    %s288 = sphi 0, %s287
    %s302 = sphi 0, %s288
    %s306 = sphi 0, %s306
    %s308 = sphi 0, %s306
    %s309 = sphi 0, %s308
    %s323 = sphi 0, %s309
    %s329 = sphi 0, %s331
    %s332 = sphi 0, %s329
    %s333 = sphi 0, %s332
    %s349 = sphi 0, %s333
  $region4: #{conv_ae_forward.1} parent=0 // loop_header_branch
    %23 = sbr.rel (%p21) target = $region8
  $region5: #{conv_ae_forward.1} parent=0 // loop_body
    %s25 = ssub.s32 %s20, 1
    %s26 = ssub.s32 %s20, 2
    %s27 = sadd.s32 %s20, 1
    %s28 = ssub.s32 %s20, %s27
    %p29 = scmp.eq.s32.totalorder %s28, 0
    %s31 = sadd.s32 %s30, 1
    %s32 = scalar_select %p29, %s30, %s31
    %p35 = pneg %p29
    %p36 = scmp.eq.s32.totalorder %s20, 1
    %p37 = por %p35, %p36
    %p38 = scmp.ne.s32.totalorder %s30, %s33
    %p39 = scmp.eq.s32.totalorder %s20, 0
    %p40 = por %p38, %p39
    %p41 = scmp.ne.s32.totalorder %s30, %s33
    %p42 = scmp.eq.s32.totalorder %s25, 1
    %p43 = por %p41, %p42
    %p44 = scmp.ne.s32.totalorder %s33, %s34
    %p45 = scmp.eq.s32.totalorder %s25, 0
    %p46 = por %p44, %p45
    %p47 = scmp.ne.s32.totalorder %s33, %s34
    %p48 = scmp.eq.s32.totalorder %s26, 1
    %p49 = por %p47, %p48
    %p51 = scmp.ne.s32.totalorder %s34, %s50
    %p52 = scmp.eq.s32.totalorder %s26, 0
    %p53 = por %p51, %p52
    %s55 = sadd.s32 %s54, 1
    %p58 = scmp.eq.s32.totalorder %s20, 1
    %p59 = scmp.ne.s32.totalorder %s54, %s56
    %p60 = scmp.eq.s32.totalorder %s20, 0
    %p61 = por %p59, %p60
    %p62 = scmp.ne.s32.totalorder %s54, %s56
    %p63 = scmp.eq.s32.totalorder %s25, 1
    %p64 = por %p62, %p63
    %p65 = scmp.ne.s32.totalorder %s56, %s57
    %p66 = scmp.eq.s32.totalorder %s25, 0
    %p67 = por %p65, %p66
    %p68 = scmp.ne.s32.totalorder %s56, %s57
    %p69 = scmp.eq.s32.totalorder %s26, 1
    %p70 = por %p68, %p69
    %p72 = scmp.ne.s32.totalorder %s57, %s71
    %p73 = scmp.eq.s32.totalorder %s26, 0
    %p74 = por %p72, %p73
    %s76 = sadd.s32 %s75, 1
    %p79 = scmp.eq.s32.totalorder %s20, 1
    %p80 = scmp.ne.s32.totalorder %s75, %s77
    %p81 = scmp.eq.s32.totalorder %s20, 0
    %p82 = por %p80, %p81
    %p83 = scmp.ne.s32.totalorder %s75, %s77
    %p84 = scmp.eq.s32.totalorder %s25, 1
    %p85 = por %p83, %p84
    %p86 = scmp.ne.s32.totalorder %s77, %s78
    %p87 = scmp.eq.s32.totalorder %s25, 0
    %p88 = por %p86, %p87
    %p89 = scmp.ne.s32.totalorder %s77, %s78
    %p90 = scmp.eq.s32.totalorder %s26, 1
    %p91 = por %p89, %p90
    %p93 = scmp.ne.s32.totalorder %s78, %s92
    %p94 = scmp.eq.s32.totalorder %s26, 0
    %p95 = por %p93, %p94
    %s97 = sadd.s32 %s96, 1
    %p100 = scmp.eq.s32.totalorder %s20, 1
    %p101 = scmp.ne.s32.totalorder %s96, %s98
    %p102 = scmp.eq.s32.totalorder %s20, 0
    %p103 = por %p101, %p102
    %p104 = scmp.ne.s32.totalorder %s96, %s98
    %p105 = scmp.eq.s32.totalorder %s25, 1
    %p106 = por %p104, %p105
    %p107 = scmp.ne.s32.totalorder %s98, %s99
    %p108 = scmp.eq.s32.totalorder %s25, 0
    %p109 = por %p107, %p108
    %p110 = scmp.ne.s32.totalorder %s98, %s99
    %p111 = scmp.eq.s32.totalorder %s26, 1
    %p112 = por %p110, %p111
    %p114 = scmp.ne.s32.totalorder %s99, %s113
    %p115 = scmp.eq.s32.totalorder %s26, 0
    %p116 = por %p114, %p115
    %s118 = sadd.s32 %s117, 1
    %p121 = scmp.eq.s32.totalorder %s20, 1
    %p122 = scmp.ne.s32.totalorder %s117, %s119
    %p123 = scmp.eq.s32.totalorder %s20, 0
    %p124 = por %p122, %p123
    %p125 = scmp.ne.s32.totalorder %s117, %s119
    %p126 = scmp.eq.s32.totalorder %s25, 1
    %p127 = por %p125, %p126
    %p128 = scmp.ne.s32.totalorder %s119, %s120
    %p129 = scmp.eq.s32.totalorder %s25, 0
    %p130 = por %p128, %p129
    %p131 = scmp.ne.s32.totalorder %s119, %s120
    %p132 = scmp.eq.s32.totalorder %s26, 1
    %p133 = por %p131, %p132
    %p135 = scmp.ne.s32.totalorder %s120, %s134
    %p136 = scmp.eq.s32.totalorder %s26, 0
    %p137 = por %p135, %p136
    %s139 = sadd.s32 %s138, 1
    %p142 = scmp.eq.s32.totalorder %s20, 1
    %p143 = scmp.ne.s32.totalorder %s138, %s140
    %p144 = scmp.eq.s32.totalorder %s20, 0
    %p145 = por %p143, %p144
    %p146 = scmp.ne.s32.totalorder %s138, %s140
    %p147 = scmp.eq.s32.totalorder %s25, 1
    %p148 = por %p146, %p147
    %p149 = scmp.ne.s32.totalorder %s140, %s141
    %p150 = scmp.eq.s32.totalorder %s25, 0
    %p151 = por %p149, %p150
    %p152 = scmp.ne.s32.totalorder %s140, %s141
    %p153 = scmp.eq.s32.totalorder %s26, 1
    %p154 = por %p152, %p153
    %p156 = scmp.ne.s32.totalorder %s141, %s155
    %p157 = scmp.eq.s32.totalorder %s26, 0
    %p158 = por %p156, %p157
    %s160 = sadd.s32 %s159, 1
    %p163 = scmp.eq.s32.totalorder %s20, 1
    %p164 = scmp.ne.s32.totalorder %s159, %s161
    %p165 = scmp.eq.s32.totalorder %s20, 0
    %p166 = por %p164, %p165
    %p167 = scmp.ne.s32.totalorder %s159, %s161
    %p168 = scmp.eq.s32.totalorder %s25, 1
    %p169 = por %p167, %p168
    %p170 = scmp.ne.s32.totalorder %s161, %s162
    %p171 = scmp.eq.s32.totalorder %s25, 0
    %p172 = por %p170, %p171
    %p173 = scmp.ne.s32.totalorder %s161, %s162
    %p174 = scmp.eq.s32.totalorder %s26, 1
    %p175 = por %p173, %p174
    %p177 = scmp.ne.s32.totalorder %s162, %s176
    %p178 = scmp.eq.s32.totalorder %s26, 0
    %p179 = por %p177, %p178
    %s181 = sadd.s32 %s180, 1
    %p184 = scmp.eq.s32.totalorder %s20, 1
    %p185 = scmp.ne.s32.totalorder %s180, %s182
    %p186 = scmp.eq.s32.totalorder %s20, 0
    %p187 = por %p185, %p186
    %p188 = scmp.ne.s32.totalorder %s180, %s182
    %p189 = scmp.eq.s32.totalorder %s25, 1
    %p190 = por %p188, %p189
    %p191 = scmp.ne.s32.totalorder %s182, %s183
    %p192 = scmp.eq.s32.totalorder %s25, 0
    %p193 = por %p191, %p192
    %p194 = scmp.ne.s32.totalorder %s182, %s183
    %p195 = scmp.eq.s32.totalorder %s26, 1
    %p196 = por %p194, %p195
    %p198 = scmp.ne.s32.totalorder %s183, %s197
    %p199 = scmp.eq.s32.totalorder %s26, 0
    %p200 = por %p198, %p199
    %s202 = sadd.s32 %s201, 1
    %p205 = scmp.eq.s32.totalorder %s20, 1
    %p206 = scmp.ne.s32.totalorder %s201, %s203
    %p207 = scmp.eq.s32.totalorder %s20, 0
    %p208 = por %p206, %p207
    %p209 = scmp.ne.s32.totalorder %s201, %s203
    %p210 = scmp.eq.s32.totalorder %s25, 1
    %p211 = por %p209, %p210
    %p212 = scmp.ne.s32.totalorder %s203, %s204
    %p213 = scmp.eq.s32.totalorder %s25, 0
    %p214 = por %p212, %p213
    %p215 = scmp.ne.s32.totalorder %s203, %s204
    %p216 = scmp.eq.s32.totalorder %s26, 1
    %p217 = por %p215, %p216
    %p219 = scmp.ne.s32.totalorder %s204, %s218
    %p220 = scmp.eq.s32.totalorder %s26, 0
    %p221 = por %p219, %p220
    %s223 = sadd.s32 %s222, 1
    %p226 = scmp.eq.s32.totalorder %s20, 1
    %p227 = scmp.ne.s32.totalorder %s222, %s224
    %p228 = scmp.eq.s32.totalorder %s20, 0
    %p229 = por %p227, %p228
    %p230 = scmp.ne.s32.totalorder %s222, %s224
    %p231 = scmp.eq.s32.totalorder %s25, 1
    %p232 = por %p230, %p231
    %p233 = scmp.ne.s32.totalorder %s224, %s225
    %p234 = scmp.eq.s32.totalorder %s25, 0
    %p235 = por %p233, %p234
    %p236 = scmp.ne.s32.totalorder %s224, %s225
    %p237 = scmp.eq.s32.totalorder %s26, 1
    %p238 = por %p236, %p237
    %p240 = scmp.ne.s32.totalorder %s225, %s239
    %p241 = scmp.eq.s32.totalorder %s26, 0
    %p242 = por %p240, %p241
    %s244 = sadd.s32 %s243, 1
    %p247 = scmp.eq.s32.totalorder %s20, 1
    %p248 = scmp.ne.s32.totalorder %s243, %s245
    %p249 = scmp.eq.s32.totalorder %s20, 0
    %p250 = por %p248, %p249
    %p251 = scmp.ne.s32.totalorder %s243, %s245
    %p252 = scmp.eq.s32.totalorder %s25, 1
    %p253 = por %p251, %p252
    %p254 = scmp.ne.s32.totalorder %s245, %s246
    %p255 = scmp.eq.s32.totalorder %s25, 0
    %p256 = por %p254, %p255
    %p257 = scmp.ne.s32.totalorder %s245, %s246
    %p258 = scmp.eq.s32.totalorder %s26, 1
    %p259 = por %p257, %p258
    %p261 = scmp.ne.s32.totalorder %s246, %s260
    %p262 = scmp.eq.s32.totalorder %s26, 0
    %p263 = por %p261, %p262
    %s265 = sadd.s32 %s264, 1
    %p268 = scmp.eq.s32.totalorder %s20, 1
    %p269 = scmp.ne.s32.totalorder %s264, %s266
    %p270 = scmp.eq.s32.totalorder %s20, 0
    %p271 = por %p269, %p270
    %p272 = scmp.ne.s32.totalorder %s264, %s266
    %p273 = scmp.eq.s32.totalorder %s25, 1
    %p274 = por %p272, %p273
    %p275 = scmp.ne.s32.totalorder %s266, %s267
    %p276 = scmp.eq.s32.totalorder %s25, 0
    %p277 = por %p275, %p276
    %p278 = scmp.ne.s32.totalorder %s266, %s267
    %p279 = scmp.eq.s32.totalorder %s26, 1
    %p280 = por %p278, %p279
    %p282 = scmp.ne.s32.totalorder %s267, %s281
    %p283 = scmp.eq.s32.totalorder %s26, 0
    %p284 = por %p282, %p283
    %s286 = sadd.s32 %s285, 1
    %p289 = scmp.eq.s32.totalorder %s20, 1
    %p290 = scmp.ne.s32.totalorder %s285, %s287
    %p291 = scmp.eq.s32.totalorder %s20, 0
    %p292 = por %p290, %p291
    %p293 = scmp.ne.s32.totalorder %s285, %s287
    %p294 = scmp.eq.s32.totalorder %s25, 1
    %p295 = por %p293, %p294
    %p296 = scmp.ne.s32.totalorder %s287, %s288
    %p297 = scmp.eq.s32.totalorder %s25, 0
    %p298 = por %p296, %p297
    %p299 = scmp.ne.s32.totalorder %s287, %s288
    %p300 = scmp.eq.s32.totalorder %s26, 1
    %p301 = por %p299, %p300
    %p303 = scmp.ne.s32.totalorder %s288, %s302
    %p304 = scmp.eq.s32.totalorder %s26, 0
    %p305 = por %p303, %p304
    %s307 = sadd.s32 %s306, 1
    %p310 = scmp.eq.s32.totalorder %s20, 1
    %p311 = scmp.ne.s32.totalorder %s306, %s308
    %p312 = scmp.eq.s32.totalorder %s20, 0
    %p313 = por %p311, %p312
    %p314 = scmp.ne.s32.totalorder %s306, %s308
    %p315 = scmp.eq.s32.totalorder %s25, 1
    %p316 = por %p314, %p315
    %p317 = scmp.ne.s32.totalorder %s308, %s309
    %p318 = scmp.eq.s32.totalorder %s25, 0
    %p319 = por %p317, %p318
    %p320 = scmp.ne.s32.totalorder %s308, %s309
    %p321 = scmp.eq.s32.totalorder %s26, 1
    %p322 = por %p320, %p321
    %p324 = scmp.ne.s32.totalorder %s309, %s323
    %p325 = scmp.eq.s32.totalorder %s26, 0
    %p326 = por %p324, %p325
    %s327 = ssub.s32 %s20, %s27
    %p328 = scmp.eq.s32.totalorder %s327, 0
    %s330 = sadd.s32 %s329, 1
    %s331 = scalar_select %p328, %s329, %s330
    %p334 = pneg %p328
    %p335 = scmp.eq.s32.totalorder %s20, 1
    %p336 = por %p334, %p335
    %p337 = scmp.ne.s32.totalorder %s329, %s332
    %p338 = scmp.eq.s32.totalorder %s20, 0
    %p339 = por %p337, %p338
    %p340 = scmp.ne.s32.totalorder %s329, %s332
    %p341 = scmp.eq.s32.totalorder %s25, 1
    %p342 = por %p340, %p341
    %p343 = scmp.ne.s32.totalorder %s332, %s333
    %p344 = scmp.eq.s32.totalorder %s25, 0
    %p345 = por %p343, %p344
    %p346 = scmp.ne.s32.totalorder %s332, %s333
    %p347 = scmp.eq.s32.totalorder %s26, 1
    %p348 = por %p346, %p347
    %p350 = scmp.ne.s32.totalorder %s333, %s349
    %p351 = scmp.eq.s32.totalorder %s26, 0
    %p352 = por %p350, %p351
    %p353 = scmp.le.s32.totalorder 1, %s20
    %p354 = scmp.lt.s32.totalorder %s20, 3
    %p355 = pnand %p353, %p354
    %p356 = pneg %p355
    // Predicated region
    $region9: #{conv_ae_forward.1} parent=5 // pred_check
      _
    $region10: #{conv_ae_forward.1} parent=5 // pred_check_branch
      %358 = sbr.rel (%p355) target = $region12
    $region11: #{conv_ae_forward.1} parent=5 // pred_region
      %s359 = ssub.s32 %s20, 1
      // Predicated region
      $region13: #{conv_ae_forward.1} parent=11 // pred_check
        %p360 = pneg %p67
      $region14: #{conv_ae_forward.1} parent=11 // pred_check_branch
        %362 = sbr.rel (%p360) target = $region16
      $region15: #{conv_ae_forward.1} parent=11 // pred_region
        _
      $region16: #{conv_ae_forward.1} parent=11 // pred_fallthru
        _
      // Predicated region
      $region17: #{conv_ae_forward.1} parent=11 // pred_check
        %p363 = pneg %p88
      $region18: #{conv_ae_forward.1} parent=11 // pred_check_branch
        %365 = sbr.rel (%p363) target = $region20
      $region19: #{conv_ae_forward.1} parent=11 // pred_region
        _
      $region20: #{conv_ae_forward.1} parent=11 // pred_fallthru
        _
      // Predicated region
      $region21: #{conv_ae_forward.1} parent=11 // pred_check
        %p366 = pneg %p109
      $region22: #{conv_ae_forward.1} parent=11 // pred_check_branch
        %368 = sbr.rel (%p366) target = $region24
      $region23: #{conv_ae_forward.1} parent=11 // pred_region
        _
      $region24: #{conv_ae_forward.1} parent=11 // pred_fallthru
        _
      // Predicated region
      $region25: #{conv_ae_forward.1} parent=11 // pred_check
        %p369 = pneg %p130
      $region26: #{conv_ae_forward.1} parent=11 // pred_check_branch
        %371 = sbr.rel (%p369) target = $region28
      $region27: #{conv_ae_forward.1} parent=11 // pred_region
        _
      $region28: #{conv_ae_forward.1} parent=11 // pred_fallthru
        _
      // Predicated region
      $region29: #{conv_ae_forward.1} parent=11 // pred_check
        %p372 = pneg %p151
      $region30: #{conv_ae_forward.1} parent=11 // pred_check_branch
        %374 = sbr.rel (%p372) target = $region32
      $region31: #{conv_ae_forward.1} parent=11 // pred_region
        _
      $region32: #{conv_ae_forward.1} parent=11 // pred_fallthru
        _
      // Predicated region
      $region33: #{conv_ae_forward.1} parent=11 // pred_check
        %p375 = pneg %p172
      $region34: #{conv_ae_forward.1} parent=11 // pred_check_branch
        %377 = sbr.rel (%p375) target = $region36
      $region35: #{conv_ae_forward.1} parent=11 // pred_region
        _
      $region36: #{conv_ae_forward.1} parent=11 // pred_fallthru
        _
      // Predicated region
      $region37: #{conv_ae_forward.1} parent=11 // pred_check
        %p378 = pneg %p193
      $region38: #{conv_ae_forward.1} parent=11 // pred_check_branch
        %380 = sbr.rel (%p378) target = $region40
      $region39: #{conv_ae_forward.1} parent=11 // pred_region
        _
      $region40: #{conv_ae_forward.1} parent=11 // pred_fallthru
        _
      // Predicated region
      $region41: #{conv_ae_forward.1} parent=11 // pred_check
        %p381 = pneg %p214
      $region42: #{conv_ae_forward.1} parent=11 // pred_check_branch
        %383 = sbr.rel (%p381) target = $region44
      $region43: #{conv_ae_forward.1} parent=11 // pred_region
        _
      $region44: #{conv_ae_forward.1} parent=11 // pred_fallthru
        _
      // Predicated region
      $region45: #{conv_ae_forward.1} parent=11 // pred_check
        %p384 = pneg %p235
      $region46: #{conv_ae_forward.1} parent=11 // pred_check_branch
        %386 = sbr.rel (%p384) target = $region48
      $region47: #{conv_ae_forward.1} parent=11 // pred_region
        _
      $region48: #{conv_ae_forward.1} parent=11 // pred_fallthru
        _
      // Predicated region
      $region49: #{conv_ae_forward.1} parent=11 // pred_check
        %p387 = pneg %p256
      $region50: #{conv_ae_forward.1} parent=11 // pred_check_branch
        %389 = sbr.rel (%p387) target = $region52
      $region51: #{conv_ae_forward.1} parent=11 // pred_region
        _
      $region52: #{conv_ae_forward.1} parent=11 // pred_fallthru
        _
      // Predicated region
      $region53: #{conv_ae_forward.1} parent=11 // pred_check
        %p390 = pneg %p277
      $region54: #{conv_ae_forward.1} parent=11 // pred_check_branch
        %392 = sbr.rel (%p390) target = $region56
      $region55: #{conv_ae_forward.1} parent=11 // pred_region
        _
      $region56: #{conv_ae_forward.1} parent=11 // pred_fallthru
        _
      // Predicated region
      $region57: #{conv_ae_forward.1} parent=11 // pred_check
        %p393 = pneg %p298
      $region58: #{conv_ae_forward.1} parent=11 // pred_check_branch
        %395 = sbr.rel (%p393) target = $region60
      $region59: #{conv_ae_forward.1} parent=11 // pred_region
        _
      $region60: #{conv_ae_forward.1} parent=11 // pred_fallthru
        _
      // Predicated region
      $region61: #{conv_ae_forward.1} parent=11 // pred_check
        %p396 = pneg %p319
      $region62: #{conv_ae_forward.1} parent=11 // pred_check_branch
        %398 = sbr.rel (%p396) target = $region64
      $region63: #{conv_ae_forward.1} parent=11 // pred_region
        _
      $region64: #{conv_ae_forward.1} parent=11 // pred_fallthru
        _
    $region12: #{conv_ae_forward.1} parent=5 // pred_fallthru
      _
    %p399 = scmp.lt.s32.totalorder %s20, 2
    // Predicated region
    $region65: #{conv_ae_forward.1} parent=5 // pred_check
      %p400 = pneg %p399
    $region66: #{conv_ae_forward.1} parent=5 // pred_check_branch
      %402 = sbr.rel (%p400) target = $region68
    $region67: #{conv_ae_forward.1} parent=5 // pred_region
      // Predicated region
      $region69: #{conv_ae_forward.1} parent=67 // pred_check
        %p403 = pneg %p40
      $region70: #{conv_ae_forward.1} parent=67 // pred_check_branch
        %405 = sbr.rel (%p403) target = $region72
      $region71: #{conv_ae_forward.1} parent=67 // pred_region
        %p406 = scmp.lt.s32.totalorder %s20, 1
        %s407 = scalar_select %p406, %s20, 1
        %s408 = smul.addr %s407, 48
        %s409 = smul.addr %s408, 8
        %s410 = scalar_lea.vmem %s0, %s409
      $region72: #{conv_ae_forward.1} parent=67 // pred_fallthru
        _
    $region68: #{conv_ae_forward.1} parent=5 // pred_fallthru
      _
    %p411 = scmp.le.s32.totalorder 1, %s20
    %p412 = scmp.lt.s32.totalorder %s20, 3
    %p413 = pnand %p411, %p412
    %p414 = pneg %p413
    // Predicated region
    $region73: #{conv_ae_forward.1} parent=5 // pred_check
      _
    $region74: #{conv_ae_forward.1} parent=5 // pred_check_branch
      %416 = sbr.rel (%p413) target = $region76
    $region75: #{conv_ae_forward.1} parent=5 // pred_region
      %s417 = ssub.s32 %s20, 1
      %p418 = scmp.lt.s32.totalorder %s25, 1
      %s419 = scalar_select %p418, %s25, 1
      %s420 = smul.addr %s419, 48
      %s421 = smul.addr %s420, 8
      %s422 = scalar_lea.vmem %s0, %s421
      %p423 = pneg %p46
      %p424 = pneg %p43
      %p425 = pneg %p67
      %p426 = pneg %p64
      %p427 = pneg %p88
      %p428 = pneg %p85
      %p429 = pneg %p109
      %p430 = pneg %p106
      %p431 = pneg %p130
      %p432 = pneg %p127
      %p433 = pneg %p151
      %p434 = pneg %p148
      %p435 = pneg %p172
      %p436 = pneg %p169
      %p437 = pneg %p193
      %p438 = pneg %p190
      %p439 = pneg %p214
      %p440 = pneg %p211
      %p441 = pneg %p235
      %p442 = pneg %p232
      %p443 = pneg %p256
      %p444 = pneg %p253
      %p445 = pneg %p277
      %p446 = pneg %p274
      %p447 = pneg %p298
      %p448 = pneg %p295
      %p449 = pneg %p319
      %p450 = pneg %p316
      %p451 = pneg %p345
      %p452 = pneg %p342
      %p453 = scmp.lt.s32.totalorder %s25, 1
      %s454 = scalar_select %p453, %s25, 1
      %s455 = smul.addr %s454, 8
      %s456 = smul.addr %s455, 8
      %s457 = scalar_lea.vmem %s14, %s456
      %p458 = scmp.lt.s32.totalorder %s25, 1
      %s459 = scalar_select %p458, %s25, 1
      %s460 = smul.addr %s459, 48
      %s461 = smul.addr %s460, 8
      %s462 = scalar_lea.vmem %s0, %s461
      %p463 = scmp.lt.s32.totalorder %s25, 1
      %s464 = scalar_select %p463, %s25, 1
      %s465 = smul.addr %s464, 8
      %s466 = smul.addr %s465, 8
      %s467 = scalar_lea.vmem %s14, %s466
      %v468 = vld [vmem:[%s1] sm:$0xff]
      %v469 = vld [vmem:[%s462] sm:$0xff]
      %v470 = vld [vmem:[%s462 + $0x8] sm:$0xff]
      %v471 = vld [vmem:[%s462 + $0x10] sm:$0xff]
      %v472 = vld [vmem:[%s462 + $0x18] sm:$0xff]
      %v473 = vld [vmem:[%s462 + $0x20] sm:$0xff]
      %v474 = vld [vmem:[%s462 + $0x28] sm:$0xff]
      %v475 = vld [vmem:[%s462 + $0x30] sm:$0xff]
      %v476 = vld [vmem:[%s462 + $0x40] sm:$0xff]
      %v477 = vld [vmem:[%s462 + $0x48] sm:$0xff]
      %v478 = vld [vmem:[%s462 + $0x50] sm:$0xff]
      %v479 = vld [vmem:[%s462 + $0x58] sm:$0xff]
      %v480 = vld [vmem:[%s462 + $0x60] sm:$0xff]
      %v481 = vld [vmem:[%s462 + $0x68] sm:$0xff]
      %v482 = vld [vmem:[%s462 + $0x70] sm:$0xff]
      %v483 = vld [vmem:[%s462 + $0x80] sm:$0xff]
      %v484 = vld [vmem:[%s462 + $0x88] sm:$0xff]
      %v485 = vld [vmem:[%s462 + $0x90] sm:$0xff]
      %v486 = vld [vmem:[%s462 + $0x98] sm:$0xff]
      %v487 = vld [vmem:[%s462 + $0xa0] sm:$0xff]
      %v488 = vld [vmem:[%s462 + $0xa8] sm:$0xff]
      %v489 = vld [vmem:[%s462 + $0xb0] sm:$0xff]
      %v490 = vld [vmem:[%s462 + $0xc0] sm:$0xff]
      %v491 = vld [vmem:[%s462 + $0xc8] sm:$0xff]
      %v492 = vld [vmem:[%s462 + $0xd0] sm:$0xff]
      %v493 = vld [vmem:[%s462 + $0xd8] sm:$0xff]
      %v494 = vld [vmem:[%s462 + $0xe0] sm:$0xff]
      %v495 = vld [vmem:[%s462 + $0xe8] sm:$0xff]
      %v496 = vld [vmem:[%s462 + $0xf0] sm:$0xff]
      %v497 = vld [vmem:[%s462 + $0x100] sm:$0xff]
      %v498 = vld [vmem:[%s462 + $0x108] sm:$0xff]
      %v499 = vld [vmem:[%s462 + $0x110] sm:$0xff]
      %v500 = vld [vmem:[%s462 + $0x118] sm:$0xff]
      %v501 = vld [vmem:[%s462 + $0x120] sm:$0xff]
      %v502 = vld [vmem:[%s462 + $0x128] sm:$0xff]
      %v503 = vld [vmem:[%s462 + $0x130] sm:$0xff]
      %v504 = vld [vmem:[%s462 + $0x140] sm:$0x3]
      %v505 = vld [vmem:[%s462 + $0x148] sm:$0x3]
      %v506 = vld [vmem:[%s462 + $0x150] sm:$0x3]
      %v507 = vld [vmem:[%s462 + $0x158] sm:$0x3]
      %v508 = vld [vmem:[%s462 + $0x160] sm:$0x3]
      %v509 = vld [vmem:[%s462 + $0x168] sm:$0x3]
      %v510 = vld [vmem:[%s462 + $0x170] sm:$0x3]
      %s511 = scalar_lea.vmem %s1, 8
      %v512 = vld [vmem:[%s511] sm:$0xff]
      %555 = vrot.lane.b32.xlu0 %v469, 118
      %v556 = vpop.permute.xlu0 %555
      %557 = vrot.lane.b32.xlu0 %v470, 118
      %v558 = vpop.permute.xlu0 %557
      %559 = vrot.lane.b32.xlu0 %v471, 118
      %v560 = vpop.permute.xlu0 %559
      %561 = vrot.lane.b32.xlu0 %v472, 118
      %v562 = vpop.permute.xlu0 %561
      %563 = vrot.lane.b32.xlu0 %v473, 118
      %v564 = vpop.permute.xlu0 %563
      %565 = vrot.lane.b32.xlu0 %v474, 118
      %v566 = vpop.permute.xlu0 %565
      %567 = vrot.lane.b32.xlu0 %v475, 118
      %v568 = vpop.permute.xlu0 %567
      %569 = vrot.lane.b32.xlu0 %v476, 118
      %v570 = vpop.permute.xlu0 %569
      %571 = vrot.lane.b32.xlu0 %v477, 118
      %v572 = vpop.permute.xlu0 %571
      %573 = vrot.lane.b32.xlu0 %v478, 118
      %v574 = vpop.permute.xlu0 %573
      %575 = vrot.lane.b32.xlu0 %v479, 118
      %v576 = vpop.permute.xlu0 %575
      %577 = vrot.lane.b32.xlu0 %v480, 118
      %v578 = vpop.permute.xlu0 %577
      %579 = vrot.lane.b32.xlu0 %v481, 118
      %v580 = vpop.permute.xlu0 %579
      %581 = vrot.lane.b32.xlu0 %v482, 118
      %v582 = vpop.permute.xlu0 %581
      %583 = vrot.lane.b32.xlu0 %v483, 118
      %v584 = vpop.permute.xlu0 %583
      %585 = vrot.lane.b32.xlu0 %v484, 118
      %v586 = vpop.permute.xlu0 %585
      %587 = vrot.lane.b32.xlu0 %v485, 118
      %v588 = vpop.permute.xlu0 %587
      %589 = vrot.lane.b32.xlu0 %v486, 118
      %v590 = vpop.permute.xlu0 %589
      %591 = vrot.lane.b32.xlu0 %v487, 118
      %v592 = vpop.permute.xlu0 %591
      %593 = vrot.lane.b32.xlu0 %v488, 118
      %v594 = vpop.permute.xlu0 %593
      %595 = vrot.lane.b32.xlu0 %v489, 118
      %v596 = vpop.permute.xlu0 %595
      %597 = vrot.lane.b32.xlu0 %v490, 118
      %v598 = vpop.permute.xlu0 %597
      %599 = vrot.lane.b32.xlu0 %v491, 118
      %v600 = vpop.permute.xlu0 %599
      %601 = vrot.lane.b32.xlu0 %v492, 118
      %v602 = vpop.permute.xlu0 %601
      %603 = vrot.lane.b32.xlu0 %v493, 118
      %v604 = vpop.permute.xlu0 %603
      %605 = vrot.lane.b32.xlu0 %v494, 118
      %v606 = vpop.permute.xlu0 %605
      %607 = vrot.lane.b32.xlu0 %v495, 118
      %v608 = vpop.permute.xlu0 %607
      %609 = vrot.lane.b32.xlu0 %v496, 118
      %v610 = vpop.permute.xlu0 %609
      %611 = vrot.lane.b32.xlu0 %v497, 118
      %v612 = vpop.permute.xlu0 %611
      %613 = vrot.lane.b32.xlu0 %v498, 118
      %v614 = vpop.permute.xlu0 %613
      %615 = vrot.lane.b32.xlu0 %v499, 118
      %v616 = vpop.permute.xlu0 %615
      %617 = vrot.lane.b32.xlu0 %v500, 118
      %v618 = vpop.permute.xlu0 %617
      %619 = vrot.lane.b32.xlu0 %v501, 118
      %v620 = vpop.permute.xlu0 %619
      %621 = vrot.lane.b32.xlu0 %v502, 118
      %v622 = vpop.permute.xlu0 %621
      %623 = vrot.lane.b32.xlu0 %v503, 118
      %v624 = vpop.permute.xlu0 %623
      %625 = vrot.lane.b32.xlu0 %v504, 118
      %v626 = vpop.permute.xlu0 %625
      %627 = vrot.lane.b32.xlu0 %v505, 118
      %v628 = vpop.permute.xlu0 %627
      %629 = vrot.lane.b32.xlu0 %v506, 118
      %v630 = vpop.permute.xlu0 %629
      %631 = vrot.lane.b32.xlu0 %v507, 118
      %v632 = vpop.permute.xlu0 %631
      %633 = vrot.lane.b32.xlu0 %v508, 118
      %v634 = vpop.permute.xlu0 %633
      %635 = vrot.lane.b32.xlu0 %v509, 118
      %v636 = vpop.permute.xlu0 %635
      %637 = vrot.lane.b32.xlu0 %v510, 118
      %v638 = vpop.permute.xlu0 %637
      %vm639 = vcmask 965632
      %v640 = vsel %vm639, %v556, %v558
      %v641 = vsel %vm639, %v558, %v560
      %v642 = vsel %vm639, %v560, %v562
      %v643 = vsel %vm639, %v562, %v564
      %v644 = vsel %vm639, %v564, %v566
      %v645 = vsel %vm639, %v566, %v568
      %v646 = vsel %vm639, %v570, %v572
      %v647 = vsel %vm639, %v572, %v574
      %v648 = vsel %vm639, %v574, %v576
      %v649 = vsel %vm639, %v576, %v578
      %v650 = vsel %vm639, %v578, %v580
      %v651 = vsel %vm639, %v580, %v582
      %v652 = vsel %vm639, %v584, %v586
      %v653 = vsel %vm639, %v586, %v588
      %v654 = vsel %vm639, %v588, %v590
      %v655 = vsel %vm639, %v590, %v592
      %v656 = vsel %vm639, %v592, %v594
      %v657 = vsel %vm639, %v594, %v596
      %v658 = vsel %vm639, %v598, %v600
      %v659 = vsel %vm639, %v600, %v602
      %v660 = vsel %vm639, %v602, %v604
      %v661 = vsel %vm639, %v604, %v606
      %v662 = vsel %vm639, %v606, %v608
      %v663 = vsel %vm639, %v608, %v610
      %v664 = vsel %vm639, %v612, %v614
      %v665 = vsel %vm639, %v614, %v616
      %v666 = vsel %vm639, %v616, %v618
      %v667 = vsel %vm639, %v618, %v620
      %v668 = vsel %vm639, %v620, %v622
      %v669 = vsel %vm639, %v622, %v624
      %v670 = vsel %vm639, %v626, %v628
      %v671 = vsel %vm639, %v628, %v630
      %v672 = vsel %vm639, %v630, %v632
      %v673 = vsel %vm639, %v632, %v634
      %v674 = vsel %vm639, %v634, %v636
      %v675 = vsel %vm639, %v636, %v638
      %vm711 = vcmask 343040
      %v713 = vsel %vm711, %v512, 0
      %vm715 = vcmask 1041408
      %v716 = vsel %vm715, %v670, 0
      %v718 = vsel %vm715, %v671, 0
      %v720 = vsel %vm715, %v672, 0
      %v722 = vsel %vm715, %v673, 0
      %v724 = vsel %vm715, %v674, 0
      %v726 = vsel %vm715, %v675, 0
      %v728 = vsel %vm715, %v638, 0
      %730 = vmatprep.subr.mxu0 %v641
      %731 = vmatpush1.msra.mxu0 %v640
      %732 = vmatprep.subr.mxu0 %v647
      %733 = vmatpush1.msra.mxu0 %v646
      %734 = vmatprep.subr.mxu0 %v653
      %735 = vmatpush1.msra.mxu0 %v652
      %736 = vmatprep.subr.mxu0 %v659
      %737 = vmatpush1.msra.mxu0 %v658
      %738 = vmatprep.subr.mxu0 %v665
      %739 = vmatpush1.msra.mxu0 %v664
      %740 = vmatprep.subr.mxu0 %v718
      %741 = vmatpush1.msra.mxu0 %v716
      %742 = vmatprep.subr.mxu0 0.0
      %743 = vmatpush1.msra.mxu0 0.0
      %744 = vmatprep.subr.mxu0 0.0
      %745 = vmatpush1.msra.mxu0 0.0
      %746 = vmatprep.subr.mxu0 0.0
      %747 = vmatpush1.msra.mxu0 0.0
      %748 = vmatprep.subr.mxu0 0.0
      %749 = vmatpush1.msra.mxu0 0.0
      %750 = vmatprep.subr.mxu0 0.0
      %751 = vmatpush1.msra.mxu0 0.0
      %752 = vmatprep.subr.mxu0 0.0
      %753 = vmatpush1.msra.mxu0 0.0
      %754 = vmatprep.subr.mxu0 0.0
      %755 = vmatpush1.msra.mxu0 0.0
      %756 = vmatprep.subr.mxu0 0.0
      %757 = vmatpush1.msra.mxu0 0.0
      %758 = vmatprep.subr.mxu0 0.0
      %759 = vmatpush1.msra.mxu0 0.0
      %760 = vmatprep.subr.mxu0 0.0
      %761 = vmatpush1.msra.mxu0 0.0
      %762 = vmatprep.subr.mxu0 0.0
      %763 = vmatpush1.msra.mxu0 0.0
      %764 = vmatprep.subr.mxu0 0.0
      %765 = vmatpush1.msra.mxu0 0.0
      %766 = vmatprep.subr.mxu0 0.0
      %767 = vmatpush1.msra.mxu0 0.0
      %768 = vmatprep.subr.mxu0 0.0
      %769 = vmatpush1.msra.mxu0 0.0
      %770 = vmatprep.subr.mxu0 0.0
      %771 = vmatpush1.msra.mxu0 0.0
      %772 = vmatprep.subr.mxu0 0.0
      %773 = vmatpush1.msra.mxu0 0.0
      %774 = vmatprep.subr.mxu0 0.0
      %775 = vmatpush1.msra.mxu0 0.0
      %776 = vmatprep.subr.mxu0 0.0
      %777 = vmatpush1.msra.mxu0 0.0
      %778 = vmatprep.subr.mxu0 0.0
      %779 = vmatpush1.msra.mxu0 0.0
      %780 = vmatprep.subr.mxu0 0.0
      %781 = vmatpush1.msra.mxu0 0.0
      %782 = vmatprep.subr.mxu0 0.0
      %783 = vmatpush1.msra.mxu0 0.0
      %784 = vmatprep.subr.mxu0 0.0
      %785 = vmatpush1.msra.mxu0 0.0
      %786 = vmatprep.subr.mxu0 0.0
      %787 = vmatpush1.msra.mxu0 0.0
      %788 = vmatprep.subr.mxu0 0.0
      %789 = vmatpush1.msra.mxu0 0.0
      %790 = vmatprep.subr.mxu0 0.0
      %791 = vmatpush1.msra.mxu0 0.0
      %792 = vmatprep.subr.mxu0 0.0
      %793 = vmatpush1.msra.mxu0 0.0
      %794 = vmatprep.mubr.f32.mxu0 0.0
      %795 = vmatmul.mubr.f32.gmra.mrb[0].mxu0 %v713
      %v796 = vpop.f32.mrb[0].mxu0
      %v797 = vadd.f32 0.0, %v796
      %v798 = vpop.f32.mrb[0].mxu0
      %v799 = vadd.f32 0.0, %v798
      %800 = vdwg.mxu0
      %801 = vmatprep.subr.mxu0 %v643
      %802 = vmatpush1.msra.mxu0 %v642
      %803 = vmatprep.subr.mxu0 %v649
      %804 = vmatpush1.msra.mxu0 %v648
      %805 = vmatprep.subr.mxu0 %v655
      %806 = vmatpush1.msra.mxu0 %v654
      %807 = vmatprep.subr.mxu0 %v661
      %808 = vmatpush1.msra.mxu0 %v660
      %809 = vmatprep.subr.mxu0 %v667
      %810 = vmatpush1.msra.mxu0 %v666
      %811 = vmatprep.subr.mxu0 %v722
      %812 = vmatpush1.msra.mxu0 %v720
      %813 = vmatprep.subr.mxu0 0.0
      %814 = vmatpush1.msra.mxu0 0.0
      %815 = vmatprep.subr.mxu0 0.0
      %816 = vmatpush1.msra.mxu0 0.0
      %817 = vmatprep.subr.mxu0 0.0
      %818 = vmatpush1.msra.mxu0 0.0
      %819 = vmatprep.subr.mxu0 0.0
      %820 = vmatpush1.msra.mxu0 0.0
      %821 = vmatprep.subr.mxu0 0.0
      %822 = vmatpush1.msra.mxu0 0.0
      %823 = vmatprep.subr.mxu0 0.0
      %824 = vmatpush1.msra.mxu0 0.0
      %825 = vmatprep.subr.mxu0 0.0
      %826 = vmatpush1.msra.mxu0 0.0
      %827 = vmatprep.subr.mxu0 0.0
      %828 = vmatpush1.msra.mxu0 0.0
      %829 = vmatprep.subr.mxu0 0.0
      %830 = vmatpush1.msra.mxu0 0.0
      %831 = vmatprep.subr.mxu0 0.0
      %832 = vmatpush1.msra.mxu0 0.0
      %833 = vmatprep.subr.mxu0 0.0
      %834 = vmatpush1.msra.mxu0 0.0
      %835 = vmatprep.subr.mxu0 0.0
      %836 = vmatpush1.msra.mxu0 0.0
      %837 = vmatprep.subr.mxu0 0.0
      %838 = vmatpush1.msra.mxu0 0.0
      %839 = vmatprep.subr.mxu0 0.0
      %840 = vmatpush1.msra.mxu0 0.0
      %841 = vmatprep.subr.mxu0 0.0
      %842 = vmatpush1.msra.mxu0 0.0
      %843 = vmatprep.subr.mxu0 0.0
      %844 = vmatpush1.msra.mxu0 0.0
      %845 = vmatprep.subr.mxu0 0.0
      %846 = vmatpush1.msra.mxu0 0.0
      %847 = vmatprep.subr.mxu0 0.0
      %848 = vmatpush1.msra.mxu0 0.0
      %849 = vmatprep.subr.mxu0 0.0
      %850 = vmatpush1.msra.mxu0 0.0
      %851 = vmatprep.subr.mxu0 0.0
      %852 = vmatpush1.msra.mxu0 0.0
      %853 = vmatprep.subr.mxu0 0.0
      %854 = vmatpush1.msra.mxu0 0.0
      %855 = vmatprep.subr.mxu0 0.0
      %856 = vmatpush1.msra.mxu0 0.0
      %857 = vmatprep.subr.mxu0 0.0
      %858 = vmatpush1.msra.mxu0 0.0
      %859 = vmatprep.subr.mxu0 0.0
      %860 = vmatpush1.msra.mxu0 0.0
      %861 = vmatprep.subr.mxu0 0.0
      %862 = vmatpush1.msra.mxu0 0.0
      %863 = vmatprep.subr.mxu0 0.0
      %864 = vmatpush1.msra.mxu0 0.0
      %865 = vmatprep.mubr.f32.mxu0 0.0
      %866 = vmatmul.mubr.f32.gmra.mrb[0].mxu0 %v713
      %v867 = vpop.f32.mrb[0].mxu0
      %v868 = vadd.f32 0.0, %v867
      %v869 = vpop.f32.mrb[0].mxu0
      %v870 = vadd.f32 0.0, %v869
      %871 = vdwg.mxu0
      %872 = vmatprep.subr.mxu0 %v645
      %873 = vmatpush1.msra.mxu0 %v644
      %874 = vmatprep.subr.mxu0 %v651
      %875 = vmatpush1.msra.mxu0 %v650
      %876 = vmatprep.subr.mxu0 %v657
      %877 = vmatpush1.msra.mxu0 %v656
      %878 = vmatprep.subr.mxu0 %v663
      %879 = vmatpush1.msra.mxu0 %v662
      %880 = vmatprep.subr.mxu0 %v669
      %881 = vmatpush1.msra.mxu0 %v668
      %882 = vmatprep.subr.mxu0 %v726
      %883 = vmatpush1.msra.mxu0 %v724
      %884 = vmatprep.subr.mxu0 0.0
      %885 = vmatpush1.msra.mxu0 0.0
      %886 = vmatprep.subr.mxu0 0.0
      %887 = vmatpush1.msra.mxu0 0.0
      %888 = vmatprep.subr.mxu0 0.0
      %889 = vmatpush1.msra.mxu0 0.0
      %890 = vmatprep.subr.mxu0 0.0
      %891 = vmatpush1.msra.mxu0 0.0
      %892 = vmatprep.subr.mxu0 0.0
      %893 = vmatpush1.msra.mxu0 0.0
      %894 = vmatprep.subr.mxu0 0.0
      %895 = vmatpush1.msra.mxu0 0.0
      %896 = vmatprep.subr.mxu0 0.0
      %897 = vmatpush1.msra.mxu0 0.0
      %898 = vmatprep.subr.mxu0 0.0
      %899 = vmatpush1.msra.mxu0 0.0
      %900 = vmatprep.subr.mxu0 0.0
      %901 = vmatpush1.msra.mxu0 0.0
      %902 = vmatprep.subr.mxu0 0.0
      %903 = vmatpush1.msra.mxu0 0.0
      %904 = vmatprep.subr.mxu0 0.0
      %905 = vmatpush1.msra.mxu0 0.0
      %906 = vmatprep.subr.mxu0 0.0
      %907 = vmatpush1.msra.mxu0 0.0
      %908 = vmatprep.subr.mxu0 0.0
      %909 = vmatpush1.msra.mxu0 0.0
      %910 = vmatprep.subr.mxu0 0.0
      %911 = vmatpush1.msra.mxu0 0.0
      %912 = vmatprep.subr.mxu0 0.0
      %913 = vmatpush1.msra.mxu0 0.0
      %914 = vmatprep.subr.mxu0 0.0
      %915 = vmatpush1.msra.mxu0 0.0
      %916 = vmatprep.subr.mxu0 0.0
      %917 = vmatpush1.msra.mxu0 0.0
      %918 = vmatprep.subr.mxu0 0.0
      %919 = vmatpush1.msra.mxu0 0.0
      %920 = vmatprep.subr.mxu0 0.0
      %921 = vmatpush1.msra.mxu0 0.0
      %922 = vmatprep.subr.mxu0 0.0
      %923 = vmatpush1.msra.mxu0 0.0
      %924 = vmatprep.subr.mxu0 0.0
      %925 = vmatpush1.msra.mxu0 0.0
      %926 = vmatprep.subr.mxu0 0.0
      %927 = vmatpush1.msra.mxu0 0.0
      %928 = vmatprep.subr.mxu0 0.0
      %929 = vmatpush1.msra.mxu0 0.0
      %930 = vmatprep.subr.mxu0 0.0
      %931 = vmatpush1.msra.mxu0 0.0
      %932 = vmatprep.subr.mxu0 0.0
      %933 = vmatpush1.msra.mxu0 0.0
      %934 = vmatprep.subr.mxu0 0.0
      %935 = vmatpush1.msra.mxu0 0.0
      %936 = vmatprep.mubr.f32.mxu0 0.0
      %937 = vmatmul.mubr.f32.gmra.mrb[0].mxu0 %v713
      %v938 = vpop.f32.mrb[0].mxu0
      %v939 = vadd.f32 0.0, %v938
      %v940 = vpop.f32.mrb[0].mxu0
      %v941 = vadd.f32 0.0, %v940
      %942 = vdwg.mxu0
      %943 = vmatprep.subr.mxu0 0.0
      %944 = vmatpush1.msra.mxu0 %v568
      %945 = vmatprep.subr.mxu0 0.0
      %946 = vmatpush1.msra.mxu0 %v582
      %947 = vmatprep.subr.mxu0 0.0
      %948 = vmatpush1.msra.mxu0 %v596
      %949 = vmatprep.subr.mxu0 0.0
      %950 = vmatpush1.msra.mxu0 %v610
      %951 = vmatprep.subr.mxu0 0.0
      %952 = vmatpush1.msra.mxu0 %v624
      %953 = vmatprep.subr.mxu0 0.0
      %954 = vmatpush1.msra.mxu0 %v728
      %955 = vmatprep.subr.mxu0 0.0
      %956 = vmatpush1.msra.mxu0 0.0
      %957 = vmatprep.subr.mxu0 0.0
      %958 = vmatpush1.msra.mxu0 0.0
      %959 = vmatprep.subr.mxu0 0.0
      %960 = vmatpush1.msra.mxu0 0.0
      %961 = vmatprep.subr.mxu0 0.0
      %962 = vmatpush1.msra.mxu0 0.0
      %963 = vmatprep.subr.mxu0 0.0
      %964 = vmatpush1.msra.mxu0 0.0
      %965 = vmatprep.subr.mxu0 0.0
      %966 = vmatpush1.msra.mxu0 0.0
      %967 = vmatprep.subr.mxu0 0.0
      %968 = vmatpush1.msra.mxu0 0.0
      %969 = vmatprep.subr.mxu0 0.0
      %970 = vmatpush1.msra.mxu0 0.0
      %971 = vmatprep.subr.mxu0 0.0
      %972 = vmatpush1.msra.mxu0 0.0
      %973 = vmatprep.subr.mxu0 0.0
      %974 = vmatpush1.msra.mxu0 0.0
      %975 = vmatprep.subr.mxu0 0.0
      %976 = vmatpush1.msra.mxu0 0.0
      %977 = vmatprep.subr.mxu0 0.0
      %978 = vmatpush1.msra.mxu0 0.0
      %979 = vmatprep.subr.mxu0 0.0
      %980 = vmatpush1.msra.mxu0 0.0
      %981 = vmatprep.subr.mxu0 0.0
      %982 = vmatpush1.msra.mxu0 0.0
      %983 = vmatprep.subr.mxu0 0.0
      %984 = vmatpush1.msra.mxu0 0.0
      %985 = vmatprep.subr.mxu0 0.0
      %986 = vmatpush1.msra.mxu0 0.0
      %987 = vmatprep.subr.mxu0 0.0
      %988 = vmatpush1.msra.mxu0 0.0
      %989 = vmatprep.subr.mxu0 0.0
      %990 = vmatpush1.msra.mxu0 0.0
      %991 = vmatprep.subr.mxu0 0.0
      %992 = vmatpush1.msra.mxu0 0.0
      %993 = vmatprep.subr.mxu0 0.0
      %994 = vmatpush1.msra.mxu0 0.0
      %995 = vmatprep.subr.mxu0 0.0
      %996 = vmatpush1.msra.mxu0 0.0
      %997 = vmatprep.subr.mxu0 0.0
      %998 = vmatpush1.msra.mxu0 0.0
      %999 = vmatprep.subr.mxu0 0.0
      %1000 = vmatpush1.msra.mxu0 0.0
      %1001 = vmatprep.subr.mxu0 0.0
      %1002 = vmatpush1.msra.mxu0 0.0
      %1003 = vmatprep.subr.mxu0 0.0
      %1004 = vmatpush1.msra.mxu0 0.0
      %1005 = vmatprep.subr.mxu0 0.0
      %1006 = vmatpush1.msra.mxu0 0.0
      %1007 = vmatprep.mubr.f32.mxu0 0.0
      %1008 = vmatmul.mubr.f32.gmra.mrb[0].mxu0 %v713
      %v1009 = vpop.f32.mrb[0].mxu0
      %v1010 = vadd.f32 0.0, %v1009
      %v1011 = vpop.f32.mrb[0].mxu0
      %1012 = vdwg.mxu0
      %v1014 = vsel %vm711, %v468, 0
      %v1016 = vsel %vm715, %v504, 0
      %v1018 = vsel %vm715, %v505, 0
      %v1020 = vsel %vm715, %v506, 0
      %v1022 = vsel %vm715, %v507, 0
      %v1024 = vsel %vm715, %v508, 0
      %v1026 = vsel %vm715, %v509, 0
      %v1028 = vsel %vm715, %v510, 0
      %1030 = vmatprep.subr.mxu0 %v470
      %1031 = vmatpush1.msra.mxu0 %v469
      %1032 = vmatprep.subr.mxu0 %v477
      %1033 = vmatpush1.msra.mxu0 %v476
      %1034 = vmatprep.subr.mxu0 %v484
      %1035 = vmatpush1.msra.mxu0 %v483
      %1036 = vmatprep.subr.mxu0 %v491
      %1037 = vmatpush1.msra.mxu0 %v490
      %1038 = vmatprep.subr.mxu0 %v498
      %1039 = vmatpush1.msra.mxu0 %v497
      %1040 = vmatprep.subr.mxu0 %v1018
      %1041 = vmatpush1.msra.mxu0 %v1016
      %1042 = vmatprep.subr.mxu0 0.0
      %1043 = vmatpush1.msra.mxu0 0.0
      %1044 = vmatprep.subr.mxu0 0.0
      %1045 = vmatpush1.msra.mxu0 0.0
      %1046 = vmatprep.subr.mxu0 0.0
      %1047 = vmatpush1.msra.mxu0 0.0
      %1048 = vmatprep.subr.mxu0 0.0
      %1049 = vmatpush1.msra.mxu0 0.0
      %1050 = vmatprep.subr.mxu0 0.0
      %1051 = vmatpush1.msra.mxu0 0.0
      %1052 = vmatprep.subr.mxu0 0.0
      %1053 = vmatpush1.msra.mxu0 0.0
      %1054 = vmatprep.subr.mxu0 0.0
      %1055 = vmatpush1.msra.mxu0 0.0
      %1056 = vmatprep.subr.mxu0 0.0
      %1057 = vmatpush1.msra.mxu0 0.0
      %1058 = vmatprep.subr.mxu0 0.0
      %1059 = vmatpush1.msra.mxu0 0.0
      %1060 = vmatprep.subr.mxu0 0.0
      %1061 = vmatpush1.msra.mxu0 0.0
      %1062 = vmatprep.subr.mxu0 0.0
      %1063 = vmatpush1.msra.mxu0 0.0
      %1064 = vmatprep.subr.mxu0 0.0
      %1065 = vmatpush1.msra.mxu0 0.0
      %1066 = vmatprep.subr.mxu0 0.0
      %1067 = vmatpush1.msra.mxu0 0.0
      %1068 = vmatprep.subr.mxu0 0.0
      %1069 = vmatpush1.msra.mxu0 0.0
      %1070 = vmatprep.subr.mxu0 0.0
      %1071 = vmatpush1.msra.mxu0 0.0
      %1072 = vmatprep.subr.mxu0 0.0
      %1073 = vmatpush1.msra.mxu0 0.0
      %1074 = vmatprep.subr.mxu0 0.0
      %1075 = vmatpush1.msra.mxu0 0.0
      %1076 = vmatprep.subr.mxu0 0.0
      %1077 = vmatpush1.msra.mxu0 0.0
      %1078 = vmatprep.subr.mxu0 0.0
      %1079 = vmatpush1.msra.mxu0 0.0
      %1080 = vmatprep.subr.mxu0 0.0
      %1081 = vmatpush1.msra.mxu0 0.0
      %1082 = vmatprep.subr.mxu0 0.0
      %1083 = vmatpush1.msra.mxu0 0.0
      %1084 = vmatprep.subr.mxu0 0.0
      %1085 = vmatpush1.msra.mxu0 0.0
      %1086 = vmatprep.subr.mxu0 0.0
      %1087 = vmatpush1.msra.mxu0 0.0
      %1088 = vmatprep.subr.mxu0 0.0
      %1089 = vmatpush1.msra.mxu0 0.0
      %1090 = vmatprep.subr.mxu0 0.0
      %1091 = vmatpush1.msra.mxu0 0.0
      %1092 = vmatprep.subr.mxu0 0.0
      %1093 = vmatpush1.msra.mxu0 0.0
      %1094 = vmatprep.mubr.f32.mxu0 0.0
      %1095 = vmatmul.mubr.f32.gmra.mrb[0].mxu0 %v1014
      %v1096 = vpop.f32.mrb[0].mxu0
      %v1097 = vadd.f32 %v797, %v1096
      %v1098 = vpop.f32.mrb[0].mxu0
      %v1099 = vadd.f32 %v799, %v1098
      %1100 = vdwg.mxu0
      %1101 = vmatprep.subr.mxu0 %v472
      %1102 = vmatpush1.msra.mxu0 %v471
      %1103 = vmatprep.subr.mxu0 %v479
      %1104 = vmatpush1.msra.mxu0 %v478
      %1105 = vmatprep.subr.mxu0 %v486
      %1106 = vmatpush1.msra.mxu0 %v485
      %1107 = vmatprep.subr.mxu0 %v493
      %1108 = vmatpush1.msra.mxu0 %v492
      %1109 = vmatprep.subr.mxu0 %v500
      %1110 = vmatpush1.msra.mxu0 %v499
      %1111 = vmatprep.subr.mxu0 %v1022
      %1112 = vmatpush1.msra.mxu0 %v1020
      %1113 = vmatprep.subr.mxu0 0.0
      %1114 = vmatpush1.msra.mxu0 0.0
      %1115 = vmatprep.subr.mxu0 0.0
      %1116 = vmatpush1.msra.mxu0 0.0
      %1117 = vmatprep.subr.mxu0 0.0
      %1118 = vmatpush1.msra.mxu0 0.0
      %1119 = vmatprep.subr.mxu0 0.0
      %1120 = vmatpush1.msra.mxu0 0.0
      %1121 = vmatprep.subr.mxu0 0.0
      %1122 = vmatpush1.msra.mxu0 0.0
      %1123 = vmatprep.subr.mxu0 0.0
      %1124 = vmatpush1.msra.mxu0 0.0
      %1125 = vmatprep.subr.mxu0 0.0
      %1126 = vmatpush1.msra.mxu0 0.0
      %1127 = vmatprep.subr.mxu0 0.0
      %1128 = vmatpush1.msra.mxu0 0.0
      %1129 = vmatprep.subr.mxu0 0.0
      %1130 = vmatpush1.msra.mxu0 0.0
      %1131 = vmatprep.subr.mxu0 0.0
      %1132 = vmatpush1.msra.mxu0 0.0
      %1133 = vmatprep.subr.mxu0 0.0
      %1134 = vmatpush1.msra.mxu0 0.0
      %1135 = vmatprep.subr.mxu0 0.0
      %1136 = vmatpush1.msra.mxu0 0.0
      %1137 = vmatprep.subr.mxu0 0.0
      %1138 = vmatpush1.msra.mxu0 0.0
      %1139 = vmatprep.subr.mxu0 0.0
      %1140 = vmatpush1.msra.mxu0 0.0
      %1141 = vmatprep.subr.mxu0 0.0
      %1142 = vmatpush1.msra.mxu0 0.0
      %1143 = vmatprep.subr.mxu0 0.0
      %1144 = vmatpush1.msra.mxu0 0.0
      %1145 = vmatprep.subr.mxu0 0.0
      %1146 = vmatpush1.msra.mxu0 0.0
      %1147 = vmatprep.subr.mxu0 0.0
      %1148 = vmatpush1.msra.mxu0 0.0
      %1149 = vmatprep.subr.mxu0 0.0
      %1150 = vmatpush1.msra.mxu0 0.0
      %1151 = vmatprep.subr.mxu0 0.0
      %1152 = vmatpush1.msra.mxu0 0.0
      %1153 = vmatprep.subr.mxu0 0.0
      %1154 = vmatpush1.msra.mxu0 0.0
      %1155 = vmatprep.subr.mxu0 0.0
      %1156 = vmatpush1.msra.mxu0 0.0
      %1157 = vmatprep.subr.mxu0 0.0
      %1158 = vmatpush1.msra.mxu0 0.0
      %1159 = vmatprep.subr.mxu0 0.0
      %1160 = vmatpush1.msra.mxu0 0.0
      %1161 = vmatprep.subr.mxu0 0.0
      %1162 = vmatpush1.msra.mxu0 0.0
      %1163 = vmatprep.subr.mxu0 0.0
      %1164 = vmatpush1.msra.mxu0 0.0
      %1165 = vmatprep.mubr.f32.mxu0 0.0
      %1166 = vmatmul.mubr.f32.gmra.mrb[0].mxu0 %v1014
      %v1167 = vpop.f32.mrb[0].mxu0
      %v1168 = vadd.f32 %v868, %v1167
      %v1169 = vpop.f32.mrb[0].mxu0
      %v1170 = vadd.f32 %v870, %v1169
      %1171 = vdwg.mxu0
      %1172 = vmatprep.subr.mxu0 %v474
      %1173 = vmatpush1.msra.mxu0 %v473
      %1174 = vmatprep.subr.mxu0 %v481
      %1175 = vmatpush1.msra.mxu0 %v480
      %1176 = vmatprep.subr.mxu0 %v488
      %1177 = vmatpush1.msra.mxu0 %v487
      %1178 = vmatprep.subr.mxu0 %v495
      %1179 = vmatpush1.msra.mxu0 %v494
      %1180 = vmatprep.subr.mxu0 %v502
      %1181 = vmatpush1.msra.mxu0 %v501
      %1182 = vmatprep.subr.mxu0 %v1026
      %1183 = vmatpush1.msra.mxu0 %v1024
      %1184 = vmatprep.subr.mxu0 0.0
      %1185 = vmatpush1.msra.mxu0 0.0
      %1186 = vmatprep.subr.mxu0 0.0
      %1187 = vmatpush1.msra.mxu0 0.0
      %1188 = vmatprep.subr.mxu0 0.0
      %1189 = vmatpush1.msra.mxu0 0.0
      %1190 = vmatprep.subr.mxu0 0.0
      %1191 = vmatpush1.msra.mxu0 0.0
      %1192 = vmatprep.subr.mxu0 0.0
      %1193 = vmatpush1.msra.mxu0 0.0
      %1194 = vmatprep.subr.mxu0 0.0
      %1195 = vmatpush1.msra.mxu0 0.0
      %1196 = vmatprep.subr.mxu0 0.0
      %1197 = vmatpush1.msra.mxu0 0.0
      %1198 = vmatprep.subr.mxu0 0.0
      %1199 = vmatpush1.msra.mxu0 0.0
      %1200 = vmatprep.subr.mxu0 0.0
      %1201 = vmatpush1.msra.mxu0 0.0
      %1202 = vmatprep.subr.mxu0 0.0
      %1203 = vmatpush1.msra.mxu0 0.0
      %1204 = vmatprep.subr.mxu0 0.0
      %1205 = vmatpush1.msra.mxu0 0.0
      %1206 = vmatprep.subr.mxu0 0.0
      %1207 = vmatpush1.msra.mxu0 0.0
      %1208 = vmatprep.subr.mxu0 0.0
      %1209 = vmatpush1.msra.mxu0 0.0
      %1210 = vmatprep.subr.mxu0 0.0
      %1211 = vmatpush1.msra.mxu0 0.0
      %1212 = vmatprep.subr.mxu0 0.0
      %1213 = vmatpush1.msra.mxu0 0.0
      %1214 = vmatprep.subr.mxu0 0.0
      %1215 = vmatpush1.msra.mxu0 0.0
      %1216 = vmatprep.subr.mxu0 0.0
      %1217 = vmatpush1.msra.mxu0 0.0
      %1218 = vmatprep.subr.mxu0 0.0
      %1219 = vmatpush1.msra.mxu0 0.0
      %1220 = vmatprep.subr.mxu0 0.0
      %1221 = vmatpush1.msra.mxu0 0.0
      %1222 = vmatprep.subr.mxu0 0.0
      %1223 = vmatpush1.msra.mxu0 0.0
      %1224 = vmatprep.subr.mxu0 0.0
      %1225 = vmatpush1.msra.mxu0 0.0
      %1226 = vmatprep.subr.mxu0 0.0
      %1227 = vmatpush1.msra.mxu0 0.0
      %1228 = vmatprep.subr.mxu0 0.0
      %1229 = vmatpush1.msra.mxu0 0.0
      %1230 = vmatprep.subr.mxu0 0.0
      %1231 = vmatpush1.msra.mxu0 0.0
      %1232 = vmatprep.subr.mxu0 0.0
      %1233 = vmatpush1.msra.mxu0 0.0
      %1234 = vmatprep.subr.mxu0 0.0
      %1235 = vmatpush1.msra.mxu0 0.0
      %1236 = vmatprep.mubr.f32.mxu0 0.0
      %1237 = vmatmul.mubr.f32.gmra.mrb[0].mxu0 %v1014
      %v1238 = vpop.f32.mrb[0].mxu0
      %v1239 = vadd.f32 %v939, %v1238
      %v1240 = vpop.f32.mrb[0].mxu0
      %v1241 = vadd.f32 %v941, %v1240
      %1242 = vdwg.mxu0
      %1243 = vmatprep.subr.mxu0 0.0
      %1244 = vmatpush1.msra.mxu0 %v475
      %1245 = vmatprep.subr.mxu0 0.0
      %1246 = vmatpush1.msra.mxu0 %v482
      %1247 = vmatprep.subr.mxu0 0.0
      %1248 = vmatpush1.msra.mxu0 %v489
      %1249 = vmatprep.subr.mxu0 0.0
      %1250 = vmatpush1.msra.mxu0 %v496
      %1251 = vmatprep.subr.mxu0 0.0
      %1252 = vmatpush1.msra.mxu0 %v503
      %1253 = vmatprep.subr.mxu0 0.0
      %1254 = vmatpush1.msra.mxu0 %v1028
      %1255 = vmatprep.subr.mxu0 0.0
      %1256 = vmatpush1.msra.mxu0 0.0
      %1257 = vmatprep.subr.mxu0 0.0
      %1258 = vmatpush1.msra.mxu0 0.0
      %1259 = vmatprep.subr.mxu0 0.0
      %1260 = vmatpush1.msra.mxu0 0.0
      %1261 = vmatprep.subr.mxu0 0.0
      %1262 = vmatpush1.msra.mxu0 0.0
      %1263 = vmatprep.subr.mxu0 0.0
      %1264 = vmatpush1.msra.mxu0 0.0
      %1265 = vmatprep.subr.mxu0 0.0
      %1266 = vmatpush1.msra.mxu0 0.0
      %1267 = vmatprep.subr.mxu0 0.0
      %1268 = vmatpush1.msra.mxu0 0.0
      %1269 = vmatprep.subr.mxu0 0.0
      %1270 = vmatpush1.msra.mxu0 0.0
      %1271 = vmatprep.subr.mxu0 0.0
      %1272 = vmatpush1.msra.mxu0 0.0
      %1273 = vmatprep.subr.mxu0 0.0
      %1274 = vmatpush1.msra.mxu0 0.0
      %1275 = vmatprep.subr.mxu0 0.0
      %1276 = vmatpush1.msra.mxu0 0.0
      %1277 = vmatprep.subr.mxu0 0.0
      %1278 = vmatpush1.msra.mxu0 0.0
      %1279 = vmatprep.subr.mxu0 0.0
      %1280 = vmatpush1.msra.mxu0 0.0
      %1281 = vmatprep.subr.mxu0 0.0
      %1282 = vmatpush1.msra.mxu0 0.0
      %1283 = vmatprep.subr.mxu0 0.0
      %1284 = vmatpush1.msra.mxu0 0.0
      %1285 = vmatprep.subr.mxu0 0.0
      %1286 = vmatpush1.msra.mxu0 0.0
      %1287 = vmatprep.subr.mxu0 0.0
      %1288 = vmatpush1.msra.mxu0 0.0
      %1289 = vmatprep.subr.mxu0 0.0
      %1290 = vmatpush1.msra.mxu0 0.0
      %1291 = vmatprep.subr.mxu0 0.0
      %1292 = vmatpush1.msra.mxu0 0.0
      %1293 = vmatprep.subr.mxu0 0.0
      %1294 = vmatpush1.msra.mxu0 0.0
      %1295 = vmatprep.subr.mxu0 0.0
      %1296 = vmatpush1.msra.mxu0 0.0
      %1297 = vmatprep.subr.mxu0 0.0
      %1298 = vmatpush1.msra.mxu0 0.0
      %1299 = vmatprep.subr.mxu0 0.0
      %1300 = vmatpush1.msra.mxu0 0.0
      %1301 = vmatprep.subr.mxu0 0.0
      %1302 = vmatpush1.msra.mxu0 0.0
      %1303 = vmatprep.subr.mxu0 0.0
      %1304 = vmatpush1.msra.mxu0 0.0
      %1305 = vmatprep.subr.mxu0 0.0
      %1306 = vmatpush1.msra.mxu0 0.0
      %1307 = vmatprep.mubr.f32.mxu0 0.0
      %1308 = vmatmul.mubr.f32.gmra.mrb[0].mxu0 %v1014
      %v1309 = vpop.f32.mrb[0].mxu0
      %v1310 = vadd.f32 %v1010, %v1309
      %v1311 = vpop.f32.mrb[0].mxu0
      %1312 = vdwg.mxu0
      %s1313 = scalar_lea.vmem %s1, 16
      %v1314 = vld [vmem:[%s1313] sm:$0xff]
      %1315 = vrot.lane.b32.xlu0 %v469, 108
      %v1316 = vpop.permute.xlu0 %1315
      %1317 = vrot.lane.b32.xlu0 %v470, 108
      %v1318 = vpop.permute.xlu0 %1317
      %1319 = vrot.lane.b32.xlu0 %v471, 108
      %v1320 = vpop.permute.xlu0 %1319
      %1321 = vrot.lane.b32.xlu0 %v472, 108
      %v1322 = vpop.permute.xlu0 %1321
      %1323 = vrot.lane.b32.xlu0 %v473, 108
      %v1324 = vpop.permute.xlu0 %1323
      %1325 = vrot.lane.b32.xlu0 %v474, 108
      %v1326 = vpop.permute.xlu0 %1325
      %1327 = vrot.lane.b32.xlu0 %v475, 108
      %v1328 = vpop.permute.xlu0 %1327
      %1329 = vrot.lane.b32.xlu0 %v476, 108
      %v1330 = vpop.permute.xlu0 %1329
      %1331 = vrot.lane.b32.xlu0 %v477, 108
      %v1332 = vpop.permute.xlu0 %1331
      %1333 = vrot.lane.b32.xlu0 %v478, 108
      %v1334 = vpop.permute.xlu0 %1333
      %1335 = vrot.lane.b32.xlu0 %v479, 108
      %v1336 = vpop.permute.xlu0 %1335
      %1337 = vrot.lane.b32.xlu0 %v480, 108
      %v1338 = vpop.permute.xlu0 %1337
      %1339 = vrot.lane.b32.xlu0 %v481, 108
      %v1340 = vpop.permute.xlu0 %1339
      %1341 = vrot.lane.b32.xlu0 %v482, 108
      %v1342 = vpop.permute.xlu0 %1341
      %1343 = vrot.lane.b32.xlu0 %v483, 108
      %v1344 = vpop.permute.xlu0 %1343
      %1345 = vrot.lane.b32.xlu0 %v484, 108
      %v1346 = vpop.permute.xlu0 %1345
      %1347 = vrot.lane.b32.xlu0 %v485, 108
      %v1348 = vpop.permute.xlu0 %1347
      %1349 = vrot.lane.b32.xlu0 %v486, 108
      %v1350 = vpop.permute.xlu0 %1349
      %1351 = vrot.lane.b32.xlu0 %v487, 108
      %v1352 = vpop.permute.xlu0 %1351
      %1353 = vrot.lane.b32.xlu0 %v488, 108
      %v1354 = vpop.permute.xlu0 %1353
      %1355 = vrot.lane.b32.xlu0 %v489, 108
      %v1356 = vpop.permute.xlu0 %1355
      %1357 = vrot.lane.b32.xlu0 %v490, 108
      %v1358 = vpop.permute.xlu0 %1357
      %1359 = vrot.lane.b32.xlu0 %v491, 108
      %v1360 = vpop.permute.xlu0 %1359
      %1361 = vrot.lane.b32.xlu0 %v492, 108
      %v1362 = vpop.permute.xlu0 %1361
      %1363 = vrot.lane.b32.xlu0 %v493, 108
      %v1364 = vpop.permute.xlu0 %1363
      %1365 = vrot.lane.b32.xlu0 %v494, 108
      %v1366 = vpop.permute.xlu0 %1365
      %1367 = vrot.lane.b32.xlu0 %v495, 108
      %v1368 = vpop.permute.xlu0 %1367
      %1369 = vrot.lane.b32.xlu0 %v496, 108
      %v1370 = vpop.permute.xlu0 %1369
      %1371 = vrot.lane.b32.xlu0 %v497, 108
      %v1372 = vpop.permute.xlu0 %1371
      %1373 = vrot.lane.b32.xlu0 %v498, 108
      %v1374 = vpop.permute.xlu0 %1373
      %1375 = vrot.lane.b32.xlu0 %v499, 108
      %v1376 = vpop.permute.xlu0 %1375
      %1377 = vrot.lane.b32.xlu0 %v500, 108
      %v1378 = vpop.permute.xlu0 %1377
      %1379 = vrot.lane.b32.xlu0 %v501, 108
      %v1380 = vpop.permute.xlu0 %1379
      %1381 = vrot.lane.b32.xlu0 %v502, 108
      %v1382 = vpop.permute.xlu0 %1381
      %1383 = vrot.lane.b32.xlu0 %v503, 108
      %v1384 = vpop.permute.xlu0 %1383
      %1385 = vrot.lane.b32.xlu0 %v504, 108
      %v1386 = vpop.permute.xlu0 %1385
      %1387 = vrot.lane.b32.xlu0 %v505, 108
      %v1388 = vpop.permute.xlu0 %1387
      %1389 = vrot.lane.b32.xlu0 %v506, 108
      %v1390 = vpop.permute.xlu0 %1389
      %1391 = vrot.lane.b32.xlu0 %v507, 108
      %v1392 = vpop.permute.xlu0 %1391
      %1393 = vrot.lane.b32.xlu0 %v508, 108
      %v1394 = vpop.permute.xlu0 %1393
      %1395 = vrot.lane.b32.xlu0 %v509, 108
      %v1396 = vpop.permute.xlu0 %1395
      %1397 = vrot.lane.b32.xlu0 %v510, 108
      %v1398 = vpop.permute.xlu0 %1397
      %vm1399 = vcmask 883712
      %v1400 = vsel %vm1399, %v1316, %v1318
      %v1401 = vsel %vm1399, %v1318, %v1320
      %v1402 = vsel %vm1399, %v1320, %v1322
      %v1403 = vsel %vm1399, %v1322, %v1324
      %v1404 = vsel %vm1399, %v1324, %v1326
      %v1405 = vsel %vm1399, %v1326, %v1328
      %v1406 = vsel %vm1399, %v1330, %v1332
      %v1407 = vsel %vm1399, %v1332, %v1334
      %v1408 = vsel %vm1399, %v1334, %v1336
      %v1409 = vsel %vm1399, %v1336, %v1338
      %v1410 = vsel %vm1399, %v1338, %v1340
      %v1411 = vsel %vm1399, %v1340, %v1342
      %v1412 = vsel %vm1399, %v1344, %v1346
      %v1413 = vsel %vm1399, %v1346, %v1348
      %v1414 = vsel %vm1399, %v1348, %v1350
      %v1415 = vsel %vm1399, %v1350, %v1352
      %v1416 = vsel %vm1399, %v1352, %v1354
      %v1417 = vsel %vm1399, %v1354, %v1356
      %v1418 = vsel %vm1399, %v1358, %v1360
      %v1419 = vsel %vm1399, %v1360, %v1362
      %v1420 = vsel %vm1399, %v1362, %v1364
      %v1421 = vsel %vm1399, %v1364, %v1366
      %v1422 = vsel %vm1399, %v1366, %v1368
      %v1423 = vsel %vm1399, %v1368, %v1370
      %v1424 = vsel %vm1399, %v1372, %v1374
      %v1425 = vsel %vm1399, %v1374, %v1376
      %v1426 = vsel %vm1399, %v1376, %v1378
      %v1427 = vsel %vm1399, %v1378, %v1380
      %v1428 = vsel %vm1399, %v1380, %v1382
      %v1429 = vsel %vm1399, %v1382, %v1384
      %v1430 = vsel %vm1399, %v1386, %v1388
      %v1431 = vsel %vm1399, %v1388, %v1390
      %v1432 = vsel %vm1399, %v1390, %v1392
      %v1433 = vsel %vm1399, %v1392, %v1394
      %v1434 = vsel %vm1399, %v1394, %v1396
      %v1435 = vsel %vm1399, %v1396, %v1398
      %v1472 = vsel %vm711, %v1314, 0
      %v1474 = vsel %vm715, %v1430, 0
      %v1476 = vsel %vm715, %v1431, 0
      %v1478 = vsel %vm715, %v1432, 0
      %v1480 = vsel %vm715, %v1433, 0
      %v1482 = vsel %vm715, %v1434, 0
      %v1484 = vsel %vm715, %v1435, 0
      %v1486 = vsel %vm715, %v1398, 0
      %1488 = vmatprep.subr.mxu0 %v1401
      %1489 = vmatpush1.msra.mxu0 %v1400
      %1490 = vmatprep.subr.mxu0 %v1407
      %1491 = vmatpush1.msra.mxu0 %v1406
      %1492 = vmatprep.subr.mxu0 %v1413
      %1493 = vmatpush1.msra.mxu0 %v1412
      %1494 = vmatprep.subr.mxu0 %v1419
      %1495 = vmatpush1.msra.mxu0 %v1418
      %1496 = vmatprep.subr.mxu0 %v1425
      %1497 = vmatpush1.msra.mxu0 %v1424
      %1498 = vmatprep.subr.mxu0 %v1476
      %1499 = vmatpush1.msra.mxu0 %v1474
      %1500 = vmatprep.subr.mxu0 0.0
      %1501 = vmatpush1.msra.mxu0 0.0
      %1502 = vmatprep.subr.mxu0 0.0
      %1503 = vmatpush1.msra.mxu0 0.0
      %1504 = vmatprep.subr.mxu0 0.0
      %1505 = vmatpush1.msra.mxu0 0.0
      %1506 = vmatprep.subr.mxu0 0.0
      %1507 = vmatpush1.msra.mxu0 0.0
      %1508 = vmatprep.subr.mxu0 0.0
      %1509 = vmatpush1.msra.mxu0 0.0
      %1510 = vmatprep.subr.mxu0 0.0
      %1511 = vmatpush1.msra.mxu0 0.0
      %1512 = vmatprep.subr.mxu0 0.0
      %1513 = vmatpush1.msra.mxu0 0.0
      %1514 = vmatprep.subr.mxu0 0.0
      %1515 = vmatpush1.msra.mxu0 0.0
      %1516 = vmatprep.subr.mxu0 0.0
      %1517 = vmatpush1.msra.mxu0 0.0
      %1518 = vmatprep.subr.mxu0 0.0
      %1519 = vmatpush1.msra.mxu0 0.0
      %1520 = vmatprep.subr.mxu0 0.0
      %1521 = vmatpush1.msra.mxu0 0.0
      %1522 = vmatprep.subr.mxu0 0.0
      %1523 = vmatpush1.msra.mxu0 0.0
      %1524 = vmatprep.subr.mxu0 0.0
      %1525 = vmatpush1.msra.mxu0 0.0
      %1526 = vmatprep.subr.mxu0 0.0
      %1527 = vmatpush1.msra.mxu0 0.0
      %1528 = vmatprep.subr.mxu0 0.0
      %1529 = vmatpush1.msra.mxu0 0.0
      %1530 = vmatprep.subr.mxu0 0.0
      %1531 = vmatpush1.msra.mxu0 0.0
      %1532 = vmatprep.subr.mxu0 0.0
      %1533 = vmatpush1.msra.mxu0 0.0
      %1534 = vmatprep.subr.mxu0 0.0
      %1535 = vmatpush1.msra.mxu0 0.0
      %1536 = vmatprep.subr.mxu0 0.0
      %1537 = vmatpush1.msra.mxu0 0.0
      %1538 = vmatprep.subr.mxu0 0.0
      %1539 = vmatpush1.msra.mxu0 0.0
      %1540 = vmatprep.subr.mxu0 0.0
      %1541 = vmatpush1.msra.mxu0 0.0
      %1542 = vmatprep.subr.mxu0 0.0
      %1543 = vmatpush1.msra.mxu0 0.0
      %1544 = vmatprep.subr.mxu0 0.0
      %1545 = vmatpush1.msra.mxu0 0.0
      %1546 = vmatprep.subr.mxu0 0.0
      %1547 = vmatpush1.msra.mxu0 0.0
      %1548 = vmatprep.subr.mxu0 0.0
      %1549 = vmatpush1.msra.mxu0 0.0
      %1550 = vmatprep.subr.mxu0 0.0
      %1551 = vmatpush1.msra.mxu0 0.0
      %1552 = vmatprep.mubr.f32.mxu0 0.0
      %1553 = vmatmul.mubr.f32.gmra.mrb[0].mxu0 %v1472
      %v1554 = vpop.f32.mrb[0].mxu0
      %v1555 = vadd.f32 0.0, %v1554
      %v1556 = vpop.f32.mrb[0].mxu0
      %v1557 = vadd.f32 0.0, %v1556
      %1558 = vdwg.mxu0
      %1559 = vmatprep.subr.mxu0 %v1403
      %1560 = vmatpush1.msra.mxu0 %v1402
      %1561 = vmatprep.subr.mxu0 %v1409
      %1562 = vmatpush1.msra.mxu0 %v1408
      %1563 = vmatprep.subr.mxu0 %v1415
      %1564 = vmatpush1.msra.mxu0 %v1414
      %1565 = vmatprep.subr.mxu0 %v1421
      %1566 = vmatpush1.msra.mxu0 %v1420
      %1567 = vmatprep.subr.mxu0 %v1427
      %1568 = vmatpush1.msra.mxu0 %v1426
      %1569 = vmatprep.subr.mxu0 %v1480
      %1570 = vmatpush1.msra.mxu0 %v1478
      %1571 = vmatprep.subr.mxu0 0.0
      %1572 = vmatpush1.msra.mxu0 0.0
      %1573 = vmatprep.subr.mxu0 0.0
      %1574 = vmatpush1.msra.mxu0 0.0
      %1575 = vmatprep.subr.mxu0 0.0
      %1576 = vmatpush1.msra.mxu0 0.0
      %1577 = vmatprep.subr.mxu0 0.0
      %1578 = vmatpush1.msra.mxu0 0.0
      %1579 = vmatprep.subr.mxu0 0.0
      %1580 = vmatpush1.msra.mxu0 0.0
      %1581 = vmatprep.subr.mxu0 0.0
      %1582 = vmatpush1.msra.mxu0 0.0
      %1583 = vmatprep.subr.mxu0 0.0
      %1584 = vmatpush1.msra.mxu0 0.0
      %1585 = vmatprep.subr.mxu0 0.0
      %1586 = vmatpush1.msra.mxu0 0.0
      %1587 = vmatprep.subr.mxu0 0.0
      %1588 = vmatpush1.msra.mxu0 0.0
      %1589 = vmatprep.subr.mxu0 0.0
      %1590 = vmatpush1.msra.mxu0 0.0
      %1591 = vmatprep.subr.mxu0 0.0
      %1592 = vmatpush1.msra.mxu0 0.0
      %1593 = vmatprep.subr.mxu0 0.0
      %1594 = vmatpush1.msra.mxu0 0.0
      %1595 = vmatprep.subr.mxu0 0.0
      %1596 = vmatpush1.msra.mxu0 0.0
      %1597 = vmatprep.subr.mxu0 0.0
      %1598 = vmatpush1.msra.mxu0 0.0
      %1599 = vmatprep.subr.mxu0 0.0
      %1600 = vmatpush1.msra.mxu0 0.0
      %1601 = vmatprep.subr.mxu0 0.0
      %1602 = vmatpush1.msra.mxu0 0.0
      %1603 = vmatprep.subr.mxu0 0.0
      %1604 = vmatpush1.msra.mxu0 0.0
      %1605 = vmatprep.subr.mxu0 0.0
      %1606 = vmatpush1.msra.mxu0 0.0
      %1607 = vmatprep.subr.mxu0 0.0
      %1608 = vmatpush1.msra.mxu0 0.0
      %1609 = vmatprep.subr.mxu0 0.0
      %1610 = vmatpush1.msra.mxu0 0.0
      %1611 = vmatprep.subr.mxu0 0.0
      %1612 = vmatpush1.msra.mxu0 0.0
      %1613 = vmatprep.subr.mxu0 0.0
      %1614 = vmatpush1.msra.mxu0 0.0
      %1615 = vmatprep.subr.mxu0 0.0
      %1616 = vmatpush1.msra.mxu0 0.0
      %1617 = vmatprep.subr.mxu0 0.0
      %1618 = vmatpush1.msra.mxu0 0.0
      %1619 = vmatprep.subr.mxu0 0.0
      %1620 = vmatpush1.msra.mxu0 0.0
      %1621 = vmatprep.subr.mxu0 0.0
      %1622 = vmatpush1.msra.mxu0 0.0
      %1623 = vmatprep.mubr.f32.mxu0 0.0
      %1624 = vmatmul.mubr.f32.gmra.mrb[0].mxu0 %v1472
      %v1625 = vpop.f32.mrb[0].mxu0
      %v1626 = vadd.f32 0.0, %v1625
      %v1627 = vpop.f32.mrb[0].mxu0
      %v1628 = vadd.f32 0.0, %v1627
      %1629 = vdwg.mxu0
      %1630 = vmatprep.subr.mxu0 %v1405
      %1631 = vmatpush1.msra.mxu0 %v1404
      %1632 = vmatprep.subr.mxu0 %v1411
      %1633 = vmatpush1.msra.mxu0 %v1410
      %1634 = vmatprep.subr.mxu0 %v1417
      %1635 = vmatpush1.msra.mxu0 %v1416
      %1636 = vmatprep.subr.mxu0 %v1423
      %1637 = vmatpush1.msra.mxu0 %v1422
      %1638 = vmatprep.subr.mxu0 %v1429
      %1639 = vmatpush1.msra.mxu0 %v1428
      %1640 = vmatprep.subr.mxu0 %v1484
      %1641 = vmatpush1.msra.mxu0 %v1482
      %1642 = vmatprep.subr.mxu0 0.0
      %1643 = vmatpush1.msra.mxu0 0.0
      %1644 = vmatprep.subr.mxu0 0.0
      %1645 = vmatpush1.msra.mxu0 0.0
      %1646 = vmatprep.subr.mxu0 0.0
      %1647 = vmatpush1.msra.mxu0 0.0
      %1648 = vmatprep.subr.mxu0 0.0
      %1649 = vmatpush1.msra.mxu0 0.0
      %1650 = vmatprep.subr.mxu0 0.0
      %1651 = vmatpush1.msra.mxu0 0.0
      %1652 = vmatprep.subr.mxu0 0.0
      %1653 = vmatpush1.msra.mxu0 0.0
      %1654 = vmatprep.subr.mxu0 0.0
      %1655 = vmatpush1.msra.mxu0 0.0
      %1656 = vmatprep.subr.mxu0 0.0
      %1657 = vmatpush1.msra.mxu0 0.0
      %1658 = vmatprep.subr.mxu0 0.0
      %1659 = vmatpush1.msra.mxu0 0.0
      %1660 = vmatprep.subr.mxu0 0.0
      %1661 = vmatpush1.msra.mxu0 0.0
      %1662 = vmatprep.subr.mxu0 0.0
      %1663 = vmatpush1.msra.mxu0 0.0
      %1664 = vmatprep.subr.mxu0 0.0
      %1665 = vmatpush1.msra.mxu0 0.0
      %1666 = vmatprep.subr.mxu0 0.0
      %1667 = vmatpush1.msra.mxu0 0.0
      %1668 = vmatprep.subr.mxu0 0.0
      %1669 = vmatpush1.msra.mxu0 0.0
      %1670 = vmatprep.subr.mxu0 0.0
      %1671 = vmatpush1.msra.mxu0 0.0
      %1672 = vmatprep.subr.mxu0 0.0
      %1673 = vmatpush1.msra.mxu0 0.0
      %1674 = vmatprep.subr.mxu0 0.0
      %1675 = vmatpush1.msra.mxu0 0.0
      %1676 = vmatprep.subr.mxu0 0.0
      %1677 = vmatpush1.msra.mxu0 0.0
      %1678 = vmatprep.subr.mxu0 0.0
      %1679 = vmatpush1.msra.mxu0 0.0
      %1680 = vmatprep.subr.mxu0 0.0
      %1681 = vmatpush1.msra.mxu0 0.0
      %1682 = vmatprep.subr.mxu0 0.0
      %1683 = vmatpush1.msra.mxu0 0.0
      %1684 = vmatprep.subr.mxu0 0.0
      %1685 = vmatpush1.msra.mxu0 0.0
      %1686 = vmatprep.subr.mxu0 0.0
      %1687 = vmatpush1.msra.mxu0 0.0
      %1688 = vmatprep.subr.mxu0 0.0
      %1689 = vmatpush1.msra.mxu0 0.0
      %1690 = vmatprep.subr.mxu0 0.0
      %1691 = vmatpush1.msra.mxu0 0.0
      %1692 = vmatprep.subr.mxu0 0.0
      %1693 = vmatpush1.msra.mxu0 0.0
      %1694 = vmatprep.mubr.f32.mxu0 0.0
      %1695 = vmatmul.mubr.f32.gmra.mrb[0].mxu0 %v1472
      %v1696 = vpop.f32.mrb[0].mxu0
      %v1697 = vadd.f32 0.0, %v1696
      %v1698 = vpop.f32.mrb[0].mxu0
      %v1699 = vadd.f32 0.0, %v1698
      %1700 = vdwg.mxu0
      %1701 = vmatprep.subr.mxu0 0.0
      %1702 = vmatpush1.msra.mxu0 %v1328
      %1703 = vmatprep.subr.mxu0 0.0
      %1704 = vmatpush1.msra.mxu0 %v1342
      %1705 = vmatprep.subr.mxu0 0.0
      %1706 = vmatpush1.msra.mxu0 %v1356
      %1707 = vmatprep.subr.mxu0 0.0
      %1708 = vmatpush1.msra.mxu0 %v1370
      %1709 = vmatprep.subr.mxu0 0.0
      %1710 = vmatpush1.msra.mxu0 %v1384
      %1711 = vmatprep.subr.mxu0 0.0
      %1712 = vmatpush1.msra.mxu0 %v1486
      %1713 = vmatprep.subr.mxu0 0.0
      %1714 = vmatpush1.msra.mxu0 0.0
      %1715 = vmatprep.subr.mxu0 0.0
      %1716 = vmatpush1.msra.mxu0 0.0
      %1717 = vmatprep.subr.mxu0 0.0
      %1718 = vmatpush1.msra.mxu0 0.0
      %1719 = vmatprep.subr.mxu0 0.0
      %1720 = vmatpush1.msra.mxu0 0.0
      %1721 = vmatprep.subr.mxu0 0.0
      %1722 = vmatpush1.msra.mxu0 0.0
      %1723 = vmatprep.subr.mxu0 0.0
      %1724 = vmatpush1.msra.mxu0 0.0
      %1725 = vmatprep.subr.mxu0 0.0
      %1726 = vmatpush1.msra.mxu0 0.0
      %1727 = vmatprep.subr.mxu0 0.0
      %1728 = vmatpush1.msra.mxu0 0.0
      %1729 = vmatprep.subr.mxu0 0.0
      %1730 = vmatpush1.msra.mxu0 0.0
      %1731 = vmatprep.subr.mxu0 0.0
      %1732 = vmatpush1.msra.mxu0 0.0
      %1733 = vmatprep.subr.mxu0 0.0
      %1734 = vmatpush1.msra.mxu0 0.0
      %1735 = vmatprep.subr.mxu0 0.0
      %1736 = vmatpush1.msra.mxu0 0.0
      %1737 = vmatprep.subr.mxu0 0.0
      %1738 = vmatpush1.msra.mxu0 0.0
      %1739 = vmatprep.subr.mxu0 0.0
      %1740 = vmatpush1.msra.mxu0 0.0
      %1741 = vmatprep.subr.mxu0 0.0
      %1742 = vmatpush1.msra.mxu0 0.0
      %1743 = vmatprep.subr.mxu0 0.0
      %1744 = vmatpush1.msra.mxu0 0.0
      %1745 = vmatprep.subr.mxu0 0.0
      %1746 = vmatpush1.msra.mxu0 0.0
      %1747 = vmatprep.subr.mxu0 0.0
      %1748 = vmatpush1.msra.mxu0 0.0
      %1749 = vmatprep.subr.mxu0 0.0
      %1750 = vmatpush1.msra.mxu0 0.0
      %1751 = vmatprep.subr.mxu0 0.0
      %1752 = vmatpush1.msra.mxu0 0.0
      %1753 = vmatprep.subr.mxu0 0.0
      %1754 = vmatpush1.msra.mxu0 0.0
      %1755 = vmatprep.subr.mxu0 0.0
      %1756 = vmatpush1.msra.mxu0 0.0
      %1757 = vmatprep.subr.mxu0 0.0
      %1758 = vmatpush1.msra.mxu0 0.0
      %1759 = vmatprep.subr.mxu0 0.0
      %1760 = vmatpush1.msra.mxu0 0.0
      %1761 = vmatprep.subr.mxu0 0.0
      %1762 = vmatpush1.msra.mxu0 0.0
      %1763 = vmatprep.subr.mxu0 0.0
      %1764 = vmatpush1.msra.mxu0 0.0
      %1765 = vmatprep.mubr.f32.mxu0 0.0
      %1766 = vmatmul.mubr.f32.gmra.mrb[0].mxu0 %v1472
      %v1767 = vpop.f32.mrb[0].mxu0
      %v1768 = vadd.f32 0.0, %v1767
      %v1769 = vpop.f32.mrb[0].mxu0
      %1770 = vdwg.mxu0
      %v1771 = vadd.f32 %v1097, %v1555
      %v1772 = vadd.f32 %v1099, %v1557
      %v1773 = vadd.f32 %v1168, %v1626
      %v1774 = vadd.f32 %v1170, %v1628
      %v1775 = vadd.f32 %v1239, %v1697
      %v1776 = vadd.f32 %v1241, %v1699
      %v1777 = vadd.f32 %v1310, %v1768
      %s1778 = scalar_lea.vmem %s1, 24
      %v1779 = vld [vmem:[%s1778] sm:$0xff]
      %1780 = vrot.lane.b32.xlu0 %v469, 28
      %v1781 = vpop.permute.xlu0 %1780
      %1782 = vrot.lane.b32.xlu0 %v470, 28
      %v1783 = vpop.permute.xlu0 %1782
      %1784 = vrot.lane.b32.xlu0 %v471, 28
      %v1785 = vpop.permute.xlu0 %1784
      %1786 = vrot.lane.b32.xlu0 %v472, 28
      %v1787 = vpop.permute.xlu0 %1786
      %1788 = vrot.lane.b32.xlu0 %v473, 28
      %v1789 = vpop.permute.xlu0 %1788
      %1790 = vrot.lane.b32.xlu0 %v474, 28
      %v1791 = vpop.permute.xlu0 %1790
      %1792 = vrot.lane.b32.xlu0 %v475, 28
      %v1793 = vpop.permute.xlu0 %1792
      %1794 = vrot.lane.b32.xlu0 %v476, 28
      %v1795 = vpop.permute.xlu0 %1794
      %1796 = vrot.lane.b32.xlu0 %v477, 28
      %v1797 = vpop.permute.xlu0 %1796
      %1798 = vrot.lane.b32.xlu0 %v478, 28
      %v1799 = vpop.permute.xlu0 %1798
      %1800 = vrot.lane.b32.xlu0 %v479, 28
      %v1801 = vpop.permute.xlu0 %1800
      %1802 = vrot.lane.b32.xlu0 %v480, 28
      %v1803 = vpop.permute.xlu0 %1802
      %1804 = vrot.lane.b32.xlu0 %v481, 28
      %v1805 = vpop.permute.xlu0 %1804
      %1806 = vrot.lane.b32.xlu0 %v482, 28
      %v1807 = vpop.permute.xlu0 %1806
      %1808 = vrot.lane.b32.xlu0 %v483, 28
      %v1809 = vpop.permute.xlu0 %1808
      %1810 = vrot.lane.b32.xlu0 %v484, 28
      %v1811 = vpop.permute.xlu0 %1810
      %1812 = vrot.lane.b32.xlu0 %v485, 28
      %v1813 = vpop.permute.xlu0 %1812
      %1814 = vrot.lane.b32.xlu0 %v486, 28
      %v1815 = vpop.permute.xlu0 %1814
      %1816 = vrot.lane.b32.xlu0 %v487, 28
      %v1817 = vpop.permute.xlu0 %1816
      %1818 = vrot.lane.b32.xlu0 %v488, 28
      %v1819 = vpop.permute.xlu0 %1818
      %1820 = vrot.lane.b32.xlu0 %v489, 28
      %v1821 = vpop.permute.xlu0 %1820
      %1822 = vrot.lane.b32.xlu0 %v490, 28
      %v1823 = vpop.permute.xlu0 %1822
      %1824 = vrot.lane.b32.xlu0 %v491, 28
      %v1825 = vpop.permute.xlu0 %1824
      %1826 = vrot.lane.b32.xlu0 %v492, 28
      %v1827 = vpop.permute.xlu0 %1826
      %1828 = vrot.lane.b32.xlu0 %v493, 28
      %v1829 = vpop.permute.xlu0 %1828
      %1830 = vrot.lane.b32.xlu0 %v494, 28
      %v1831 = vpop.permute.xlu0 %1830
      %1832 = vrot.lane.b32.xlu0 %v495, 28
      %v1833 = vpop.permute.xlu0 %1832
      %1834 = vrot.lane.b32.xlu0 %v496, 28
      %v1835 = vpop.permute.xlu0 %1834
      %1836 = vrot.lane.b32.xlu0 %v497, 28
      %v1837 = vpop.permute.xlu0 %1836
      %1838 = vrot.lane.b32.xlu0 %v498, 28
      %v1839 = vpop.permute.xlu0 %1838
      %1840 = vrot.lane.b32.xlu0 %v499, 28
      %v1841 = vpop.permute.xlu0 %1840
      %1842 = vrot.lane.b32.xlu0 %v500, 28
      %v1843 = vpop.permute.xlu0 %1842
      %1844 = vrot.lane.b32.xlu0 %v501, 28
      %v1845 = vpop.permute.xlu0 %1844
      %1846 = vrot.lane.b32.xlu0 %v502, 28
      %v1847 = vpop.permute.xlu0 %1846
      %1848 = vrot.lane.b32.xlu0 %v503, 28
      %v1849 = vpop.permute.xlu0 %1848
      %1850 = vrot.lane.b32.xlu0 %v504, 28
      %v1851 = vpop.permute.xlu0 %1850
      %1852 = vrot.lane.b32.xlu0 %v505, 28
      %v1853 = vpop.permute.xlu0 %1852
      %1854 = vrot.lane.b32.xlu0 %v506, 28
      %v1855 = vpop.permute.xlu0 %1854
      %1856 = vrot.lane.b32.xlu0 %v507, 28
      %v1857 = vpop.permute.xlu0 %1856
      %1858 = vrot.lane.b32.xlu0 %v508, 28
      %v1859 = vpop.permute.xlu0 %1858
      %1860 = vrot.lane.b32.xlu0 %v509, 28
      %v1861 = vpop.permute.xlu0 %1860
      %1862 = vrot.lane.b32.xlu0 %v510, 28
      %v1863 = vpop.permute.xlu0 %1862
      %vm1864 = vcmask 228352
      %v1865 = vsel %vm1864, %v1781, %v1783
      %v1866 = vsel %vm1864, %v1783, %v1785
      %v1867 = vsel %vm1864, %v1785, %v1787
      %v1868 = vsel %vm1864, %v1787, %v1789
      %v1869 = vsel %vm1864, %v1789, %v1791
      %v1870 = vsel %vm1864, %v1791, %v1793
      %v1871 = vsel %vm1864, %v1795, %v1797
      %v1872 = vsel %vm1864, %v1797, %v1799
      %v1873 = vsel %vm1864, %v1799, %v1801
      %v1874 = vsel %vm1864, %v1801, %v1803
      %v1875 = vsel %vm1864, %v1803, %v1805
      %v1876 = vsel %vm1864, %v1805, %v1807
      %v1877 = vsel %vm1864, %v1809, %v1811
      %v1878 = vsel %vm1864, %v1811, %v1813
      %v1879 = vsel %vm1864, %v1813, %v1815
      %v1880 = vsel %vm1864, %v1815, %v1817
      %v1881 = vsel %vm1864, %v1817, %v1819
      %v1882 = vsel %vm1864, %v1819, %v1821
      %v1883 = vsel %vm1864, %v1823, %v1825
      %v1884 = vsel %vm1864, %v1825, %v1827
      %v1885 = vsel %vm1864, %v1827, %v1829
      %v1886 = vsel %vm1864, %v1829, %v1831
      %v1887 = vsel %vm1864, %v1831, %v1833
      %v1888 = vsel %vm1864, %v1833, %v1835
      %v1889 = vsel %vm1864, %v1837, %v1839
      %v1890 = vsel %vm1864, %v1839, %v1841
      %v1891 = vsel %vm1864, %v1841, %v1843
      %v1892 = vsel %vm1864, %v1843, %v1845
      %v1893 = vsel %vm1864, %v1845, %v1847
      %v1894 = vsel %vm1864, %v1847, %v1849
      %v1895 = vsel %vm1864, %v1851, %v1853
      %v1896 = vsel %vm1864, %v1853, %v1855
      %v1897 = vsel %vm1864, %v1855, %v1857
      %v1898 = vsel %vm1864, %v1857, %v1859
      %v1899 = vsel %vm1864, %v1859, %v1861
      %v1900 = vsel %vm1864, %v1861, %v1863
      %v1937 = vsel %vm711, %v1779, 0
      %v1939 = vsel %vm715, %v1895, 0
      %v1941 = vsel %vm715, %v1896, 0
      %v1943 = vsel %vm715, %v1897, 0
      %v1945 = vsel %vm715, %v1898, 0
      %v1947 = vsel %vm715, %v1899, 0
      %v1949 = vsel %vm715, %v1900, 0
      %v1951 = vsel %vm715, %v1863, 0
      %1953 = vmatprep.subr.mxu0 %v1866
      %1954 = vmatpush1.msra.mxu0 %v1865
      %1955 = vmatprep.subr.mxu0 %v1872
      %1956 = vmatpush1.msra.mxu0 %v1871
      %1957 = vmatprep.subr.mxu0 %v1878
      %1958 = vmatpush1.msra.mxu0 %v1877
      %1959 = vmatprep.subr.mxu0 %v1884
      %1960 = vmatpush1.msra.mxu0 %v1883
      %1961 = vmatprep.subr.mxu0 %v1890
      %1962 = vmatpush1.msra.mxu0 %v1889
      %1963 = vmatprep.subr.mxu0 %v1941
      %1964 = vmatpush1.msra.mxu0 %v1939
      %1965 = vmatprep.subr.mxu0 0.0
      %1966 = vmatpush1.msra.mxu0 0.0
      %1967 = vmatprep.subr.mxu0 0.0
      %1968 = vmatpush1.msra.mxu0 0.0
      %1969 = vmatprep.subr.mxu0 0.0
      %1970 = vmatpush1.msra.mxu0 0.0
      %1971 = vmatprep.subr.mxu0 0.0
      %1972 = vmatpush1.msra.mxu0 0.0
      %1973 = vmatprep.subr.mxu0 0.0
      %1974 = vmatpush1.msra.mxu0 0.0
      %1975 = vmatprep.subr.mxu0 0.0
      %1976 = vmatpush1.msra.mxu0 0.0
      %1977 = vmatprep.subr.mxu0 0.0
      %1978 = vmatpush1.msra.mxu0 0.0
      %1979 = vmatprep.subr.mxu0 0.0
      %1980 = vmatpush1.msra.mxu0 0.0
      %1981 = vmatprep.subr.mxu0 0.0
      %1982 = vmatpush1.msra.mxu0 0.0
      %1983 = vmatprep.subr.mxu0 0.0
      %1984 = vmatpush1.msra.mxu0 0.0
      %1985 = vmatprep.subr.mxu0 0.0
      %1986 = vmatpush1.msra.mxu0 0.0
      %1987 = vmatprep.subr.mxu0 0.0
      %1988 = vmatpush1.msra.mxu0 0.0
      %1989 = vmatprep.subr.mxu0 0.0
      %1990 = vmatpush1.msra.mxu0 0.0
      %1991 = vmatprep.subr.mxu0 0.0
      %1992 = vmatpush1.msra.mxu0 0.0
      %1993 = vmatprep.subr.mxu0 0.0
      %1994 = vmatpush1.msra.mxu0 0.0
      %1995 = vmatprep.subr.mxu0 0.0
      %1996 = vmatpush1.msra.mxu0 0.0
      %1997 = vmatprep.subr.mxu0 0.0
      %1998 = vmatpush1.msra.mxu0 0.0
      %1999 = vmatprep.subr.mxu0 0.0
      %2000 = vmatpush1.msra.mxu0 0.0
      %2001 = vmatprep.subr.mxu0 0.0
      %2002 = vmatpush1.msra.mxu0 0.0
      %2003 = vmatprep.subr.mxu0 0.0
      %2004 = vmatpush1.msra.mxu0 0.0
      %2005 = vmatprep.subr.mxu0 0.0
      %2006 = vmatpush1.msra.mxu0 0.0
      %2007 = vmatprep.subr.mxu0 0.0
      %2008 = vmatpush1.msra.mxu0 0.0
      %2009 = vmatprep.subr.mxu0 0.0
      %2010 = vmatpush1.msra.mxu0 0.0
      %2011 = vmatprep.subr.mxu0 0.0
      %2012 = vmatpush1.msra.mxu0 0.0
      %2013 = vmatprep.subr.mxu0 0.0
      %2014 = vmatpush1.msra.mxu0 0.0
      %2015 = vmatprep.subr.mxu0 0.0
      %2016 = vmatpush1.msra.mxu0 0.0
      %2017 = vmatprep.mubr.f32.mxu0 0.0
      %2018 = vmatmul.mubr.f32.gmra.mrb[0].mxu0 %v1937
      %v2019 = vpop.f32.mrb[0].mxu0
      %v2020 = vadd.f32 0.0, %v2019
      %v2021 = vpop.f32.mrb[0].mxu0
      %v2022 = vadd.f32 0.0, %v2021
      %2023 = vdwg.mxu0
      %2024 = vmatprep.subr.mxu0 %v1868
      %2025 = vmatpush1.msra.mxu0 %v1867
      %2026 = vmatprep.subr.mxu0 %v1874
      %2027 = vmatpush1.msra.mxu0 %v1873
      %2028 = vmatprep.subr.mxu0 %v1880
      %2029 = vmatpush1.msra.mxu0 %v1879
      %2030 = vmatprep.subr.mxu0 %v1886
      %2031 = vmatpush1.msra.mxu0 %v1885
      %2032 = vmatprep.subr.mxu0 %v1892
      %2033 = vmatpush1.msra.mxu0 %v1891
      %2034 = vmatprep.subr.mxu0 %v1945
      %2035 = vmatpush1.msra.mxu0 %v1943
      %2036 = vmatprep.subr.mxu0 0.0
      %2037 = vmatpush1.msra.mxu0 0.0
      %2038 = vmatprep.subr.mxu0 0.0
      %2039 = vmatpush1.msra.mxu0 0.0
      %2040 = vmatprep.subr.mxu0 0.0
      %2041 = vmatpush1.msra.mxu0 0.0
      %2042 = vmatprep.subr.mxu0 0.0
      %2043 = vmatpush1.msra.mxu0 0.0
      %2044 = vmatprep.subr.mxu0 0.0
      %2045 = vmatpush1.msra.mxu0 0.0
      %2046 = vmatprep.subr.mxu0 0.0
      %2047 = vmatpush1.msra.mxu0 0.0
      %2048 = vmatprep.subr.mxu0 0.0
      %2049 = vmatpush1.msra.mxu0 0.0
      %2050 = vmatprep.subr.mxu0 0.0
      %2051 = vmatpush1.msra.mxu0 0.0
      %2052 = vmatprep.subr.mxu0 0.0
      %2053 = vmatpush1.msra.mxu0 0.0
      %2054 = vmatprep.subr.mxu0 0.0
      %2055 = vmatpush1.msra.mxu0 0.0
      %2056 = vmatprep.subr.mxu0 0.0
      %2057 = vmatpush1.msra.mxu0 0.0
      %2058 = vmatprep.subr.mxu0 0.0
      %2059 = vmatpush1.msra.mxu0 0.0
      %2060 = vmatprep.subr.mxu0 0.0
      %2061 = vmatpush1.msra.mxu0 0.0
      %2062 = vmatprep.subr.mxu0 0.0
      %2063 = vmatpush1.msra.mxu0 0.0
      %2064 = vmatprep.subr.mxu0 0.0
      %2065 = vmatpush1.msra.mxu0 0.0
      %2066 = vmatprep.subr.mxu0 0.0
      %2067 = vmatpush1.msra.mxu0 0.0
      %2068 = vmatprep.subr.mxu0 0.0
      %2069 = vmatpush1.msra.mxu0 0.0
      %2070 = vmatprep.subr.mxu0 0.0
      %2071 = vmatpush1.msra.mxu0 0.0
      %2072 = vmatprep.subr.mxu0 0.0
      %2073 = vmatpush1.msra.mxu0 0.0
      %2074 = vmatprep.subr.mxu0 0.0
      %2075 = vmatpush1.msra.mxu0 0.0
      %2076 = vmatprep.subr.mxu0 0.0
      %2077 = vmatpush1.msra.mxu0 0.0
      %2078 = vmatprep.subr.mxu0 0.0
      %2079 = vmatpush1.msra.mxu0 0.0
      %2080 = vmatprep.subr.mxu0 0.0
      %2081 = vmatpush1.msra.mxu0 0.0
      %2082 = vmatprep.subr.mxu0 0.0
      %2083 = vmatpush1.msra.mxu0 0.0
      %2084 = vmatprep.subr.mxu0 0.0
      %2085 = vmatpush1.msra.mxu0 0.0
      %2086 = vmatprep.subr.mxu0 0.0
      %2087 = vmatpush1.msra.mxu0 0.0
      %2088 = vmatprep.mubr.f32.mxu0 0.0
      %2089 = vmatmul.mubr.f32.gmra.mrb[0].mxu0 %v1937
      %v2090 = vpop.f32.mrb[0].mxu0
      %v2091 = vadd.f32 0.0, %v2090
      %v2092 = vpop.f32.mrb[0].mxu0
      %v2093 = vadd.f32 0.0, %v2092
      %2094 = vdwg.mxu0
      %2095 = vmatprep.subr.mxu0 %v1870
      %2096 = vmatpush1.msra.mxu0 %v1869
      %2097 = vmatprep.subr.mxu0 %v1876
      %2098 = vmatpush1.msra.mxu0 %v1875
      %2099 = vmatprep.subr.mxu0 %v1882
      %2100 = vmatpush1.msra.mxu0 %v1881
      %2101 = vmatprep.subr.mxu0 %v1888
      %2102 = vmatpush1.msra.mxu0 %v1887
      %2103 = vmatprep.subr.mxu0 %v1894
      %2104 = vmatpush1.msra.mxu0 %v1893
      %2105 = vmatprep.subr.mxu0 %v1949
      %2106 = vmatpush1.msra.mxu0 %v1947
      %2107 = vmatprep.subr.mxu0 0.0
      %2108 = vmatpush1.msra.mxu0 0.0
      %2109 = vmatprep.subr.mxu0 0.0
      %2110 = vmatpush1.msra.mxu0 0.0
      %2111 = vmatprep.subr.mxu0 0.0
      %2112 = vmatpush1.msra.mxu0 0.0
      %2113 = vmatprep.subr.mxu0 0.0
      %2114 = vmatpush1.msra.mxu0 0.0
      %2115 = vmatprep.subr.mxu0 0.0
      %2116 = vmatpush1.msra.mxu0 0.0
      %2117 = vmatprep.subr.mxu0 0.0
      %2118 = vmatpush1.msra.mxu0 0.0
      %2119 = vmatprep.subr.mxu0 0.0
      %2120 = vmatpush1.msra.mxu0 0.0
      %2121 = vmatprep.subr.mxu0 0.0
      %2122 = vmatpush1.msra.mxu0 0.0
      %2123 = vmatprep.subr.mxu0 0.0
      %2124 = vmatpush1.msra.mxu0 0.0
      %2125 = vmatprep.subr.mxu0 0.0
      %2126 = vmatpush1.msra.mxu0 0.0
      %2127 = vmatprep.subr.mxu0 0.0
      %2128 = vmatpush1.msra.mxu0 0.0
      %2129 = vmatprep.subr.mxu0 0.0
      %2130 = vmatpush1.msra.mxu0 0.0
      %2131 = vmatprep.subr.mxu0 0.0
      %2132 = vmatpush1.msra.mxu0 0.0
      %2133 = vmatprep.subr.mxu0 0.0
      %2134 = vmatpush1.msra.mxu0 0.0
      %2135 = vmatprep.subr.mxu0 0.0
      %2136 = vmatpush1.msra.mxu0 0.0
      %2137 = vmatprep.subr.mxu0 0.0
      %2138 = vmatpush1.msra.mxu0 0.0
      %2139 = vmatprep.subr.mxu0 0.0
      %2140 = vmatpush1.msra.mxu0 0.0
      %2141 = vmatprep.subr.mxu0 0.0
      %2142 = vmatpush1.msra.mxu0 0.0
      %2143 = vmatprep.subr.mxu0 0.0
      %2144 = vmatpush1.msra.mxu0 0.0
      %2145 = vmatprep.subr.mxu0 0.0
      %2146 = vmatpush1.msra.mxu0 0.0
      %2147 = vmatprep.subr.mxu0 0.0
      %2148 = vmatpush1.msra.mxu0 0.0
      %2149 = vmatprep.subr.mxu0 0.0
      %2150 = vmatpush1.msra.mxu0 0.0
      %2151 = vmatprep.subr.mxu0 0.0
      %2152 = vmatpush1.msra.mxu0 0.0
      %2153 = vmatprep.subr.mxu0 0.0
      %2154 = vmatpush1.msra.mxu0 0.0
      %2155 = vmatprep.subr.mxu0 0.0
      %2156 = vmatpush1.msra.mxu0 0.0
      %2157 = vmatprep.subr.mxu0 0.0
      %2158 = vmatpush1.msra.mxu0 0.0
      %2159 = vmatprep.mubr.f32.mxu0 0.0
      %2160 = vmatmul.mubr.f32.gmra.mrb[0].mxu0 %v1937
      %v2161 = vpop.f32.mrb[0].mxu0
      %v2162 = vadd.f32 0.0, %v2161
      %v2163 = vpop.f32.mrb[0].mxu0
      %v2164 = vadd.f32 0.0, %v2163
      %2165 = vdwg.mxu0
      %2166 = vmatprep.subr.mxu0 0.0
      %2167 = vmatpush1.msra.mxu0 %v1793
      %2168 = vmatprep.subr.mxu0 0.0
      %2169 = vmatpush1.msra.mxu0 %v1807
      %2170 = vmatprep.subr.mxu0 0.0
      %2171 = vmatpush1.msra.mxu0 %v1821
      %2172 = vmatprep.subr.mxu0 0.0
      %2173 = vmatpush1.msra.mxu0 %v1835
      %2174 = vmatprep.subr.mxu0 0.0
      %2175 = vmatpush1.msra.mxu0 %v1849
      %2176 = vmatprep.subr.mxu0 0.0
      %2177 = vmatpush1.msra.mxu0 %v1951
      %2178 = vmatprep.subr.mxu0 0.0
      %2179 = vmatpush1.msra.mxu0 0.0
      %2180 = vmatprep.subr.mxu0 0.0
      %2181 = vmatpush1.msra.mxu0 0.0
      %2182 = vmatprep.subr.mxu0 0.0
      %2183 = vmatpush1.msra.mxu0 0.0
      %2184 = vmatprep.subr.mxu0 0.0
      %2185 = vmatpush1.msra.mxu0 0.0
      %2186 = vmatprep.subr.mxu0 0.0
      %2187 = vmatpush1.msra.mxu0 0.0
      %2188 = vmatprep.subr.mxu0 0.0
      %2189 = vmatpush1.msra.mxu0 0.0
      %2190 = vmatprep.subr.mxu0 0.0
      %2191 = vmatpush1.msra.mxu0 0.0
      %2192 = vmatprep.subr.mxu0 0.0
      %2193 = vmatpush1.msra.mxu0 0.0
      %2194 = vmatprep.subr.mxu0 0.0
      %2195 = vmatpush1.msra.mxu0 0.0
      %2196 = vmatprep.subr.mxu0 0.0
      %2197 = vmatpush1.msra.mxu0 0.0
      %2198 = vmatprep.subr.mxu0 0.0
      %2199 = vmatpush1.msra.mxu0 0.0
      %2200 = vmatprep.subr.mxu0 0.0
      %2201 = vmatpush1.msra.mxu0 0.0
      %2202 = vmatprep.subr.mxu0 0.0
      %2203 = vmatpush1.msra.mxu0 0.0
      %2204 = vmatprep.subr.mxu0 0.0
      %2205 = vmatpush1.msra.mxu0 0.0
      %2206 = vmatprep.subr.mxu0 0.0
      %2207 = vmatpush1.msra.mxu0 0.0
      %2208 = vmatprep.subr.mxu0 0.0
      %2209 = vmatpush1.msra.mxu0 0.0
      %2210 = vmatprep.subr.mxu0 0.0
      %2211 = vmatpush1.msra.mxu0 0.0
      %2212 = vmatprep.subr.mxu0 0.0
      %2213 = vmatpush1.msra.mxu0 0.0
      %2214 = vmatprep.subr.mxu0 0.0
      %2215 = vmatpush1.msra.mxu0 0.0
      %2216 = vmatprep.subr.mxu0 0.0
      %2217 = vmatpush1.msra.mxu0 0.0
      %2218 = vmatprep.subr.mxu0 0.0
      %2219 = vmatpush1.msra.mxu0 0.0
      %2220 = vmatprep.subr.mxu0 0.0
      %2221 = vmatpush1.msra.mxu0 0.0
      %2222 = vmatprep.subr.mxu0 0.0
      %2223 = vmatpush1.msra.mxu0 0.0
      %2224 = vmatprep.subr.mxu0 0.0
      %2225 = vmatpush1.msra.mxu0 0.0
      %2226 = vmatprep.subr.mxu0 0.0
      %2227 = vmatpush1.msra.mxu0 0.0
      %2228 = vmatprep.subr.mxu0 0.0
      %2229 = vmatpush1.msra.mxu0 0.0
      %2230 = vmatprep.mubr.f32.mxu0 0.0
      %2231 = vmatmul.mubr.f32.gmra.mrb[0].mxu0 %v1937
      %v2232 = vpop.f32.mrb[0].mxu0
      %v2233 = vadd.f32 0.0, %v2232
      %v2234 = vpop.f32.mrb[0].mxu0
      %2235 = vdwg.mxu0
      %v2236 = vadd.f32 %v1771, %v2020
      %v2237 = vadd.f32 %v1772, %v2022
      %v2238 = vadd.f32 %v1773, %v2091
      %v2239 = vadd.f32 %v1774, %v2093
      %v2240 = vadd.f32 %v1775, %v2162
      %v2241 = vadd.f32 %v1776, %v2164
      %v2242 = vadd.f32 %v1777, %v2233
      %s2243 = scalar_lea.vmem %s1, 32
      %v2244 = vld [vmem:[%s2243] sm:$0xff]
      %2245 = vrot.lane.b32.xlu0 %v469, 18
      %v2246 = vpop.permute.xlu0 %2245
      %2247 = vrot.lane.b32.xlu0 %v470, 18
      %v2248 = vpop.permute.xlu0 %2247
      %2249 = vrot.lane.b32.xlu0 %v471, 18
      %v2250 = vpop.permute.xlu0 %2249
      %2251 = vrot.lane.b32.xlu0 %v472, 18
      %v2252 = vpop.permute.xlu0 %2251
      %2253 = vrot.lane.b32.xlu0 %v473, 18
      %v2254 = vpop.permute.xlu0 %2253
      %2255 = vrot.lane.b32.xlu0 %v474, 18
      %v2256 = vpop.permute.xlu0 %2255
      %2257 = vrot.lane.b32.xlu0 %v475, 18
      %v2258 = vpop.permute.xlu0 %2257
      %2259 = vrot.lane.b32.xlu0 %v476, 18
      %v2260 = vpop.permute.xlu0 %2259
      %2261 = vrot.lane.b32.xlu0 %v477, 18
      %v2262 = vpop.permute.xlu0 %2261
      %2263 = vrot.lane.b32.xlu0 %v478, 18
      %v2264 = vpop.permute.xlu0 %2263
      %2265 = vrot.lane.b32.xlu0 %v479, 18
      %v2266 = vpop.permute.xlu0 %2265
      %2267 = vrot.lane.b32.xlu0 %v480, 18
      %v2268 = vpop.permute.xlu0 %2267
      %2269 = vrot.lane.b32.xlu0 %v481, 18
      %v2270 = vpop.permute.xlu0 %2269
      %2271 = vrot.lane.b32.xlu0 %v482, 18
      %v2272 = vpop.permute.xlu0 %2271
      %2273 = vrot.lane.b32.xlu0 %v483, 18
      %v2274 = vpop.permute.xlu0 %2273
      %2275 = vrot.lane.b32.xlu0 %v484, 18
      %v2276 = vpop.permute.xlu0 %2275
      %2277 = vrot.lane.b32.xlu0 %v485, 18
      %v2278 = vpop.permute.xlu0 %2277
      %2279 = vrot.lane.b32.xlu0 %v486, 18
      %v2280 = vpop.permute.xlu0 %2279
      %2281 = vrot.lane.b32.xlu0 %v487, 18
      %v2282 = vpop.permute.xlu0 %2281
      %2283 = vrot.lane.b32.xlu0 %v488, 18
      %v2284 = vpop.permute.xlu0 %2283
      %2285 = vrot.lane.b32.xlu0 %v489, 18
      %v2286 = vpop.permute.xlu0 %2285
      %2287 = vrot.lane.b32.xlu0 %v490, 18
      %v2288 = vpop.permute.xlu0 %2287
      %2289 = vrot.lane.b32.xlu0 %v491, 18
      %v2290 = vpop.permute.xlu0 %2289
      %2291 = vrot.lane.b32.xlu0 %v492, 18
      %v2292 = vpop.permute.xlu0 %2291
      %2293 = vrot.lane.b32.xlu0 %v493, 18
      %v2294 = vpop.permute.xlu0 %2293
      %2295 = vrot.lane.b32.xlu0 %v494, 18
      %v2296 = vpop.permute.xlu0 %2295
      %2297 = vrot.lane.b32.xlu0 %v495, 18
      %v2298 = vpop.permute.xlu0 %2297
      %2299 = vrot.lane.b32.xlu0 %v496, 18
      %v2300 = vpop.permute.xlu0 %2299
      %2301 = vrot.lane.b32.xlu0 %v497, 18
      %v2302 = vpop.permute.xlu0 %2301
      %2303 = vrot.lane.b32.xlu0 %v498, 18
      %v2304 = vpop.permute.xlu0 %2303
      %2305 = vrot.lane.b32.xlu0 %v499, 18
      %v2306 = vpop.permute.xlu0 %2305
      %2307 = vrot.lane.b32.xlu0 %v500, 18
      %v2308 = vpop.permute.xlu0 %2307
      %2309 = vrot.lane.b32.xlu0 %v501, 18
      %v2310 = vpop.permute.xlu0 %2309
      %2311 = vrot.lane.b32.xlu0 %v502, 18
      %v2312 = vpop.permute.xlu0 %2311
      %2313 = vrot.lane.b32.xlu0 %v503, 18
      %v2314 = vpop.permute.xlu0 %2313
      %2315 = vrot.lane.b32.xlu0 %v504, 18
      %v2316 = vpop.permute.xlu0 %2315
      %2317 = vrot.lane.b32.xlu0 %v505, 18
      %v2318 = vpop.permute.xlu0 %2317
      %2319 = vrot.lane.b32.xlu0 %v506, 18
      %v2320 = vpop.permute.xlu0 %2319
      %2321 = vrot.lane.b32.xlu0 %v507, 18
      %v2322 = vpop.permute.xlu0 %2321
      %2323 = vrot.lane.b32.xlu0 %v508, 18
      %v2324 = vpop.permute.xlu0 %2323
      %2325 = vrot.lane.b32.xlu0 %v509, 18
      %v2326 = vpop.permute.xlu0 %2325
      %2327 = vrot.lane.b32.xlu0 %v510, 18
      %v2328 = vpop.permute.xlu0 %2327
      %vm2329 = vcmask 146432
      %v2330 = vsel %vm2329, %v2246, %v2248
      %v2331 = vsel %vm2329, %v2248, %v2250
      %v2332 = vsel %vm2329, %v2250, %v2252
      %v2333 = vsel %vm2329, %v2252, %v2254
      %v2334 = vsel %vm2329, %v2254, %v2256
      %v2335 = vsel %vm2329, %v2256, %v2258
      %v2336 = vsel %vm2329, %v2260, %v2262
      %v2337 = vsel %vm2329, %v2262, %v2264
      %v2338 = vsel %vm2329, %v2264, %v2266
      %v2339 = vsel %vm2329, %v2266, %v2268
      %v2340 = vsel %vm2329, %v2268, %v2270
      %v2341 = vsel %vm2329, %v2270, %v2272
      %v2342 = vsel %vm2329, %v2274, %v2276
      %v2343 = vsel %vm2329, %v2276, %v2278
      %v2344 = vsel %vm2329, %v2278, %v2280
      %v2345 = vsel %vm2329, %v2280, %v2282
      %v2346 = vsel %vm2329, %v2282, %v2284
      %v2347 = vsel %vm2329, %v2284, %v2286
      %v2348 = vsel %vm2329, %v2288, %v2290
      %v2349 = vsel %vm2329, %v2290, %v2292
      %v2350 = vsel %vm2329, %v2292, %v2294
      %v2351 = vsel %vm2329, %v2294, %v2296
      %v2352 = vsel %vm2329, %v2296, %v2298
      %v2353 = vsel %vm2329, %v2298, %v2300
      %v2354 = vsel %vm2329, %v2302, %v2304
      %v2355 = vsel %vm2329, %v2304, %v2306
      %v2356 = vsel %vm2329, %v2306, %v2308
      %v2357 = vsel %vm2329, %v2308, %v2310
      %v2358 = vsel %vm2329, %v2310, %v2312
      %v2359 = vsel %vm2329, %v2312, %v2314
      %v2360 = vsel %vm2329, %v2316, %v2318
      %v2361 = vsel %vm2329, %v2318, %v2320
      %v2362 = vsel %vm2329, %v2320, %v2322
      %v2363 = vsel %vm2329, %v2322, %v2324
      %v2364 = vsel %vm2329, %v2324, %v2326
      %v2365 = vsel %vm2329, %v2326, %v2328
      %v2402 = vsel %vm711, %v2244, 0
      %v2404 = vsel %vm715, %v2360, 0
      %v2406 = vsel %vm715, %v2361, 0
      %v2408 = vsel %vm715, %v2362, 0
      %v2410 = vsel %vm715, %v2363, 0
      %v2412 = vsel %vm715, %v2364, 0
      %v2414 = vsel %vm715, %v2365, 0
      %v2416 = vsel %vm715, %v2328, 0
      %2418 = vmatprep.subr.mxu0 %v2331
      %2419 = vmatpush1.msra.mxu0 %v2330
      %2420 = vmatprep.subr.mxu0 %v2337
      %2421 = vmatpush1.msra.mxu0 %v2336
      %2422 = vmatprep.subr.mxu0 %v2343
      %2423 = vmatpush1.msra.mxu0 %v2342
      %2424 = vmatprep.subr.mxu0 %v2349
      %2425 = vmatpush1.msra.mxu0 %v2348
      %2426 = vmatprep.subr.mxu0 %v2355
      %2427 = vmatpush1.msra.mxu0 %v2354
      %2428 = vmatprep.subr.mxu0 %v2406
      %2429 = vmatpush1.msra.mxu0 %v2404
      %2430 = vmatprep.subr.mxu0 0.0
      %2431 = vmatpush1.msra.mxu0 0.0
      %2432 = vmatprep.subr.mxu0 0.0
      %2433 = vmatpush1.msra.mxu0 0.0
      %2434 = vmatprep.subr.mxu0 0.0
      %2435 = vmatpush1.msra.mxu0 0.0
      %2436 = vmatprep.subr.mxu0 0.0
      %2437 = vmatpush1.msra.mxu0 0.0
      %2438 = vmatprep.subr.mxu0 0.0
      %2439 = vmatpush1.msra.mxu0 0.0
      %2440 = vmatprep.subr.mxu0 0.0
      %2441 = vmatpush1.msra.mxu0 0.0
      %2442 = vmatprep.subr.mxu0 0.0
      %2443 = vmatpush1.msra.mxu0 0.0
      %2444 = vmatprep.subr.mxu0 0.0
      %2445 = vmatpush1.msra.mxu0 0.0
      %2446 = vmatprep.subr.mxu0 0.0
      %2447 = vmatpush1.msra.mxu0 0.0
      %2448 = vmatprep.subr.mxu0 0.0
      %2449 = vmatpush1.msra.mxu0 0.0
      %2450 = vmatprep.subr.mxu0 0.0
      %2451 = vmatpush1.msra.mxu0 0.0
      %2452 = vmatprep.subr.mxu0 0.0
      %2453 = vmatpush1.msra.mxu0 0.0
      %2454 = vmatprep.subr.mxu0 0.0
      %2455 = vmatpush1.msra.mxu0 0.0
      %2456 = vmatprep.subr.mxu0 0.0
      %2457 = vmatpush1.msra.mxu0 0.0
      %2458 = vmatprep.subr.mxu0 0.0
      %2459 = vmatpush1.msra.mxu0 0.0
      %2460 = vmatprep.subr.mxu0 0.0
      %2461 = vmatpush1.msra.mxu0 0.0
      %2462 = vmatprep.subr.mxu0 0.0
      %2463 = vmatpush1.msra.mxu0 0.0
      %2464 = vmatprep.subr.mxu0 0.0
      %2465 = vmatpush1.msra.mxu0 0.0
      %2466 = vmatprep.subr.mxu0 0.0
      %2467 = vmatpush1.msra.mxu0 0.0
      %2468 = vmatprep.subr.mxu0 0.0
      %2469 = vmatpush1.msra.mxu0 0.0
      %2470 = vmatprep.subr.mxu0 0.0
      %2471 = vmatpush1.msra.mxu0 0.0
      %2472 = vmatprep.subr.mxu0 0.0
      %2473 = vmatpush1.msra.mxu0 0.0
      %2474 = vmatprep.subr.mxu0 0.0
      %2475 = vmatpush1.msra.mxu0 0.0
      %2476 = vmatprep.subr.mxu0 0.0
      %2477 = vmatpush1.msra.mxu0 0.0
      %2478 = vmatprep.subr.mxu0 0.0
      %2479 = vmatpush1.msra.mxu0 0.0
      %2480 = vmatprep.subr.mxu0 0.0
      %2481 = vmatpush1.msra.mxu0 0.0
      %2482 = vmatprep.mubr.f32.mxu0 0.0
      %2483 = vmatmul.mubr.f32.gmra.mrb[0].mxu0 %v2402
      %v2484 = vpop.f32.mrb[0].mxu0
      %v2485 = vadd.f32 0.0, %v2484
      %v2486 = vpop.f32.mrb[0].mxu0
      %v2487 = vadd.f32 0.0, %v2486
      %2488 = vdwg.mxu0
      %2489 = vmatprep.subr.mxu0 %v2333
      %2490 = vmatpush1.msra.mxu0 %v2332
      %2491 = vmatprep.subr.mxu0 %v2339
      %2492 = vmatpush1.msra.mxu0 %v2338
      %2493 = vmatprep.subr.mxu0 %v2345
      %2494 = vmatpush1.msra.mxu0 %v2344
      %2495 = vmatprep.subr.mxu0 %v2351
      %2496 = vmatpush1.msra.mxu0 %v2350
      %2497 = vmatprep.subr.mxu0 %v2357
      %2498 = vmatpush1.msra.mxu0 %v2356
      %2499 = vmatprep.subr.mxu0 %v2410
      %2500 = vmatpush1.msra.mxu0 %v2408
      %2501 = vmatprep.subr.mxu0 0.0
      %2502 = vmatpush1.msra.mxu0 0.0
      %2503 = vmatprep.subr.mxu0 0.0
      %2504 = vmatpush1.msra.mxu0 0.0
      %2505 = vmatprep.subr.mxu0 0.0
      %2506 = vmatpush1.msra.mxu0 0.0
      %2507 = vmatprep.subr.mxu0 0.0
      %2508 = vmatpush1.msra.mxu0 0.0
      %2509 = vmatprep.subr.mxu0 0.0
      %2510 = vmatpush1.msra.mxu0 0.0
      %2511 = vmatprep.subr.mxu0 0.0
      %2512 = vmatpush1.msra.mxu0 0.0
      %2513 = vmatprep.subr.mxu0 0.0
      %2514 = vmatpush1.msra.mxu0 0.0
      %2515 = vmatprep.subr.mxu0 0.0
      %2516 = vmatpush1.msra.mxu0 0.0
      %2517 = vmatprep.subr.mxu0 0.0
      %2518 = vmatpush1.msra.mxu0 0.0
      %2519 = vmatprep.subr.mxu0 0.0
      %2520 = vmatpush1.msra.mxu0 0.0
      %2521 = vmatprep.subr.mxu0 0.0
      %2522 = vmatpush1.msra.mxu0 0.0
      %2523 = vmatprep.subr.mxu0 0.0
      %2524 = vmatpush1.msra.mxu0 0.0
      %2525 = vmatprep.subr.mxu0 0.0
      %2526 = vmatpush1.msra.mxu0 0.0
      %2527 = vmatprep.subr.mxu0 0.0
      %2528 = vmatpush1.msra.mxu0 0.0
      %2529 = vmatprep.subr.mxu0 0.0
      %2530 = vmatpush1.msra.mxu0 0.0
      %2531 = vmatprep.subr.mxu0 0.0
      %2532 = vmatpush1.msra.mxu0 0.0
      %2533 = vmatprep.subr.mxu0 0.0
      %2534 = vmatpush1.msra.mxu0 0.0
      %2535 = vmatprep.subr.mxu0 0.0
      %2536 = vmatpush1.msra.mxu0 0.0
      %2537 = vmatprep.subr.mxu0 0.0
      %2538 = vmatpush1.msra.mxu0 0.0
      %2539 = vmatprep.subr.mxu0 0.0
      %2540 = vmatpush1.msra.mxu0 0.0
      %2541 = vmatprep.subr.mxu0 0.0
      %2542 = vmatpush1.msra.mxu0 0.0
      %2543 = vmatprep.subr.mxu0 0.0
      %2544 = vmatpush1.msra.mxu0 0.0
      %2545 = vmatprep.subr.mxu0 0.0
      %2546 = vmatpush1.msra.mxu0 0.0
      %2547 = vmatprep.subr.mxu0 0.0
      %2548 = vmatpush1.msra.mxu0 0.0
      %2549 = vmatprep.subr.mxu0 0.0
      %2550 = vmatpush1.msra.mxu0 0.0
      %2551 = vmatprep.subr.mxu0 0.0
      %2552 = vmatpush1.msra.mxu0 0.0
      %2553 = vmatprep.mubr.f32.mxu0 0.0
      %2554 = vmatmul.mubr.f32.gmra.mrb[0].mxu0 %v2402
      %v2555 = vpop.f32.mrb[0].mxu0
      %v2556 = vadd.f32 0.0, %v2555
      %v2557 = vpop.f32.mrb[0].mxu0
      %v2558 = vadd.f32 0.0, %v2557
      %2559 = vdwg.mxu0
      %2560 = vmatprep.subr.mxu0 %v2335
      %2561 = vmatpush1.msra.mxu0 %v2334
      %2562 = vmatprep.subr.mxu0 %v2341
      %2563 = vmatpush1.msra.mxu0 %v2340
      %2564 = vmatprep.subr.mxu0 %v2347
      %2565 = vmatpush1.msra.mxu0 %v2346
      %2566 = vmatprep.subr.mxu0 %v2353
      %2567 = vmatpush1.msra.mxu0 %v2352
      %2568 = vmatprep.subr.mxu0 %v2359
      %2569 = vmatpush1.msra.mxu0 %v2358
      %2570 = vmatprep.subr.mxu0 %v2414
      %2571 = vmatpush1.msra.mxu0 %v2412
      %2572 = vmatprep.subr.mxu0 0.0
      %2573 = vmatpush1.msra.mxu0 0.0
      %2574 = vmatprep.subr.mxu0 0.0
      %2575 = vmatpush1.msra.mxu0 0.0
      %2576 = vmatprep.subr.mxu0 0.0
      %2577 = vmatpush1.msra.mxu0 0.0
      %2578 = vmatprep.subr.mxu0 0.0
      %2579 = vmatpush1.msra.mxu0 0.0
      %2580 = vmatprep.subr.mxu0 0.0
      %2581 = vmatpush1.msra.mxu0 0.0
      %2582 = vmatprep.subr.mxu0 0.0
      %2583 = vmatpush1.msra.mxu0 0.0
      %2584 = vmatprep.subr.mxu0 0.0
      %2585 = vmatpush1.msra.mxu0 0.0
      %2586 = vmatprep.subr.mxu0 0.0
      %2587 = vmatpush1.msra.mxu0 0.0
      %2588 = vmatprep.subr.mxu0 0.0
      %2589 = vmatpush1.msra.mxu0 0.0
      %2590 = vmatprep.subr.mxu0 0.0
      %2591 = vmatpush1.msra.mxu0 0.0
      %2592 = vmatprep.subr.mxu0 0.0
      %2593 = vmatpush1.msra.mxu0 0.0
      %2594 = vmatprep.subr.mxu0 0.0
      %2595 = vmatpush1.msra.mxu0 0.0
      %2596 = vmatprep.subr.mxu0 0.0
      %2597 = vmatpush1.msra.mxu0 0.0
      %2598 = vmatprep.subr.mxu0 0.0
      %2599 = vmatpush1.msra.mxu0 0.0
      %2600 = vmatprep.subr.mxu0 0.0
      %2601 = vmatpush1.msra.mxu0 0.0
      %2602 = vmatprep.subr.mxu0 0.0
      %2603 = vmatpush1.msra.mxu0 0.0
      %2604 = vmatprep.subr.mxu0 0.0
      %2605 = vmatpush1.msra.mxu0 0.0
      %2606 = vmatprep.subr.mxu0 0.0
      %2607 = vmatpush1.msra.mxu0 0.0
      %2608 = vmatprep.subr.mxu0 0.0
      %2609 = vmatpush1.msra.mxu0 0.0
      %2610 = vmatprep.subr.mxu0 0.0
      %2611 = vmatpush1.msra.mxu0 0.0
      %2612 = vmatprep.subr.mxu0 0.0
      %2613 = vmatpush1.msra.mxu0 0.0
      %2614 = vmatprep.subr.mxu0 0.0
      %2615 = vmatpush1.msra.mxu0 0.0
      %2616 = vmatprep.subr.mxu0 0.0
      %2617 = vmatpush1.msra.mxu0 0.0
      %2618 = vmatprep.subr.mxu0 0.0
      %2619 = vmatpush1.msra.mxu0 0.0
      %2620 = vmatprep.subr.mxu0 0.0
      %2621 = vmatpush1.msra.mxu0 0.0
      %2622 = vmatprep.subr.mxu0 0.0
      %2623 = vmatpush1.msra.mxu0 0.0
      %2624 = vmatprep.mubr.f32.mxu0 0.0
      %2625 = vmatmul.mubr.f32.gmra.mrb[0].mxu0 %v2402
      %v2626 = vpop.f32.mrb[0].mxu0
      %v2627 = vadd.f32 0.0, %v2626
      %v2628 = vpop.f32.mrb[0].mxu0
      %v2629 = vadd.f32 0.0, %v2628
      %2630 = vdwg.mxu0
      %2631 = vmatprep.subr.mxu0 0.0
      %2632 = vmatpush1.msra.mxu0 %v2258
      %2633 = vmatprep.subr.mxu0 0.0
      %2634 = vmatpush1.msra.mxu0 %v2272
      %2635 = vmatprep.subr.mxu0 0.0
      %2636 = vmatpush1.msra.mxu0 %v2286
      %2637 = vmatprep.subr.mxu0 0.0
      %2638 = vmatpush1.msra.mxu0 %v2300
      %2639 = vmatprep.subr.mxu0 0.0
      %2640 = vmatpush1.msra.mxu0 %v2314
      %2641 = vmatprep.subr.mxu0 0.0
      %2642 = vmatpush1.msra.mxu0 %v2416
      %2643 = vmatprep.subr.mxu0 0.0
      %2644 = vmatpush1.msra.mxu0 0.0
      %2645 = vmatprep.subr.mxu0 0.0
      %2646 = vmatpush1.msra.mxu0 0.0
      %2647 = vmatprep.subr.mxu0 0.0
      %2648 = vmatpush1.msra.mxu0 0.0
      %2649 = vmatprep.subr.mxu0 0.0
      %2650 = vmatpush1.msra.mxu0 0.0
      %2651 = vmatprep.subr.mxu0 0.0
      %2652 = vmatpush1.msra.mxu0 0.0
      %2653 = vmatprep.subr.mxu0 0.0
      %2654 = vmatpush1.msra.mxu0 0.0
      %2655 = vmatprep.subr.mxu0 0.0
      %2656 = vmatpush1.msra.mxu0 0.0
      %2657 = vmatprep.subr.mxu0 0.0
      %2658 = vmatpush1.msra.mxu0 0.0
      %2659 = vmatprep.subr.mxu0 0.0
      %2660 = vmatpush1.msra.mxu0 0.0
      %2661 = vmatprep.subr.mxu0 0.0
      %2662 = vmatpush1.msra.mxu0 0.0
      %2663 = vmatprep.subr.mxu0 0.0
      %2664 = vmatpush1.msra.mxu0 0.0
      %2665 = vmatprep.subr.mxu0 0.0
      %2666 = vmatpush1.msra.mxu0 0.0
      %2667 = vmatprep.subr.mxu0 0.0
      %2668 = vmatpush1.msra.mxu0 0.0
      %2669 = vmatprep.subr.mxu0 0.0
      %2670 = vmatpush1.msra.mxu0 0.0
      %2671 = vmatprep.subr.mxu0 0.0
      %2672 = vmatpush1.msra.mxu0 0.0
      %2673 = vmatprep.subr.mxu0 0.0
      %2674 = vmatpush1.msra.mxu0 0.0
      %2675 = vmatprep.subr.mxu0 0.0
      %2676 = vmatpush1.msra.mxu0 0.0
      %2677 = vmatprep.subr.mxu0 0.0
      %2678 = vmatpush1.msra.mxu0 0.0
      %2679 = vmatprep.subr.mxu0 0.0
      %2680 = vmatpush1.msra.mxu0 0.0
      %2681 = vmatprep.subr.mxu0 0.0
      %2682 = vmatpush1.msra.mxu0 0.0
      %2683 = vmatprep.subr.mxu0 0.0
      %2684 = vmatpush1.msra.mxu0 0.0
      %2685 = vmatprep.subr.mxu0 0.0
      %2686 = vmatpush1.msra.mxu0 0.0
      %2687 = vmatprep.subr.mxu0 0.0
      %2688 = vmatpush1.msra.mxu0 0.0
      %2689 = vmatprep.subr.mxu0 0.0
      %2690 = vmatpush1.msra.mxu0 0.0
      %2691 = vmatprep.subr.mxu0 0.0
      %2692 = vmatpush1.msra.mxu0 0.0
      %2693 = vmatprep.subr.mxu0 0.0
      %2694 = vmatpush1.msra.mxu0 0.0
      %2695 = vmatprep.mubr.f32.mxu0 0.0
      %2696 = vmatmul.mubr.f32.gmra.mrb[0].mxu0 %v2402
      %v2697 = vpop.f32.mrb[0].mxu0
      %v2698 = vadd.f32 0.0, %v2697
      %v2699 = vpop.f32.mrb[0].mxu0
      %2700 = vdwg.mxu0
      %v2701 = vadd.f32 %v2236, %v2485
      %v2702 = vadd.f32 %v2237, %v2487
      %v2703 = vadd.f32 %v2238, %v2556
      %v2704 = vadd.f32 %v2239, %v2558
      %v2705 = vadd.f32 %v2240, %v2627
      %v2706 = vadd.f32 %v2241, %v2629
      %v2707 = vadd.f32 %v2242, %v2698
      %s2708 = scalar_lea.vmem %s1, 40
      %v2709 = vld [vmem:[%s2708] sm:$0xff]
      %v2710 = vld [vmem:[%s462] sm:$0xff]
      %v2711 = vld [vmem:[%s462 + $0x8] sm:$0xff]
      %v2712 = vld [vmem:[%s462 + $0x10] sm:$0xff]
      %v2713 = vld [vmem:[%s462 + $0x18] sm:$0xff]
      %v2714 = vld [vmem:[%s462 + $0x20] sm:$0xff]
      %v2715 = vld [vmem:[%s462 + $0x28] sm:$0xff]
      %v2716 = vld [vmem:[%s462 + $0x30] sm:$0xff]
      %v2717 = vld [vmem:[%s462 + $0x38] sm:$0xff]
      %v2718 = vld [vmem:[%s462 + $0x40] sm:$0xff]
      %v2719 = vld [vmem:[%s462 + $0x48] sm:$0xff]
      %v2720 = vld [vmem:[%s462 + $0x50] sm:$0xff]
      %v2721 = vld [vmem:[%s462 + $0x58] sm:$0xff]
      %v2722 = vld [vmem:[%s462 + $0x60] sm:$0xff]
      %v2723 = vld [vmem:[%s462 + $0x68] sm:$0xff]
      %v2724 = vld [vmem:[%s462 + $0x70] sm:$0xff]
      %v2725 = vld [vmem:[%s462 + $0x78] sm:$0xff]
      %v2726 = vld [vmem:[%s462 + $0x80] sm:$0xff]
      %v2727 = vld [vmem:[%s462 + $0x88] sm:$0xff]
      %v2728 = vld [vmem:[%s462 + $0x90] sm:$0xff]
      %v2729 = vld [vmem:[%s462 + $0x98] sm:$0xff]
      %v2730 = vld [vmem:[%s462 + $0xa0] sm:$0xff]
      %v2731 = vld [vmem:[%s462 + $0xa8] sm:$0xff]
      %v2732 = vld [vmem:[%s462 + $0xb0] sm:$0xff]
      %v2733 = vld [vmem:[%s462 + $0xb8] sm:$0xff]
      %v2734 = vld [vmem:[%s462 + $0xc0] sm:$0xff]
      %v2735 = vld [vmem:[%s462 + $0xc8] sm:$0xff]
      %v2736 = vld [vmem:[%s462 + $0xd0] sm:$0xff]
      %v2737 = vld [vmem:[%s462 + $0xd8] sm:$0xff]
      %v2738 = vld [vmem:[%s462 + $0xe0] sm:$0xff]
      %v2739 = vld [vmem:[%s462 + $0xe8] sm:$0xff]
      %v2740 = vld [vmem:[%s462 + $0xf0] sm:$0xff]
      %v2741 = vld [vmem:[%s462 + $0xf8] sm:$0xff]
      %v2742 = vld [vmem:[%s462 + $0x100] sm:$0xff]
      %v2743 = vld [vmem:[%s462 + $0x108] sm:$0xff]
      %v2744 = vld [vmem:[%s462 + $0x110] sm:$0xff]
      %v2745 = vld [vmem:[%s462 + $0x118] sm:$0xff]
      %v2746 = vld [vmem:[%s462 + $0x120] sm:$0xff]
      %v2747 = vld [vmem:[%s462 + $0x128] sm:$0xff]
      %v2748 = vld [vmem:[%s462 + $0x130] sm:$0xff]
      %v2749 = vld [vmem:[%s462 + $0x138] sm:$0xff]
      %v2750 = vld [vmem:[%s462 + $0x140] sm:$0x3]
      %v2751 = vld [vmem:[%s462 + $0x148] sm:$0x3]
      %v2752 = vld [vmem:[%s462 + $0x150] sm:$0x3]
      %v2753 = vld [vmem:[%s462 + $0x158] sm:$0x3]
      %v2754 = vld [vmem:[%s462 + $0x160] sm:$0x3]
      %v2755 = vld [vmem:[%s462 + $0x168] sm:$0x3]
      %v2756 = vld [vmem:[%s462 + $0x170] sm:$0x3]
      %v2757 = vld [vmem:[%s462 + $0x178] sm:$0x3]
      %2806 = vrot.lane.b32.xlu0 %v2710, 8
      %v2807 = vpop.permute.xlu0 %2806
      %2808 = vrot.lane.b32.xlu0 %v2711, 8
      %v2809 = vpop.permute.xlu0 %2808
      %2810 = vrot.lane.b32.xlu0 %v2712, 8
      %v2811 = vpop.permute.xlu0 %2810
      %2812 = vrot.lane.b32.xlu0 %v2713, 8
      %v2813 = vpop.permute.xlu0 %2812
      %2814 = vrot.lane.b32.xlu0 %v2714, 8
      %v2815 = vpop.permute.xlu0 %2814
      %2816 = vrot.lane.b32.xlu0 %v2715, 8
      %v2817 = vpop.permute.xlu0 %2816
      %2818 = vrot.lane.b32.xlu0 %v2716, 8
      %v2819 = vpop.permute.xlu0 %2818
      %2820 = vrot.lane.b32.xlu0 %v2717, 8
      %v2821 = vpop.permute.xlu0 %2820
      %2822 = vrot.lane.b32.xlu0 %v2718, 8
      %v2823 = vpop.permute.xlu0 %2822
      %2824 = vrot.lane.b32.xlu0 %v2719, 8
      %v2825 = vpop.permute.xlu0 %2824
      %2826 = vrot.lane.b32.xlu0 %v2720, 8
      %v2827 = vpop.permute.xlu0 %2826
      %2828 = vrot.lane.b32.xlu0 %v2721, 8
      %v2829 = vpop.permute.xlu0 %2828
      %2830 = vrot.lane.b32.xlu0 %v2722, 8
      %v2831 = vpop.permute.xlu0 %2830
      %2832 = vrot.lane.b32.xlu0 %v2723, 8
      %v2833 = vpop.permute.xlu0 %2832
      %2834 = vrot.lane.b32.xlu0 %v2724, 8
      %v2835 = vpop.permute.xlu0 %2834
      %2836 = vrot.lane.b32.xlu0 %v2725, 8
      %v2837 = vpop.permute.xlu0 %2836
      %2838 = vrot.lane.b32.xlu0 %v2726, 8
      %v2839 = vpop.permute.xlu0 %2838
      %2840 = vrot.lane.b32.xlu0 %v2727, 8
      %v2841 = vpop.permute.xlu0 %2840
      %2842 = vrot.lane.b32.xlu0 %v2728, 8
      %v2843 = vpop.permute.xlu0 %2842
      %2844 = vrot.lane.b32.xlu0 %v2729, 8
      %v2845 = vpop.permute.xlu0 %2844
      %2846 = vrot.lane.b32.xlu0 %v2730, 8
      %v2847 = vpop.permute.xlu0 %2846
      %2848 = vrot.lane.b32.xlu0 %v2731, 8
      %v2849 = vpop.permute.xlu0 %2848
      %2850 = vrot.lane.b32.xlu0 %v2732, 8
      %v2851 = vpop.permute.xlu0 %2850
      %2852 = vrot.lane.b32.xlu0 %v2733, 8
      %v2853 = vpop.permute.xlu0 %2852
      %2854 = vrot.lane.b32.xlu0 %v2734, 8
      %v2855 = vpop.permute.xlu0 %2854
      %2856 = vrot.lane.b32.xlu0 %v2735, 8
      %v2857 = vpop.permute.xlu0 %2856
      %2858 = vrot.lane.b32.xlu0 %v2736, 8
      %v2859 = vpop.permute.xlu0 %2858
      %2860 = vrot.lane.b32.xlu0 %v2737, 8
      %v2861 = vpop.permute.xlu0 %2860
      %2862 = vrot.lane.b32.xlu0 %v2738, 8
      %v2863 = vpop.permute.xlu0 %2862
      %2864 = vrot.lane.b32.xlu0 %v2739, 8
      %v2865 = vpop.permute.xlu0 %2864
      %2866 = vrot.lane.b32.xlu0 %v2740, 8
      %v2867 = vpop.permute.xlu0 %2866
      %2868 = vrot.lane.b32.xlu0 %v2741, 8
      %v2869 = vpop.permute.xlu0 %2868
      %2870 = vrot.lane.b32.xlu0 %v2742, 8
      %v2871 = vpop.permute.xlu0 %2870
      %2872 = vrot.lane.b32.xlu0 %v2743, 8
      %v2873 = vpop.permute.xlu0 %2872
      %2874 = vrot.lane.b32.xlu0 %v2744, 8
      %v2875 = vpop.permute.xlu0 %2874
      %2876 = vrot.lane.b32.xlu0 %v2745, 8
      %v2877 = vpop.permute.xlu0 %2876
      %2878 = vrot.lane.b32.xlu0 %v2746, 8
      %v2879 = vpop.permute.xlu0 %2878
      %2880 = vrot.lane.b32.xlu0 %v2747, 8
      %v2881 = vpop.permute.xlu0 %2880
      %2882 = vrot.lane.b32.xlu0 %v2748, 8
      %v2883 = vpop.permute.xlu0 %2882
      %2884 = vrot.lane.b32.xlu0 %v2749, 8
      %v2885 = vpop.permute.xlu0 %2884
      %2886 = vrot.lane.b32.xlu0 %v2750, 8
      %v2887 = vpop.permute.xlu0 %2886
      %2888 = vrot.lane.b32.xlu0 %v2751, 8
      %v2889 = vpop.permute.xlu0 %2888
      %2890 = vrot.lane.b32.xlu0 %v2752, 8
      %v2891 = vpop.permute.xlu0 %2890
      %2892 = vrot.lane.b32.xlu0 %v2753, 8
      %v2893 = vpop.permute.xlu0 %2892
      %2894 = vrot.lane.b32.xlu0 %v2754, 8
      %v2895 = vpop.permute.xlu0 %2894
      %2896 = vrot.lane.b32.xlu0 %v2755, 8
      %v2897 = vpop.permute.xlu0 %2896
      %2898 = vrot.lane.b32.xlu0 %v2756, 8
      %v2899 = vpop.permute.xlu0 %2898
      %2900 = vrot.lane.b32.xlu0 %v2757, 8
      %v2901 = vpop.permute.xlu0 %2900
      %vm2902 = vcmask 64512
      %v2903 = vsel %vm2902, %v2807, %v2809
      %v2904 = vsel %vm2902, %v2809, %v2811
      %v2905 = vsel %vm2902, %v2811, %v2813
      %v2906 = vsel %vm2902, %v2813, %v2815
      %v2907 = vsel %vm2902, %v2815, %v2817
      %v2908 = vsel %vm2902, %v2817, %v2819
      %v2909 = vsel %vm2902, %v2819, %v2821
      %v2910 = vsel %vm2902, %v2823, %v2825
      %v2911 = vsel %vm2902, %v2825, %v2827
      %v2912 = vsel %vm2902, %v2827, %v2829
      %v2913 = vsel %vm2902, %v2829, %v2831
      %v2914 = vsel %vm2902, %v2831, %v2833
      %v2915 = vsel %vm2902, %v2833, %v2835
      %v2916 = vsel %vm2902, %v2835, %v2837
      %v2917 = vsel %vm2902, %v2839, %v2841
      %v2918 = vsel %vm2902, %v2841, %v2843
      %v2919 = vsel %vm2902, %v2843, %v2845
      %v2920 = vsel %vm2902, %v2845, %v2847
      %v2921 = vsel %vm2902, %v2847, %v2849
      %v2922 = vsel %vm2902, %v2849, %v2851
      %v2923 = vsel %vm2902, %v2851, %v2853
      %v2924 = vsel %vm2902, %v2855, %v2857
      %v2925 = vsel %vm2902, %v2857, %v2859
      %v2926 = vsel %vm2902, %v2859, %v2861
      %v2927 = vsel %vm2902, %v2861, %v2863
      %v2928 = vsel %vm2902, %v2863, %v2865
      %v2929 = vsel %vm2902, %v2865, %v2867
      %v2930 = vsel %vm2902, %v2867, %v2869
      %v2931 = vsel %vm2902, %v2871, %v2873
      %v2932 = vsel %vm2902, %v2873, %v2875
      %v2933 = vsel %vm2902, %v2875, %v2877
      %v2934 = vsel %vm2902, %v2877, %v2879
      %v2935 = vsel %vm2902, %v2879, %v2881
      %v2936 = vsel %vm2902, %v2881, %v2883
      %v2937 = vsel %vm2902, %v2883, %v2885
      %v2938 = vsel %vm2902, %v2887, %v2889
      %v2939 = vsel %vm2902, %v2889, %v2891
      %v2940 = vsel %vm2902, %v2891, %v2893
      %v2941 = vsel %vm2902, %v2893, %v2895
      %v2942 = vsel %vm2902, %v2895, %v2897
      %v2943 = vsel %vm2902, %v2897, %v2899
      %v2944 = vsel %vm2902, %v2899, %v2901
      %v2981 = vsel %vm711, %v2709, 0
      %v2983 = vsel %vm715, %v2938, 0
      %v2985 = vsel %vm715, %v2939, 0
      %v2987 = vsel %vm715, %v2940, 0
      %v2989 = vsel %vm715, %v2941, 0
      %v2991 = vsel %vm715, %v2942, 0
      %v2993 = vsel %vm715, %v2943, 0
      %v2995 = vsel %vm715, %v2944, 0
      %2997 = vmatprep.subr.mxu0 %v2904
      %2998 = vmatpush1.msra.mxu0 %v2903
      %2999 = vmatprep.subr.mxu0 %v2911
      %3000 = vmatpush1.msra.mxu0 %v2910
      %3001 = vmatprep.subr.mxu0 %v2918
      %3002 = vmatpush1.msra.mxu0 %v2917
      %3003 = vmatprep.subr.mxu0 %v2925
      %3004 = vmatpush1.msra.mxu0 %v2924
      %3005 = vmatprep.subr.mxu0 %v2932
      %3006 = vmatpush1.msra.mxu0 %v2931
      %3007 = vmatprep.subr.mxu0 %v2985
      %3008 = vmatpush1.msra.mxu0 %v2983
      %3009 = vmatprep.subr.mxu0 0.0
      %3010 = vmatpush1.msra.mxu0 0.0
      %3011 = vmatprep.subr.mxu0 0.0
      %3012 = vmatpush1.msra.mxu0 0.0
      %3013 = vmatprep.subr.mxu0 0.0
      %3014 = vmatpush1.msra.mxu0 0.0
      %3015 = vmatprep.subr.mxu0 0.0
      %3016 = vmatpush1.msra.mxu0 0.0
      %3017 = vmatprep.subr.mxu0 0.0
      %3018 = vmatpush1.msra.mxu0 0.0
      %3019 = vmatprep.subr.mxu0 0.0
      %3020 = vmatpush1.msra.mxu0 0.0
      %3021 = vmatprep.subr.mxu0 0.0
      %3022 = vmatpush1.msra.mxu0 0.0
      %3023 = vmatprep.subr.mxu0 0.0
      %3024 = vmatpush1.msra.mxu0 0.0
      %3025 = vmatprep.subr.mxu0 0.0
      %3026 = vmatpush1.msra.mxu0 0.0
      %3027 = vmatprep.subr.mxu0 0.0
      %3028 = vmatpush1.msra.mxu0 0.0
      %3029 = vmatprep.subr.mxu0 0.0
      %3030 = vmatpush1.msra.mxu0 0.0
      %3031 = vmatprep.subr.mxu0 0.0
      %3032 = vmatpush1.msra.mxu0 0.0
      %3033 = vmatprep.subr.mxu0 0.0
      %3034 = vmatpush1.msra.mxu0 0.0
      %3035 = vmatprep.subr.mxu0 0.0
      %3036 = vmatpush1.msra.mxu0 0.0
      %3037 = vmatprep.subr.mxu0 0.0
      %3038 = vmatpush1.msra.mxu0 0.0
      %3039 = vmatprep.subr.mxu0 0.0
      %3040 = vmatpush1.msra.mxu0 0.0
      %3041 = vmatprep.subr.mxu0 0.0
      %3042 = vmatpush1.msra.mxu0 0.0
      %3043 = vmatprep.subr.mxu0 0.0
      %3044 = vmatpush1.msra.mxu0 0.0
      %3045 = vmatprep.subr.mxu0 0.0
      %3046 = vmatpush1.msra.mxu0 0.0
      %3047 = vmatprep.subr.mxu0 0.0
      %3048 = vmatpush1.msra.mxu0 0.0
      %3049 = vmatprep.subr.mxu0 0.0
      %3050 = vmatpush1.msra.mxu0 0.0
      %3051 = vmatprep.subr.mxu0 0.0
      %3052 = vmatpush1.msra.mxu0 0.0
      %3053 = vmatprep.subr.mxu0 0.0
      %3054 = vmatpush1.msra.mxu0 0.0
      %3055 = vmatprep.subr.mxu0 0.0
      %3056 = vmatpush1.msra.mxu0 0.0
      %3057 = vmatprep.subr.mxu0 0.0
      %3058 = vmatpush1.msra.mxu0 0.0
      %3059 = vmatprep.subr.mxu0 0.0
      %3060 = vmatpush1.msra.mxu0 0.0
      %3061 = vmatprep.mubr.f32.mxu0 0.0
      %3062 = vmatmul.mubr.f32.gmra.mrb[0].mxu0 %v2981
      %v3063 = vpop.f32.mrb[0].mxu0
      %v3064 = vadd.f32 0.0, %v3063
      %v3065 = vpop.f32.mrb[0].mxu0
      %v3066 = vadd.f32 0.0, %v3065
      %3067 = vdwg.mxu0
      %3068 = vmatprep.subr.mxu0 %v2906
      %3069 = vmatpush1.msra.mxu0 %v2905
      %3070 = vmatprep.subr.mxu0 %v2913
      %3071 = vmatpush1.msra.mxu0 %v2912
      %3072 = vmatprep.subr.mxu0 %v2920
      %3073 = vmatpush1.msra.mxu0 %v2919
      %3074 = vmatprep.subr.mxu0 %v2927
      %3075 = vmatpush1.msra.mxu0 %v2926
      %3076 = vmatprep.subr.mxu0 %v2934
      %3077 = vmatpush1.msra.mxu0 %v2933
      %3078 = vmatprep.subr.mxu0 %v2989
      %3079 = vmatpush1.msra.mxu0 %v2987
      %3080 = vmatprep.subr.mxu0 0.0
      %3081 = vmatpush1.msra.mxu0 0.0
      %3082 = vmatprep.subr.mxu0 0.0
      %3083 = vmatpush1.msra.mxu0 0.0
      %3084 = vmatprep.subr.mxu0 0.0
      %3085 = vmatpush1.msra.mxu0 0.0
      %3086 = vmatprep.subr.mxu0 0.0
      %3087 = vmatpush1.msra.mxu0 0.0
      %3088 = vmatprep.subr.mxu0 0.0
      %3089 = vmatpush1.msra.mxu0 0.0
      %3090 = vmatprep.subr.mxu0 0.0
      %3091 = vmatpush1.msra.mxu0 0.0
      %3092 = vmatprep.subr.mxu0 0.0
      %3093 = vmatpush1.msra.mxu0 0.0
      %3094 = vmatprep.subr.mxu0 0.0
      %3095 = vmatpush1.msra.mxu0 0.0
      %3096 = vmatprep.subr.mxu0 0.0
      %3097 = vmatpush1.msra.mxu0 0.0
      %3098 = vmatprep.subr.mxu0 0.0
      %3099 = vmatpush1.msra.mxu0 0.0
      %3100 = vmatprep.subr.mxu0 0.0
      %3101 = vmatpush1.msra.mxu0 0.0
      %3102 = vmatprep.subr.mxu0 0.0
      %3103 = vmatpush1.msra.mxu0 0.0
      %3104 = vmatprep.subr.mxu0 0.0
      %3105 = vmatpush1.msra.mxu0 0.0
      %3106 = vmatprep.subr.mxu0 0.0
      %3107 = vmatpush1.msra.mxu0 0.0
      %3108 = vmatprep.subr.mxu0 0.0
      %3109 = vmatpush1.msra.mxu0 0.0
      %3110 = vmatprep.subr.mxu0 0.0
      %3111 = vmatpush1.msra.mxu0 0.0
      %3112 = vmatprep.subr.mxu0 0.0
      %3113 = vmatpush1.msra.mxu0 0.0
      %3114 = vmatprep.subr.mxu0 0.0
      %3115 = vmatpush1.msra.mxu0 0.0
      %3116 = vmatprep.subr.mxu0 0.0
      %3117 = vmatpush1.msra.mxu0 0.0
      %3118 = vmatprep.subr.mxu0 0.0
      %3119 = vmatpush1.msra.mxu0 0.0
      %3120 = vmatprep.subr.mxu0 0.0
      %3121 = vmatpush1.msra.mxu0 0.0
      %3122 = vmatprep.subr.mxu0 0.0
      %3123 = vmatpush1.msra.mxu0 0.0
      %3124 = vmatprep.subr.mxu0 0.0
      %3125 = vmatpush1.msra.mxu0 0.0
      %3126 = vmatprep.subr.mxu0 0.0
      %3127 = vmatpush1.msra.mxu0 0.0
      %3128 = vmatprep.subr.mxu0 0.0
      %3129 = vmatpush1.msra.mxu0 0.0
      %3130 = vmatprep.subr.mxu0 0.0
      %3131 = vmatpush1.msra.mxu0 0.0
      %3132 = vmatprep.mubr.f32.mxu0 0.0
      %3133 = vmatmul.mubr.f32.gmra.mrb[0].mxu0 %v2981
      %v3134 = vpop.f32.mrb[0].mxu0
      %v3135 = vadd.f32 0.0, %v3134
      %v3136 = vpop.f32.mrb[0].mxu0
      %v3137 = vadd.f32 0.0, %v3136
      %3138 = vdwg.mxu0
      %3139 = vmatprep.subr.mxu0 %v2908
      %3140 = vmatpush1.msra.mxu0 %v2907
      %3141 = vmatprep.subr.mxu0 %v2915
      %3142 = vmatpush1.msra.mxu0 %v2914
      %3143 = vmatprep.subr.mxu0 %v2922
      %3144 = vmatpush1.msra.mxu0 %v2921
      %3145 = vmatprep.subr.mxu0 %v2929
      %3146 = vmatpush1.msra.mxu0 %v2928
      %3147 = vmatprep.subr.mxu0 %v2936
      %3148 = vmatpush1.msra.mxu0 %v2935
      %3149 = vmatprep.subr.mxu0 %v2993
      %3150 = vmatpush1.msra.mxu0 %v2991
      %3151 = vmatprep.subr.mxu0 0.0
      %3152 = vmatpush1.msra.mxu0 0.0
      %3153 = vmatprep.subr.mxu0 0.0
      %3154 = vmatpush1.msra.mxu0 0.0
      %3155 = vmatprep.subr.mxu0 0.0
      %3156 = vmatpush1.msra.mxu0 0.0
      %3157 = vmatprep.subr.mxu0 0.0
      %3158 = vmatpush1.msra.mxu0 0.0
      %3159 = vmatprep.subr.mxu0 0.0
      %3160 = vmatpush1.msra.mxu0 0.0
      %3161 = vmatprep.subr.mxu0 0.0
      %3162 = vmatpush1.msra.mxu0 0.0
      %3163 = vmatprep.subr.mxu0 0.0
      %3164 = vmatpush1.msra.mxu0 0.0
      %3165 = vmatprep.subr.mxu0 0.0
      %3166 = vmatpush1.msra.mxu0 0.0
      %3167 = vmatprep.subr.mxu0 0.0
      %3168 = vmatpush1.msra.mxu0 0.0
      %3169 = vmatprep.subr.mxu0 0.0
      %3170 = vmatpush1.msra.mxu0 0.0
      %3171 = vmatprep.subr.mxu0 0.0
      %3172 = vmatpush1.msra.mxu0 0.0
      %3173 = vmatprep.subr.mxu0 0.0
      %3174 = vmatpush1.msra.mxu0 0.0
      %3175 = vmatprep.subr.mxu0 0.0
      %3176 = vmatpush1.msra.mxu0 0.0
      %3177 = vmatprep.subr.mxu0 0.0
      %3178 = vmatpush1.msra.mxu0 0.0
      %3179 = vmatprep.subr.mxu0 0.0
      %3180 = vmatpush1.msra.mxu0 0.0
      %3181 = vmatprep.subr.mxu0 0.0
      %3182 = vmatpush1.msra.mxu0 0.0
      %3183 = vmatprep.subr.mxu0 0.0
      %3184 = vmatpush1.msra.mxu0 0.0
      %3185 = vmatprep.subr.mxu0 0.0
      %3186 = vmatpush1.msra.mxu0 0.0
      %3187 = vmatprep.subr.mxu0 0.0
      %3188 = vmatpush1.msra.mxu0 0.0
      %3189 = vmatprep.subr.mxu0 0.0
      %3190 = vmatpush1.msra.mxu0 0.0
      %3191 = vmatprep.subr.mxu0 0.0
      %3192 = vmatpush1.msra.mxu0 0.0
      %3193 = vmatprep.subr.mxu0 0.0
      %3194 = vmatpush1.msra.mxu0 0.0
      %3195 = vmatprep.subr.mxu0 0.0
      %3196 = vmatpush1.msra.mxu0 0.0
      %3197 = vmatprep.subr.mxu0 0.0
      %3198 = vmatpush1.msra.mxu0 0.0
      %3199 = vmatprep.subr.mxu0 0.0
      %3200 = vmatpush1.msra.mxu0 0.0
      %3201 = vmatprep.subr.mxu0 0.0
      %3202 = vmatpush1.msra.mxu0 0.0
      %3203 = vmatprep.mubr.f32.mxu0 0.0
      %3204 = vmatmul.mubr.f32.gmra.mrb[0].mxu0 %v2981
      %v3205 = vpop.f32.mrb[0].mxu0
      %v3206 = vadd.f32 0.0, %v3205
      %v3207 = vpop.f32.mrb[0].mxu0
      %v3208 = vadd.f32 0.0, %v3207
      %3209 = vdwg.mxu0
      %3210 = vmatprep.subr.mxu0 0.0
      %3211 = vmatpush1.msra.mxu0 %v2909
      %3212 = vmatprep.subr.mxu0 0.0
      %3213 = vmatpush1.msra.mxu0 %v2916
      %3214 = vmatprep.subr.mxu0 0.0
      %3215 = vmatpush1.msra.mxu0 %v2923
      %3216 = vmatprep.subr.mxu0 0.0
      %3217 = vmatpush1.msra.mxu0 %v2930
      %3218 = vmatprep.subr.mxu0 0.0
      %3219 = vmatpush1.msra.mxu0 %v2937
      %3220 = vmatprep.subr.mxu0 0.0
      %3221 = vmatpush1.msra.mxu0 %v2995
      %3222 = vmatprep.subr.mxu0 0.0
      %3223 = vmatpush1.msra.mxu0 0.0
      %3224 = vmatprep.subr.mxu0 0.0
      %3225 = vmatpush1.msra.mxu0 0.0
      %3226 = vmatprep.subr.mxu0 0.0
      %3227 = vmatpush1.msra.mxu0 0.0
      %3228 = vmatprep.subr.mxu0 0.0
      %3229 = vmatpush1.msra.mxu0 0.0
      %3230 = vmatprep.subr.mxu0 0.0
      %3231 = vmatpush1.msra.mxu0 0.0
      %3232 = vmatprep.subr.mxu0 0.0
      %3233 = vmatpush1.msra.mxu0 0.0
      %3234 = vmatprep.subr.mxu0 0.0
      %3235 = vmatpush1.msra.mxu0 0.0
      %3236 = vmatprep.subr.mxu0 0.0
      %3237 = vmatpush1.msra.mxu0 0.0
      %3238 = vmatprep.subr.mxu0 0.0
      %3239 = vmatpush1.msra.mxu0 0.0
      %3240 = vmatprep.subr.mxu0 0.0
      %3241 = vmatpush1.msra.mxu0 0.0
      %3242 = vmatprep.subr.mxu0 0.0
      %3243 = vmatpush1.msra.mxu0 0.0
      %3244 = vmatprep.subr.mxu0 0.0
      %3245 = vmatpush1.msra.mxu0 0.0
      %3246 = vmatprep.subr.mxu0 0.0
      %3247 = vmatpush1.msra.mxu0 0.0
      %3248 = vmatprep.subr.mxu0 0.0
      %3249 = vmatpush1.msra.mxu0 0.0
      %3250 = vmatprep.subr.mxu0 0.0
      %3251 = vmatpush1.msra.mxu0 0.0
      %3252 = vmatprep.subr.mxu0 0.0
      %3253 = vmatpush1.msra.mxu0 0.0
      %3254 = vmatprep.subr.mxu0 0.0
      %3255 = vmatpush1.msra.mxu0 0.0
      %3256 = vmatprep.subr.mxu0 0.0
      %3257 = vmatpush1.msra.mxu0 0.0
      %3258 = vmatprep.subr.mxu0 0.0
      %3259 = vmatpush1.msra.mxu0 0.0
      %3260 = vmatprep.subr.mxu0 0.0
      %3261 = vmatpush1.msra.mxu0 0.0
      %3262 = vmatprep.subr.mxu0 0.0
      %3263 = vmatpush1.msra.mxu0 0.0
      %3264 = vmatprep.subr.mxu0 0.0
      %3265 = vmatpush1.msra.mxu0 0.0
      %3266 = vmatprep.subr.mxu0 0.0
      %3267 = vmatpush1.msra.mxu0 0.0
      %3268 = vmatprep.subr.mxu0 0.0
      %3269 = vmatpush1.msra.mxu0 0.0
      %3270 = vmatprep.subr.mxu0 0.0
      %3271 = vmatpush1.msra.mxu0 0.0
      %3272 = vmatprep.subr.mxu0 0.0
      %3273 = vmatpush1.msra.mxu0 0.0
      %3274 = vmatprep.mubr.f32.mxu0 0.0
      %3275 = vmatmul.mubr.f32.gmra.mrb[0].mxu0 %v2981
      %v3276 = vpop.f32.mrb[0].mxu0
      %v3277 = vadd.f32 0.0, %v3276
      %v3278 = vpop.f32.mrb[0].mxu0
      %3279 = vdwg.mxu0
      %v3280 = vadd.f32 %v2701, %v3064
      %v3281 = vadd.f32 %v2702, %v3066
      %v3282 = vadd.f32 %v2703, %v3135
      %v3283 = vadd.f32 %v2704, %v3137
      %v3284 = vadd.f32 %v2705, %v3206
      %v3285 = vadd.f32 %v2706, %v3208
      %v3286 = vadd.f32 %v2707, %v3277
      %s3287 = scalar_lea.vmem %s1, 48
      %v3288 = vld [vmem:[%s3287] sm:$0xff]
      %3289 = vrot.lane.b32.xlu0 %v2711, 56
      %v3290 = vpop.permute.xlu0 %3289
      %3291 = vrot.lane.b32.xlu0 %v2712, 56
      %v3292 = vpop.permute.xlu0 %3291
      %3293 = vrot.lane.b32.xlu0 %v2713, 56
      %v3294 = vpop.permute.xlu0 %3293
      %3295 = vrot.lane.b32.xlu0 %v2714, 56
      %v3296 = vpop.permute.xlu0 %3295
      %3297 = vrot.lane.b32.xlu0 %v2715, 56
      %v3298 = vpop.permute.xlu0 %3297
      %3299 = vrot.lane.b32.xlu0 %v2716, 56
      %v3300 = vpop.permute.xlu0 %3299
      %3301 = vrot.lane.b32.xlu0 %v2717, 56
      %v3302 = vpop.permute.xlu0 %3301
      %3303 = vrot.lane.b32.xlu0 %v2719, 56
      %v3304 = vpop.permute.xlu0 %3303
      %3305 = vrot.lane.b32.xlu0 %v2720, 56
      %v3306 = vpop.permute.xlu0 %3305
      %3307 = vrot.lane.b32.xlu0 %v2721, 56
      %v3308 = vpop.permute.xlu0 %3307
      %3309 = vrot.lane.b32.xlu0 %v2722, 56
      %v3310 = vpop.permute.xlu0 %3309
      %3311 = vrot.lane.b32.xlu0 %v2723, 56
      %v3312 = vpop.permute.xlu0 %3311
      %3313 = vrot.lane.b32.xlu0 %v2724, 56
      %v3314 = vpop.permute.xlu0 %3313
      %3315 = vrot.lane.b32.xlu0 %v2725, 56
      %v3316 = vpop.permute.xlu0 %3315
      %3317 = vrot.lane.b32.xlu0 %v2727, 56
      %v3318 = vpop.permute.xlu0 %3317
      %3319 = vrot.lane.b32.xlu0 %v2728, 56
      %v3320 = vpop.permute.xlu0 %3319
      %3321 = vrot.lane.b32.xlu0 %v2729, 56
      %v3322 = vpop.permute.xlu0 %3321
      %3323 = vrot.lane.b32.xlu0 %v2730, 56
      %v3324 = vpop.permute.xlu0 %3323
      %3325 = vrot.lane.b32.xlu0 %v2731, 56
      %v3326 = vpop.permute.xlu0 %3325
      %3327 = vrot.lane.b32.xlu0 %v2732, 56
      %v3328 = vpop.permute.xlu0 %3327
      %3329 = vrot.lane.b32.xlu0 %v2733, 56
      %v3330 = vpop.permute.xlu0 %3329
      %3331 = vrot.lane.b32.xlu0 %v2735, 56
      %v3332 = vpop.permute.xlu0 %3331
      %3333 = vrot.lane.b32.xlu0 %v2736, 56
      %v3334 = vpop.permute.xlu0 %3333
      %3335 = vrot.lane.b32.xlu0 %v2737, 56
      %v3336 = vpop.permute.xlu0 %3335
      %3337 = vrot.lane.b32.xlu0 %v2738, 56
      %v3338 = vpop.permute.xlu0 %3337
      %3339 = vrot.lane.b32.xlu0 %v2739, 56
      %v3340 = vpop.permute.xlu0 %3339
      %3341 = vrot.lane.b32.xlu0 %v2740, 56
      %v3342 = vpop.permute.xlu0 %3341
      %3343 = vrot.lane.b32.xlu0 %v2741, 56
      %v3344 = vpop.permute.xlu0 %3343
      %3345 = vrot.lane.b32.xlu0 %v2743, 56
      %v3346 = vpop.permute.xlu0 %3345
      %3347 = vrot.lane.b32.xlu0 %v2744, 56
      %v3348 = vpop.permute.xlu0 %3347
      %3349 = vrot.lane.b32.xlu0 %v2745, 56
      %v3350 = vpop.permute.xlu0 %3349
      %3351 = vrot.lane.b32.xlu0 %v2746, 56
      %v3352 = vpop.permute.xlu0 %3351
      %3353 = vrot.lane.b32.xlu0 %v2747, 56
      %v3354 = vpop.permute.xlu0 %3353
      %3355 = vrot.lane.b32.xlu0 %v2748, 56
      %v3356 = vpop.permute.xlu0 %3355
      %3357 = vrot.lane.b32.xlu0 %v2749, 56
      %v3358 = vpop.permute.xlu0 %3357
      %3359 = vrot.lane.b32.xlu0 %v2751, 56
      %v3360 = vpop.permute.xlu0 %3359
      %3361 = vrot.lane.b32.xlu0 %v2752, 56
      %v3362 = vpop.permute.xlu0 %3361
      %3363 = vrot.lane.b32.xlu0 %v2753, 56
      %v3364 = vpop.permute.xlu0 %3363
      %3365 = vrot.lane.b32.xlu0 %v2754, 56
      %v3366 = vpop.permute.xlu0 %3365
      %3367 = vrot.lane.b32.xlu0 %v2755, 56
      %v3368 = vpop.permute.xlu0 %3367
      %3369 = vrot.lane.b32.xlu0 %v2756, 56
      %v3370 = vpop.permute.xlu0 %3369
      %3371 = vrot.lane.b32.xlu0 %v2757, 56
      %v3372 = vpop.permute.xlu0 %3371
      %vm3373 = vcmask 457728
      %v3374 = vsel %vm3373, %v3290, %v3292
      %v3375 = vsel %vm3373, %v3292, %v3294
      %v3376 = vsel %vm3373, %v3294, %v3296
      %v3377 = vsel %vm3373, %v3296, %v3298
      %v3378 = vsel %vm3373, %v3298, %v3300
      %v3379 = vsel %vm3373, %v3300, %v3302
      %v3380 = vsel %vm3373, %v3304, %v3306
      %v3381 = vsel %vm3373, %v3306, %v3308
      %v3382 = vsel %vm3373, %v3308, %v3310
      %v3383 = vsel %vm3373, %v3310, %v3312
      %v3384 = vsel %vm3373, %v3312, %v3314
      %v3385 = vsel %vm3373, %v3314, %v3316
      %v3386 = vsel %vm3373, %v3318, %v3320
      %v3387 = vsel %vm3373, %v3320, %v3322
      %v3388 = vsel %vm3373, %v3322, %v3324
      %v3389 = vsel %vm3373, %v3324, %v3326
      %v3390 = vsel %vm3373, %v3326, %v3328
      %v3391 = vsel %vm3373, %v3328, %v3330
      %v3392 = vsel %vm3373, %v3332, %v3334
      %v3393 = vsel %vm3373, %v3334, %v3336
      %v3394 = vsel %vm3373, %v3336, %v3338
      %v3395 = vsel %vm3373, %v3338, %v3340
      %v3396 = vsel %vm3373, %v3340, %v3342
      %v3397 = vsel %vm3373, %v3342, %v3344
      %v3398 = vsel %vm3373, %v3346, %v3348
      %v3399 = vsel %vm3373, %v3348, %v3350
      %v3400 = vsel %vm3373, %v3350, %v3352
      %v3401 = vsel %vm3373, %v3352, %v3354
      %v3402 = vsel %vm3373, %v3354, %v3356
      %v3403 = vsel %vm3373, %v3356, %v3358
      %v3404 = vsel %vm3373, %v3360, %v3362
      %v3405 = vsel %vm3373, %v3362, %v3364
      %v3406 = vsel %vm3373, %v3364, %v3366
      %v3407 = vsel %vm3373, %v3366, %v3368
      %v3408 = vsel %vm3373, %v3368, %v3370
      %v3409 = vsel %vm3373, %v3370, %v3372
      %v3446 = vsel %vm711, %v3288, 0
      %v3448 = vsel %vm715, %v3404, 0
      %v3450 = vsel %vm715, %v3405, 0
      %v3452 = vsel %vm715, %v3406, 0
      %v3454 = vsel %vm715, %v3407, 0
      %v3456 = vsel %vm715, %v3408, 0
      %v3458 = vsel %vm715, %v3409, 0
      %v3460 = vsel %vm715, %v3372, 0
      %3462 = vmatprep.subr.mxu0 %v3375
      %3463 = vmatpush1.msra.mxu0 %v3374
      %3464 = vmatprep.subr.mxu0 %v3381
      %3465 = vmatpush1.msra.mxu0 %v3380
      %3466 = vmatprep.subr.mxu0 %v3387
      %3467 = vmatpush1.msra.mxu0 %v3386
      %3468 = vmatprep.subr.mxu0 %v3393
      %3469 = vmatpush1.msra.mxu0 %v3392
      %3470 = vmatprep.subr.mxu0 %v3399
      %3471 = vmatpush1.msra.mxu0 %v3398
      %3472 = vmatprep.subr.mxu0 %v3450
      %3473 = vmatpush1.msra.mxu0 %v3448
      %3474 = vmatprep.subr.mxu0 0.0
      %3475 = vmatpush1.msra.mxu0 0.0
      %3476 = vmatprep.subr.mxu0 0.0
      %3477 = vmatpush1.msra.mxu0 0.0
      %3478 = vmatprep.subr.mxu0 0.0
      %3479 = vmatpush1.msra.mxu0 0.0
      %3480 = vmatprep.subr.mxu0 0.0
      %3481 = vmatpush1.msra.mxu0 0.0
      %3482 = vmatprep.subr.mxu0 0.0
      %3483 = vmatpush1.msra.mxu0 0.0
      %3484 = vmatprep.subr.mxu0 0.0
      %3485 = vmatpush1.msra.mxu0 0.0
      %3486 = vmatprep.subr.mxu0 0.0
      %3487 = vmatpush1.msra.mxu0 0.0
      %3488 = vmatprep.subr.mxu0 0.0
      %3489 = vmatpush1.msra.mxu0 0.0
      %3490 = vmatprep.subr.mxu0 0.0
      %3491 = vmatpush1.msra.mxu0 0.0
      %3492 = vmatprep.subr.mxu0 0.0
      %3493 = vmatpush1.msra.mxu0 0.0
      %3494 = vmatprep.subr.mxu0 0.0
      %3495 = vmatpush1.msra.mxu0 0.0
      %3496 = vmatprep.subr.mxu0 0.0
      %3497 = vmatpush1.msra.mxu0 0.0
      %3498 = vmatprep.subr.mxu0 0.0
      %3499 = vmatpush1.msra.mxu0 0.0
      %3500 = vmatprep.subr.mxu0 0.0
      %3501 = vmatpush1.msra.mxu0 0.0
      %3502 = vmatprep.subr.mxu0 0.0
      %3503 = vmatpush1.msra.mxu0 0.0
      %3504 = vmatprep.subr.mxu0 0.0
      %3505 = vmatpush1.msra.mxu0 0.0
      %3506 = vmatprep.subr.mxu0 0.0
      %3507 = vmatpush1.msra.mxu0 0.0
      %3508 = vmatprep.subr.mxu0 0.0
      %3509 = vmatpush1.msra.mxu0 0.0
      %3510 = vmatprep.subr.mxu0 0.0
      %3511 = vmatpush1.msra.mxu0 0.0
      %3512 = vmatprep.subr.mxu0 0.0
      %3513 = vmatpush1.msra.mxu0 0.0
      %3514 = vmatprep.subr.mxu0 0.0
      %3515 = vmatpush1.msra.mxu0 0.0
      %3516 = vmatprep.subr.mxu0 0.0
      %3517 = vmatpush1.msra.mxu0 0.0
      %3518 = vmatprep.subr.mxu0 0.0
      %3519 = vmatpush1.msra.mxu0 0.0
      %3520 = vmatprep.subr.mxu0 0.0
      %3521 = vmatpush1.msra.mxu0 0.0
      %3522 = vmatprep.subr.mxu0 0.0
      %3523 = vmatpush1.msra.mxu0 0.0
      %3524 = vmatprep.subr.mxu0 0.0
      %3525 = vmatpush1.msra.mxu0 0.0
      %3526 = vmatprep.mubr.f32.mxu0 0.0
      %3527 = vmatmul.mubr.f32.gmra.mrb[0].mxu0 %v3446
      %v3528 = vpop.f32.mrb[0].mxu0
      %v3529 = vadd.f32 0.0, %v3528
      %v3530 = vpop.f32.mrb[0].mxu0
      %v3531 = vadd.f32 0.0, %v3530
      %3532 = vdwg.mxu0
      %3533 = vmatprep.subr.mxu0 %v3377
      %3534 = vmatpush1.msra.mxu0 %v3376
      %3535 = vmatprep.subr.mxu0 %v3383
      %3536 = vmatpush1.msra.mxu0 %v3382
      %3537 = vmatprep.subr.mxu0 %v3389
      %3538 = vmatpush1.msra.mxu0 %v3388
      %3539 = vmatprep.subr.mxu0 %v3395
      %3540 = vmatpush1.msra.mxu0 %v3394
      %3541 = vmatprep.subr.mxu0 %v3401
      %3542 = vmatpush1.msra.mxu0 %v3400
      %3543 = vmatprep.subr.mxu0 %v3454
      %3544 = vmatpush1.msra.mxu0 %v3452
      %3545 = vmatprep.subr.mxu0 0.0
      %3546 = vmatpush1.msra.mxu0 0.0
      %3547 = vmatprep.subr.mxu0 0.0
      %3548 = vmatpush1.msra.mxu0 0.0
      %3549 = vmatprep.subr.mxu0 0.0
      %3550 = vmatpush1.msra.mxu0 0.0
      %3551 = vmatprep.subr.mxu0 0.0
      %3552 = vmatpush1.msra.mxu0 0.0
      %3553 = vmatprep.subr.mxu0 0.0
      %3554 = vmatpush1.msra.mxu0 0.0
      %3555 = vmatprep.subr.mxu0 0.0
      %3556 = vmatpush1.msra.mxu0 0.0
      %3557 = vmatprep.subr.mxu0 0.0
      %3558 = vmatpush1.msra.mxu0 0.0
      %3559 = vmatprep.subr.mxu0 0.0
      %3560 = vmatpush1.msra.mxu0 0.0
      %3561 = vmatprep.subr.mxu0 0.0
      %3562 = vmatpush1.msra.mxu0 0.0
      %3563 = vmatprep.subr.mxu0 0.0
      %3564 = vmatpush1.msra.mxu0 0.0
      %3565 = vmatprep.subr.mxu0 0.0
      %3566 = vmatpush1.msra.mxu0 0.0
      %3567 = vmatprep.subr.mxu0 0.0
      %3568 = vmatpush1.msra.mxu0 0.0
      %3569 = vmatprep.subr.mxu0 0.0
      %3570 = vmatpush1.msra.mxu0 0.0
      %3571 = vmatprep.subr.mxu0 0.0
      %3572 = vmatpush1.msra.mxu0 0.0
      %3573 = vmatprep.subr.mxu0 0.0
      %3574 = vmatpush1.msra.mxu0 0.0
      %3575 = vmatprep.subr.mxu0 0.0
      %3576 = vmatpush1.msra.mxu0 0.0
      %3577 = vmatprep.subr.mxu0 0.0
      %3578 = vmatpush1.msra.mxu0 0.0
      %3579 = vmatprep.subr.mxu0 0.0
      %3580 = vmatpush1.msra.mxu0 0.0
      %3581 = vmatprep.subr.mxu0 0.0
      %3582 = vmatpush1.msra.mxu0 0.0
      %3583 = vmatprep.subr.mxu0 0.0
      %3584 = vmatpush1.msra.mxu0 0.0
      %3585 = vmatprep.subr.mxu0 0.0
      %3586 = vmatpush1.msra.mxu0 0.0
      %3587 = vmatprep.subr.mxu0 0.0
      %3588 = vmatpush1.msra.mxu0 0.0
      %3589 = vmatprep.subr.mxu0 0.0
      %3590 = vmatpush1.msra.mxu0 0.0
      %3591 = vmatprep.subr.mxu0 0.0
      %3592 = vmatpush1.msra.mxu0 0.0
      %3593 = vmatprep.subr.mxu0 0.0
      %3594 = vmatpush1.msra.mxu0 0.0
      %3595 = vmatprep.subr.mxu0 0.0
      %3596 = vmatpush1.msra.mxu0 0.0
      %3597 = vmatprep.mubr.f32.mxu0 0.0
      %3598 = vmatmul.mubr.f32.gmra.mrb[0].mxu0 %v3446
      %v3599 = vpop.f32.mrb[0].mxu0
      %v3600 = vadd.f32 0.0, %v3599
      %v3601 = vpop.f32.mrb[0].mxu0
      %v3602 = vadd.f32 0.0, %v3601
      %3603 = vdwg.mxu0
      %3604 = vmatprep.subr.mxu0 %v3379
      %3605 = vmatpush1.msra.mxu0 %v3378
      %3606 = vmatprep.subr.mxu0 %v3385
      %3607 = vmatpush1.msra.mxu0 %v3384
      %3608 = vmatprep.subr.mxu0 %v3391
      %3609 = vmatpush1.msra.mxu0 %v3390
      %3610 = vmatprep.subr.mxu0 %v3397
      %3611 = vmatpush1.msra.mxu0 %v3396
      %3612 = vmatprep.subr.mxu0 %v3403
      %3613 = vmatpush1.msra.mxu0 %v3402
      %3614 = vmatprep.subr.mxu0 %v3458
      %3615 = vmatpush1.msra.mxu0 %v3456
      %3616 = vmatprep.subr.mxu0 0.0
      %3617 = vmatpush1.msra.mxu0 0.0
      %3618 = vmatprep.subr.mxu0 0.0
      %3619 = vmatpush1.msra.mxu0 0.0
      %3620 = vmatprep.subr.mxu0 0.0
      %3621 = vmatpush1.msra.mxu0 0.0
      %3622 = vmatprep.subr.mxu0 0.0
      %3623 = vmatpush1.msra.mxu0 0.0
      %3624 = vmatprep.subr.mxu0 0.0
      %3625 = vmatpush1.msra.mxu0 0.0
      %3626 = vmatprep.subr.mxu0 0.0
      %3627 = vmatpush1.msra.mxu0 0.0
      %3628 = vmatprep.subr.mxu0 0.0
      %3629 = vmatpush1.msra.mxu0 0.0
      %3630 = vmatprep.subr.mxu0 0.0
      %3631 = vmatpush1.msra.mxu0 0.0
      %3632 = vmatprep.subr.mxu0 0.0
      %3633 = vmatpush1.msra.mxu0 0.0
      %3634 = vmatprep.subr.mxu0 0.0
      %3635 = vmatpush1.msra.mxu0 0.0
      %3636 = vmatprep.subr.mxu0 0.0
      %3637 = vmatpush1.msra.mxu0 0.0
      %3638 = vmatprep.subr.mxu0 0.0
      %3639 = vmatpush1.msra.mxu0 0.0
      %3640 = vmatprep.subr.mxu0 0.0
      %3641 = vmatpush1.msra.mxu0 0.0
      %3642 = vmatprep.subr.mxu0 0.0
      %3643 = vmatpush1.msra.mxu0 0.0
      %3644 = vmatprep.subr.mxu0 0.0
      %3645 = vmatpush1.msra.mxu0 0.0
      %3646 = vmatprep.subr.mxu0 0.0
      %3647 = vmatpush1.msra.mxu0 0.0
      %3648 = vmatprep.subr.mxu0 0.0
      %3649 = vmatpush1.msra.mxu0 0.0
      %3650 = vmatprep.subr.mxu0 0.0
      %3651 = vmatpush1.msra.mxu0 0.0
      %3652 = vmatprep.subr.mxu0 0.0
      %3653 = vmatpush1.msra.mxu0 0.0
      %3654 = vmatprep.subr.mxu0 0.0
      %3655 = vmatpush1.msra.mxu0 0.0
      %3656 = vmatprep.subr.mxu0 0.0
      %3657 = vmatpush1.msra.mxu0 0.0
      %3658 = vmatprep.subr.mxu0 0.0
      %3659 = vmatpush1.msra.mxu0 0.0
      %3660 = vmatprep.subr.mxu0 0.0
      %3661 = vmatpush1.msra.mxu0 0.0
      %3662 = vmatprep.subr.mxu0 0.0
      %3663 = vmatpush1.msra.mxu0 0.0
      %3664 = vmatprep.subr.mxu0 0.0
      %3665 = vmatpush1.msra.mxu0 0.0
      %3666 = vmatprep.subr.mxu0 0.0
      %3667 = vmatpush1.msra.mxu0 0.0
      %3668 = vmatprep.mubr.f32.mxu0 0.0
      %3669 = vmatmul.mubr.f32.gmra.mrb[0].mxu0 %v3446
      %v3670 = vpop.f32.mrb[0].mxu0
      %v3671 = vadd.f32 0.0, %v3670
      %v3672 = vpop.f32.mrb[0].mxu0
      %v3673 = vadd.f32 0.0, %v3672
      %3674 = vdwg.mxu0
      %3675 = vmatprep.subr.mxu0 0.0
      %3676 = vmatpush1.msra.mxu0 %v3302
      %3677 = vmatprep.subr.mxu0 0.0
      %3678 = vmatpush1.msra.mxu0 %v3316
      %3679 = vmatprep.subr.mxu0 0.0
      %3680 = vmatpush1.msra.mxu0 %v3330
      %3681 = vmatprep.subr.mxu0 0.0
      %3682 = vmatpush1.msra.mxu0 %v3344
      %3683 = vmatprep.subr.mxu0 0.0
      %3684 = vmatpush1.msra.mxu0 %v3358
      %3685 = vmatprep.subr.mxu0 0.0
      %3686 = vmatpush1.msra.mxu0 %v3460
      %3687 = vmatprep.subr.mxu0 0.0
      %3688 = vmatpush1.msra.mxu0 0.0
      %3689 = vmatprep.subr.mxu0 0.0
      %3690 = vmatpush1.msra.mxu0 0.0
      %3691 = vmatprep.subr.mxu0 0.0
      %3692 = vmatpush1.msra.mxu0 0.0
      %3693 = vmatprep.subr.mxu0 0.0
      %3694 = vmatpush1.msra.mxu0 0.0
      %3695 = vmatprep.subr.mxu0 0.0
      %3696 = vmatpush1.msra.mxu0 0.0
      %3697 = vmatprep.subr.mxu0 0.0
      %3698 = vmatpush1.msra.mxu0 0.0
      %3699 = vmatprep.subr.mxu0 0.0
      %3700 = vmatpush1.msra.mxu0 0.0
      %3701 = vmatprep.subr.mxu0 0.0
      %3702 = vmatpush1.msra.mxu0 0.0
      %3703 = vmatprep.subr.mxu0 0.0
      %3704 = vmatpush1.msra.mxu0 0.0
      %3705 = vmatprep.subr.mxu0 0.0
      %3706 = vmatpush1.msra.mxu0 0.0
      %3707 = vmatprep.subr.mxu0 0.0
      %3708 = vmatpush1.msra.mxu0 0.0
      %3709 = vmatprep.subr.mxu0 0.0
      %3710 = vmatpush1.msra.mxu0 0.0
      %3711 = vmatprep.subr.mxu0 0.0
      %3712 = vmatpush1.msra.mxu0 0.0
      %3713 = vmatprep.subr.mxu0 0.0
      %3714 = vmatpush1.msra.mxu0 0.0
      %3715 = vmatprep.subr.mxu0 0.0
      %3716 = vmatpush1.msra.mxu0 0.0
      %3717 = vmatprep.subr.mxu0 0.0
      %3718 = vmatpush1.msra.mxu0 0.0
      %3719 = vmatprep.subr.mxu0 0.0
      %3720 = vmatpush1.msra.mxu0 0.0
      %3721 = vmatprep.subr.mxu0 0.0
      %3722 = vmatpush1.msra.mxu0 0.0
      %3723 = vmatprep.subr.mxu0 0.0
      %3724 = vmatpush1.msra.mxu0 0.0
      %3725 = vmatprep.subr.mxu0 0.0
      %3726 = vmatpush1.msra.mxu0 0.0
      %3727 = vmatprep.subr.mxu0 0.0
      %3728 = vmatpush1.msra.mxu0 0.0
      %3729 = vmatprep.subr.mxu0 0.0
      %3730 = vmatpush1.msra.mxu0 0.0
      %3731 = vmatprep.subr.mxu0 0.0
      %3732 = vmatpush1.msra.mxu0 0.0
      %3733 = vmatprep.subr.mxu0 0.0
      %3734 = vmatpush1.msra.mxu0 0.0
      %3735 = vmatprep.subr.mxu0 0.0
      %3736 = vmatpush1.msra.mxu0 0.0
      %3737 = vmatprep.subr.mxu0 0.0
      %3738 = vmatpush1.msra.mxu0 0.0
      %3739 = vmatprep.mubr.f32.mxu0 0.0
      %3740 = vmatmul.mubr.f32.gmra.mrb[0].mxu0 %v3446
      %v3741 = vpop.f32.mrb[0].mxu0
      %v3742 = vadd.f32 0.0, %v3741
      %v3743 = vpop.f32.mrb[0].mxu0
      %3744 = vdwg.mxu0
      %v3745 = vadd.f32 %v3280, %v3529
      %v3746 = vadd.f32 %v3281, %v3531
      %v3747 = vadd.f32 %v3282, %v3600
      %v3748 = vadd.f32 %v3283, %v3602
      %v3749 = vadd.f32 %v3284, %v3671
      %v3750 = vadd.f32 %v3285, %v3673
      %v3751 = vadd.f32 %v3286, %v3742
      %s3752 = scalar_lea.vmem %s1, 56
      %v3753 = vld [vmem:[%s3752] sm:$0xff]
      %3754 = vrot.lane.b32.xlu0 %v2711, 46
      %v3755 = vpop.permute.xlu0 %3754
      %3756 = vrot.lane.b32.xlu0 %v2712, 46
      %v3757 = vpop.permute.xlu0 %3756
      %3758 = vrot.lane.b32.xlu0 %v2713, 46
      %v3759 = vpop.permute.xlu0 %3758
      %3760 = vrot.lane.b32.xlu0 %v2714, 46
      %v3761 = vpop.permute.xlu0 %3760
      %3762 = vrot.lane.b32.xlu0 %v2715, 46
      %v3763 = vpop.permute.xlu0 %3762
      %3764 = vrot.lane.b32.xlu0 %v2716, 46
      %v3765 = vpop.permute.xlu0 %3764
      %3766 = vrot.lane.b32.xlu0 %v2717, 46
      %v3767 = vpop.permute.xlu0 %3766
      %3768 = vrot.lane.b32.xlu0 %v2719, 46
      %v3769 = vpop.permute.xlu0 %3768
      %3770 = vrot.lane.b32.xlu0 %v2720, 46
      %v3771 = vpop.permute.xlu0 %3770
      %3772 = vrot.lane.b32.xlu0 %v2721, 46
      %v3773 = vpop.permute.xlu0 %3772
      %3774 = vrot.lane.b32.xlu0 %v2722, 46
      %v3775 = vpop.permute.xlu0 %3774
      %3776 = vrot.lane.b32.xlu0 %v2723, 46
      %v3777 = vpop.permute.xlu0 %3776
      %3778 = vrot.lane.b32.xlu0 %v2724, 46
      %v3779 = vpop.permute.xlu0 %3778
      %3780 = vrot.lane.b32.xlu0 %v2725, 46
      %v3781 = vpop.permute.xlu0 %3780
      %3782 = vrot.lane.b32.xlu0 %v2727, 46
      %v3783 = vpop.permute.xlu0 %3782
      %3784 = vrot.lane.b32.xlu0 %v2728, 46
      %v3785 = vpop.permute.xlu0 %3784
      %3786 = vrot.lane.b32.xlu0 %v2729, 46
      %v3787 = vpop.permute.xlu0 %3786
      %3788 = vrot.lane.b32.xlu0 %v2730, 46
      %v3789 = vpop.permute.xlu0 %3788
      %3790 = vrot.lane.b32.xlu0 %v2731, 46
      %v3791 = vpop.permute.xlu0 %3790
      %3792 = vrot.lane.b32.xlu0 %v2732, 46
      %v3793 = vpop.permute.xlu0 %3792
      %3794 = vrot.lane.b32.xlu0 %v2733, 46
      %v3795 = vpop.permute.xlu0 %3794
      %3796 = vrot.lane.b32.xlu0 %v2735, 46
      %v3797 = vpop.permute.xlu0 %3796
      %3798 = vrot.lane.b32.xlu0 %v2736, 46
      %v3799 = vpop.permute.xlu0 %3798
      %3800 = vrot.lane.b32.xlu0 %v2737, 46
      %v3801 = vpop.permute.xlu0 %3800
      %3802 = vrot.lane.b32.xlu0 %v2738, 46
      %v3803 = vpop.permute.xlu0 %3802
      %3804 = vrot.lane.b32.xlu0 %v2739, 46
      %v3805 = vpop.permute.xlu0 %3804
      %3806 = vrot.lane.b32.xlu0 %v2740, 46
      %v3807 = vpop.permute.xlu0 %3806
      %3808 = vrot.lane.b32.xlu0 %v2741, 46
      %v3809 = vpop.permute.xlu0 %3808
      %3810 = vrot.lane.b32.xlu0 %v2743, 46
      %v3811 = vpop.permute.xlu0 %3810
      %3812 = vrot.lane.b32.xlu0 %v2744, 46
      %v3813 = vpop.permute.xlu0 %3812
      %3814 = vrot.lane.b32.xlu0 %v2745, 46
      %v3815 = vpop.permute.xlu0 %3814
      %3816 = vrot.lane.b32.xlu0 %v2746, 46
      %v3817 = vpop.permute.xlu0 %3816
      %3818 = vrot.lane.b32.xlu0 %v2747, 46
      %v3819 = vpop.permute.xlu0 %3818
      %3820 = vrot.lane.b32.xlu0 %v2748, 46
      %v3821 = vpop.permute.xlu0 %3820
      %3822 = vrot.lane.b32.xlu0 %v2749, 46
      %v3823 = vpop.permute.xlu0 %3822
      %3824 = vrot.lane.b32.xlu0 %v2751, 46
      %v3825 = vpop.permute.xlu0 %3824
      %3826 = vrot.lane.b32.xlu0 %v2752, 46
      %v3827 = vpop.permute.xlu0 %3826
      %3828 = vrot.lane.b32.xlu0 %v2753, 46
      %v3829 = vpop.permute.xlu0 %3828
      %3830 = vrot.lane.b32.xlu0 %v2754, 46
      %v3831 = vpop.permute.xlu0 %3830
      %3832 = vrot.lane.b32.xlu0 %v2755, 46
      %v3833 = vpop.permute.xlu0 %3832
      %3834 = vrot.lane.b32.xlu0 %v2756, 46
      %v3835 = vpop.permute.xlu0 %3834
      %3836 = vrot.lane.b32.xlu0 %v2757, 46
      %v3837 = vpop.permute.xlu0 %3836
      %vm3838 = vcmask 375808
      %v3839 = vsel %vm3838, %v3755, %v3757
      %v3840 = vsel %vm3838, %v3757, %v3759
      %v3841 = vsel %vm3838, %v3759, %v3761
      %v3842 = vsel %vm3838, %v3761, %v3763
      %v3843 = vsel %vm3838, %v3763, %v3765
      %v3844 = vsel %vm3838, %v3765, %v3767
      %v3845 = vsel %vm3838, %v3769, %v3771
      %v3846 = vsel %vm3838, %v3771, %v3773
      %v3847 = vsel %vm3838, %v3773, %v3775
      %v3848 = vsel %vm3838, %v3775, %v3777
      %v3849 = vsel %vm3838, %v3777, %v3779
      %v3850 = vsel %vm3838, %v3779, %v3781
      %v3851 = vsel %vm3838, %v3783, %v3785
      %v3852 = vsel %vm3838, %v3785, %v3787
      %v3853 = vsel %vm3838, %v3787, %v3789
      %v3854 = vsel %vm3838, %v3789, %v3791
      %v3855 = vsel %vm3838, %v3791, %v3793
      %v3856 = vsel %vm3838, %v3793, %v3795
      %v3857 = vsel %vm3838, %v3797, %v3799
      %v3858 = vsel %vm3838, %v3799, %v3801
      %v3859 = vsel %vm3838, %v3801, %v3803
      %v3860 = vsel %vm3838, %v3803, %v3805
      %v3861 = vsel %vm3838, %v3805, %v3807
      %v3862 = vsel %vm3838, %v3807, %v3809
      %v3863 = vsel %vm3838, %v3811, %v3813
      %v3864 = vsel %vm3838, %v3813, %v3815
      %v3865 = vsel %vm3838, %v3815, %v3817
      %v3866 = vsel %vm3838, %v3817, %v3819
      %v3867 = vsel %vm3838, %v3819, %v3821
      %v3868 = vsel %vm3838, %v3821, %v3823
      %v3869 = vsel %vm3838, %v3825, %v3827
      %v3870 = vsel %vm3838, %v3827, %v3829
      %v3871 = vsel %vm3838, %v3829, %v3831
      %v3872 = vsel %vm3838, %v3831, %v3833
      %v3873 = vsel %vm3838, %v3833, %v3835
      %v3874 = vsel %vm3838, %v3835, %v3837
      %v3911 = vsel %vm711, %v3753, 0
      %v3913 = vsel %vm715, %v3869, 0
      %v3915 = vsel %vm715, %v3870, 0
      %v3917 = vsel %vm715, %v3871, 0
      %v3919 = vsel %vm715, %v3872, 0
      %v3921 = vsel %vm715, %v3873, 0
      %v3923 = vsel %vm715, %v3874, 0
      %v3925 = vsel %vm715, %v3837, 0
      %3927 = vmatprep.subr.mxu0 %v3840
      %3928 = vmatpush1.msra.mxu0 %v3839
      %3929 = vmatprep.subr.mxu0 %v3846
      %3930 = vmatpush1.msra.mxu0 %v3845
      %3931 = vmatprep.subr.mxu0 %v3852
      %3932 = vmatpush1.msra.mxu0 %v3851
      %3933 = vmatprep.subr.mxu0 %v3858
      %3934 = vmatpush1.msra.mxu0 %v3857
      %3935 = vmatprep.subr.mxu0 %v3864
      %3936 = vmatpush1.msra.mxu0 %v3863
      %3937 = vmatprep.subr.mxu0 %v3915
      %3938 = vmatpush1.msra.mxu0 %v3913
      %3939 = vmatprep.subr.mxu0 0.0
      %3940 = vmatpush1.msra.mxu0 0.0
      %3941 = vmatprep.subr.mxu0 0.0
      %3942 = vmatpush1.msra.mxu0 0.0
      %3943 = vmatprep.subr.mxu0 0.0
      %3944 = vmatpush1.msra.mxu0 0.0
      %3945 = vmatprep.subr.mxu0 0.0
      %3946 = vmatpush1.msra.mxu0 0.0
      %3947 = vmatprep.subr.mxu0 0.0
      %3948 = vmatpush1.msra.mxu0 0.0
      %3949 = vmatprep.subr.mxu0 0.0
      %3950 = vmatpush1.msra.mxu0 0.0
      %3951 = vmatprep.subr.mxu0 0.0
      %3952 = vmatpush1.msra.mxu0 0.0
      %3953 = vmatprep.subr.mxu0 0.0
      %3954 = vmatpush1.msra.mxu0 0.0
      %3955 = vmatprep.subr.mxu0 0.0
      %3956 = vmatpush1.msra.mxu0 0.0
      %3957 = vmatprep.subr.mxu0 0.0
      %3958 = vmatpush1.msra.mxu0 0.0
      %3959 = vmatprep.subr.mxu0 0.0
      %3960 = vmatpush1.msra.mxu0 0.0
      %3961 = vmatprep.subr.mxu0 0.0
      %3962 = vmatpush1.msra.mxu0 0.0
      %3963 = vmatprep.subr.mxu0 0.0
      %3964 = vmatpush1.msra.mxu0 0.0
      %3965 = vmatprep.subr.mxu0 0.0
      %3966 = vmatpush1.msra.mxu0 0.0
      %3967 = vmatprep.subr.mxu0 0.0
      %3968 = vmatpush1.msra.mxu0 0.0
      %3969 = vmatprep.subr.mxu0 0.0
      %3970 = vmatpush1.msra.mxu0 0.0
      %3971 = vmatprep.subr.mxu0 0.0
      %3972 = vmatpush1.msra.mxu0 0.0
      %3973 = vmatprep.subr.mxu0 0.0
      %3974 = vmatpush1.msra.mxu0 0.0
      %3975 = vmatprep.subr.mxu0 0.0
      %3976 = vmatpush1.msra.mxu0 0.0
      %3977 = vmatprep.subr.mxu0 0.0
      %3978 = vmatpush1.msra.mxu0 0.0
      %3979 = vmatprep.subr.mxu0 0.0
      %3980 = vmatpush1.msra.mxu0 0.0
      %3981 = vmatprep.subr.mxu0 0.0
      %3982 = vmatpush1.msra.mxu0 0.0
      %3983 = vmatprep.subr.mxu0 0.0
      %3984 = vmatpush1.msra.mxu0 0.0
      %3985 = vmatprep.subr.mxu0 0.0
      %3986 = vmatpush1.msra.mxu0 0.0
      %3987 = vmatprep.subr.mxu0 0.0
      %3988 = vmatpush1.msra.mxu0 0.0
      %3989 = vmatprep.subr.mxu0 0.0
      %3990 = vmatpush1.msra.mxu0 0.0
      %3991 = vmatprep.mubr.f32.mxu0 0.0
      %3992 = vmatmul.mubr.f32.gmra.mrb[0].mxu0 %v3911
      %v3993 = vpop.f32.mrb[0].mxu0
      %v3994 = vadd.f32 0.0, %v3993
      %v3995 = vpop.f32.mrb[0].mxu0
      %v3996 = vadd.f32 0.0, %v3995
      %3997 = vdwg.mxu0
      %3998 = vmatprep.subr.mxu0 %v3842
      %3999 = vmatpush1.msra.mxu0 %v3841
      %4000 = vmatprep.subr.mxu0 %v3848
      %4001 = vmatpush1.msra.mxu0 %v3847
      %4002 = vmatprep.subr.mxu0 %v3854
      %4003 = vmatpush1.msra.mxu0 %v3853
      %4004 = vmatprep.subr.mxu0 %v3860
      %4005 = vmatpush1.msra.mxu0 %v3859
      %4006 = vmatprep.subr.mxu0 %v3866
      %4007 = vmatpush1.msra.mxu0 %v3865
      %4008 = vmatprep.subr.mxu0 %v3919
      %4009 = vmatpush1.msra.mxu0 %v3917
      %4010 = vmatprep.subr.mxu0 0.0
      %4011 = vmatpush1.msra.mxu0 0.0
      %4012 = vmatprep.subr.mxu0 0.0
      %4013 = vmatpush1.msra.mxu0 0.0
      %4014 = vmatprep.subr.mxu0 0.0
      %4015 = vmatpush1.msra.mxu0 0.0
      %4016 = vmatprep.subr.mxu0 0.0
      %4017 = vmatpush1.msra.mxu0 0.0
      %4018 = vmatprep.subr.mxu0 0.0
      %4019 = vmatpush1.msra.mxu0 0.0
      %4020 = vmatprep.subr.mxu0 0.0
      %4021 = vmatpush1.msra.mxu0 0.0
      %4022 = vmatprep.subr.mxu0 0.0
      %4023 = vmatpush1.msra.mxu0 0.0
      %4024 = vmatprep.subr.mxu0 0.0
      %4025 = vmatpush1.msra.mxu0 0.0
      %4026 = vmatprep.subr.mxu0 0.0
      %4027 = vmatpush1.msra.mxu0 0.0
      %4028 = vmatprep.subr.mxu0 0.0
      %4029 = vmatpush1.msra.mxu0 0.0
      %4030 = vmatprep.subr.mxu0 0.0
      %4031 = vmatpush1.msra.mxu0 0.0
      %4032 = vmatprep.subr.mxu0 0.0
      %4033 = vmatpush1.msra.mxu0 0.0
      %4034 = vmatprep.subr.mxu0 0.0
      %4035 = vmatpush1.msra.mxu0 0.0
      %4036 = vmatprep.subr.mxu0 0.0
      %4037 = vmatpush1.msra.mxu0 0.0
      %4038 = vmatprep.subr.mxu0 0.0
      %4039 = vmatpush1.msra.mxu0 0.0
      %4040 = vmatprep.subr.mxu0 0.0
      %4041 = vmatpush1.msra.mxu0 0.0
      %4042 = vmatprep.subr.mxu0 0.0
      %4043 = vmatpush1.msra.mxu0 0.0
      %4044 = vmatprep.subr.mxu0 0.0
      %4045 = vmatpush1.msra.mxu0 0.0
      %4046 = vmatprep.subr.mxu0 0.0
      %4047 = vmatpush1.msra.mxu0 0.0
      %4048 = vmatprep.subr.mxu0 0.0
      %4049 = vmatpush1.msra.mxu0 0.0
      %4050 = vmatprep.subr.mxu0 0.0
      %4051 = vmatpush1.msra.mxu0 0.0
      %4052 = vmatprep.subr.mxu0 0.0
      %4053 = vmatpush1.msra.mxu0 0.0
      %4054 = vmatprep.subr.mxu0 0.0
      %4055 = vmatpush1.msra.mxu0 0.0
      %4056 = vmatprep.subr.mxu0 0.0
      %4057 = vmatpush1.msra.mxu0 0.0
      %4058 = vmatprep.subr.mxu0 0.0
      %4059 = vmatpush1.msra.mxu0 0.0
      %4060 = vmatprep.subr.mxu0 0.0
      %4061 = vmatpush1.msra.mxu0 0.0
      %4062 = vmatprep.mubr.f32.mxu0 0.0
      %4063 = vmatmul.mubr.f32.gmra.mrb[0].mxu0 %v3911
      %v4064 = vpop.f32.mrb[0].mxu0
      %v4065 = vadd.f32 0.0, %v4064
      %v4066 = vpop.f32.mrb[0].mxu0
      %v4067 = vadd.f32 0.0, %v4066
      %4068 = vdwg.mxu0
      %4069 = vmatprep.subr.mxu0 %v3844
      %4070 = vmatpush1.msra.mxu0 %v3843
      %4071 = vmatprep.subr.mxu0 %v3850
      %4072 = vmatpush1.msra.mxu0 %v3849
      %4073 = vmatprep.subr.mxu0 %v3856
      %4074 = vmatpush1.msra.mxu0 %v3855
      %4075 = vmatprep.subr.mxu0 %v3862
      %4076 = vmatpush1.msra.mxu0 %v3861
      %4077 = vmatprep.subr.mxu0 %v3868
      %4078 = vmatpush1.msra.mxu0 %v3867
      %4079 = vmatprep.subr.mxu0 %v3923
      %4080 = vmatpush1.msra.mxu0 %v3921
      %4081 = vmatprep.subr.mxu0 0.0
      %4082 = vmatpush1.msra.mxu0 0.0
      %4083 = vmatprep.subr.mxu0 0.0
      %4084 = vmatpush1.msra.mxu0 0.0
      %4085 = vmatprep.subr.mxu0 0.0
      %4086 = vmatpush1.msra.mxu0 0.0
      %4087 = vmatprep.subr.mxu0 0.0
      %4088 = vmatpush1.msra.mxu0 0.0
      %4089 = vmatprep.subr.mxu0 0.0
      %4090 = vmatpush1.msra.mxu0 0.0
      %4091 = vmatprep.subr.mxu0 0.0
      %4092 = vmatpush1.msra.mxu0 0.0
      %4093 = vmatprep.subr.mxu0 0.0
      %4094 = vmatpush1.msra.mxu0 0.0
      %4095 = vmatprep.subr.mxu0 0.0
      %4096 = vmatpush1.msra.mxu0 0.0
      %4097 = vmatprep.subr.mxu0 0.0
      %4098 = vmatpush1.msra.mxu0 0.0
      %4099 = vmatprep.subr.mxu0 0.0
      %4100 = vmatpush1.msra.mxu0 0.0
      %4101 = vmatprep.subr.mxu0 0.0
      %4102 = vmatpush1.msra.mxu0 0.0
      %4103 = vmatprep.subr.mxu0 0.0
      %4104 = vmatpush1.msra.mxu0 0.0
      %4105 = vmatprep.subr.mxu0 0.0
      %4106 = vmatpush1.msra.mxu0 0.0
      %4107 = vmatprep.subr.mxu0 0.0
      %4108 = vmatpush1.msra.mxu0 0.0
      %4109 = vmatprep.subr.mxu0 0.0
      %4110 = vmatpush1.msra.mxu0 0.0
      %4111 = vmatprep.subr.mxu0 0.0
      %4112 = vmatpush1.msra.mxu0 0.0
      %4113 = vmatprep.subr.mxu0 0.0
      %4114 = vmatpush1.msra.mxu0 0.0
      %4115 = vmatprep.subr.mxu0 0.0
      %4116 = vmatpush1.msra.mxu0 0.0
      %4117 = vmatprep.subr.mxu0 0.0
      %4118 = vmatpush1.msra.mxu0 0.0
      %4119 = vmatprep.subr.mxu0 0.0
      %4120 = vmatpush1.msra.mxu0 0.0
      %4121 = vmatprep.subr.mxu0 0.0
      %4122 = vmatpush1.msra.mxu0 0.0
      %4123 = vmatprep.subr.mxu0 0.0
      %4124 = vmatpush1.msra.mxu0 0.0
      %4125 = vmatprep.subr.mxu0 0.0
      %4126 = vmatpush1.msra.mxu0 0.0
      %4127 = vmatprep.subr.mxu0 0.0
      %4128 = vmatpush1.msra.mxu0 0.0
      %4129 = vmatprep.subr.mxu0 0.0
      %4130 = vmatpush1.msra.mxu0 0.0
      %4131 = vmatprep.subr.mxu0 0.0
      %4132 = vmatpush1.msra.mxu0 0.0
      %4133 = vmatprep.mubr.f32.mxu0 0.0
      %4134 = vmatmul.mubr.f32.gmra.mrb[0].mxu0 %v3911
      %v4135 = vpop.f32.mrb[0].mxu0
      %v4136 = vadd.f32 0.0, %v4135
      %v4137 = vpop.f32.mrb[0].mxu0
      %v4138 = vadd.f32 0.0, %v4137
      %4139 = vdwg.mxu0
      %4140 = vmatprep.subr.mxu0 0.0
      %4141 = vmatpush1.msra.mxu0 %v3767
      %4142 = vmatprep.subr.mxu0 0.0
      %4143 = vmatpush1.msra.mxu0 %v3781
      %4144 = vmatprep.subr.mxu0 0.0
      %4145 = vmatpush1.msra.mxu0 %v3795
      %4146 = vmatprep.subr.mxu0 0.0
      %4147 = vmatpush1.msra.mxu0 %v3809
      %4148 = vmatprep.subr.mxu0 0.0
      %4149 = vmatpush1.msra.mxu0 %v3823
      %4150 = vmatprep.subr.mxu0 0.0
      %4151 = vmatpush1.msra.mxu0 %v3925
      %4152 = vmatprep.subr.mxu0 0.0
      %4153 = vmatpush1.msra.mxu0 0.0
      %4154 = vmatprep.subr.mxu0 0.0
      %4155 = vmatpush1.msra.mxu0 0.0
      %4156 = vmatprep.subr.mxu0 0.0
      %4157 = vmatpush1.msra.mxu0 0.0
      %4158 = vmatprep.subr.mxu0 0.0
      %4159 = vmatpush1.msra.mxu0 0.0
      %4160 = vmatprep.subr.mxu0 0.0
      %4161 = vmatpush1.msra.mxu0 0.0
      %4162 = vmatprep.subr.mxu0 0.0
      %4163 = vmatpush1.msra.mxu0 0.0
      %4164 = vmatprep.subr.mxu0 0.0
      %4165 = vmatpush1.msra.mxu0 0.0
      %4166 = vmatprep.subr.mxu0 0.0
      %4167 = vmatpush1.msra.mxu0 0.0
      %4168 = vmatprep.subr.mxu0 0.0
      %4169 = vmatpush1.msra.mxu0 0.0
      %4170 = vmatprep.subr.mxu0 0.0
      %4171 = vmatpush1.msra.mxu0 0.0
      %4172 = vmatprep.subr.mxu0 0.0
      %4173 = vmatpush1.msra.mxu0 0.0
      %4174 = vmatprep.subr.mxu0 0.0
      %4175 = vmatpush1.msra.mxu0 0.0
      %4176 = vmatprep.subr.mxu0 0.0
      %4177 = vmatpush1.msra.mxu0 0.0
      %4178 = vmatprep.subr.mxu0 0.0
      %4179 = vmatpush1.msra.mxu0 0.0
      %4180 = vmatprep.subr.mxu0 0.0
      %4181 = vmatpush1.msra.mxu0 0.0
      %4182 = vmatprep.subr.mxu0 0.0
      %4183 = vmatpush1.msra.mxu0 0.0
      %4184 = vmatprep.subr.mxu0 0.0
      %4185 = vmatpush1.msra.mxu0 0.0
      %4186 = vmatprep.subr.mxu0 0.0
      %4187 = vmatpush1.msra.mxu0 0.0
      %4188 = vmatprep.subr.mxu0 0.0
      %4189 = vmatpush1.msra.mxu0 0.0
      %4190 = vmatprep.subr.mxu0 0.0
      %4191 = vmatpush1.msra.mxu0 0.0
      %4192 = vmatprep.subr.mxu0 0.0
      %4193 = vmatpush1.msra.mxu0 0.0
      %4194 = vmatprep.subr.mxu0 0.0
      %4195 = vmatpush1.msra.mxu0 0.0
      %4196 = vmatprep.subr.mxu0 0.0
      %4197 = vmatpush1.msra.mxu0 0.0
      %4198 = vmatprep.subr.mxu0 0.0
      %4199 = vmatpush1.msra.mxu0 0.0
      %4200 = vmatprep.subr.mxu0 0.0
      %4201 = vmatpush1.msra.mxu0 0.0
      %4202 = vmatprep.subr.mxu0 0.0
      %4203 = vmatpush1.msra.mxu0 0.0
      %4204 = vmatprep.mubr.f32.mxu0 0.0
      %4205 = vmatmul.mubr.f32.gmra.mrb[0].mxu0 %v3911
      %v4206 = vpop.f32.mrb[0].mxu0
      %v4207 = vadd.f32 0.0, %v4206
      %v4208 = vpop.f32.mrb[0].mxu0
      %4209 = vdwg.mxu0
      %v4210 = vadd.f32 %v3745, %v3994
      %v4211 = vadd.f32 %v3746, %v3996
      %v4212 = vadd.f32 %v3747, %v4065
      %v4213 = vadd.f32 %v3748, %v4067
      %v4214 = vadd.f32 %v3749, %v4136
      %v4215 = vadd.f32 %v3750, %v4138
      %v4216 = vadd.f32 %v3751, %v4207
      %s4217 = scalar_lea.vmem %s1, 64
      %v4218 = vld [vmem:[%s4217] sm:$0xff]
      %4219 = vrot.lane.b32.xlu0 %v2711, 36
      %v4220 = vpop.permute.xlu0 %4219
      %4221 = vrot.lane.b32.xlu0 %v2712, 36
      %v4222 = vpop.permute.xlu0 %4221
      %4223 = vrot.lane.b32.xlu0 %v2713, 36
      %v4224 = vpop.permute.xlu0 %4223
      %4225 = vrot.lane.b32.xlu0 %v2714, 36
      %v4226 = vpop.permute.xlu0 %4225
      %4227 = vrot.lane.b32.xlu0 %v2715, 36
      %v4228 = vpop.permute.xlu0 %4227
      %4229 = vrot.lane.b32.xlu0 %v2716, 36
      %v4230 = vpop.permute.xlu0 %4229
      %4231 = vrot.lane.b32.xlu0 %v2717, 36
      %v4232 = vpop.permute.xlu0 %4231
      %4233 = vrot.lane.b32.xlu0 %v2719, 36
      %v4234 = vpop.permute.xlu0 %4233
      %4235 = vrot.lane.b32.xlu0 %v2720, 36
      %v4236 = vpop.permute.xlu0 %4235
      %4237 = vrot.lane.b32.xlu0 %v2721, 36
      %v4238 = vpop.permute.xlu0 %4237
      %4239 = vrot.lane.b32.xlu0 %v2722, 36
      %v4240 = vpop.permute.xlu0 %4239
      %4241 = vrot.lane.b32.xlu0 %v2723, 36
      %v4242 = vpop.permute.xlu0 %4241
      %4243 = vrot.lane.b32.xlu0 %v2724, 36
      %v4244 = vpop.permute.xlu0 %4243
      %4245 = vrot.lane.b32.xlu0 %v2725, 36
      %v4246 = vpop.permute.xlu0 %4245
      %4247 = vrot.lane.b32.xlu0 %v2727, 36
      %v4248 = vpop.permute.xlu0 %4247
      %4249 = vrot.lane.b32.xlu0 %v2728, 36
      %v4250 = vpop.permute.xlu0 %4249
      %4251 = vrot.lane.b32.xlu0 %v2729, 36
      %v4252 = vpop.permute.xlu0 %4251
      %4253 = vrot.lane.b32.xlu0 %v2730, 36
      %v4254 = vpop.permute.xlu0 %4253
      %4255 = vrot.lane.b32.xlu0 %v2731, 36
      %v4256 = vpop.permute.xlu0 %4255
      %4257 = vrot.lane.b32.xlu0 %v2732, 36
      %v4258 = vpop.permute.xlu0 %4257
      %4259 = vrot.lane.b32.xlu0 %v2733, 36
      %v4260 = vpop.permute.xlu0 %4259
      %4261 = vrot.lane.b32.xlu0 %v2735, 36
      %v4262 = vpop.permute.xlu0 %4261
      %4263 = vrot.lane.b32.xlu0 %v2736, 36
      %v4264 = vpop.permute.xlu0 %4263
      %4265 = vrot.lane.b32.xlu0 %v2737, 36
      %v4266 = vpop.permute.xlu0 %4265
      %4267 = vrot.lane.b32.xlu0 %v2738, 36
      %v4268 = vpop.permute.xlu0 %4267
      %4269 = vrot.lane.b32.xlu0 %v2739, 36
      %v4270 = vpop.permute.xlu0 %4269
      %4271 = vrot.lane.b32.xlu0 %v2740, 36
      %v4272 = vpop.permute.xlu0 %4271
      %4273 = vrot.lane.b32.xlu0 %v2741, 36
      %v4274 = vpop.permute.xlu0 %4273
      %4275 = vrot.lane.b32.xlu0 %v2743, 36
      %v4276 = vpop.permute.xlu0 %4275
      %4277 = vrot.lane.b32.xlu0 %v2744, 36
      %v4278 = vpop.permute.xlu0 %4277
      %4279 = vrot.lane.b32.xlu0 %v2745, 36
      %v4280 = vpop.permute.xlu0 %4279
      %4281 = vrot.lane.b32.xlu0 %v2746, 36
      %v4282 = vpop.permute.xlu0 %4281
      %4283 = vrot.lane.b32.xlu0 %v2747, 36
      %v4284 = vpop.permute.xlu0 %4283
      %4285 = vrot.lane.b32.xlu0 %v2748, 36
      %v4286 = vpop.permute.xlu0 %4285
      %4287 = vrot.lane.b32.xlu0 %v2749, 36
      %v4288 = vpop.permute.xlu0 %4287
      %4289 = vrot.lane.b32.xlu0 %v2751, 36
      %v4290 = vpop.permute.xlu0 %4289
      %4291 = vrot.lane.b32.xlu0 %v2752, 36
      %v4292 = vpop.permute.xlu0 %4291
      %4293 = vrot.lane.b32.xlu0 %v2753, 36
      %v4294 = vpop.permute.xlu0 %4293
      %4295 = vrot.lane.b32.xlu0 %v2754, 36
      %v4296 = vpop.permute.xlu0 %4295
      %4297 = vrot.lane.b32.xlu0 %v2755, 36
      %v4298 = vpop.permute.xlu0 %4297
      %4299 = vrot.lane.b32.xlu0 %v2756, 36
      %v4300 = vpop.permute.xlu0 %4299
      %4301 = vrot.lane.b32.xlu0 %v2757, 36
      %v4302 = vpop.permute.xlu0 %4301
      %vm4303 = vcmask 293888
      %v4304 = vsel %vm4303, %v4220, %v4222
      %v4305 = vsel %vm4303, %v4222, %v4224
      %v4306 = vsel %vm4303, %v4224, %v4226
      %v4307 = vsel %vm4303, %v4226, %v4228
      %v4308 = vsel %vm4303, %v4228, %v4230
      %v4309 = vsel %vm4303, %v4230, %v4232
      %v4310 = vsel %vm4303, %v4234, %v4236
      %v4311 = vsel %vm4303, %v4236, %v4238
      %v4312 = vsel %vm4303, %v4238, %v4240
      %v4313 = vsel %vm4303, %v4240, %v4242
      %v4314 = vsel %vm4303, %v4242, %v4244
      %v4315 = vsel %vm4303, %v4244, %v4246
      %v4316 = vsel %vm4303, %v4248, %v4250
      %v4317 = vsel %vm4303, %v4250, %v4252
      %v4318 = vsel %vm4303, %v4252, %v4254
      %v4319 = vsel %vm4303, %v4254, %v4256
      %v4320 = vsel %vm4303, %v4256, %v4258
      %v4321 = vsel %vm4303, %v4258, %v4260
      %v4322 = vsel %vm4303, %v4262, %v4264
      %v4323 = vsel %vm4303, %v4264, %v4266
      %v4324 = vsel %vm4303, %v4266, %v4268
      %v4325 = vsel %vm4303, %v4268, %v4270
      %v4326 = vsel %vm4303, %v4270, %v4272
      %v4327 = vsel %vm4303, %v4272, %v4274
      %v4328 = vsel %vm4303, %v4276, %v4278
      %v4329 = vsel %vm4303, %v4278, %v4280
      %v4330 = vsel %vm4303, %v4280, %v4282
      %v4331 = vsel %vm4303, %v4282, %v4284
      %v4332 = vsel %vm4303, %v4284, %v4286
      %v4333 = vsel %vm4303, %v4286, %v4288
      %v4334 = vsel %vm4303, %v4290, %v4292
      %v4335 = vsel %vm4303, %v4292, %v4294
      %v4336 = vsel %vm4303, %v4294, %v4296
      %v4337 = vsel %vm4303, %v4296, %v4298
      %v4338 = vsel %vm4303, %v4298, %v4300
      %v4339 = vsel %vm4303, %v4300, %v4302
      %v4376 = vsel %vm711, %v4218, 0
      %v4378 = vsel %vm715, %v4334, 0
      %v4380 = vsel %vm715, %v4335, 0
      %v4382 = vsel %vm715, %v4336, 0
      %v4384 = vsel %vm715, %v4337, 0
      %v4386 = vsel %vm715, %v4338, 0
      %v4388 = vsel %vm715, %v4339, 0
      %v4390 = vsel %vm715, %v4302, 0
      %4392 = vmatprep.subr.mxu0 %v4305
      %4393 = vmatpush1.msra.mxu0 %v4304
      %4394 = vmatprep.subr.mxu0 %v4311
      %4395 = vmatpush1.msra.mxu0 %v4310
      %4396 = vmatprep.subr.mxu0 %v4317
      %4397 = vmatpush1.msra.mxu0 %v4316
      %4398 = vmatprep.subr.mxu0 %v4323
      %4399 = vmatpush1.msra.mxu0 %v4322
      %4400 = vmatprep.subr.mxu0 %v4329
      %4401 = vmatpush1.msra.mxu0 %v4328
      %4402 = vmatprep.subr.mxu0 %v4380
      %4403 = vmatpush1.msra.mxu0 %v4378
      %4404 = vmatprep.subr.mxu0 0.0
      %4405 = vmatpush1.msra.mxu0 0.0
      %4406 = vmatprep.subr.mxu0 0.0
      %4407 = vmatpush1.msra.mxu0 0.0
      %4408 = vmatprep.subr.mxu0 0.0
      %4409 = vmatpush1.msra.mxu0 0.0
      %4410 = vmatprep.subr.mxu0 0.0
      %4411 = vmatpush1.msra.mxu0 0.0
      %4412 = vmatprep.subr.mxu0 0.0
      %4413 = vmatpush1.msra.mxu0 0.0
      %4414 = vmatprep.subr.mxu0 0.0
      %4415 = vmatpush1.msra.mxu0 0.0
      %4416 = vmatprep.subr.mxu0 0.0
      %4417 = vmatpush1.msra.mxu0 0.0
      %4418 = vmatprep.subr.mxu0 0.0
      %4419 = vmatpush1.msra.mxu0 0.0
      %4420 = vmatprep.subr.mxu0 0.0
      %4421 = vmatpush1.msra.mxu0 0.0
      %4422 = vmatprep.subr.mxu0 0.0
      %4423 = vmatpush1.msra.mxu0 0.0
      %4424 = vmatprep.subr.mxu0 0.0
      %4425 = vmatpush1.msra.mxu0 0.0
      %4426 = vmatprep.subr.mxu0 0.0
      %4427 = vmatpush1.msra.mxu0 0.0
      %4428 = vmatprep.subr.mxu0 0.0
      %4429 = vmatpush1.msra.mxu0 0.0
      %4430 = vmatprep.subr.mxu0 0.0
      %4431 = vmatpush1.msra.mxu0 0.0
      %4432 = vmatprep.subr.mxu0 0.0
      %4433 = vmatpush1.msra.mxu0 0.0
      %4434 = vmatprep.subr.mxu0 0.0
      %4435 = vmatpush1.msra.mxu0 0.0
      %4436 = vmatprep.subr.mxu0 0.0
      %4437 = vmatpush1.msra.mxu0 0.0
      %4438 = vmatprep.subr.mxu0 0.0
      %4439 = vmatpush1.msra.mxu0 0.0
      %4440 = vmatprep.subr.mxu0 0.0
      %4441 = vmatpush1.msra.mxu0 0.0
      %4442 = vmatprep.subr.mxu0 0.0
      %4443 = vmatpush1.msra.mxu0 0.0
      %4444 = vmatprep.subr.mxu0 0.0
      %4445 = vmatpush1.msra.mxu0 0.0
      %4446 = vmatprep.subr.mxu0 0.0
      %4447 = vmatpush1.msra.mxu0 0.0
      %4448 = vmatprep.subr.mxu0 0.0
      %4449 = vmatpush1.msra.mxu0 0.0
      %4450 = vmatprep.subr.mxu0 0.0
      %4451 = vmatpush1.msra.mxu0 0.0
      %4452 = vmatprep.subr.mxu0 0.0
      %4453 = vmatpush1.msra.mxu0 0.0
      %4454 = vmatprep.subr.mxu0 0.0
      %4455 = vmatpush1.msra.mxu0 0.0
      %4456 = vmatprep.mubr.f32.mxu0 0.0
      %4457 = vmatmul.mubr.f32.gmra.mrb[0].mxu0 %v4376
      %v4458 = vpop.f32.mrb[0].mxu0
      %v4459 = vadd.f32 0.0, %v4458
      %v4460 = vpop.f32.mrb[0].mxu0
      %v4461 = vadd.f32 0.0, %v4460
      %4462 = vdwg.mxu0
      %4463 = vmatprep.subr.mxu0 %v4307
      %4464 = vmatpush1.msra.mxu0 %v4306
      %4465 = vmatprep.subr.mxu0 %v4313
      %4466 = vmatpush1.msra.mxu0 %v4312
      %4467 = vmatprep.subr.mxu0 %v4319
      %4468 = vmatpush1.msra.mxu0 %v4318
      %4469 = vmatprep.subr.mxu0 %v4325
      %4470 = vmatpush1.msra.mxu0 %v4324
      %4471 = vmatprep.subr.mxu0 %v4331
      %4472 = vmatpush1.msra.mxu0 %v4330
      %4473 = vmatprep.subr.mxu0 %v4384
      %4474 = vmatpush1.msra.mxu0 %v4382
      %4475 = vmatprep.subr.mxu0 0.0
      %4476 = vmatpush1.msra.mxu0 0.0
      %4477 = vmatprep.subr.mxu0 0.0
      %4478 = vmatpush1.msra.mxu0 0.0
      %4479 = vmatprep.subr.mxu0 0.0
      %4480 = vmatpush1.msra.mxu0 0.0
      %4481 = vmatprep.subr.mxu0 0.0
      %4482 = vmatpush1.msra.mxu0 0.0
      %4483 = vmatprep.subr.mxu0 0.0
      %4484 = vmatpush1.msra.mxu0 0.0
      %4485 = vmatprep.subr.mxu0 0.0
      %4486 = vmatpush1.msra.mxu0 0.0
      %4487 = vmatprep.subr.mxu0 0.0
      %4488 = vmatpush1.msra.mxu0 0.0
      %4489 = vmatprep.subr.mxu0 0.0
      %4490 = vmatpush1.msra.mxu0 0.0
      %4491 = vmatprep.subr.mxu0 0.0
      %4492 = vmatpush1.msra.mxu0 0.0
      %4493 = vmatprep.subr.mxu0 0.0
      %4494 = vmatpush1.msra.mxu0 0.0
      %4495 = vmatprep.subr.mxu0 0.0
      %4496 = vmatpush1.msra.mxu0 0.0
      %4497 = vmatprep.subr.mxu0 0.0
      %4498 = vmatpush1.msra.mxu0 0.0
      %4499 = vmatprep.subr.mxu0 0.0
      %4500 = vmatpush1.msra.mxu0 0.0
      %4501 = vmatprep.subr.mxu0 0.0
      %4502 = vmatpush1.msra.mxu0 0.0
      %4503 = vmatprep.subr.mxu0 0.0
      %4504 = vmatpush1.msra.mxu0 0.0
      %4505 = vmatprep.subr.mxu0 0.0
      %4506 = vmatpush1.msra.mxu0 0.0
      %4507 = vmatprep.subr.mxu0 0.0
      %4508 = vmatpush1.msra.mxu0 0.0
      %4509 = vmatprep.subr.mxu0 0.0
      %4510 = vmatpush1.msra.mxu0 0.0
      %4511 = vmatprep.subr.mxu0 0.0
      %4512 = vmatpush1.msra.mxu0 0.0
      %4513 = vmatprep.subr.mxu0 0.0
      %4514 = vmatpush1.msra.mxu0 0.0
      %4515 = vmatprep.subr.mxu0 0.0
      %4516 = vmatpush1.msra.mxu0 0.0
      %4517 = vmatprep.subr.mxu0 0.0
      %4518 = vmatpush1.msra.mxu0 0.0
      %4519 = vmatprep.subr.mxu0 0.0
      %4520 = vmatpush1.msra.mxu0 0.0
      %4521 = vmatprep.subr.mxu0 0.0
      %4522 = vmatpush1.msra.mxu0 0.0
      %4523 = vmatprep.subr.mxu0 0.0
      %4524 = vmatpush1.msra.mxu0 0.0
      %4525 = vmatprep.subr.mxu0 0.0
      %4526 = vmatpush1.msra.mxu0 0.0
      %4527 = vmatprep.mubr.f32.mxu0 0.0
      %4528 = vmatmul.mubr.f32.gmra.mrb[0].mxu0 %v4376
      %v4529 = vpop.f32.mrb[0].mxu0
      %v4530 = vadd.f32 0.0, %v4529
      %v4531 = vpop.f32.mrb[0].mxu0
      %v4532 = vadd.f32 0.0, %v4531
      %4533 = vdwg.mxu0
      %4534 = vmatprep.subr.mxu0 %v4309
      %4535 = vmatpush1.msra.mxu0 %v4308
      %4536 = vmatprep.subr.mxu0 %v4315
      %4537 = vmatpush1.msra.mxu0 %v4314
      %4538 = vmatprep.subr.mxu0 %v4321
      %4539 = vmatpush1.msra.mxu0 %v4320
      %4540 = vmatprep.subr.mxu0 %v4327
      %4541 = vmatpush1.msra.mxu0 %v4326
      %4542 = vmatprep.subr.mxu0 %v4333
      %4543 = vmatpush1.msra.mxu0 %v4332
      %4544 = vmatprep.subr.mxu0 %v4388
      %4545 = vmatpush1.msra.mxu0 %v4386
      %4546 = vmatprep.subr.mxu0 0.0
      %4547 = vmatpush1.msra.mxu0 0.0
      %4548 = vmatprep.subr.mxu0 0.0
      %4549 = vmatpush1.msra.mxu0 0.0
      %4550 = vmatprep.subr.mxu0 0.0
      %4551 = vmatpush1.msra.mxu0 0.0
      %4552 = vmatprep.subr.mxu0 0.0
      %4553 = vmatpush1.msra.mxu0 0.0
      %4554 = vmatprep.subr.mxu0 0.0
      %4555 = vmatpush1.msra.mxu0 0.0
      %4556 = vmatprep.subr.mxu0 0.0
      %4557 = vmatpush1.msra.mxu0 0.0
      %4558 = vmatprep.subr.mxu0 0.0
      %4559 = vmatpush1.msra.mxu0 0.0
      %4560 = vmatprep.subr.mxu0 0.0
      %4561 = vmatpush1.msra.mxu0 0.0
      %4562 = vmatprep.subr.mxu0 0.0
      %4563 = vmatpush1.msra.mxu0 0.0
      %4564 = vmatprep.subr.mxu0 0.0
      %4565 = vmatpush1.msra.mxu0 0.0
      %4566 = vmatprep.subr.mxu0 0.0
      %4567 = vmatpush1.msra.mxu0 0.0
      %4568 = vmatprep.subr.mxu0 0.0
      %4569 = vmatpush1.msra.mxu0 0.0
      %4570 = vmatprep.subr.mxu0 0.0
      %4571 = vmatpush1.msra.mxu0 0.0
      %4572 = vmatprep.subr.mxu0 0.0
      %4573 = vmatpush1.msra.mxu0 0.0
      %4574 = vmatprep.subr.mxu0 0.0
      %4575 = vmatpush1.msra.mxu0 0.0
      %4576 = vmatprep.subr.mxu0 0.0
      %4577 = vmatpush1.msra.mxu0 0.0
      %4578 = vmatprep.subr.mxu0 0.0
      %4579 = vmatpush1.msra.mxu0 0.0
      %4580 = vmatprep.subr.mxu0 0.0
      %4581 = vmatpush1.msra.mxu0 0.0
      %4582 = vmatprep.subr.mxu0 0.0
      %4583 = vmatpush1.msra.mxu0 0.0
      %4584 = vmatprep.subr.mxu0 0.0
      %4585 = vmatpush1.msra.mxu0 0.0
      %4586 = vmatprep.subr.mxu0 0.0
      %4587 = vmatpush1.msra.mxu0 0.0
      %4588 = vmatprep.subr.mxu0 0.0
      %4589 = vmatpush1.msra.mxu0 0.0
      %4590 = vmatprep.subr.mxu0 0.0
      %4591 = vmatpush1.msra.mxu0 0.0
      %4592 = vmatprep.subr.mxu0 0.0
      %4593 = vmatpush1.msra.mxu0 0.0
      %4594 = vmatprep.subr.mxu0 0.0
      %4595 = vmatpush1.msra.mxu0 0.0
      %4596 = vmatprep.subr.mxu0 0.0
      %4597 = vmatpush1.msra.mxu0 0.0
      %4598 = vmatprep.mubr.f32.mxu0 0.0
      %4599 = vmatmul.mubr.f32.gmra.mrb[0].mxu0 %v4376
      %v4600 = vpop.f32.mrb[0].mxu0
      %v4601 = vadd.f32 0.0, %v4600
      %v4602 = vpop.f32.mrb[0].mxu0
      %v4603 = vadd.f32 0.0, %v4602
      %4604 = vdwg.mxu0
      %4605 = vmatprep.subr.mxu0 0.0
      %4606 = vmatpush1.msra.mxu0 %v4232
      %4607 = vmatprep.subr.mxu0 0.0
      %4608 = vmatpush1.msra.mxu0 %v4246
      %4609 = vmatprep.subr.mxu0 0.0
      %4610 = vmatpush1.msra.mxu0 %v4260
      %4611 = vmatprep.subr.mxu0 0.0
      %4612 = vmatpush1.msra.mxu0 %v4274
      %4613 = vmatprep.subr.mxu0 0.0
      %4614 = vmatpush1.msra.mxu0 %v4288
      %4615 = vmatprep.subr.mxu0 0.0
      %4616 = vmatpush1.msra.mxu0 %v4390
      %4617 = vmatprep.subr.mxu0 0.0
      %4618 = vmatpush1.msra.mxu0 0.0
      %4619 = vmatprep.subr.mxu0 0.0
      %4620 = vmatpush1.msra.mxu0 0.0
      %4621 = vmatprep.subr.mxu0 0.0
      %4622 = vmatpush1.msra.mxu0 0.0
      %4623 = vmatprep.subr.mxu0 0.0
      %4624 = vmatpush1.msra.mxu0 0.0
      %4625 = vmatprep.subr.mxu0 0.0
      %4626 = vmatpush1.msra.mxu0 0.0
      %4627 = vmatprep.subr.mxu0 0.0
      %4628 = vmatpush1.msra.mxu0 0.0
      %4629 = vmatprep.subr.mxu0 0.0
      %4630 = vmatpush1.msra.mxu0 0.0
      %4631 = vmatprep.subr.mxu0 0.0
      %4632 = vmatpush1.msra.mxu0 0.0
      %4633 = vmatprep.subr.mxu0 0.0
      %4634 = vmatpush1.msra.mxu0 0.0
      %4635 = vmatprep.subr.mxu0 0.0
      %4636 = vmatpush1.msra.mxu0 0.0
      %4637 = vmatprep.subr.mxu0 0.0
      %4638 = vmatpush1.msra.mxu0 0.0
      %4639 = vmatprep.subr.mxu0 0.0
      %4640 = vmatpush1.msra.mxu0 0.0
      %4641 = vmatprep.subr.mxu0 0.0
      %4642 = vmatpush1.msra.mxu0 0.0
      %4643 = vmatprep.subr.mxu0 0.0
      %4644 = vmatpush1.msra.mxu0 0.0
      %4645 = vmatprep.subr.mxu0 0.0
      %4646 = vmatpush1.msra.mxu0 0.0
      %4647 = vmatprep.subr.mxu0 0.0
      %4648 = vmatpush1.msra.mxu0 0.0
      %4649 = vmatprep.subr.mxu0 0.0
      %4650 = vmatpush1.msra.mxu0 0.0
      %4651 = vmatprep.subr.mxu0 0.0
      %4652 = vmatpush1.msra.mxu0 0.0
      %4653 = vmatprep.subr.mxu0 0.0
      %4654 = vmatpush1.msra.mxu0 0.0
      %4655 = vmatprep.subr.mxu0 0.0
      %4656 = vmatpush1.msra.mxu0 0.0
      %4657 = vmatprep.subr.mxu0 0.0
      %4658 = vmatpush1.msra.mxu0 0.0
      %4659 = vmatprep.subr.mxu0 0.0
      %4660 = vmatpush1.msra.mxu0 0.0
      %4661 = vmatprep.subr.mxu0 0.0
      %4662 = vmatpush1.msra.mxu0 0.0
      %4663 = vmatprep.subr.mxu0 0.0
      %4664 = vmatpush1.msra.mxu0 0.0
      %4665 = vmatprep.subr.mxu0 0.0
      %4666 = vmatpush1.msra.mxu0 0.0
      %4667 = vmatprep.subr.mxu0 0.0
      %4668 = vmatpush1.msra.mxu0 0.0
      %4669 = vmatprep.mubr.f32.mxu0 0.0
      %4670 = vmatmul.mubr.f32.gmra.mrb[0].mxu0 %v4376
      %v4671 = vpop.f32.mrb[0].mxu0
      %v4672 = vadd.f32 0.0, %v4671
      %v4673 = vpop.f32.mrb[0].mxu0
      %4674 = vdwg.mxu0
      %v4675 = vadd.f32 %v4210, %v4459
      %v4676 = vadd.f32 %v4211, %v4461
      %v4677 = vadd.f32 %v4212, %v4530
      %v4678 = vadd.f32 %v4213, %v4532
      %v4679 = vadd.f32 %v4214, %v4601
      %v4680 = vadd.f32 %v4215, %v4603
      %v4681 = vadd.f32 %v4216, %v4672
      %v4682 = vld [vmem:[%s2] sm:$0xff]
      %4684 = vset.pattern.permute.xlu0 0
      %4685 = vperm.xlu0 %4684, %v4682
      %v4686 = vpop.permute.xlu0 %4685
      %v4688 = vadd.f32 %v4675, %v4686
      %v4689 = vadd.f32 %v4676, %v4686
      %v4690 = vadd.f32 %v4677, %v4686
      %v4691 = vadd.f32 %v4678, %v4686
      %v4692 = vadd.f32 %v4679, %v4686
      %v4693 = vadd.f32 %v4680, %v4686
      %v4694 = vadd.f32 %v4681, %v4686
      %v4695 = vmax.f32 %v4688, 0.0
      %v4696 = vmax.f32 %v4689, 0.0
      %v4697 = vmax.f32 %v4690, 0.0
      %v4698 = vmax.f32 %v4691, 0.0
      %v4699 = vmax.f32 %v4692, 0.0
      %v4700 = vmax.f32 %v4693, 0.0
      %v4701 = vmax.f32 %v4694, 0.0
      %v4702 = vld [vmem:[%s3] sm:$0xff]
      %v4703 = vld [vmem:[%s3 + $0x8] sm:$0xff]
      %v4704 = vld [vmem:[%s3 + $0x10] sm:$0xff]
      %v4705 = vld [vmem:[%s3 + $0x18] sm:$0xff]
      %v4706 = vld [vmem:[%s3 + $0x20] sm:$0xff]
      %v4707 = vld [vmem:[%s3 + $0x28] sm:$0xff]
      %v4708 = vld [vmem:[%s3 + $0x30] sm:$0xff]
      %v4709 = vld [vmem:[%s3 + $0x38] sm:$0xff]
      %v4710 = vld [vmem:[%s3 + $0x40] sm:$0xff]
      %v4711 = vld [vmem:[%s3 + $0x48] sm:$0xff]
      %v4712 = vld [vmem:[%s3 + $0x50] sm:$0xff]
      %v4713 = vld [vmem:[%s3 + $0x58] sm:$0xff]
      %v4714 = vld [vmem:[%s3 + $0x60] sm:$0xff]
      %v4715 = vld [vmem:[%s3 + $0x68] sm:$0xff]
      %v4716 = vld [vmem:[%s3 + $0x70] sm:$0xff]
      %v4717 = vld [vmem:[%s3 + $0x78] sm:$0xff]
      %v4718 = vld [vmem:[%s3 + $0x80] sm:$0xff]
      %v4719 = vld [vmem:[%s3 + $0x88] sm:$0xff]
      %v4720 = vld [vmem:[%s3 + $0x90] sm:$0xff]
      %v4721 = vld [vmem:[%s3 + $0x98] sm:$0xff]
      %v4722 = vld [vmem:[%s3 + $0xa0] sm:$0xff]
      %v4723 = vld [vmem:[%s3 + $0xa8] sm:$0xff]
      %v4724 = vld [vmem:[%s3 + $0xb0] sm:$0xff]
      %v4725 = vld [vmem:[%s3 + $0xb8] sm:$0xff]
      %v4726 = vld [vmem:[%s3 + $0xc0] sm:$0xff]
      %v4727 = vld [vmem:[%s3 + $0xc8] sm:$0xff]
      %v4728 = vld [vmem:[%s3 + $0xd0] sm:$0xff]
      %v4729 = vld [vmem:[%s3 + $0xd8] sm:$0xff]
      %v4730 = vld [vmem:[%s3 + $0xe0] sm:$0xff]
      %v4731 = vld [vmem:[%s3 + $0xe8] sm:$0xff]
      %v4732 = vld [vmem:[%s3 + $0xf0] sm:$0xff]
      %v4733 = vld [vmem:[%s3 + $0xf8] sm:$0xff]
      %v4734 = vld [vmem:[%s3 + $0x100] sm:$0xff]
      %v4735 = vld [vmem:[%s3 + $0x108] sm:$0xff]
      %v4736 = vld [vmem:[%s3 + $0x110] sm:$0xff]
      %v4737 = vld [vmem:[%s3 + $0x118] sm:$0xff]
      %v4738 = vld [vmem:[%s3 + $0x120] sm:$0xff]
      %v4739 = vld [vmem:[%s3 + $0x128] sm:$0xff]
      %v4740 = vld [vmem:[%s3 + $0x130] sm:$0xff]
      %v4741 = vld [vmem:[%s3 + $0x138] sm:$0xff]
      %v4742 = vld [vmem:[%s3 + $0x140] sm:$0xff]
      %v4743 = vld [vmem:[%s3 + $0x148] sm:$0xff]
      %v4744 = vld [vmem:[%s3 + $0x150] sm:$0xff]
      %v4745 = vld [vmem:[%s3 + $0x158] sm:$0xff]
      %v4746 = vld [vmem:[%s3 + $0x160] sm:$0xff]
      %v4747 = vld [vmem:[%s3 + $0x168] sm:$0xff]
      %v4748 = vld [vmem:[%s3 + $0x170] sm:$0xff]
      %v4749 = vld [vmem:[%s3 + $0x178] sm:$0xff]
      %v4750 = vld [vmem:[%s3 + $0x180] sm:$0xff]
      %v4751 = vld [vmem:[%s3 + $0x188] sm:$0xff]
      %v4752 = vld [vmem:[%s3 + $0x190] sm:$0xff]
      %v4753 = vld [vmem:[%s3 + $0x198] sm:$0xff]
      %v4754 = vld [vmem:[%s3 + $0x1a0] sm:$0xff]
      %v4755 = vld [vmem:[%s3 + $0x1a8] sm:$0xff]
      %v4756 = vld [vmem:[%s3 + $0x1b0] sm:$0xff]
      %v4757 = vld [vmem:[%s3 + $0x1b8] sm:$0xff]
      %v4758 = vld [vmem:[%s3 + $0x1c0] sm:$0xff]
      %v4759 = vld [vmem:[%s3 + $0x1c8] sm:$0xff]
      %v4760 = vld [vmem:[%s3 + $0x1d0] sm:$0xff]
      %v4761 = vld [vmem:[%s3 + $0x1d8] sm:$0xff]
      %v4762 = vld [vmem:[%s3 + $0x1e0] sm:$0xff]
      %v4763 = vld [vmem:[%s3 + $0x1e8] sm:$0xff]
      %v4764 = vld [vmem:[%s3 + $0x1f0] sm:$0xff]
      %v4765 = vld [vmem:[%s3 + $0x1f8] sm:$0xff]
      %v4766 = vld [vmem:[%s3 + $0x200] sm:$0xff]
      %v4767 = vld [vmem:[%s3 + $0x208] sm:$0xff]
      %v4768 = vld [vmem:[%s3 + $0x210] sm:$0xff]
      %v4769 = vld [vmem:[%s3 + $0x218] sm:$0xff]
      %v4770 = vld [vmem:[%s3 + $0x220] sm:$0xff]
      %v4771 = vld [vmem:[%s3 + $0x228] sm:$0xff]
      %v4772 = vld [vmem:[%s3 + $0x230] sm:$0xff]
      %v4773 = vld [vmem:[%s3 + $0x238] sm:$0xff]
      %v4774 = vld [vmem:[%s3 + $0x240] sm:$0xff]
      %v4775 = vld [vmem:[%s3 + $0x248] sm:$0xff]
      %v4776 = vld [vmem:[%s3 + $0x250] sm:$0xff]
      %v4777 = vld [vmem:[%s3 + $0x258] sm:$0xff]
      %v4778 = vld [vmem:[%s3 + $0x260] sm:$0xff]
      %v4779 = vld [vmem:[%s3 + $0x268] sm:$0xff]
      %v4780 = vld [vmem:[%s3 + $0x270] sm:$0xff]
      %v4781 = vld [vmem:[%s3 + $0x278] sm:$0xff]
      %v4782 = vld [vmem:[%s3 + $0x280] sm:$0xff]
      %v4783 = vld [vmem:[%s3 + $0x288] sm:$0xff]
      %v4784 = vld [vmem:[%s3 + $0x290] sm:$0xff]
      %v4785 = vld [vmem:[%s3 + $0x298] sm:$0xff]
      %v4786 = vld [vmem:[%s3 + $0x2a0] sm:$0xff]
      %v4787 = vld [vmem:[%s3 + $0x2a8] sm:$0xff]
      %v4788 = vld [vmem:[%s3 + $0x2b0] sm:$0xff]
      %v4789 = vld [vmem:[%s3 + $0x2b8] sm:$0xff]
      %v4790 = vld [vmem:[%s3 + $0x2c0] sm:$0xff]
      %v4791 = vld [vmem:[%s3 + $0x2c8] sm:$0xff]
      %v4792 = vld [vmem:[%s3 + $0x2d0] sm:$0xff]
      %v4793 = vld [vmem:[%s3 + $0x2d8] sm:$0xff]
      %v4794 = vld [vmem:[%s3 + $0x2e0] sm:$0xff]
      %v4795 = vld [vmem:[%s3 + $0x2e8] sm:$0xff]
      %v4796 = vld [vmem:[%s3 + $0x2f0] sm:$0xff]
      %v4797 = vld [vmem:[%s3 + $0x2f8] sm:$0xff]
      %v4798 = vld [vmem:[%s3 + $0x300] sm:$0xff]
      %v4799 = vld [vmem:[%s3 + $0x308] sm:$0xff]
      %v4800 = vld [vmem:[%s3 + $0x310] sm:$0xff]
      %v4801 = vld [vmem:[%s3 + $0x318] sm:$0xff]
      %v4802 = vld [vmem:[%s3 + $0x320] sm:$0xff]
      %v4803 = vld [vmem:[%s3 + $0x328] sm:$0xff]
      %v4804 = vld [vmem:[%s3 + $0x330] sm:$0xff]
      %v4805 = vld [vmem:[%s3 + $0x338] sm:$0xff]
      %v4806 = vld [vmem:[%s3 + $0x340] sm:$0xff]
      %v4807 = vld [vmem:[%s3 + $0x348] sm:$0xff]
      %v4808 = vld [vmem:[%s3 + $0x350] sm:$0xff]
      %v4809 = vld [vmem:[%s3 + $0x358] sm:$0xff]
      %v4810 = vld [vmem:[%s3 + $0x360] sm:$0xff]
      %v4811 = vld [vmem:[%s3 + $0x368] sm:$0xff]
      %v4812 = vld [vmem:[%s3 + $0x370] sm:$0xff]
      %v4813 = vld [vmem:[%s3 + $0x378] sm:$0xff]
      %v4814 = vld [vmem:[%s3 + $0x380] sm:$0xff]
      %v4815 = vld [vmem:[%s3 + $0x388] sm:$0xff]
      %v4816 = vld [vmem:[%s3 + $0x390] sm:$0xff]
      %v4817 = vld [vmem:[%s3 + $0x398] sm:$0xff]
      %v4818 = vld [vmem:[%s3 + $0x3a0] sm:$0xff]
      %v4819 = vld [vmem:[%s3 + $0x3a8] sm:$0xff]
      %v4820 = vld [vmem:[%s3 + $0x3b0] sm:$0xff]
      %v4821 = vld [vmem:[%s3 + $0x3b8] sm:$0xff]
      %v4822 = vld [vmem:[%s3 + $0x3c0] sm:$0xff]
      %v4823 = vld [vmem:[%s3 + $0x3c8] sm:$0xff]
      %v4824 = vld [vmem:[%s3 + $0x3d0] sm:$0xff]
      %v4825 = vld [vmem:[%s3 + $0x3d8] sm:$0xff]
      %v4826 = vld [vmem:[%s3 + $0x3e0] sm:$0xff]
      %v4827 = vld [vmem:[%s3 + $0x3e8] sm:$0xff]
      %v4828 = vld [vmem:[%s3 + $0x3f0] sm:$0xff]
      %v4829 = vld [vmem:[%s3 + $0x3f8] sm:$0xff]
      %v4830 = vld [vmem:[%s3 + $0x400] sm:$0xff]
      %v4831 = vld [vmem:[%s3 + $0x408] sm:$0xff]
      %v4832 = vld [vmem:[%s3 + $0x410] sm:$0xff]
      %v4833 = vld [vmem:[%s3 + $0x418] sm:$0xff]
      %v4834 = vld [vmem:[%s3 + $0x420] sm:$0xff]
      %v4835 = vld [vmem:[%s3 + $0x428] sm:$0xff]
      %v4836 = vld [vmem:[%s3 + $0x430] sm:$0xff]
      %v4837 = vld [vmem:[%s3 + $0x438] sm:$0xff]
      %v4838 = vld [vmem:[%s3 + $0x440] sm:$0xff]
      %v4839 = vld [vmem:[%s3 + $0x448] sm:$0xff]
      %v4840 = vld [vmem:[%s3 + $0x450] sm:$0xff]
      %v4841 = vld [vmem:[%s3 + $0x458] sm:$0xff]
      %v4842 = vld [vmem:[%s3 + $0x460] sm:$0xff]
      %v4843 = vld [vmem:[%s3 + $0x468] sm:$0xff]
      %v4844 = vld [vmem:[%s3 + $0x470] sm:$0xff]
      %v4845 = vld [vmem:[%s3 + $0x478] sm:$0xff]
      %v4846 = vld [vmem:[%s3 + $0x480] sm:$0xff]
      %v4847 = vld [vmem:[%s3 + $0x488] sm:$0xff]
      %v4848 = vld [vmem:[%s3 + $0x490] sm:$0xff]
      %v4849 = vld [vmem:[%s3 + $0x498] sm:$0xff]
      %v4850 = vld [vmem:[%s3 + $0x4a0] sm:$0xff]
      %v4851 = vld [vmem:[%s3 + $0x4a8] sm:$0xff]
      %v4852 = vld [vmem:[%s3 + $0x4b0] sm:$0xff]
      %v4853 = vld [vmem:[%s3 + $0x4b8] sm:$0xff]
      %v4854 = vld [vmem:[%s3 + $0x4c0] sm:$0xff]
      %v4855 = vld [vmem:[%s3 + $0x4c8] sm:$0xff]
      %v4856 = vld [vmem:[%s3 + $0x4d0] sm:$0xff]
      %v4857 = vld [vmem:[%s3 + $0x4d8] sm:$0xff]
      %v4858 = vld [vmem:[%s3 + $0x4e0] sm:$0xff]
      %v4859 = vld [vmem:[%s3 + $0x4e8] sm:$0xff]
      %v4860 = vld [vmem:[%s3 + $0x4f0] sm:$0xff]
      %v4861 = vld [vmem:[%s3 + $0x4f8] sm:$0xff]
      %v4862 = vld [vmem:[%s3 + $0x500] sm:$0xff]
      %v4863 = vld [vmem:[%s3 + $0x508] sm:$0xff]
      %v4864 = vld [vmem:[%s3 + $0x510] sm:$0xff]
      %v4865 = vld [vmem:[%s3 + $0x518] sm:$0xff]
      %v4866 = vld [vmem:[%s3 + $0x520] sm:$0xff]
      %v4867 = vld [vmem:[%s3 + $0x528] sm:$0xff]
      %v4868 = vld [vmem:[%s3 + $0x530] sm:$0xff]
      %v4869 = vld [vmem:[%s3 + $0x538] sm:$0xff]
      %v4870 = vld [vmem:[%s3 + $0x540] sm:$0xff]
      %v4871 = vld [vmem:[%s3 + $0x548] sm:$0xff]
      %v4872 = vld [vmem:[%s3 + $0x550] sm:$0xff]
      %v4873 = vld [vmem:[%s3 + $0x558] sm:$0xff]
      %v4874 = vld [vmem:[%s3 + $0x560] sm:$0xff]
      %v4875 = vld [vmem:[%s3 + $0x568] sm:$0xff]
      %v4876 = vld [vmem:[%s3 + $0x570] sm:$0xff]
      %v4877 = vld [vmem:[%s3 + $0x578] sm:$0xff]
      %v4878 = vld [vmem:[%s3 + $0x580] sm:$0xff]
      %v4879 = vld [vmem:[%s3 + $0x588] sm:$0xff]
      %v4880 = vld [vmem:[%s3 + $0x590] sm:$0xff]
      %v4881 = vld [vmem:[%s3 + $0x598] sm:$0xff]
      %v4882 = vld [vmem:[%s3 + $0x5a0] sm:$0xff]
      %v4883 = vld [vmem:[%s3 + $0x5a8] sm:$0xff]
      %v4884 = vld [vmem:[%s3 + $0x5b0] sm:$0xff]
      %v4885 = vld [vmem:[%s3 + $0x5b8] sm:$0xff]
      %v4886 = vld [vmem:[%s3 + $0x5c0] sm:$0xff]
      %v4887 = vld [vmem:[%s3 + $0x5c8] sm:$0xff]
      %v4888 = vld [vmem:[%s3 + $0x5d0] sm:$0xff]
      %v4889 = vld [vmem:[%s3 + $0x5d8] sm:$0xff]
      %v4890 = vld [vmem:[%s3 + $0x5e0] sm:$0xff]
      %v4891 = vld [vmem:[%s3 + $0x5e8] sm:$0xff]
      %v4892 = vld [vmem:[%s3 + $0x5f0] sm:$0xff]
      %v4893 = vld [vmem:[%s3 + $0x5f8] sm:$0xff]
      %v4894 = vld [vmem:[%s3 + $0x600] sm:$0xff]
      %v4895 = vld [vmem:[%s3 + $0x608] sm:$0xff]
      %v4896 = vld [vmem:[%s3 + $0x610] sm:$0xff]
      %v4897 = vld [vmem:[%s3 + $0x618] sm:$0xff]
      %v4898 = vld [vmem:[%s3 + $0x620] sm:$0xff]
      %v4899 = vld [vmem:[%s3 + $0x628] sm:$0xff]
      %v4900 = vld [vmem:[%s3 + $0x630] sm:$0xff]
      %v4901 = vld [vmem:[%s3 + $0x638] sm:$0xff]
      %v4902 = vld [vmem:[%s3 + $0x640] sm:$0xff]
      %v4903 = vld [vmem:[%s3 + $0x648] sm:$0xff]
      %v4904 = vld [vmem:[%s3 + $0x650] sm:$0xff]
      %v4905 = vld [vmem:[%s3 + $0x658] sm:$0xff]
      %v4906 = vld [vmem:[%s3 + $0x660] sm:$0xff]
      %v4907 = vld [vmem:[%s3 + $0x668] sm:$0xff]
      %v4908 = vld [vmem:[%s3 + $0x670] sm:$0xff]
      %v4909 = vld [vmem:[%s3 + $0x678] sm:$0xff]
      %v4910 = vld [vmem:[%s3 + $0x680] sm:$0xff]
      %v4911 = vld [vmem:[%s3 + $0x688] sm:$0xff]
      %v4912 = vld [vmem:[%s3 + $0x690] sm:$0xff]
      %v4913 = vld [vmem:[%s3 + $0x698] sm:$0xff]
      %v4914 = vld [vmem:[%s3 + $0x6a0] sm:$0xff]
      %v4915 = vld [vmem:[%s3 + $0x6a8] sm:$0xff]
      %v4916 = vld [vmem:[%s3 + $0x6b0] sm:$0xff]
      %v4917 = vld [vmem:[%s3 + $0x6b8] sm:$0xff]
      %v4918 = vld [vmem:[%s3 + $0x6c0] sm:$0xff]
      %v4919 = vld [vmem:[%s3 + $0x6c8] sm:$0xff]
      %v4920 = vld [vmem:[%s3 + $0x6d0] sm:$0xff]
      %v4921 = vld [vmem:[%s3 + $0x6d8] sm:$0xff]
      %v4922 = vld [vmem:[%s3 + $0x6e0] sm:$0xff]
      %v4923 = vld [vmem:[%s3 + $0x6e8] sm:$0xff]
      %v4924 = vld [vmem:[%s3 + $0x6f0] sm:$0xff]
      %v4925 = vld [vmem:[%s3 + $0x6f8] sm:$0xff]
      %v4926 = vld [vmem:[%s3 + $0x700] sm:$0xff]
      %v4927 = vld [vmem:[%s3 + $0x708] sm:$0xff]
      %v4928 = vld [vmem:[%s3 + $0x710] sm:$0xff]
      %v4929 = vld [vmem:[%s3 + $0x718] sm:$0xff]
      %v4930 = vld [vmem:[%s3 + $0x720] sm:$0xff]
      %v4931 = vld [vmem:[%s3 + $0x728] sm:$0xff]
      %v4932 = vld [vmem:[%s3 + $0x730] sm:$0xff]
      %v4933 = vld [vmem:[%s3 + $0x738] sm:$0xff]
      %v4934 = vld [vmem:[%s3 + $0x740] sm:$0xff]
      %v4935 = vld [vmem:[%s3 + $0x748] sm:$0xff]
      %v4936 = vld [vmem:[%s3 + $0x750] sm:$0xff]
      %v4937 = vld [vmem:[%s3 + $0x758] sm:$0xff]
      %v4938 = vld [vmem:[%s3 + $0x760] sm:$0xff]
      %v4939 = vld [vmem:[%s3 + $0x768] sm:$0xff]
      %v4940 = vld [vmem:[%s3 + $0x770] sm:$0xff]
      %v4941 = vld [vmem:[%s3 + $0x778] sm:$0xff]
      %v4942 = vld [vmem:[%s3 + $0x780] sm:$0xff]
      %v4943 = vld [vmem:[%s3 + $0x788] sm:$0xff]
      %v4944 = vld [vmem:[%s3 + $0x790] sm:$0xff]
      %v4945 = vld [vmem:[%s3 + $0x798] sm:$0xff]
      %v4946 = vld [vmem:[%s3 + $0x7a0] sm:$0xff]
      %v4947 = vld [vmem:[%s3 + $0x7a8] sm:$0xff]
      %v4948 = vld [vmem:[%s3 + $0x7b0] sm:$0xff]
      %v4949 = vld [vmem:[%s3 + $0x7b8] sm:$0xff]
      %v4950 = vld [vmem:[%s3 + $0x7c0] sm:$0xff]
      %v4951 = vld [vmem:[%s3 + $0x7c8] sm:$0xff]
      %v4952 = vld [vmem:[%s3 + $0x7d0] sm:$0xff]
      %v4953 = vld [vmem:[%s3 + $0x7d8] sm:$0xff]
      %v4954 = vld [vmem:[%s3 + $0x7e0] sm:$0xff]
      %v4955 = vld [vmem:[%s3 + $0x7e8] sm:$0xff]
      %v4956 = vld [vmem:[%s3 + $0x7f0] sm:$0xff]
      %v4957 = vld [vmem:[%s3 + $0x7f8] sm:$0xff]
      %v4958 = vld [vmem:[%s3 + $0x800] sm:$0xff]
      %v4959 = vld [vmem:[%s3 + $0x808] sm:$0xff]
      %v4960 = vld [vmem:[%s3 + $0x810] sm:$0xff]
      %v4961 = vld [vmem:[%s3 + $0x818] sm:$0xff]
      %v4962 = vld [vmem:[%s3 + $0x820] sm:$0xff]
      %v4963 = vld [vmem:[%s3 + $0x828] sm:$0xff]
      %v4964 = vld [vmem:[%s3 + $0x830] sm:$0xff]
      %v4965 = vld [vmem:[%s3 + $0x838] sm:$0xff]
      %v4966 = vld [vmem:[%s3 + $0x840] sm:$0xff]
      %v4967 = vld [vmem:[%s3 + $0x848] sm:$0xff]
      %v4968 = vld [vmem:[%s3 + $0x850] sm:$0xff]
      %v4969 = vld [vmem:[%s3 + $0x858] sm:$0xff]
      %v4970 = vld [vmem:[%s3 + $0x860] sm:$0xff]
      %v4971 = vld [vmem:[%s3 + $0x868] sm:$0xff]
      %v4972 = vld [vmem:[%s3 + $0x870] sm:$0xff]
      %v4973 = vld [vmem:[%s3 + $0x878] sm:$0xff]
      %v4974 = vld [vmem:[%s3 + $0x880] sm:$0xff]
      %v4975 = vld [vmem:[%s3 + $0x888] sm:$0xff]
      %v4976 = vld [vmem:[%s3 + $0x890] sm:$0xff]
      %v4977 = vld [vmem:[%s3 + $0x898] sm:$0xff]
      %v4978 = vld [vmem:[%s3 + $0x8a0] sm:$0xff]
      %v4979 = vld [vmem:[%s3 + $0x8a8] sm:$0xff]
      %v4980 = vld [vmem:[%s3 + $0x8b0] sm:$0xff]
      %v4981 = vld [vmem:[%s3 + $0x8b8] sm:$0xff]
      %v4982 = vld [vmem:[%s3 + $0x8c0] sm:$0xff]
      %v4983 = vld [vmem:[%s3 + $0x8c8] sm:$0xff]
      %v4984 = vld [vmem:[%s3 + $0x8d0] sm:$0xff]
      %v4985 = vld [vmem:[%s3 + $0x8d8] sm:$0xff]
      %v4986 = vld [vmem:[%s3 + $0x8e0] sm:$0xff]
      %v4987 = vld [vmem:[%s3 + $0x8e8] sm:$0xff]
      %v4988 = vld [vmem:[%s3 + $0x8f0] sm:$0xff]
      %v4989 = vld [vmem:[%s3 + $0x8f8] sm:$0xff]
      %v4990 = vld [vmem:[%s3 + $0x900] sm:$0xff]
      %v4991 = vld [vmem:[%s3 + $0x908] sm:$0xff]
      %v4992 = vld [vmem:[%s3 + $0x910] sm:$0xff]
      %v4993 = vld [vmem:[%s3 + $0x918] sm:$0xff]
      %v4994 = vld [vmem:[%s3 + $0x920] sm:$0xff]
      %v4995 = vld [vmem:[%s3 + $0x928] sm:$0xff]
      %v4996 = vld [vmem:[%s3 + $0x930] sm:$0xff]
      %v4997 = vld [vmem:[%s3 + $0x938] sm:$0xff]
      %v4998 = vld [vmem:[%s3 + $0x940] sm:$0xff]
      %v4999 = vld [vmem:[%s3 + $0x948] sm:$0xff]
      %v5000 = vld [vmem:[%s3 + $0x950] sm:$0xff]
      %v5001 = vld [vmem:[%s3 + $0x958] sm:$0xff]
      %v5002 = vld [vmem:[%s3 + $0x960] sm:$0xff]
      %v5003 = vld [vmem:[%s3 + $0x968] sm:$0xff]
      %v5004 = vld [vmem:[%s3 + $0x970] sm:$0xff]
      %v5005 = vld [vmem:[%s3 + $0x978] sm:$0xff]
      %v5006 = vld [vmem:[%s3 + $0x980] sm:$0xff]
      %v5007 = vld [vmem:[%s3 + $0x988] sm:$0xff]
      %v5008 = vld [vmem:[%s3 + $0x990] sm:$0xff]
      %v5009 = vld [vmem:[%s3 + $0x998] sm:$0xff]
      %v5010 = vld [vmem:[%s3 + $0x9a0] sm:$0xff]
      %v5011 = vld [vmem:[%s3 + $0x9a8] sm:$0xff]
      %v5012 = vld [vmem:[%s3 + $0x9b0] sm:$0xff]
      %v5013 = vld [vmem:[%s3 + $0x9b8] sm:$0xff]
      %v5014 = vld [vmem:[%s3 + $0x9c0] sm:$0xff]
      %v5015 = vld [vmem:[%s3 + $0x9c8] sm:$0xff]
      %v5016 = vld [vmem:[%s3 + $0x9d0] sm:$0xff]
      %v5017 = vld [vmem:[%s3 + $0x9d8] sm:$0xff]
      %v5018 = vld [vmem:[%s3 + $0x9e0] sm:$0xff]
      %v5019 = vld [vmem:[%s3 + $0x9e8] sm:$0xff]
      %v5020 = vld [vmem:[%s3 + $0x9f0] sm:$0xff]
      %v5021 = vld [vmem:[%s3 + $0x9f8] sm:$0xff]
      %v5022 = vld [vmem:[%s3 + $0xa00] sm:$0xff]
      %v5023 = vld [vmem:[%s3 + $0xa08] sm:$0xff]
      %v5024 = vld [vmem:[%s3 + $0xa10] sm:$0xff]
      %v5025 = vld [vmem:[%s3 + $0xa18] sm:$0xff]
      %v5026 = vld [vmem:[%s3 + $0xa20] sm:$0xff]
      %v5027 = vld [vmem:[%s3 + $0xa28] sm:$0xff]
      %v5028 = vld [vmem:[%s3 + $0xa30] sm:$0xff]
      %v5029 = vld [vmem:[%s3 + $0xa38] sm:$0xff]
      %v5030 = vld [vmem:[%s3 + $0xa40] sm:$0xff]
      %v5031 = vld [vmem:[%s3 + $0xa48] sm:$0xff]
      %v5032 = vld [vmem:[%s3 + $0xa50] sm:$0xff]
      %v5033 = vld [vmem:[%s3 + $0xa58] sm:$0xff]
      %v5034 = vld [vmem:[%s3 + $0xa60] sm:$0xff]
      %v5035 = vld [vmem:[%s3 + $0xa68] sm:$0xff]
      %v5036 = vld [vmem:[%s3 + $0xa70] sm:$0xff]
      %v5037 = vld [vmem:[%s3 + $0xa78] sm:$0xff]
      %v5038 = vld [vmem:[%s3 + $0xa80] sm:$0xff]
      %v5039 = vld [vmem:[%s3 + $0xa88] sm:$0xff]
      %v5040 = vld [vmem:[%s3 + $0xa90] sm:$0xff]
      %v5041 = vld [vmem:[%s3 + $0xa98] sm:$0xff]
      %v5042 = vld [vmem:[%s3 + $0xaa0] sm:$0xff]
      %v5043 = vld [vmem:[%s3 + $0xaa8] sm:$0xff]
      %v5044 = vld [vmem:[%s3 + $0xab0] sm:$0xff]
      %v5045 = vld [vmem:[%s3 + $0xab8] sm:$0xff]
      %v5046 = vld [vmem:[%s3 + $0xac0] sm:$0xff]
      %v5047 = vld [vmem:[%s3 + $0xac8] sm:$0xff]
      %v5048 = vld [vmem:[%s3 + $0xad0] sm:$0xff]
      %v5049 = vld [vmem:[%s3 + $0xad8] sm:$0xff]
      %v5050 = vld [vmem:[%s3 + $0xae0] sm:$0xff]
      %v5051 = vld [vmem:[%s3 + $0xae8] sm:$0xff]
      %v5052 = vld [vmem:[%s3 + $0xaf0] sm:$0xff]
      %v5053 = vld [vmem:[%s3 + $0xaf8] sm:$0xff]
      %v5054 = vld [vmem:[%s3 + $0xb00] sm:$0xff]
      %v5055 = vld [vmem:[%s3 + $0xb08] sm:$0xff]
      %v5056 = vld [vmem:[%s3 + $0xb10] sm:$0xff]
      %v5057 = vld [vmem:[%s3 + $0xb18] sm:$0xff]
      %v5058 = vld [vmem:[%s3 + $0xb20] sm:$0xff]
      %v5059 = vld [vmem:[%s3 + $0xb28] sm:$0xff]
      %v5060 = vld [vmem:[%s3 + $0xb30] sm:$0xff]
      %v5061 = vld [vmem:[%s3 + $0xb38] sm:$0xff]
      %v5062 = vld [vmem:[%s3 + $0xb40] sm:$0xff]
      %v5063 = vld [vmem:[%s3 + $0xb48] sm:$0xff]
      %v5064 = vld [vmem:[%s3 + $0xb50] sm:$0xff]
      %v5065 = vld [vmem:[%s3 + $0xb58] sm:$0xff]
      %v5066 = vld [vmem:[%s3 + $0xb60] sm:$0xff]
      %v5067 = vld [vmem:[%s3 + $0xb68] sm:$0xff]
      %v5068 = vld [vmem:[%s3 + $0xb70] sm:$0xff]
      %v5069 = vld [vmem:[%s3 + $0xb78] sm:$0xff]
      %v5070 = vld [vmem:[%s3 + $0xb80] sm:$0xff]
      %v5071 = vld [vmem:[%s3 + $0xb88] sm:$0xff]
      %v5072 = vld [vmem:[%s3 + $0xb90] sm:$0xff]
      %v5073 = vld [vmem:[%s3 + $0xb98] sm:$0xff]
      %v5074 = vld [vmem:[%s3 + $0xba0] sm:$0xff]
      %v5075 = vld [vmem:[%s3 + $0xba8] sm:$0xff]
      %v5076 = vld [vmem:[%s3 + $0xbb0] sm:$0xff]
      %v5077 = vld [vmem:[%s3 + $0xbb8] sm:$0xff]
      %v5078 = vld [vmem:[%s3 + $0xbc0] sm:$0xff]
      %v5079 = vld [vmem:[%s3 + $0xbc8] sm:$0xff]
      %v5080 = vld [vmem:[%s3 + $0xbd0] sm:$0xff]
      %v5081 = vld [vmem:[%s3 + $0xbd8] sm:$0xff]
      %v5082 = vld [vmem:[%s3 + $0xbe0] sm:$0xff]
      %v5083 = vld [vmem:[%s3 + $0xbe8] sm:$0xff]
      %v5084 = vld [vmem:[%s3 + $0xbf0] sm:$0xff]
      %v5085 = vld [vmem:[%s3 + $0xbf8] sm:$0xff]
      %v5086 = vld [vmem:[%s3 + $0xc00] sm:$0xff]
      %v5087 = vld [vmem:[%s3 + $0xc08] sm:$0xff]
      %v5088 = vld [vmem:[%s3 + $0xc10] sm:$0xff]
      %v5089 = vld [vmem:[%s3 + $0xc18] sm:$0xff]
      %v5090 = vld [vmem:[%s3 + $0xc20] sm:$0x3]
      %v5091 = vld [vmem:[%s3 + $0xc28] sm:$0x3]
      %v5092 = vld [vmem:[%s3 + $0xc30] sm:$0x3]
      %v5093 = vld [vmem:[%s3 + $0xc38] sm:$0x3]
      %vm5094 = vcmask 80896
      %v5096 = vsel %vm5094, %v4701, 0
      %v5099 = vsel %vm715, %v5090, 0
      %v5102 = vsel %vm715, %v5091, 0
      %v5105 = vsel %vm715, %v5092, 0
      %v5108 = vsel %vm715, %v5093, 0
      %5110 = vmatprep.subr.mxu0 %v4703
      %5111 = vmatpush1.msra.mxu0 %v4702
      %5112 = vmatprep.subr.mxu0 %v4707
      %5113 = vmatpush1.msra.mxu0 %v4706
      %5114 = vmatprep.subr.mxu0 %v4711
      %5115 = vmatpush1.msra.mxu0 %v4710
      %5116 = vmatprep.subr.mxu0 %v4715
      %5117 = vmatpush1.msra.mxu0 %v4714
      %5118 = vmatprep.subr.mxu0 %v4719
      %5119 = vmatpush1.msra.mxu0 %v4718
      %5120 = vmatprep.subr.mxu0 %v4723
      %5121 = vmatpush1.msra.mxu0 %v4722
      %5122 = vmatprep.subr.mxu0 %v4727
      %5123 = vmatpush1.msra.mxu0 %v4726
      %5124 = vmatprep.subr.mxu0 %v4731
      %5125 = vmatpush1.msra.mxu0 %v4730
      %5126 = vmatprep.subr.mxu0 %v4735
      %5127 = vmatpush1.msra.mxu0 %v4734
      %5128 = vmatprep.subr.mxu0 %v4739
      %5129 = vmatpush1.msra.mxu0 %v4738
      %5130 = vmatprep.subr.mxu0 %v4743
      %5131 = vmatpush1.msra.mxu0 %v4742
      %5132 = vmatprep.subr.mxu0 %v4747
      %5133 = vmatpush1.msra.mxu0 %v4746
      %5134 = vmatprep.subr.mxu0 %v4751
      %5135 = vmatpush1.msra.mxu0 %v4750
      %5136 = vmatprep.subr.mxu0 %v4755
      %5137 = vmatpush1.msra.mxu0 %v4754
      %5138 = vmatprep.subr.mxu0 %v4759
      %5139 = vmatpush1.msra.mxu0 %v4758
      %5140 = vmatprep.subr.mxu0 %v4763
      %5141 = vmatpush1.msra.mxu0 %v4762
      %5142 = vmatprep.subr.mxu0 %v4767
      %5143 = vmatpush1.msra.mxu0 %v4766
      %5144 = vmatprep.subr.mxu0 %v4771
      %5145 = vmatpush1.msra.mxu0 %v4770
      %5146 = vmatprep.subr.mxu0 %v4775
      %5147 = vmatpush1.msra.mxu0 %v4774
      %5148 = vmatprep.subr.mxu0 %v4779
      %5149 = vmatpush1.msra.mxu0 %v4778
      %5150 = vmatprep.subr.mxu0 %v4783
      %5151 = vmatpush1.msra.mxu0 %v4782
      %5152 = vmatprep.subr.mxu0 %v4787
      %5153 = vmatpush1.msra.mxu0 %v4786
      %5154 = vmatprep.subr.mxu0 %v4791
      %5155 = vmatpush1.msra.mxu0 %v4790
      %5156 = vmatprep.subr.mxu0 %v4795
      %5157 = vmatpush1.msra.mxu0 %v4794
      %5158 = vmatprep.subr.mxu0 %v4799
      %5159 = vmatpush1.msra.mxu0 %v4798
      %5160 = vmatprep.subr.mxu0 %v4803
      %5161 = vmatpush1.msra.mxu0 %v4802
      %5162 = vmatprep.subr.mxu0 %v4807
      %5163 = vmatpush1.msra.mxu0 %v4806
      %5164 = vmatprep.subr.mxu0 %v4811
      %5165 = vmatpush1.msra.mxu0 %v4810
      %5166 = vmatprep.subr.mxu0 %v4815
      %5167 = vmatpush1.msra.mxu0 %v4814
      %5168 = vmatprep.subr.mxu0 %v4819
      %5169 = vmatpush1.msra.mxu0 %v4818
      %5170 = vmatprep.subr.mxu0 %v4823
      %5171 = vmatpush1.msra.mxu0 %v4822
      %5172 = vmatprep.subr.mxu0 %v4827
      %5173 = vmatpush1.msra.mxu0 %v4826
      %5174 = vmatprep.mubr.f32.mxu0 %v4696
      %5175 = vmatmul.mubr.f32.gmra.mrb[0].mxu0 %v4695
      %v5176 = vpop.f32.mrb[0].mxu0
      %v5177 = vadd.f32 0.0, %v5176
      %v5178 = vpop.f32.mrb[0].mxu0
      %v5179 = vadd.f32 0.0, %v5178
      %5180 = vdwg.mxu0
      %5181 = vmatprep.subr.mxu0 %v4831
      %5182 = vmatpush1.msra.mxu0 %v4830
      %5183 = vmatprep.subr.mxu0 %v4835
      %5184 = vmatpush1.msra.mxu0 %v4834
      %5185 = vmatprep.subr.mxu0 %v4839
      %5186 = vmatpush1.msra.mxu0 %v4838
      %5187 = vmatprep.subr.mxu0 %v4843
      %5188 = vmatpush1.msra.mxu0 %v4842
      %5189 = vmatprep.subr.mxu0 %v4847
      %5190 = vmatpush1.msra.mxu0 %v4846
      %5191 = vmatprep.subr.mxu0 %v4851
      %5192 = vmatpush1.msra.mxu0 %v4850
      %5193 = vmatprep.subr.mxu0 %v4855
      %5194 = vmatpush1.msra.mxu0 %v4854
      %5195 = vmatprep.subr.mxu0 %v4859
      %5196 = vmatpush1.msra.mxu0 %v4858
      %5197 = vmatprep.subr.mxu0 %v4863
      %5198 = vmatpush1.msra.mxu0 %v4862
      %5199 = vmatprep.subr.mxu0 %v4867
      %5200 = vmatpush1.msra.mxu0 %v4866
      %5201 = vmatprep.subr.mxu0 %v4871
      %5202 = vmatpush1.msra.mxu0 %v4870
      %5203 = vmatprep.subr.mxu0 %v4875
      %5204 = vmatpush1.msra.mxu0 %v4874
      %5205 = vmatprep.subr.mxu0 %v4879
      %5206 = vmatpush1.msra.mxu0 %v4878
      %5207 = vmatprep.subr.mxu0 %v4883
      %5208 = vmatpush1.msra.mxu0 %v4882
      %5209 = vmatprep.subr.mxu0 %v4887
      %5210 = vmatpush1.msra.mxu0 %v4886
      %5211 = vmatprep.subr.mxu0 %v4891
      %5212 = vmatpush1.msra.mxu0 %v4890
      %5213 = vmatprep.subr.mxu0 %v4895
      %5214 = vmatpush1.msra.mxu0 %v4894
      %5215 = vmatprep.subr.mxu0 %v4899
      %5216 = vmatpush1.msra.mxu0 %v4898
      %5217 = vmatprep.subr.mxu0 %v4903
      %5218 = vmatpush1.msra.mxu0 %v4902
      %5219 = vmatprep.subr.mxu0 %v4907
      %5220 = vmatpush1.msra.mxu0 %v4906
      %5221 = vmatprep.subr.mxu0 %v4911
      %5222 = vmatpush1.msra.mxu0 %v4910
      %5223 = vmatprep.subr.mxu0 %v4915
      %5224 = vmatpush1.msra.mxu0 %v4914
      %5225 = vmatprep.subr.mxu0 %v4919
      %5226 = vmatpush1.msra.mxu0 %v4918
      %5227 = vmatprep.subr.mxu0 %v4923
      %5228 = vmatpush1.msra.mxu0 %v4922
      %5229 = vmatprep.subr.mxu0 %v4927
      %5230 = vmatpush1.msra.mxu0 %v4926
      %5231 = vmatprep.subr.mxu0 %v4931
      %5232 = vmatpush1.msra.mxu0 %v4930
      %5233 = vmatprep.subr.mxu0 %v4935
      %5234 = vmatpush1.msra.mxu0 %v4934
      %5235 = vmatprep.subr.mxu0 %v4939
      %5236 = vmatpush1.msra.mxu0 %v4938
      %5237 = vmatprep.subr.mxu0 %v4943
      %5238 = vmatpush1.msra.mxu0 %v4942
      %5239 = vmatprep.subr.mxu0 %v4947
      %5240 = vmatpush1.msra.mxu0 %v4946
      %5241 = vmatprep.subr.mxu0 %v4951
      %5242 = vmatpush1.msra.mxu0 %v4950
      %5243 = vmatprep.subr.mxu0 %v4955
      %5244 = vmatpush1.msra.mxu0 %v4954
      %5245 = vmatprep.mubr.f32.mxu0 %v4698
      %5246 = vmatmul.mubr.f32.gmra.mrb[0].mxu0 %v4697
      %v5247 = vpop.f32.mrb[0].mxu0
      %v5248 = vadd.f32 %v5177, %v5247
      %v5249 = vpop.f32.mrb[0].mxu0
      %v5250 = vadd.f32 %v5179, %v5249
      %5251 = vdwg.mxu0
      %5252 = vmatprep.subr.mxu0 %v4959
      %5253 = vmatpush1.msra.mxu0 %v4958
      %5254 = vmatprep.subr.mxu0 %v4963
      %5255 = vmatpush1.msra.mxu0 %v4962
      %5256 = vmatprep.subr.mxu0 %v4967
      %5257 = vmatpush1.msra.mxu0 %v4966
      %5258 = vmatprep.subr.mxu0 %v4971
      %5259 = vmatpush1.msra.mxu0 %v4970
      %5260 = vmatprep.subr.mxu0 %v4975
      %5261 = vmatpush1.msra.mxu0 %v4974
      %5262 = vmatprep.subr.mxu0 %v4979
      %5263 = vmatpush1.msra.mxu0 %v4978
      %5264 = vmatprep.subr.mxu0 %v4983
      %5265 = vmatpush1.msra.mxu0 %v4982
      %5266 = vmatprep.subr.mxu0 %v4987
      %5267 = vmatpush1.msra.mxu0 %v4986
      %5268 = vmatprep.subr.mxu0 %v4991
      %5269 = vmatpush1.msra.mxu0 %v4990
      %5270 = vmatprep.subr.mxu0 %v4995
      %5271 = vmatpush1.msra.mxu0 %v4994
      %5272 = vmatprep.subr.mxu0 %v4999
      %5273 = vmatpush1.msra.mxu0 %v4998
      %5274 = vmatprep.subr.mxu0 %v5003
      %5275 = vmatpush1.msra.mxu0 %v5002
      %5276 = vmatprep.subr.mxu0 %v5007
      %5277 = vmatpush1.msra.mxu0 %v5006
      %5278 = vmatprep.subr.mxu0 %v5011
      %5279 = vmatpush1.msra.mxu0 %v5010
      %5280 = vmatprep.subr.mxu0 %v5015
      %5281 = vmatpush1.msra.mxu0 %v5014
      %5282 = vmatprep.subr.mxu0 %v5019
      %5283 = vmatpush1.msra.mxu0 %v5018
      %5284 = vmatprep.subr.mxu0 %v5023
      %5285 = vmatpush1.msra.mxu0 %v5022
      %5286 = vmatprep.subr.mxu0 %v5027
      %5287 = vmatpush1.msra.mxu0 %v5026
      %5288 = vmatprep.subr.mxu0 %v5031
      %5289 = vmatpush1.msra.mxu0 %v5030
      %5290 = vmatprep.subr.mxu0 %v5035
      %5291 = vmatpush1.msra.mxu0 %v5034
      %5292 = vmatprep.subr.mxu0 %v5039
      %5293 = vmatpush1.msra.mxu0 %v5038
      %5294 = vmatprep.subr.mxu0 %v5043
      %5295 = vmatpush1.msra.mxu0 %v5042
      %5296 = vmatprep.subr.mxu0 %v5047
      %5297 = vmatpush1.msra.mxu0 %v5046
      %5298 = vmatprep.subr.mxu0 %v5051
      %5299 = vmatpush1.msra.mxu0 %v5050
      %5300 = vmatprep.subr.mxu0 %v5055
      %5301 = vmatpush1.msra.mxu0 %v5054
      %5302 = vmatprep.subr.mxu0 %v5059
      %5303 = vmatpush1.msra.mxu0 %v5058
      %5304 = vmatprep.subr.mxu0 %v5063
      %5305 = vmatpush1.msra.mxu0 %v5062
      %5306 = vmatprep.subr.mxu0 %v5067
      %5307 = vmatpush1.msra.mxu0 %v5066
      %5308 = vmatprep.subr.mxu0 %v5071
      %5309 = vmatpush1.msra.mxu0 %v5070
      %5310 = vmatprep.subr.mxu0 %v5075
      %5311 = vmatpush1.msra.mxu0 %v5074
      %5312 = vmatprep.subr.mxu0 %v5079
      %5313 = vmatpush1.msra.mxu0 %v5078
      %5314 = vmatprep.subr.mxu0 %v5083
      %5315 = vmatpush1.msra.mxu0 %v5082
      %5316 = vmatprep.mubr.f32.mxu0 %v4700
      %5317 = vmatmul.mubr.f32.gmra.mrb[0].mxu0 %v4699
      %v5318 = vpop.f32.mrb[0].mxu0
      %v5319 = vadd.f32 %v5248, %v5318
      %v5320 = vpop.f32.mrb[0].mxu0
      %v5321 = vadd.f32 %v5250, %v5320
      %5322 = vdwg.mxu0
      %5323 = vmatprep.subr.mxu0 %v5087
      %5324 = vmatpush1.msra.mxu0 %v5086
      %5325 = vmatprep.subr.mxu0 %v5102
      %5326 = vmatpush1.msra.mxu0 %v5099
      %5327 = vmatprep.subr.mxu0 0.0
      %5328 = vmatpush1.msra.mxu0 0.0
      %5329 = vmatprep.subr.mxu0 0.0
      %5330 = vmatpush1.msra.mxu0 0.0
      %5331 = vmatprep.subr.mxu0 0.0
      %5332 = vmatpush1.msra.mxu0 0.0
      %5333 = vmatprep.subr.mxu0 0.0
      %5334 = vmatpush1.msra.mxu0 0.0
      %5335 = vmatprep.subr.mxu0 0.0
      %5336 = vmatpush1.msra.mxu0 0.0
      %5337 = vmatprep.subr.mxu0 0.0
      %5338 = vmatpush1.msra.mxu0 0.0
      %5339 = vmatprep.subr.mxu0 0.0
      %5340 = vmatpush1.msra.mxu0 0.0
      %5341 = vmatprep.subr.mxu0 0.0
      %5342 = vmatpush1.msra.mxu0 0.0
      %5343 = vmatprep.subr.mxu0 0.0
      %5344 = vmatpush1.msra.mxu0 0.0
      %5345 = vmatprep.subr.mxu0 0.0
      %5346 = vmatpush1.msra.mxu0 0.0
      %5347 = vmatprep.subr.mxu0 0.0
      %5348 = vmatpush1.msra.mxu0 0.0
      %5349 = vmatprep.subr.mxu0 0.0
      %5350 = vmatpush1.msra.mxu0 0.0
      %5351 = vmatprep.subr.mxu0 0.0
      %5352 = vmatpush1.msra.mxu0 0.0
      %5353 = vmatprep.subr.mxu0 0.0
      %5354 = vmatpush1.msra.mxu0 0.0
      %5355 = vmatprep.subr.mxu0 0.0
      %5356 = vmatpush1.msra.mxu0 0.0
      %5357 = vmatprep.subr.mxu0 0.0
      %5358 = vmatpush1.msra.mxu0 0.0
      %5359 = vmatprep.subr.mxu0 0.0
      %5360 = vmatpush1.msra.mxu0 0.0
      %5361 = vmatprep.subr.mxu0 0.0
      %5362 = vmatpush1.msra.mxu0 0.0
      %5363 = vmatprep.subr.mxu0 0.0
      %5364 = vmatpush1.msra.mxu0 0.0
      %5365 = vmatprep.subr.mxu0 0.0
      %5366 = vmatpush1.msra.mxu0 0.0
      %5367 = vmatprep.subr.mxu0 0.0
      %5368 = vmatpush1.msra.mxu0 0.0
      %5369 = vmatprep.subr.mxu0 0.0
      %5370 = vmatpush1.msra.mxu0 0.0
      %5371 = vmatprep.subr.mxu0 0.0
      %5372 = vmatpush1.msra.mxu0 0.0
      %5373 = vmatprep.subr.mxu0 0.0
      %5374 = vmatpush1.msra.mxu0 0.0
      %5375 = vmatprep.subr.mxu0 0.0
      %5376 = vmatpush1.msra.mxu0 0.0
      %5377 = vmatprep.subr.mxu0 0.0
      %5378 = vmatpush1.msra.mxu0 0.0
      %5379 = vmatprep.subr.mxu0 0.0
      %5380 = vmatpush1.msra.mxu0 0.0
      %5381 = vmatprep.subr.mxu0 0.0
      %5382 = vmatpush1.msra.mxu0 0.0
      %5383 = vmatprep.subr.mxu0 0.0
      %5384 = vmatpush1.msra.mxu0 0.0
      %5385 = vmatprep.subr.mxu0 0.0
      %5386 = vmatpush1.msra.mxu0 0.0
      %5387 = vmatprep.mubr.f32.mxu0 0.0
      %5388 = vmatmul.mubr.f32.gmra.mrb[0].mxu0 %v5096
      %v5389 = vpop.f32.mrb[0].mxu0
      %v5390 = vadd.f32 %v5319, %v5389
      %v5391 = vpop.f32.mrb[0].mxu0
      %v5392 = vadd.f32 %v5321, %v5391
      %5393 = vdwg.mxu0
      %5394 = vmatprep.subr.mxu0 %v4705
      %5395 = vmatpush1.msra.mxu0 %v4704
      %5396 = vmatprep.subr.mxu0 %v4709
      %5397 = vmatpush1.msra.mxu0 %v4708
      %5398 = vmatprep.subr.mxu0 %v4713
      %5399 = vmatpush1.msra.mxu0 %v4712
      %5400 = vmatprep.subr.mxu0 %v4717
      %5401 = vmatpush1.msra.mxu0 %v4716
      %5402 = vmatprep.subr.mxu0 %v4721
      %5403 = vmatpush1.msra.mxu0 %v4720
      %5404 = vmatprep.subr.mxu0 %v4725
      %5405 = vmatpush1.msra.mxu0 %v4724
      %5406 = vmatprep.subr.mxu0 %v4729
      %5407 = vmatpush1.msra.mxu0 %v4728
      %5408 = vmatprep.subr.mxu0 %v4733
      %5409 = vmatpush1.msra.mxu0 %v4732
      %5410 = vmatprep.subr.mxu0 %v4737
      %5411 = vmatpush1.msra.mxu0 %v4736
      %5412 = vmatprep.subr.mxu0 %v4741
      %5413 = vmatpush1.msra.mxu0 %v4740
      %5414 = vmatprep.subr.mxu0 %v4745
      %5415 = vmatpush1.msra.mxu0 %v4744
      %5416 = vmatprep.subr.mxu0 %v4749
      %5417 = vmatpush1.msra.mxu0 %v4748
      %5418 = vmatprep.subr.mxu0 %v4753
      %5419 = vmatpush1.msra.mxu0 %v4752
      %5420 = vmatprep.subr.mxu0 %v4757
      %5421 = vmatpush1.msra.mxu0 %v4756
      %5422 = vmatprep.subr.mxu0 %v4761
      %5423 = vmatpush1.msra.mxu0 %v4760
      %5424 = vmatprep.subr.mxu0 %v4765
      %5425 = vmatpush1.msra.mxu0 %v4764
      %5426 = vmatprep.subr.mxu0 %v4769
      %5427 = vmatpush1.msra.mxu0 %v4768
      %5428 = vmatprep.subr.mxu0 %v4773
      %5429 = vmatpush1.msra.mxu0 %v4772
      %5430 = vmatprep.subr.mxu0 %v4777
      %5431 = vmatpush1.msra.mxu0 %v4776
      %5432 = vmatprep.subr.mxu0 %v4781
      %5433 = vmatpush1.msra.mxu0 %v4780
      %5434 = vmatprep.subr.mxu0 %v4785
      %5435 = vmatpush1.msra.mxu0 %v4784
      %5436 = vmatprep.subr.mxu0 %v4789
      %5437 = vmatpush1.msra.mxu0 %v4788
      %5438 = vmatprep.subr.mxu0 %v4793
      %5439 = vmatpush1.msra.mxu0 %v4792
      %5440 = vmatprep.subr.mxu0 %v4797
      %5441 = vmatpush1.msra.mxu0 %v4796
      %5442 = vmatprep.subr.mxu0 %v4801
      %5443 = vmatpush1.msra.mxu0 %v4800
      %5444 = vmatprep.subr.mxu0 %v4805
      %5445 = vmatpush1.msra.mxu0 %v4804
      %5446 = vmatprep.subr.mxu0 %v4809
      %5447 = vmatpush1.msra.mxu0 %v4808
      %5448 = vmatprep.subr.mxu0 %v4813
      %5449 = vmatpush1.msra.mxu0 %v4812
      %5450 = vmatprep.subr.mxu0 %v4817
      %5451 = vmatpush1.msra.mxu0 %v4816
      %5452 = vmatprep.subr.mxu0 %v4821
      %5453 = vmatpush1.msra.mxu0 %v4820
      %5454 = vmatprep.subr.mxu0 %v4825
      %5455 = vmatpush1.msra.mxu0 %v4824
      %5456 = vmatprep.subr.mxu0 %v4829
      %5457 = vmatpush1.msra.mxu0 %v4828
      %5458 = vmatprep.mubr.f32.mxu0 %v4696
      %5459 = vmatmul.mubr.f32.gmra.mrb[0].mxu0 %v4695
      %v5460 = vpop.f32.mrb[0].mxu0
      %v5461 = vadd.f32 0.0, %v5460
      %v5462 = vpop.f32.mrb[0].mxu0
      %v5463 = vadd.f32 0.0, %v5462
      %5464 = vdwg.mxu0
      %5465 = vmatprep.subr.mxu0 %v4833
      %5466 = vmatpush1.msra.mxu0 %v4832
      %5467 = vmatprep.subr.mxu0 %v4837
      %5468 = vmatpush1.msra.mxu0 %v4836
      %5469 = vmatprep.subr.mxu0 %v4841
      %5470 = vmatpush1.msra.mxu0 %v4840
      %5471 = vmatprep.subr.mxu0 %v4845
      %5472 = vmatpush1.msra.mxu0 %v4844
      %5473 = vmatprep.subr.mxu0 %v4849
      %5474 = vmatpush1.msra.mxu0 %v4848
      %5475 = vmatprep.subr.mxu0 %v4853
      %5476 = vmatpush1.msra.mxu0 %v4852
      %5477 = vmatprep.subr.mxu0 %v4857
      %5478 = vmatpush1.msra.mxu0 %v4856
      %5479 = vmatprep.subr.mxu0 %v4861
      %5480 = vmatpush1.msra.mxu0 %v4860
      %5481 = vmatprep.subr.mxu0 %v4865
      %5482 = vmatpush1.msra.mxu0 %v4864
      %5483 = vmatprep.subr.mxu0 %v4869
      %5484 = vmatpush1.msra.mxu0 %v4868
      %5485 = vmatprep.subr.mxu0 %v4873
      %5486 = vmatpush1.msra.mxu0 %v4872
      %5487 = vmatprep.subr.mxu0 %v4877
      %5488 = vmatpush1.msra.mxu0 %v4876
      %5489 = vmatprep.subr.mxu0 %v4881
      %5490 = vmatpush1.msra.mxu0 %v4880
      %5491 = vmatprep.subr.mxu0 %v4885
      %5492 = vmatpush1.msra.mxu0 %v4884
      %5493 = vmatprep.subr.mxu0 %v4889
      %5494 = vmatpush1.msra.mxu0 %v4888
      %5495 = vmatprep.subr.mxu0 %v4893
      %5496 = vmatpush1.msra.mxu0 %v4892
      %5497 = vmatprep.subr.mxu0 %v4897
      %5498 = vmatpush1.msra.mxu0 %v4896
      %5499 = vmatprep.subr.mxu0 %v4901
      %5500 = vmatpush1.msra.mxu0 %v4900
      %5501 = vmatprep.subr.mxu0 %v4905
      %5502 = vmatpush1.msra.mxu0 %v4904
      %5503 = vmatprep.subr.mxu0 %v4909
      %5504 = vmatpush1.msra.mxu0 %v4908
      %5505 = vmatprep.subr.mxu0 %v4913
      %5506 = vmatpush1.msra.mxu0 %v4912
      %5507 = vmatprep.subr.mxu0 %v4917
      %5508 = vmatpush1.msra.mxu0 %v4916
      %5509 = vmatprep.subr.mxu0 %v4921
      %5510 = vmatpush1.msra.mxu0 %v4920
      %5511 = vmatprep.subr.mxu0 %v4925
      %5512 = vmatpush1.msra.mxu0 %v4924
      %5513 = vmatprep.subr.mxu0 %v4929
      %5514 = vmatpush1.msra.mxu0 %v4928
      %5515 = vmatprep.subr.mxu0 %v4933
      %5516 = vmatpush1.msra.mxu0 %v4932
      %5517 = vmatprep.subr.mxu0 %v4937
      %5518 = vmatpush1.msra.mxu0 %v4936
      %5519 = vmatprep.subr.mxu0 %v4941
      %5520 = vmatpush1.msra.mxu0 %v4940
      %5521 = vmatprep.subr.mxu0 %v4945
      %5522 = vmatpush1.msra.mxu0 %v4944
      %5523 = vmatprep.subr.mxu0 %v4949
      %5524 = vmatpush1.msra.mxu0 %v4948
      %5525 = vmatprep.subr.mxu0 %v4953
      %5526 = vmatpush1.msra.mxu0 %v4952
      %5527 = vmatprep.subr.mxu0 %v4957
      %5528 = vmatpush1.msra.mxu0 %v4956
      %5529 = vmatprep.mubr.f32.mxu0 %v4698
      %5530 = vmatmul.mubr.f32.gmra.mrb[0].mxu0 %v4697
      %v5531 = vpop.f32.mrb[0].mxu0
      %v5532 = vadd.f32 %v5461, %v5531
      %v5533 = vpop.f32.mrb[0].mxu0
      %v5534 = vadd.f32 %v5463, %v5533
      %5535 = vdwg.mxu0
      %5536 = vmatprep.subr.mxu0 %v4961
      %5537 = vmatpush1.msra.mxu0 %v4960
      %5538 = vmatprep.subr.mxu0 %v4965
      %5539 = vmatpush1.msra.mxu0 %v4964
      %5540 = vmatprep.subr.mxu0 %v4969
      %5541 = vmatpush1.msra.mxu0 %v4968
      %5542 = vmatprep.subr.mxu0 %v4973
      %5543 = vmatpush1.msra.mxu0 %v4972
      %5544 = vmatprep.subr.mxu0 %v4977
      %5545 = vmatpush1.msra.mxu0 %v4976
      %5546 = vmatprep.subr.mxu0 %v4981
      %5547 = vmatpush1.msra.mxu0 %v4980
      %5548 = vmatprep.subr.mxu0 %v4985
      %5549 = vmatpush1.msra.mxu0 %v4984
      %5550 = vmatprep.subr.mxu0 %v4989
      %5551 = vmatpush1.msra.mxu0 %v4988
      %5552 = vmatprep.subr.mxu0 %v4993
      %5553 = vmatpush1.msra.mxu0 %v4992
      %5554 = vmatprep.subr.mxu0 %v4997
      %5555 = vmatpush1.msra.mxu0 %v4996
      %5556 = vmatprep.subr.mxu0 %v5001
      %5557 = vmatpush1.msra.mxu0 %v5000
      %5558 = vmatprep.subr.mxu0 %v5005
      %5559 = vmatpush1.msra.mxu0 %v5004
      %5560 = vmatprep.subr.mxu0 %v5009
      %5561 = vmatpush1.msra.mxu0 %v5008
      %5562 = vmatprep.subr.mxu0 %v5013
      %5563 = vmatpush1.msra.mxu0 %v5012
      %5564 = vmatprep.subr.mxu0 %v5017
      %5565 = vmatpush1.msra.mxu0 %v5016
      %5566 = vmatprep.subr.mxu0 %v5021
      %5567 = vmatpush1.msra.mxu0 %v5020
      %5568 = vmatprep.subr.mxu0 %v5025
      %5569 = vmatpush1.msra.mxu0 %v5024
      %5570 = vmatprep.subr.mxu0 %v5029
      %5571 = vmatpush1.msra.mxu0 %v5028
      %5572 = vmatprep.subr.mxu0 %v5033
      %5573 = vmatpush1.msra.mxu0 %v5032
      %5574 = vmatprep.subr.mxu0 %v5037
      %5575 = vmatpush1.msra.mxu0 %v5036
      %5576 = vmatprep.subr.mxu0 %v5041
      %5577 = vmatpush1.msra.mxu0 %v5040
      %5578 = vmatprep.subr.mxu0 %v5045
      %5579 = vmatpush1.msra.mxu0 %v5044
      %5580 = vmatprep.subr.mxu0 %v5049
      %5581 = vmatpush1.msra.mxu0 %v5048
      %5582 = vmatprep.subr.mxu0 %v5053
      %5583 = vmatpush1.msra.mxu0 %v5052
      %5584 = vmatprep.subr.mxu0 %v5057
      %5585 = vmatpush1.msra.mxu0 %v5056
      %5586 = vmatprep.subr.mxu0 %v5061
      %5587 = vmatpush1.msra.mxu0 %v5060
      %5588 = vmatprep.subr.mxu0 %v5065
      %5589 = vmatpush1.msra.mxu0 %v5064
      %5590 = vmatprep.subr.mxu0 %v5069
      %5591 = vmatpush1.msra.mxu0 %v5068
      %5592 = vmatprep.subr.mxu0 %v5073
      %5593 = vmatpush1.msra.mxu0 %v5072
      %5594 = vmatprep.subr.mxu0 %v5077
      %5595 = vmatpush1.msra.mxu0 %v5076
      %5596 = vmatprep.subr.mxu0 %v5081
      %5597 = vmatpush1.msra.mxu0 %v5080
      %5598 = vmatprep.subr.mxu0 %v5085
      %5599 = vmatpush1.msra.mxu0 %v5084
      %5600 = vmatprep.mubr.f32.mxu0 %v4700
      %5601 = vmatmul.mubr.f32.gmra.mrb[0].mxu0 %v4699
      %v5602 = vpop.f32.mrb[0].mxu0
      %v5603 = vadd.f32 %v5532, %v5602
      %v5604 = vpop.f32.mrb[0].mxu0
      %v5605 = vadd.f32 %v5534, %v5604
      %5606 = vdwg.mxu0
      %5607 = vmatprep.subr.mxu0 %v5089
      %5608 = vmatpush1.msra.mxu0 %v5088
      %5609 = vmatprep.subr.mxu0 %v5108
      %5610 = vmatpush1.msra.mxu0 %v5105
      %5611 = vmatprep.subr.mxu0 0.0
      %5612 = vmatpush1.msra.mxu0 0.0
      %5613 = vmatprep.subr.mxu0 0.0
      %5614 = vmatpush1.msra.mxu0 0.0
      %5615 = vmatprep.subr.mxu0 0.0
      %5616 = vmatpush1.msra.mxu0 0.0
      %5617 = vmatprep.subr.mxu0 0.0
      %5618 = vmatpush1.msra.mxu0 0.0
      %5619 = vmatprep.subr.mxu0 0.0
      %5620 = vmatpush1.msra.mxu0 0.0
      %5621 = vmatprep.subr.mxu0 0.0
      %5622 = vmatpush1.msra.mxu0 0.0
      %5623 = vmatprep.subr.mxu0 0.0
      %5624 = vmatpush1.msra.mxu0 0.0
      %5625 = vmatprep.subr.mxu0 0.0
      %5626 = vmatpush1.msra.mxu0 0.0
      %5627 = vmatprep.subr.mxu0 0.0
      %5628 = vmatpush1.msra.mxu0 0.0
      %5629 = vmatprep.subr.mxu0 0.0
      %5630 = vmatpush1.msra.mxu0 0.0
      %5631 = vmatprep.subr.mxu0 0.0
      %5632 = vmatpush1.msra.mxu0 0.0
      %5633 = vmatprep.subr.mxu0 0.0
      %5634 = vmatpush1.msra.mxu0 0.0
      %5635 = vmatprep.subr.mxu0 0.0
      %5636 = vmatpush1.msra.mxu0 0.0
      %5637 = vmatprep.subr.mxu0 0.0
      %5638 = vmatpush1.msra.mxu0 0.0
      %5639 = vmatprep.subr.mxu0 0.0
      %5640 = vmatpush1.msra.mxu0 0.0
      %5641 = vmatprep.subr.mxu0 0.0
      %5642 = vmatpush1.msra.mxu0 0.0
      %5643 = vmatprep.subr.mxu0 0.0
      %5644 = vmatpush1.msra.mxu0 0.0
      %5645 = vmatprep.subr.mxu0 0.0
      %5646 = vmatpush1.msra.mxu0 0.0
      %5647 = vmatprep.subr.mxu0 0.0
      %5648 = vmatpush1.msra.mxu0 0.0
      %5649 = vmatprep.subr.mxu0 0.0
      %5650 = vmatpush1.msra.mxu0 0.0
      %5651 = vmatprep.subr.mxu0 0.0
      %5652 = vmatpush1.msra.mxu0 0.0
      %5653 = vmatprep.subr.mxu0 0.0
      %5654 = vmatpush1.msra.mxu0 0.0
      %5655 = vmatprep.subr.mxu0 0.0
      %5656 = vmatpush1.msra.mxu0 0.0
      %5657 = vmatprep.subr.mxu0 0.0
      %5658 = vmatpush1.msra.mxu0 0.0
      %5659 = vmatprep.subr.mxu0 0.0
      %5660 = vmatpush1.msra.mxu0 0.0
      %5661 = vmatprep.subr.mxu0 0.0
      %5662 = vmatpush1.msra.mxu0 0.0
      %5663 = vmatprep.subr.mxu0 0.0
      %5664 = vmatpush1.msra.mxu0 0.0
      %5665 = vmatprep.subr.mxu0 0.0
      %5666 = vmatpush1.msra.mxu0 0.0
      %5667 = vmatprep.subr.mxu0 0.0
      %5668 = vmatpush1.msra.mxu0 0.0
      %5669 = vmatprep.subr.mxu0 0.0
      %5670 = vmatpush1.msra.mxu0 0.0
      %5671 = vmatprep.mubr.f32.mxu0 0.0
      %5672 = vmatmul.mubr.f32.gmra.mrb[0].mxu0 %v5096
      %v5673 = vpop.f32.mrb[0].mxu0
      %v5674 = vadd.f32 %v5603, %v5673
      %v5675 = vpop.f32.mrb[0].mxu0
      %v5676 = vadd.f32 %v5605, %v5675
      %5677 = vdwg.mxu0
      %v5678 = vmax.f32 %v5390, %v5674
      %v5679 = vmax.f32 %v5392, %v5676
      %v5680 = vmax.f32 %v5678, %v5679
      %5682 = vrot.lane.b32.xlu0 %v5680, 64
      %v5683 = vpop.permute.xlu0 %5682
      %v5685 = vmax.f32 %v5680, %v5683
      %v5686 = vld [vmem:[%s4] sm:$0xff]
      %v5687 = vld [vmem:[%s4 + $0x8] sm:$0xff]
      %v5688 = vld [vmem:[%s4 + $0x10] sm:$0xff]
      %v5689 = vld [vmem:[%s4 + $0x18] sm:$0xff]
      %v5690 = vld [vmem:[%s4 + $0x20] sm:$0xff]
      %v5691 = vld [vmem:[%s4 + $0x28] sm:$0xff]
      %v5692 = vld [vmem:[%s4 + $0x30] sm:$0xff]
      %v5693 = vld [vmem:[%s4 + $0x38] sm:$0xff]
      %v5694 = vld [vmem:[%s4 + $0x40] sm:$0xff]
      %v5695 = vld [vmem:[%s4 + $0x48] sm:$0xff]
      %v5696 = vld [vmem:[%s4 + $0x50] sm:$0xff]
      %v5697 = vld [vmem:[%s4 + $0x58] sm:$0xff]
      %v5698 = vld [vmem:[%s4 + $0x60] sm:$0xff]
      %v5699 = vld [vmem:[%s4 + $0x68] sm:$0xff]
      %v5700 = vld [vmem:[%s4 + $0x70] sm:$0xff]
      %v5701 = vld [vmem:[%s4 + $0x78] sm:$0xff]
      %vm5702 = vcmask 523264
      %v5704 = vsel %vm5702, %v5685, 0
      %5706 = vmatprep.subr.mxu0 %v5687
      %5707 = vmatpush1.msra.mxu0 %v5686
      %5708 = vmatprep.subr.mxu0 %v5689
      %5709 = vmatpush1.msra.mxu0 %v5688
      %5710 = vmatprep.subr.mxu0 %v5691
      %5711 = vmatpush1.msra.mxu0 %v5690
      %5712 = vmatprep.subr.mxu0 %v5693
      %5713 = vmatpush1.msra.mxu0 %v5692
      %5714 = vmatprep.subr.mxu0 %v5695
      %5715 = vmatpush1.msra.mxu0 %v5694
      %5716 = vmatprep.subr.mxu0 %v5697
      %5717 = vmatpush1.msra.mxu0 %v5696
      %5718 = vmatprep.subr.mxu0 %v5699
      %5719 = vmatpush1.msra.mxu0 %v5698
      %5720 = vmatprep.subr.mxu0 %v5701
      %5721 = vmatpush1.msra.mxu0 %v5700
      %5722 = vmatprep.subr.mxu0 0.0
      %5723 = vmatpush1.msra.mxu0 0.0
      %5724 = vmatprep.subr.mxu0 0.0
      %5725 = vmatpush1.msra.mxu0 0.0
      %5726 = vmatprep.subr.mxu0 0.0
      %5727 = vmatpush1.msra.mxu0 0.0
      %5728 = vmatprep.subr.mxu0 0.0
      %5729 = vmatpush1.msra.mxu0 0.0
      %5730 = vmatprep.subr.mxu0 0.0
      %5731 = vmatpush1.msra.mxu0 0.0
      %5732 = vmatprep.subr.mxu0 0.0
      %5733 = vmatpush1.msra.mxu0 0.0
      %5734 = vmatprep.subr.mxu0 0.0
      %5735 = vmatpush1.msra.mxu0 0.0
      %5736 = vmatprep.subr.mxu0 0.0
      %5737 = vmatpush1.msra.mxu0 0.0
      %5738 = vmatprep.subr.mxu0 0.0
      %5739 = vmatpush1.msra.mxu0 0.0
      %5740 = vmatprep.subr.mxu0 0.0
      %5741 = vmatpush1.msra.mxu0 0.0
      %5742 = vmatprep.subr.mxu0 0.0
      %5743 = vmatpush1.msra.mxu0 0.0
      %5744 = vmatprep.subr.mxu0 0.0
      %5745 = vmatpush1.msra.mxu0 0.0
      %5746 = vmatprep.subr.mxu0 0.0
      %5747 = vmatpush1.msra.mxu0 0.0
      %5748 = vmatprep.subr.mxu0 0.0
      %5749 = vmatpush1.msra.mxu0 0.0
      %5750 = vmatprep.subr.mxu0 0.0
      %5751 = vmatpush1.msra.mxu0 0.0
      %5752 = vmatprep.subr.mxu0 0.0
      %5753 = vmatpush1.msra.mxu0 0.0
      %5754 = vmatprep.subr.mxu0 0.0
      %5755 = vmatpush1.msra.mxu0 0.0
      %5756 = vmatprep.subr.mxu0 0.0
      %5757 = vmatpush1.msra.mxu0 0.0
      %5758 = vmatprep.subr.mxu0 0.0
      %5759 = vmatpush1.msra.mxu0 0.0
      %5760 = vmatprep.subr.mxu0 0.0
      %5761 = vmatpush1.msra.mxu0 0.0
      %5762 = vmatprep.subr.mxu0 0.0
      %5763 = vmatpush1.msra.mxu0 0.0
      %5764 = vmatprep.subr.mxu0 0.0
      %5765 = vmatpush1.msra.mxu0 0.0
      %5766 = vmatprep.subr.mxu0 0.0
      %5767 = vmatpush1.msra.mxu0 0.0
      %5768 = vmatprep.subr.mxu0 0.0
      %5769 = vmatpush1.msra.mxu0 0.0
      %5770 = vmatprep.mubr.f32.mxu0 0.0
      %5771 = vmatmul.mubr.f32.gmra.mrb[0].mxu0 %v5704
      %v5772 = vpop.f32.mrb[0].mxu0
      %v5773 = vadd.f32 0.0, %v5772
      %v5774 = vpop.f32.mrb[0].mxu0
      %v5775 = vadd.f32 0.0, %v5774
      %5776 = vdwg.mxu0
      %s5777 = scalar_lea.vmem %s4, 128
      %v5778 = vld [vmem:[%s5777] sm:$0xff]
      %v5779 = vld [vmem:[%s5777 + $0x8] sm:$0xff]
      %v5780 = vld [vmem:[%s5777 + $0x10] sm:$0xff]
      %v5781 = vld [vmem:[%s5777 + $0x18] sm:$0xff]
      %v5782 = vld [vmem:[%s5777 + $0x20] sm:$0xff]
      %v5783 = vld [vmem:[%s5777 + $0x28] sm:$0xff]
      %v5784 = vld [vmem:[%s5777 + $0x30] sm:$0xff]
      %v5785 = vld [vmem:[%s5777 + $0x38] sm:$0xff]
      %v5786 = vld [vmem:[%s5777 + $0x40] sm:$0xff]
      %v5787 = vld [vmem:[%s5777 + $0x48] sm:$0xff]
      %v5788 = vld [vmem:[%s5777 + $0x50] sm:$0xff]
      %v5789 = vld [vmem:[%s5777 + $0x58] sm:$0xff]
      %v5790 = vld [vmem:[%s5777 + $0x60] sm:$0xff]
      %v5791 = vld [vmem:[%s5777 + $0x68] sm:$0xff]
      %v5792 = vld [vmem:[%s5777 + $0x70] sm:$0xff]
      %v5793 = vld [vmem:[%s5777 + $0x78] sm:$0xff]
      %5794 = vmatprep.subr.mxu0 %v5779
      %5795 = vmatpush1.msra.mxu0 %v5778
      %5796 = vmatprep.subr.mxu0 %v5781
      %5797 = vmatpush1.msra.mxu0 %v5780
      %5798 = vmatprep.subr.mxu0 %v5783
      %5799 = vmatpush1.msra.mxu0 %v5782
      %5800 = vmatprep.subr.mxu0 %v5785
      %5801 = vmatpush1.msra.mxu0 %v5784
      %5802 = vmatprep.subr.mxu0 %v5787
      %5803 = vmatpush1.msra.mxu0 %v5786
      %5804 = vmatprep.subr.mxu0 %v5789
      %5805 = vmatpush1.msra.mxu0 %v5788
      %5806 = vmatprep.subr.mxu0 %v5791
      %5807 = vmatpush1.msra.mxu0 %v5790
      %5808 = vmatprep.subr.mxu0 %v5793
      %5809 = vmatpush1.msra.mxu0 %v5792
      %5810 = vmatprep.subr.mxu0 0.0
      %5811 = vmatpush1.msra.mxu0 0.0
      %5812 = vmatprep.subr.mxu0 0.0
      %5813 = vmatpush1.msra.mxu0 0.0
      %5814 = vmatprep.subr.mxu0 0.0
      %5815 = vmatpush1.msra.mxu0 0.0
      %5816 = vmatprep.subr.mxu0 0.0
      %5817 = vmatpush1.msra.mxu0 0.0
      %5818 = vmatprep.subr.mxu0 0.0
      %5819 = vmatpush1.msra.mxu0 0.0
      %5820 = vmatprep.subr.mxu0 0.0
      %5821 = vmatpush1.msra.mxu0 0.0
      %5822 = vmatprep.subr.mxu0 0.0
      %5823 = vmatpush1.msra.mxu0 0.0
      %5824 = vmatprep.subr.mxu0 0.0
      %5825 = vmatpush1.msra.mxu0 0.0
      %5826 = vmatprep.subr.mxu0 0.0
      %5827 = vmatpush1.msra.mxu0 0.0
      %5828 = vmatprep.subr.mxu0 0.0
      %5829 = vmatpush1.msra.mxu0 0.0
      %5830 = vmatprep.subr.mxu0 0.0
      %5831 = vmatpush1.msra.mxu0 0.0
      %5832 = vmatprep.subr.mxu0 0.0
      %5833 = vmatpush1.msra.mxu0 0.0
      %5834 = vmatprep.subr.mxu0 0.0
      %5835 = vmatpush1.msra.mxu0 0.0
      %5836 = vmatprep.subr.mxu0 0.0
      %5837 = vmatpush1.msra.mxu0 0.0
      %5838 = vmatprep.subr.mxu0 0.0
      %5839 = vmatpush1.msra.mxu0 0.0
      %5840 = vmatprep.subr.mxu0 0.0
      %5841 = vmatpush1.msra.mxu0 0.0
      %5842 = vmatprep.subr.mxu0 0.0
      %5843 = vmatpush1.msra.mxu0 0.0
      %5844 = vmatprep.subr.mxu0 0.0
      %5845 = vmatpush1.msra.mxu0 0.0
      %5846 = vmatprep.subr.mxu0 0.0
      %5847 = vmatpush1.msra.mxu0 0.0
      %5848 = vmatprep.subr.mxu0 0.0
      %5849 = vmatpush1.msra.mxu0 0.0
      %5850 = vmatprep.subr.mxu0 0.0
      %5851 = vmatpush1.msra.mxu0 0.0
      %5852 = vmatprep.subr.mxu0 0.0
      %5853 = vmatpush1.msra.mxu0 0.0
      %5854 = vmatprep.subr.mxu0 0.0
      %5855 = vmatpush1.msra.mxu0 0.0
      %5856 = vmatprep.subr.mxu0 0.0
      %5857 = vmatpush1.msra.mxu0 0.0
      %5858 = vmatprep.mubr.f32.mxu0 0.0
      %5859 = vmatmul.mubr.f32.gmra.mrb[0].mxu0 %v5704
      %v5860 = vpop.f32.mrb[0].mxu0
      %v5861 = vadd.f32 0.0, %v5860
      %v5862 = vpop.f32.mrb[0].mxu0
      %v5863 = vadd.f32 0.0, %v5862
      %5864 = vdwg.mxu0
      %s5865 = scalar_lea.vmem %s4, 256
      %v5866 = vld [vmem:[%s5865] sm:$0xff]
      %v5867 = vld [vmem:[%s5865 + $0x8] sm:$0xff]
      %v5868 = vld [vmem:[%s5865 + $0x10] sm:$0xff]
      %v5869 = vld [vmem:[%s5865 + $0x18] sm:$0xff]
      %v5870 = vld [vmem:[%s5865 + $0x20] sm:$0xff]
      %v5871 = vld [vmem:[%s5865 + $0x28] sm:$0xff]
      %v5872 = vld [vmem:[%s5865 + $0x30] sm:$0xff]
      %v5873 = vld [vmem:[%s5865 + $0x38] sm:$0xff]
      %v5874 = vld [vmem:[%s5865 + $0x40] sm:$0xff]
      %v5875 = vld [vmem:[%s5865 + $0x48] sm:$0xff]
      %v5876 = vld [vmem:[%s5865 + $0x50] sm:$0xff]
      %v5877 = vld [vmem:[%s5865 + $0x58] sm:$0xff]
      %v5878 = vld [vmem:[%s5865 + $0x60] sm:$0xff]
      %v5879 = vld [vmem:[%s5865 + $0x68] sm:$0xff]
      %v5880 = vld [vmem:[%s5865 + $0x70] sm:$0xff]
      %v5881 = vld [vmem:[%s5865 + $0x78] sm:$0xff]
      %5882 = vmatprep.subr.mxu0 %v5867
      %5883 = vmatpush1.msra.mxu0 %v5866
      %5884 = vmatprep.subr.mxu0 %v5869
      %5885 = vmatpush1.msra.mxu0 %v5868
      %5886 = vmatprep.subr.mxu0 %v5871
      %5887 = vmatpush1.msra.mxu0 %v5870
      %5888 = vmatprep.subr.mxu0 %v5873
      %5889 = vmatpush1.msra.mxu0 %v5872
      %5890 = vmatprep.subr.mxu0 %v5875
      %5891 = vmatpush1.msra.mxu0 %v5874
      %5892 = vmatprep.subr.mxu0 %v5877
      %5893 = vmatpush1.msra.mxu0 %v5876
      %5894 = vmatprep.subr.mxu0 %v5879
      %5895 = vmatpush1.msra.mxu0 %v5878
      %5896 = vmatprep.subr.mxu0 %v5881
      %5897 = vmatpush1.msra.mxu0 %v5880
      %5898 = vmatprep.subr.mxu0 0.0
      %5899 = vmatpush1.msra.mxu0 0.0
      %5900 = vmatprep.subr.mxu0 0.0
      %5901 = vmatpush1.msra.mxu0 0.0
      %5902 = vmatprep.subr.mxu0 0.0
      %5903 = vmatpush1.msra.mxu0 0.0
      %5904 = vmatprep.subr.mxu0 0.0
      %5905 = vmatpush1.msra.mxu0 0.0
      %5906 = vmatprep.subr.mxu0 0.0
      %5907 = vmatpush1.msra.mxu0 0.0
      %5908 = vmatprep.subr.mxu0 0.0
      %5909 = vmatpush1.msra.mxu0 0.0
      %5910 = vmatprep.subr.mxu0 0.0
      %5911 = vmatpush1.msra.mxu0 0.0
      %5912 = vmatprep.subr.mxu0 0.0
      %5913 = vmatpush1.msra.mxu0 0.0
      %5914 = vmatprep.subr.mxu0 0.0
      %5915 = vmatpush1.msra.mxu0 0.0
      %5916 = vmatprep.subr.mxu0 0.0
      %5917 = vmatpush1.msra.mxu0 0.0
      %5918 = vmatprep.subr.mxu0 0.0
      %5919 = vmatpush1.msra.mxu0 0.0
      %5920 = vmatprep.subr.mxu0 0.0
      %5921 = vmatpush1.msra.mxu0 0.0
      %5922 = vmatprep.subr.mxu0 0.0
      %5923 = vmatpush1.msra.mxu0 0.0
      %5924 = vmatprep.subr.mxu0 0.0
      %5925 = vmatpush1.msra.mxu0 0.0
      %5926 = vmatprep.subr.mxu0 0.0
      %5927 = vmatpush1.msra.mxu0 0.0
      %5928 = vmatprep.subr.mxu0 0.0
      %5929 = vmatpush1.msra.mxu0 0.0
      %5930 = vmatprep.subr.mxu0 0.0
      %5931 = vmatpush1.msra.mxu0 0.0
      %5932 = vmatprep.subr.mxu0 0.0
      %5933 = vmatpush1.msra.mxu0 0.0
      %5934 = vmatprep.subr.mxu0 0.0
      %5935 = vmatpush1.msra.mxu0 0.0
      %5936 = vmatprep.subr.mxu0 0.0
      %5937 = vmatpush1.msra.mxu0 0.0
      %5938 = vmatprep.subr.mxu0 0.0
      %5939 = vmatpush1.msra.mxu0 0.0
      %5940 = vmatprep.subr.mxu0 0.0
      %5941 = vmatpush1.msra.mxu0 0.0
      %5942 = vmatprep.subr.mxu0 0.0
      %5943 = vmatpush1.msra.mxu0 0.0
      %5944 = vmatprep.subr.mxu0 0.0
      %5945 = vmatpush1.msra.mxu0 0.0
      %5946 = vmatprep.mubr.f32.mxu0 0.0
      %5947 = vmatmul.mubr.f32.gmra.mrb[0].mxu0 %v5704
      %v5948 = vpop.f32.mrb[0].mxu0
      %v5949 = vadd.f32 0.0, %v5948
      %v5950 = vpop.f32.mrb[0].mxu0
      %v5951 = vadd.f32 0.0, %v5950
      %5952 = vdwg.mxu0
      %v5953 = vld [vmem:[%s5] sm:$0xf]
      %s5954 = scalar_lea.vmem %s5, 4
      %v5955 = vld [vmem:[%s5954] sm:$0xf]
      %5962 = vrot.lane.b32.xlu0 %v5773, 122
      %v5963 = vpop.permute.xlu0 %5962
      %5964 = vrot.lane.b32.xlu0 %v5775, 122
      %v5965 = vpop.permute.xlu0 %5964
      %5966 = vrot.lane.b32.xlu0 %v5861, 122
      %v5967 = vpop.permute.xlu0 %5966
      %5968 = vrot.lane.b32.xlu0 %v5863, 122
      %v5969 = vpop.permute.xlu0 %5968
      %5970 = vrot.lane.b32.xlu0 %v5949, 122
      %v5971 = vpop.permute.xlu0 %5970
      %5972 = vrot.lane.b32.xlu0 %v5951, 122
      %v5973 = vpop.permute.xlu0 %5972
      %vm5974 = vcmask 998400
      %v5975 = vsel %vm5974, %v5963, %v5965
      %v5976 = vsel %vm5974, %v5967, %v5969
      %v5977 = vsel %vm5974, %v5971, %v5973
      %vm5984 = vcmask 195584
      %v5986 = vsel %vm5984, %v5955, 0
      %5988 = vmatprep.subr.mxu0 %v5965
      %5989 = vmatpush1.msra.mxu0 %v5975
      %5990 = vmatprep.subr.mxu0 %v5969
      %5991 = vmatpush1.msra.mxu0 %v5976
      %5992 = vmatprep.subr.mxu0 %v5973
      %5993 = vmatpush1.msra.mxu0 %v5977
      %5994 = vmatprep.subr.mxu0 0.0
      %5995 = vmatpush1.msra.mxu0 0.0
      %5996 = vmatprep.subr.mxu0 0.0
      %5997 = vmatpush1.msra.mxu0 0.0
      %5998 = vmatprep.subr.mxu0 0.0
      %5999 = vmatpush1.msra.mxu0 0.0
      %6000 = vmatprep.subr.mxu0 0.0
      %6001 = vmatpush1.msra.mxu0 0.0
      %6002 = vmatprep.subr.mxu0 0.0
      %6003 = vmatpush1.msra.mxu0 0.0
      %6004 = vmatprep.subr.mxu0 0.0
      %6005 = vmatpush1.msra.mxu0 0.0
      %6006 = vmatprep.subr.mxu0 0.0
      %6007 = vmatpush1.msra.mxu0 0.0
      %6008 = vmatprep.subr.mxu0 0.0
      %6009 = vmatpush1.msra.mxu0 0.0
      %6010 = vmatprep.subr.mxu0 0.0
      %6011 = vmatpush1.msra.mxu0 0.0
      %6012 = vmatprep.subr.mxu0 0.0
      %6013 = vmatpush1.msra.mxu0 0.0
      %6014 = vmatprep.subr.mxu0 0.0
      %6015 = vmatpush1.msra.mxu0 0.0
      %6016 = vmatprep.subr.mxu0 0.0
      %6017 = vmatpush1.msra.mxu0 0.0
      %6018 = vmatprep.subr.mxu0 0.0
      %6019 = vmatpush1.msra.mxu0 0.0
      %6020 = vmatprep.subr.mxu0 0.0
      %6021 = vmatpush1.msra.mxu0 0.0
      %6022 = vmatprep.subr.mxu0 0.0
      %6023 = vmatpush1.msra.mxu0 0.0
      %6024 = vmatprep.subr.mxu0 0.0
      %6025 = vmatpush1.msra.mxu0 0.0
      %6026 = vmatprep.subr.mxu0 0.0
      %6027 = vmatpush1.msra.mxu0 0.0
      %6028 = vmatprep.subr.mxu0 0.0
      %6029 = vmatpush1.msra.mxu0 0.0
      %6030 = vmatprep.subr.mxu0 0.0
      %6031 = vmatpush1.msra.mxu0 0.0
      %6032 = vmatprep.subr.mxu0 0.0
      %6033 = vmatpush1.msra.mxu0 0.0
      %6034 = vmatprep.subr.mxu0 0.0
      %6035 = vmatpush1.msra.mxu0 0.0
      %6036 = vmatprep.subr.mxu0 0.0
      %6037 = vmatpush1.msra.mxu0 0.0
      %6038 = vmatprep.subr.mxu0 0.0
      %6039 = vmatpush1.msra.mxu0 0.0
      %6040 = vmatprep.subr.mxu0 0.0
      %6041 = vmatpush1.msra.mxu0 0.0
      %6042 = vmatprep.subr.mxu0 0.0
      %6043 = vmatpush1.msra.mxu0 0.0
      %6044 = vmatprep.subr.mxu0 0.0
      %6045 = vmatpush1.msra.mxu0 0.0
      %6046 = vmatprep.subr.mxu0 0.0
      %6047 = vmatpush1.msra.mxu0 0.0
      %6048 = vmatprep.subr.mxu0 0.0
      %6049 = vmatpush1.msra.mxu0 0.0
      %6050 = vmatprep.subr.mxu0 0.0
      %6051 = vmatpush1.msra.mxu0 0.0
      %6052 = vmatprep.mubr.f32.mxu0 0.0
      %6053 = vmatmul.mubr.f32.gmra.mrb[0].mxu0 %v5986
      %v6054 = vpop.f32.mrb[0].mxu0
      %v6055 = vadd.f32 0.0, %v6054
      %v6056 = vpop.f32.mrb[0].mxu0
      %v6057 = vadd.f32 0.0, %v6056
      %6058 = vdwg.mxu0
      %v6060 = vsel %vm5984, %v5953, 0
      %6062 = vmatprep.subr.mxu0 %v5775
      %6063 = vmatpush1.msra.mxu0 %v5773
      %6064 = vmatprep.subr.mxu0 %v5863
      %6065 = vmatpush1.msra.mxu0 %v5861
      %6066 = vmatprep.subr.mxu0 %v5951
      %6067 = vmatpush1.msra.mxu0 %v5949
      %6068 = vmatprep.subr.mxu0 0.0
      %6069 = vmatpush1.msra.mxu0 0.0
      %6070 = vmatprep.subr.mxu0 0.0
      %6071 = vmatpush1.msra.mxu0 0.0
      %6072 = vmatprep.subr.mxu0 0.0
      %6073 = vmatpush1.msra.mxu0 0.0
      %6074 = vmatprep.subr.mxu0 0.0
      %6075 = vmatpush1.msra.mxu0 0.0
      %6076 = vmatprep.subr.mxu0 0.0
      %6077 = vmatpush1.msra.mxu0 0.0
      %6078 = vmatprep.subr.mxu0 0.0
      %6079 = vmatpush1.msra.mxu0 0.0
      %6080 = vmatprep.subr.mxu0 0.0
      %6081 = vmatpush1.msra.mxu0 0.0
      %6082 = vmatprep.subr.mxu0 0.0
      %6083 = vmatpush1.msra.mxu0 0.0
      %6084 = vmatprep.subr.mxu0 0.0
      %6085 = vmatpush1.msra.mxu0 0.0
      %6086 = vmatprep.subr.mxu0 0.0
      %6087 = vmatpush1.msra.mxu0 0.0
      %6088 = vmatprep.subr.mxu0 0.0
      %6089 = vmatpush1.msra.mxu0 0.0
      %6090 = vmatprep.subr.mxu0 0.0
      %6091 = vmatpush1.msra.mxu0 0.0
      %6092 = vmatprep.subr.mxu0 0.0
      %6093 = vmatpush1.msra.mxu0 0.0
      %6094 = vmatprep.subr.mxu0 0.0
      %6095 = vmatpush1.msra.mxu0 0.0
      %6096 = vmatprep.subr.mxu0 0.0
      %6097 = vmatpush1.msra.mxu0 0.0
      %6098 = vmatprep.subr.mxu0 0.0
      %6099 = vmatpush1.msra.mxu0 0.0
      %6100 = vmatprep.subr.mxu0 0.0
      %6101 = vmatpush1.msra.mxu0 0.0
      %6102 = vmatprep.subr.mxu0 0.0
      %6103 = vmatpush1.msra.mxu0 0.0
      %6104 = vmatprep.subr.mxu0 0.0
      %6105 = vmatpush1.msra.mxu0 0.0
      %6106 = vmatprep.subr.mxu0 0.0
      %6107 = vmatpush1.msra.mxu0 0.0
      %6108 = vmatprep.subr.mxu0 0.0
      %6109 = vmatpush1.msra.mxu0 0.0
      %6110 = vmatprep.subr.mxu0 0.0
      %6111 = vmatpush1.msra.mxu0 0.0
      %6112 = vmatprep.subr.mxu0 0.0
      %6113 = vmatpush1.msra.mxu0 0.0
      %6114 = vmatprep.subr.mxu0 0.0
      %6115 = vmatpush1.msra.mxu0 0.0
      %6116 = vmatprep.subr.mxu0 0.0
      %6117 = vmatpush1.msra.mxu0 0.0
      %6118 = vmatprep.subr.mxu0 0.0
      %6119 = vmatpush1.msra.mxu0 0.0
      %6120 = vmatprep.subr.mxu0 0.0
      %6121 = vmatpush1.msra.mxu0 0.0
      %6122 = vmatprep.subr.mxu0 0.0
      %6123 = vmatpush1.msra.mxu0 0.0
      %6124 = vmatprep.subr.mxu0 0.0
      %6125 = vmatpush1.msra.mxu0 0.0
      %6126 = vmatprep.mubr.f32.mxu0 0.0
      %6127 = vmatmul.mubr.f32.gmra.mrb[0].mxu0 %v6060
      %v6128 = vpop.f32.mrb[0].mxu0
      %v6129 = vadd.f32 %v6055, %v6128
      %v6130 = vpop.f32.mrb[0].mxu0
      %v6131 = vadd.f32 %v6057, %v6130
      %6132 = vdwg.mxu0
      %s6133 = scalar_lea.vmem %s5, 8
      %v6134 = vld [vmem:[%s6133] sm:$0xf]
      %6135 = vrot.lane.b32.xlu0 %v5773, 116
      %v6136 = vpop.permute.xlu0 %6135
      %6137 = vrot.lane.b32.xlu0 %v5775, 116
      %v6138 = vpop.permute.xlu0 %6137
      %6139 = vrot.lane.b32.xlu0 %v5861, 116
      %v6140 = vpop.permute.xlu0 %6139
      %6141 = vrot.lane.b32.xlu0 %v5863, 116
      %v6142 = vpop.permute.xlu0 %6141
      %6143 = vrot.lane.b32.xlu0 %v5949, 116
      %v6144 = vpop.permute.xlu0 %6143
      %6145 = vrot.lane.b32.xlu0 %v5951, 116
      %v6146 = vpop.permute.xlu0 %6145
      %vm6147 = vcmask 949248
      %v6148 = vsel %vm6147, %v6136, %v6138
      %v6149 = vsel %vm6147, %v6140, %v6142
      %v6150 = vsel %vm6147, %v6144, %v6146
      %v6158 = vsel %vm5984, %v6134, 0
      %6160 = vmatprep.subr.mxu0 %v6138
      %6161 = vmatpush1.msra.mxu0 %v6148
      %6162 = vmatprep.subr.mxu0 %v6142
      %6163 = vmatpush1.msra.mxu0 %v6149
      %6164 = vmatprep.subr.mxu0 %v6146
      %6165 = vmatpush1.msra.mxu0 %v6150
      %6166 = vmatprep.subr.mxu0 0.0
      %6167 = vmatpush1.msra.mxu0 0.0
      %6168 = vmatprep.subr.mxu0 0.0
      %6169 = vmatpush1.msra.mxu0 0.0
      %6170 = vmatprep.subr.mxu0 0.0
      %6171 = vmatpush1.msra.mxu0 0.0
      %6172 = vmatprep.subr.mxu0 0.0
      %6173 = vmatpush1.msra.mxu0 0.0
      %6174 = vmatprep.subr.mxu0 0.0
      %6175 = vmatpush1.msra.mxu0 0.0
      %6176 = vmatprep.subr.mxu0 0.0
      %6177 = vmatpush1.msra.mxu0 0.0
      %6178 = vmatprep.subr.mxu0 0.0
      %6179 = vmatpush1.msra.mxu0 0.0
      %6180 = vmatprep.subr.mxu0 0.0
      %6181 = vmatpush1.msra.mxu0 0.0
      %6182 = vmatprep.subr.mxu0 0.0
      %6183 = vmatpush1.msra.mxu0 0.0
      %6184 = vmatprep.subr.mxu0 0.0
      %6185 = vmatpush1.msra.mxu0 0.0
      %6186 = vmatprep.subr.mxu0 0.0
      %6187 = vmatpush1.msra.mxu0 0.0
      %6188 = vmatprep.subr.mxu0 0.0
      %6189 = vmatpush1.msra.mxu0 0.0
      %6190 = vmatprep.subr.mxu0 0.0
      %6191 = vmatpush1.msra.mxu0 0.0
      %6192 = vmatprep.subr.mxu0 0.0
      %6193 = vmatpush1.msra.mxu0 0.0
      %6194 = vmatprep.subr.mxu0 0.0
      %6195 = vmatpush1.msra.mxu0 0.0
      %6196 = vmatprep.subr.mxu0 0.0
      %6197 = vmatpush1.msra.mxu0 0.0
      %6198 = vmatprep.subr.mxu0 0.0
      %6199 = vmatpush1.msra.mxu0 0.0
      %6200 = vmatprep.subr.mxu0 0.0
      %6201 = vmatpush1.msra.mxu0 0.0
      %6202 = vmatprep.subr.mxu0 0.0
      %6203 = vmatpush1.msra.mxu0 0.0
      %6204 = vmatprep.subr.mxu0 0.0
      %6205 = vmatpush1.msra.mxu0 0.0
      %6206 = vmatprep.subr.mxu0 0.0
      %6207 = vmatpush1.msra.mxu0 0.0
      %6208 = vmatprep.subr.mxu0 0.0
      %6209 = vmatpush1.msra.mxu0 0.0
      %6210 = vmatprep.subr.mxu0 0.0
      %6211 = vmatpush1.msra.mxu0 0.0
      %6212 = vmatprep.subr.mxu0 0.0
      %6213 = vmatpush1.msra.mxu0 0.0
      %6214 = vmatprep.subr.mxu0 0.0
      %6215 = vmatpush1.msra.mxu0 0.0
      %6216 = vmatprep.subr.mxu0 0.0
      %6217 = vmatpush1.msra.mxu0 0.0
      %6218 = vmatprep.subr.mxu0 0.0
      %6219 = vmatpush1.msra.mxu0 0.0
      %6220 = vmatprep.subr.mxu0 0.0
      %6221 = vmatpush1.msra.mxu0 0.0
      %6222 = vmatprep.subr.mxu0 0.0
      %6223 = vmatpush1.msra.mxu0 0.0
      %6224 = vmatprep.mubr.f32.mxu0 0.0
      %6225 = vmatmul.mubr.f32.gmra.mrb[0].mxu0 %v6158
      %v6226 = vpop.f32.mrb[0].mxu0
      %v6227 = vadd.f32 0.0, %v6226
      %v6228 = vpop.f32.mrb[0].mxu0
      %v6229 = vadd.f32 0.0, %v6228
      %6230 = vdwg.mxu0
      %v6231 = vadd.f32 %v6129, %v6227
      %v6232 = vadd.f32 %v6131, %v6229
      %s6233 = scalar_lea.vmem %s5, 12
      %v6234 = vld [vmem:[%s6233] sm:$0xf]
      %6235 = vrot.lane.b32.xlu0 %v5773, 92
      %v6236 = vpop.permute.xlu0 %6235
      %6237 = vrot.lane.b32.xlu0 %v5775, 92
      %v6238 = vpop.permute.xlu0 %6237
      %6239 = vrot.lane.b32.xlu0 %v5861, 92
      %v6240 = vpop.permute.xlu0 %6239
      %6241 = vrot.lane.b32.xlu0 %v5863, 92
      %v6242 = vpop.permute.xlu0 %6241
      %6243 = vrot.lane.b32.xlu0 %v5949, 92
      %v6244 = vpop.permute.xlu0 %6243
      %6245 = vrot.lane.b32.xlu0 %v5951, 92
      %v6246 = vpop.permute.xlu0 %6245
      %vm6247 = vcmask 752640
      %v6248 = vsel %vm6247, %v6236, %v6238
      %v6249 = vsel %vm6247, %v6240, %v6242
      %v6250 = vsel %vm6247, %v6244, %v6246
      %v6258 = vsel %vm5984, %v6234, 0
      %6260 = vmatprep.subr.mxu0 %v6238
      %6261 = vmatpush1.msra.mxu0 %v6248
      %6262 = vmatprep.subr.mxu0 %v6242
      %6263 = vmatpush1.msra.mxu0 %v6249
      %6264 = vmatprep.subr.mxu0 %v6246
      %6265 = vmatpush1.msra.mxu0 %v6250
      %6266 = vmatprep.subr.mxu0 0.0
      %6267 = vmatpush1.msra.mxu0 0.0
      %6268 = vmatprep.subr.mxu0 0.0
      %6269 = vmatpush1.msra.mxu0 0.0
      %6270 = vmatprep.subr.mxu0 0.0
      %6271 = vmatpush1.msra.mxu0 0.0
      %6272 = vmatprep.subr.mxu0 0.0
      %6273 = vmatpush1.msra.mxu0 0.0
      %6274 = vmatprep.subr.mxu0 0.0
      %6275 = vmatpush1.msra.mxu0 0.0
      %6276 = vmatprep.subr.mxu0 0.0
      %6277 = vmatpush1.msra.mxu0 0.0
      %6278 = vmatprep.subr.mxu0 0.0
      %6279 = vmatpush1.msra.mxu0 0.0
      %6280 = vmatprep.subr.mxu0 0.0
      %6281 = vmatpush1.msra.mxu0 0.0
      %6282 = vmatprep.subr.mxu0 0.0
      %6283 = vmatpush1.msra.mxu0 0.0
      %6284 = vmatprep.subr.mxu0 0.0
      %6285 = vmatpush1.msra.mxu0 0.0
      %6286 = vmatprep.subr.mxu0 0.0
      %6287 = vmatpush1.msra.mxu0 0.0
      %6288 = vmatprep.subr.mxu0 0.0
      %6289 = vmatpush1.msra.mxu0 0.0
      %6290 = vmatprep.subr.mxu0 0.0
      %6291 = vmatpush1.msra.mxu0 0.0
      %6292 = vmatprep.subr.mxu0 0.0
      %6293 = vmatpush1.msra.mxu0 0.0
      %6294 = vmatprep.subr.mxu0 0.0
      %6295 = vmatpush1.msra.mxu0 0.0
      %6296 = vmatprep.subr.mxu0 0.0
      %6297 = vmatpush1.msra.mxu0 0.0
      %6298 = vmatprep.subr.mxu0 0.0
      %6299 = vmatpush1.msra.mxu0 0.0
      %6300 = vmatprep.subr.mxu0 0.0
      %6301 = vmatpush1.msra.mxu0 0.0
      %6302 = vmatprep.subr.mxu0 0.0
      %6303 = vmatpush1.msra.mxu0 0.0
      %6304 = vmatprep.subr.mxu0 0.0
      %6305 = vmatpush1.msra.mxu0 0.0
      %6306 = vmatprep.subr.mxu0 0.0
      %6307 = vmatpush1.msra.mxu0 0.0
      %6308 = vmatprep.subr.mxu0 0.0
      %6309 = vmatpush1.msra.mxu0 0.0
      %6310 = vmatprep.subr.mxu0 0.0
      %6311 = vmatpush1.msra.mxu0 0.0
      %6312 = vmatprep.subr.mxu0 0.0
      %6313 = vmatpush1.msra.mxu0 0.0
      %6314 = vmatprep.subr.mxu0 0.0
      %6315 = vmatpush1.msra.mxu0 0.0
      %6316 = vmatprep.subr.mxu0 0.0
      %6317 = vmatpush1.msra.mxu0 0.0
      %6318 = vmatprep.subr.mxu0 0.0
      %6319 = vmatpush1.msra.mxu0 0.0
      %6320 = vmatprep.subr.mxu0 0.0
      %6321 = vmatpush1.msra.mxu0 0.0
      %6322 = vmatprep.subr.mxu0 0.0
      %6323 = vmatpush1.msra.mxu0 0.0
      %6324 = vmatprep.mubr.f32.mxu0 0.0
      %6325 = vmatmul.mubr.f32.gmra.mrb[0].mxu0 %v6258
      %v6326 = vpop.f32.mrb[0].mxu0
      %v6327 = vadd.f32 0.0, %v6326
      %v6328 = vpop.f32.mrb[0].mxu0
      %v6329 = vadd.f32 0.0, %v6328
      %6330 = vdwg.mxu0
      %v6331 = vadd.f32 %v6231, %v6327
      %v6332 = vadd.f32 %v6232, %v6329
      %s6333 = scalar_lea.vmem %s5, 16
      %v6334 = vld [vmem:[%s6333] sm:$0xf]
      %6335 = vrot.lane.b32.xlu0 %v5773, 86
      %v6336 = vpop.permute.xlu0 %6335
      %6337 = vrot.lane.b32.xlu0 %v5775, 86
      %v6338 = vpop.permute.xlu0 %6337
      %6339 = vrot.lane.b32.xlu0 %v5861, 86
      %v6340 = vpop.permute.xlu0 %6339
      %6341 = vrot.lane.b32.xlu0 %v5863, 86
      %v6342 = vpop.permute.xlu0 %6341
      %6343 = vrot.lane.b32.xlu0 %v5949, 86
      %v6344 = vpop.permute.xlu0 %6343
      %6345 = vrot.lane.b32.xlu0 %v5951, 86
      %v6346 = vpop.permute.xlu0 %6345
      %vm6347 = vcmask 703488
      %v6348 = vsel %vm6347, %v6336, %v6338
      %v6349 = vsel %vm6347, %v6340, %v6342
      %v6350 = vsel %vm6347, %v6344, %v6346
      %v6358 = vsel %vm5984, %v6334, 0
      %6360 = vmatprep.subr.mxu0 %v6338
      %6361 = vmatpush1.msra.mxu0 %v6348
      %6362 = vmatprep.subr.mxu0 %v6342
      %6363 = vmatpush1.msra.mxu0 %v6349
      %6364 = vmatprep.subr.mxu0 %v6346
      %6365 = vmatpush1.msra.mxu0 %v6350
      %6366 = vmatprep.subr.mxu0 0.0
      %6367 = vmatpush1.msra.mxu0 0.0
      %6368 = vmatprep.subr.mxu0 0.0
      %6369 = vmatpush1.msra.mxu0 0.0
      %6370 = vmatprep.subr.mxu0 0.0
      %6371 = vmatpush1.msra.mxu0 0.0
      %6372 = vmatprep.subr.mxu0 0.0
      %6373 = vmatpush1.msra.mxu0 0.0
      %6374 = vmatprep.subr.mxu0 0.0
      %6375 = vmatpush1.msra.mxu0 0.0
      %6376 = vmatprep.subr.mxu0 0.0
      %6377 = vmatpush1.msra.mxu0 0.0
      %6378 = vmatprep.subr.mxu0 0.0
      %6379 = vmatpush1.msra.mxu0 0.0
      %6380 = vmatprep.subr.mxu0 0.0
      %6381 = vmatpush1.msra.mxu0 0.0
      %6382 = vmatprep.subr.mxu0 0.0
      %6383 = vmatpush1.msra.mxu0 0.0
      %6384 = vmatprep.subr.mxu0 0.0
      %6385 = vmatpush1.msra.mxu0 0.0
      %6386 = vmatprep.subr.mxu0 0.0
      %6387 = vmatpush1.msra.mxu0 0.0
      %6388 = vmatprep.subr.mxu0 0.0
      %6389 = vmatpush1.msra.mxu0 0.0
      %6390 = vmatprep.subr.mxu0 0.0
      %6391 = vmatpush1.msra.mxu0 0.0
      %6392 = vmatprep.subr.mxu0 0.0
      %6393 = vmatpush1.msra.mxu0 0.0
      %6394 = vmatprep.subr.mxu0 0.0
      %6395 = vmatpush1.msra.mxu0 0.0
      %6396 = vmatprep.subr.mxu0 0.0
      %6397 = vmatpush1.msra.mxu0 0.0
      %6398 = vmatprep.subr.mxu0 0.0
      %6399 = vmatpush1.msra.mxu0 0.0
      %6400 = vmatprep.subr.mxu0 0.0
      %6401 = vmatpush1.msra.mxu0 0.0
      %6402 = vmatprep.subr.mxu0 0.0
      %6403 = vmatpush1.msra.mxu0 0.0
      %6404 = vmatprep.subr.mxu0 0.0
      %6405 = vmatpush1.msra.mxu0 0.0
      %6406 = vmatprep.subr.mxu0 0.0
      %6407 = vmatpush1.msra.mxu0 0.0
      %6408 = vmatprep.subr.mxu0 0.0
      %6409 = vmatpush1.msra.mxu0 0.0
      %6410 = vmatprep.subr.mxu0 0.0
      %6411 = vmatpush1.msra.mxu0 0.0
      %6412 = vmatprep.subr.mxu0 0.0
      %6413 = vmatpush1.msra.mxu0 0.0
      %6414 = vmatprep.subr.mxu0 0.0
      %6415 = vmatpush1.msra.mxu0 0.0
      %6416 = vmatprep.subr.mxu0 0.0
      %6417 = vmatpush1.msra.mxu0 0.0
      %6418 = vmatprep.subr.mxu0 0.0
      %6419 = vmatpush1.msra.mxu0 0.0
      %6420 = vmatprep.subr.mxu0 0.0
      %6421 = vmatpush1.msra.mxu0 0.0
      %6422 = vmatprep.subr.mxu0 0.0
      %6423 = vmatpush1.msra.mxu0 0.0
      %6424 = vmatprep.mubr.f32.mxu0 0.0
      %6425 = vmatmul.mubr.f32.gmra.mrb[0].mxu0 %v6358
      %v6426 = vpop.f32.mrb[0].mxu0
      %v6427 = vadd.f32 0.0, %v6426
      %v6428 = vpop.f32.mrb[0].mxu0
      %v6429 = vadd.f32 0.0, %v6428
      %6430 = vdwg.mxu0
      %v6431 = vadd.f32 %v6331, %v6427
      %v6432 = vadd.f32 %v6332, %v6429
      %s6433 = scalar_lea.vmem %s5, 20
      %v6434 = vld [vmem:[%s6433] sm:$0xf]
      %6435 = vrot.lane.b32.xlu0 %v5773, 80
      %v6436 = vpop.permute.xlu0 %6435
      %6437 = vrot.lane.b32.xlu0 %v5775, 80
      %v6438 = vpop.permute.xlu0 %6437
      %6439 = vrot.lane.b32.xlu0 %v5861, 80
      %v6440 = vpop.permute.xlu0 %6439
      %6441 = vrot.lane.b32.xlu0 %v5863, 80
      %v6442 = vpop.permute.xlu0 %6441
      %6443 = vrot.lane.b32.xlu0 %v5949, 80
      %v6444 = vpop.permute.xlu0 %6443
      %6445 = vrot.lane.b32.xlu0 %v5951, 80
      %v6446 = vpop.permute.xlu0 %6445
      %vm6447 = vcmask 654336
      %v6448 = vsel %vm6447, %v6436, %v6438
      %v6449 = vsel %vm6447, %v6440, %v6442
      %v6450 = vsel %vm6447, %v6444, %v6446
      %v6458 = vsel %vm5984, %v6434, 0
      %6460 = vmatprep.subr.mxu0 %v6438
      %6461 = vmatpush1.msra.mxu0 %v6448
      %6462 = vmatprep.subr.mxu0 %v6442
      %6463 = vmatpush1.msra.mxu0 %v6449
      %6464 = vmatprep.subr.mxu0 %v6446
      %6465 = vmatpush1.msra.mxu0 %v6450
      %6466 = vmatprep.subr.mxu0 0.0
      %6467 = vmatpush1.msra.mxu0 0.0
      %6468 = vmatprep.subr.mxu0 0.0
      %6469 = vmatpush1.msra.mxu0 0.0
      %6470 = vmatprep.subr.mxu0 0.0
      %6471 = vmatpush1.msra.mxu0 0.0
      %6472 = vmatprep.subr.mxu0 0.0
      %6473 = vmatpush1.msra.mxu0 0.0
      %6474 = vmatprep.subr.mxu0 0.0
      %6475 = vmatpush1.msra.mxu0 0.0
      %6476 = vmatprep.subr.mxu0 0.0
      %6477 = vmatpush1.msra.mxu0 0.0
      %6478 = vmatprep.subr.mxu0 0.0
      %6479 = vmatpush1.msra.mxu0 0.0
      %6480 = vmatprep.subr.mxu0 0.0
      %6481 = vmatpush1.msra.mxu0 0.0
      %6482 = vmatprep.subr.mxu0 0.0
      %6483 = vmatpush1.msra.mxu0 0.0
      %6484 = vmatprep.subr.mxu0 0.0
      %6485 = vmatpush1.msra.mxu0 0.0
      %6486 = vmatprep.subr.mxu0 0.0
      %6487 = vmatpush1.msra.mxu0 0.0
      %6488 = vmatprep.subr.mxu0 0.0
      %6489 = vmatpush1.msra.mxu0 0.0
      %6490 = vmatprep.subr.mxu0 0.0
      %6491 = vmatpush1.msra.mxu0 0.0
      %6492 = vmatprep.subr.mxu0 0.0
      %6493 = vmatpush1.msra.mxu0 0.0
      %6494 = vmatprep.subr.mxu0 0.0
      %6495 = vmatpush1.msra.mxu0 0.0
      %6496 = vmatprep.subr.mxu0 0.0
      %6497 = vmatpush1.msra.mxu0 0.0
      %6498 = vmatprep.subr.mxu0 0.0
      %6499 = vmatpush1.msra.mxu0 0.0
      %6500 = vmatprep.subr.mxu0 0.0
      %6501 = vmatpush1.msra.mxu0 0.0
      %6502 = vmatprep.subr.mxu0 0.0
      %6503 = vmatpush1.msra.mxu0 0.0
      %6504 = vmatprep.subr.mxu0 0.0
      %6505 = vmatpush1.msra.mxu0 0.0
      %6506 = vmatprep.subr.mxu0 0.0
      %6507 = vmatpush1.msra.mxu0 0.0
      %6508 = vmatprep.subr.mxu0 0.0
      %6509 = vmatpush1.msra.mxu0 0.0
      %6510 = vmatprep.subr.mxu0 0.0
      %6511 = vmatpush1.msra.mxu0 0.0
      %6512 = vmatprep.subr.mxu0 0.0
      %6513 = vmatpush1.msra.mxu0 0.0
      %6514 = vmatprep.subr.mxu0 0.0
      %6515 = vmatpush1.msra.mxu0 0.0
      %6516 = vmatprep.subr.mxu0 0.0
      %6517 = vmatpush1.msra.mxu0 0.0
      %6518 = vmatprep.subr.mxu0 0.0
      %6519 = vmatpush1.msra.mxu0 0.0
      %6520 = vmatprep.subr.mxu0 0.0
      %6521 = vmatpush1.msra.mxu0 0.0
      %6522 = vmatprep.subr.mxu0 0.0
      %6523 = vmatpush1.msra.mxu0 0.0
      %6524 = vmatprep.mubr.f32.mxu0 0.0
      %6525 = vmatmul.mubr.f32.gmra.mrb[0].mxu0 %v6458
      %v6526 = vpop.f32.mrb[0].mxu0
      %v6527 = vadd.f32 0.0, %v6526
      %v6528 = vpop.f32.mrb[0].mxu0
      %v6529 = vadd.f32 0.0, %v6528
      %6530 = vdwg.mxu0
      %v6531 = vadd.f32 %v6431, %v6527
      %v6532 = vadd.f32 %v6432, %v6529
      %s6533 = scalar_lea.vmem %s5, 24
      %v6534 = vld [vmem:[%s6533] sm:$0xf]
      %6535 = vrot.lane.b32.xlu0 %v5773, 56
      %v6536 = vpop.permute.xlu0 %6535
      %6537 = vrot.lane.b32.xlu0 %v5775, 56
      %v6538 = vpop.permute.xlu0 %6537
      %6539 = vrot.lane.b32.xlu0 %v5861, 56
      %v6540 = vpop.permute.xlu0 %6539
      %6541 = vrot.lane.b32.xlu0 %v5863, 56
      %v6542 = vpop.permute.xlu0 %6541
      %6543 = vrot.lane.b32.xlu0 %v5949, 56
      %v6544 = vpop.permute.xlu0 %6543
      %6545 = vrot.lane.b32.xlu0 %v5951, 56
      %v6546 = vpop.permute.xlu0 %6545
      %v6547 = vsel %vm3373, %v6536, %v6538
      %v6548 = vsel %vm3373, %v6540, %v6542
      %v6549 = vsel %vm3373, %v6544, %v6546
      %v6557 = vsel %vm5984, %v6534, 0
      %6559 = vmatprep.subr.mxu0 %v6538
      %6560 = vmatpush1.msra.mxu0 %v6547
      %6561 = vmatprep.subr.mxu0 %v6542
      %6562 = vmatpush1.msra.mxu0 %v6548
      %6563 = vmatprep.subr.mxu0 %v6546
      %6564 = vmatpush1.msra.mxu0 %v6549
      %6565 = vmatprep.subr.mxu0 0.0
      %6566 = vmatpush1.msra.mxu0 0.0
      %6567 = vmatprep.subr.mxu0 0.0
      %6568 = vmatpush1.msra.mxu0 0.0
      %6569 = vmatprep.subr.mxu0 0.0
      %6570 = vmatpush1.msra.mxu0 0.0
      %6571 = vmatprep.subr.mxu0 0.0
      %6572 = vmatpush1.msra.mxu0 0.0
      %6573 = vmatprep.subr.mxu0 0.0
      %6574 = vmatpush1.msra.mxu0 0.0
      %6575 = vmatprep.subr.mxu0 0.0
      %6576 = vmatpush1.msra.mxu0 0.0
      %6577 = vmatprep.subr.mxu0 0.0
      %6578 = vmatpush1.msra.mxu0 0.0
      %6579 = vmatprep.subr.mxu0 0.0
      %6580 = vmatpush1.msra.mxu0 0.0
      %6581 = vmatprep.subr.mxu0 0.0
      %6582 = vmatpush1.msra.mxu0 0.0
      %6583 = vmatprep.subr.mxu0 0.0
      %6584 = vmatpush1.msra.mxu0 0.0
      %6585 = vmatprep.subr.mxu0 0.0
      %6586 = vmatpush1.msra.mxu0 0.0
      %6587 = vmatprep.subr.mxu0 0.0
      %6588 = vmatpush1.msra.mxu0 0.0
      %6589 = vmatprep.subr.mxu0 0.0
      %6590 = vmatpush1.msra.mxu0 0.0
      %6591 = vmatprep.subr.mxu0 0.0
      %6592 = vmatpush1.msra.mxu0 0.0
      %6593 = vmatprep.subr.mxu0 0.0
      %6594 = vmatpush1.msra.mxu0 0.0
      %6595 = vmatprep.subr.mxu0 0.0
      %6596 = vmatpush1.msra.mxu0 0.0
      %6597 = vmatprep.subr.mxu0 0.0
      %6598 = vmatpush1.msra.mxu0 0.0
      %6599 = vmatprep.subr.mxu0 0.0
      %6600 = vmatpush1.msra.mxu0 0.0
      %6601 = vmatprep.subr.mxu0 0.0
      %6602 = vmatpush1.msra.mxu0 0.0
      %6603 = vmatprep.subr.mxu0 0.0
      %6604 = vmatpush1.msra.mxu0 0.0
      %6605 = vmatprep.subr.mxu0 0.0
      %6606 = vmatpush1.msra.mxu0 0.0
      %6607 = vmatprep.subr.mxu0 0.0
      %6608 = vmatpush1.msra.mxu0 0.0
      %6609 = vmatprep.subr.mxu0 0.0
      %6610 = vmatpush1.msra.mxu0 0.0
      %6611 = vmatprep.subr.mxu0 0.0
      %6612 = vmatpush1.msra.mxu0 0.0
      %6613 = vmatprep.subr.mxu0 0.0
      %6614 = vmatpush1.msra.mxu0 0.0
      %6615 = vmatprep.subr.mxu0 0.0
      %6616 = vmatpush1.msra.mxu0 0.0
      %6617 = vmatprep.subr.mxu0 0.0
      %6618 = vmatpush1.msra.mxu0 0.0
      %6619 = vmatprep.subr.mxu0 0.0
      %6620 = vmatpush1.msra.mxu0 0.0
      %6621 = vmatprep.subr.mxu0 0.0
      %6622 = vmatpush1.msra.mxu0 0.0
      %6623 = vmatprep.mubr.f32.mxu0 0.0
      %6624 = vmatmul.mubr.f32.gmra.mrb[0].mxu0 %v6557
      %v6625 = vpop.f32.mrb[0].mxu0
      %v6626 = vadd.f32 0.0, %v6625
      %v6627 = vpop.f32.mrb[0].mxu0
      %v6628 = vadd.f32 0.0, %v6627
      %6629 = vdwg.mxu0
      %v6630 = vadd.f32 %v6531, %v6626
      %v6631 = vadd.f32 %v6532, %v6628
      %s6632 = scalar_lea.vmem %s5, 28
      %v6633 = vld [vmem:[%s6632] sm:$0xf]
      %6634 = vrot.lane.b32.xlu0 %v5773, 50
      %v6635 = vpop.permute.xlu0 %6634
      %6636 = vrot.lane.b32.xlu0 %v5775, 50
      %v6637 = vpop.permute.xlu0 %6636
      %6638 = vrot.lane.b32.xlu0 %v5861, 50
      %v6639 = vpop.permute.xlu0 %6638
      %6640 = vrot.lane.b32.xlu0 %v5863, 50
      %v6641 = vpop.permute.xlu0 %6640
      %6642 = vrot.lane.b32.xlu0 %v5949, 50
      %v6643 = vpop.permute.xlu0 %6642
      %6644 = vrot.lane.b32.xlu0 %v5951, 50
      %v6645 = vpop.permute.xlu0 %6644
      %vm6646 = vcmask 408576
      %v6647 = vsel %vm6646, %v6635, %v6637
      %v6648 = vsel %vm6646, %v6639, %v6641
      %v6649 = vsel %vm6646, %v6643, %v6645
      %v6657 = vsel %vm5984, %v6633, 0
      %6659 = vmatprep.subr.mxu0 %v6637
      %6660 = vmatpush1.msra.mxu0 %v6647
      %6661 = vmatprep.subr.mxu0 %v6641
      %6662 = vmatpush1.msra.mxu0 %v6648
      %6663 = vmatprep.subr.mxu0 %v6645
      %6664 = vmatpush1.msra.mxu0 %v6649
      %6665 = vmatprep.subr.mxu0 0.0
      %6666 = vmatpush1.msra.mxu0 0.0
      %6667 = vmatprep.subr.mxu0 0.0
      %6668 = vmatpush1.msra.mxu0 0.0
      %6669 = vmatprep.subr.mxu0 0.0
      %6670 = vmatpush1.msra.mxu0 0.0
      %6671 = vmatprep.subr.mxu0 0.0
      %6672 = vmatpush1.msra.mxu0 0.0
      %6673 = vmatprep.subr.mxu0 0.0
      %6674 = vmatpush1.msra.mxu0 0.0
      %6675 = vmatprep.subr.mxu0 0.0
      %6676 = vmatpush1.msra.mxu0 0.0
      %6677 = vmatprep.subr.mxu0 0.0
      %6678 = vmatpush1.msra.mxu0 0.0
      %6679 = vmatprep.subr.mxu0 0.0
      %6680 = vmatpush1.msra.mxu0 0.0
      %6681 = vmatprep.subr.mxu0 0.0
      %6682 = vmatpush1.msra.mxu0 0.0
      %6683 = vmatprep.subr.mxu0 0.0
      %6684 = vmatpush1.msra.mxu0 0.0
      %6685 = vmatprep.subr.mxu0 0.0
      %6686 = vmatpush1.msra.mxu0 0.0
      %6687 = vmatprep.subr.mxu0 0.0
      %6688 = vmatpush1.msra.mxu0 0.0
      %6689 = vmatprep.subr.mxu0 0.0
      %6690 = vmatpush1.msra.mxu0 0.0
      %6691 = vmatprep.subr.mxu0 0.0
      %6692 = vmatpush1.msra.mxu0 0.0
      %6693 = vmatprep.subr.mxu0 0.0
      %6694 = vmatpush1.msra.mxu0 0.0
      %6695 = vmatprep.subr.mxu0 0.0
      %6696 = vmatpush1.msra.mxu0 0.0
      %6697 = vmatprep.subr.mxu0 0.0
      %6698 = vmatpush1.msra.mxu0 0.0
      %6699 = vmatprep.subr.mxu0 0.0
      %6700 = vmatpush1.msra.mxu0 0.0
      %6701 = vmatprep.subr.mxu0 0.0
      %6702 = vmatpush1.msra.mxu0 0.0
      %6703 = vmatprep.subr.mxu0 0.0
      %6704 = vmatpush1.msra.mxu0 0.0
      %6705 = vmatprep.subr.mxu0 0.0
      %6706 = vmatpush1.msra.mxu0 0.0
      %6707 = vmatprep.subr.mxu0 0.0
      %6708 = vmatpush1.msra.mxu0 0.0
      %6709 = vmatprep.subr.mxu0 0.0
      %6710 = vmatpush1.msra.mxu0 0.0
      %6711 = vmatprep.subr.mxu0 0.0
      %6712 = vmatpush1.msra.mxu0 0.0
      %6713 = vmatprep.subr.mxu0 0.0
      %6714 = vmatpush1.msra.mxu0 0.0
      %6715 = vmatprep.subr.mxu0 0.0
      %6716 = vmatpush1.msra.mxu0 0.0
      %6717 = vmatprep.subr.mxu0 0.0
      %6718 = vmatpush1.msra.mxu0 0.0
      %6719 = vmatprep.subr.mxu0 0.0
      %6720 = vmatpush1.msra.mxu0 0.0
      %6721 = vmatprep.subr.mxu0 0.0
      %6722 = vmatpush1.msra.mxu0 0.0
      %6723 = vmatprep.mubr.f32.mxu0 0.0
      %6724 = vmatmul.mubr.f32.gmra.mrb[0].mxu0 %v6657
      %v6725 = vpop.f32.mrb[0].mxu0
      %v6726 = vadd.f32 0.0, %v6725
      %v6727 = vpop.f32.mrb[0].mxu0
      %v6728 = vadd.f32 0.0, %v6727
      %6729 = vdwg.mxu0
      %v6730 = vadd.f32 %v6630, %v6726
      %v6731 = vadd.f32 %v6631, %v6728
      %s6732 = scalar_lea.vmem %s5, 32
      %v6733 = vld [vmem:[%s6732] sm:$0xf]
      %6734 = vrot.lane.b32.xlu0 %v5773, 44
      %v6735 = vpop.permute.xlu0 %6734
      %6736 = vrot.lane.b32.xlu0 %v5775, 44
      %v6737 = vpop.permute.xlu0 %6736
      %6738 = vrot.lane.b32.xlu0 %v5861, 44
      %v6739 = vpop.permute.xlu0 %6738
      %6740 = vrot.lane.b32.xlu0 %v5863, 44
      %v6741 = vpop.permute.xlu0 %6740
      %6742 = vrot.lane.b32.xlu0 %v5949, 44
      %v6743 = vpop.permute.xlu0 %6742
      %6744 = vrot.lane.b32.xlu0 %v5951, 44
      %v6745 = vpop.permute.xlu0 %6744
      %vm6746 = vcmask 359424
      %v6747 = vsel %vm6746, %v6735, %v6737
      %v6748 = vsel %vm6746, %v6739, %v6741
      %v6749 = vsel %vm6746, %v6743, %v6745
      %v6757 = vsel %vm5984, %v6733, 0
      %6759 = vmatprep.subr.mxu0 %v6737
      %6760 = vmatpush1.msra.mxu0 %v6747
      %6761 = vmatprep.subr.mxu0 %v6741
      %6762 = vmatpush1.msra.mxu0 %v6748
      %6763 = vmatprep.subr.mxu0 %v6745
      %6764 = vmatpush1.msra.mxu0 %v6749
      %6765 = vmatprep.subr.mxu0 0.0
      %6766 = vmatpush1.msra.mxu0 0.0
      %6767 = vmatprep.subr.mxu0 0.0
      %6768 = vmatpush1.msra.mxu0 0.0
      %6769 = vmatprep.subr.mxu0 0.0
      %6770 = vmatpush1.msra.mxu0 0.0
      %6771 = vmatprep.subr.mxu0 0.0
      %6772 = vmatpush1.msra.mxu0 0.0
      %6773 = vmatprep.subr.mxu0 0.0
      %6774 = vmatpush1.msra.mxu0 0.0
      %6775 = vmatprep.subr.mxu0 0.0
      %6776 = vmatpush1.msra.mxu0 0.0
      %6777 = vmatprep.subr.mxu0 0.0
      %6778 = vmatpush1.msra.mxu0 0.0
      %6779 = vmatprep.subr.mxu0 0.0
      %6780 = vmatpush1.msra.mxu0 0.0
      %6781 = vmatprep.subr.mxu0 0.0
      %6782 = vmatpush1.msra.mxu0 0.0
      %6783 = vmatprep.subr.mxu0 0.0
      %6784 = vmatpush1.msra.mxu0 0.0
      %6785 = vmatprep.subr.mxu0 0.0
      %6786 = vmatpush1.msra.mxu0 0.0
      %6787 = vmatprep.subr.mxu0 0.0
      %6788 = vmatpush1.msra.mxu0 0.0
      %6789 = vmatprep.subr.mxu0 0.0
      %6790 = vmatpush1.msra.mxu0 0.0
      %6791 = vmatprep.subr.mxu0 0.0
      %6792 = vmatpush1.msra.mxu0 0.0
      %6793 = vmatprep.subr.mxu0 0.0
      %6794 = vmatpush1.msra.mxu0 0.0
      %6795 = vmatprep.subr.mxu0 0.0
      %6796 = vmatpush1.msra.mxu0 0.0
      %6797 = vmatprep.subr.mxu0 0.0
      %6798 = vmatpush1.msra.mxu0 0.0
      %6799 = vmatprep.subr.mxu0 0.0
      %6800 = vmatpush1.msra.mxu0 0.0
      %6801 = vmatprep.subr.mxu0 0.0
      %6802 = vmatpush1.msra.mxu0 0.0
      %6803 = vmatprep.subr.mxu0 0.0
      %6804 = vmatpush1.msra.mxu0 0.0
      %6805 = vmatprep.subr.mxu0 0.0
      %6806 = vmatpush1.msra.mxu0 0.0
      %6807 = vmatprep.subr.mxu0 0.0
      %6808 = vmatpush1.msra.mxu0 0.0
      %6809 = vmatprep.subr.mxu0 0.0
      %6810 = vmatpush1.msra.mxu0 0.0
      %6811 = vmatprep.subr.mxu0 0.0
      %6812 = vmatpush1.msra.mxu0 0.0
      %6813 = vmatprep.subr.mxu0 0.0
      %6814 = vmatpush1.msra.mxu0 0.0
      %6815 = vmatprep.subr.mxu0 0.0
      %6816 = vmatpush1.msra.mxu0 0.0
      %6817 = vmatprep.subr.mxu0 0.0
      %6818 = vmatpush1.msra.mxu0 0.0
      %6819 = vmatprep.subr.mxu0 0.0
      %6820 = vmatpush1.msra.mxu0 0.0
      %6821 = vmatprep.subr.mxu0 0.0
      %6822 = vmatpush1.msra.mxu0 0.0
      %6823 = vmatprep.mubr.f32.mxu0 0.0
      %6824 = vmatmul.mubr.f32.gmra.mrb[0].mxu0 %v6757
      %v6825 = vpop.f32.mrb[0].mxu0
      %v6826 = vadd.f32 0.0, %v6825
      %v6827 = vpop.f32.mrb[0].mxu0
      %v6828 = vadd.f32 0.0, %v6827
      %6829 = vdwg.mxu0
      %v6830 = vadd.f32 %v6730, %v6826
      %v6831 = vadd.f32 %v6731, %v6828
      %v6832 = vld [vmem:[%s6] sm:$0xf]
      %6834 = vset.pattern.permute.xlu0 0
      %6835 = vperm.xlu0 %6834, %v6832
      %v6836 = vpop.permute.xlu0 %6835
      %v6838 = vadd.f32 %v6830, %v6836
      %v6839 = vadd.f32 %v6831, %v6836
      %v6840 = vmax.f32 %v6838, 0.0
      %v6841 = vmax.f32 %v6839, 0.0
      %v6842 = vld [vmem:[%s7] sm:$0xff]
      %v6843 = vld [vmem:[%s7 + $0x8] sm:$0xff]
      %v6844 = vld [vmem:[%s7 + $0x10] sm:$0xff]
      %v6845 = vld [vmem:[%s7 + $0x18] sm:$0xff]
      %v6846 = vld [vmem:[%s7 + $0x20] sm:$0xff]
      %v6847 = vld [vmem:[%s7 + $0x28] sm:$0xff]
      %v6848 = vld [vmem:[%s7 + $0x30] sm:$0xff]
      %v6849 = vld [vmem:[%s7 + $0x38] sm:$0xff]
      %v6850 = vld [vmem:[%s7 + $0x40] sm:$0xff]
      %v6851 = vld [vmem:[%s7 + $0x48] sm:$0xff]
      %v6852 = vld [vmem:[%s7 + $0x50] sm:$0xff]
      %v6853 = vld [vmem:[%s7 + $0x58] sm:$0xff]
      %v6854 = vld [vmem:[%s7 + $0x60] sm:$0xff]
      %v6855 = vld [vmem:[%s7 + $0x68] sm:$0xff]
      %v6856 = vld [vmem:[%s7 + $0x70] sm:$0xff]
      %v6857 = vld [vmem:[%s7 + $0x78] sm:$0xff]
      %v6858 = vld [vmem:[%s7 + $0x80] sm:$0x3]
      %vm6859 = vcmask 15360
      %v6861 = vsel %vm6859, %v6841, 0
      %v6864 = vsel %vm715, %v6858, 0
      %6866 = vmatprep.subr.mxu0 0.0
      %6867 = vmatpush1.msra.mxu0 %v6842
      %6868 = vmatprep.subr.mxu0 0.0
      %6869 = vmatpush1.msra.mxu0 %v6843
      %6870 = vmatprep.subr.mxu0 0.0
      %6871 = vmatpush1.msra.mxu0 %v6844
      %6872 = vmatprep.subr.mxu0 0.0
      %6873 = vmatpush1.msra.mxu0 %v6845
      %6874 = vmatprep.subr.mxu0 0.0
      %6875 = vmatpush1.msra.mxu0 %v6846
      %6876 = vmatprep.subr.mxu0 0.0
      %6877 = vmatpush1.msra.mxu0 %v6847
      %6878 = vmatprep.subr.mxu0 0.0
      %6879 = vmatpush1.msra.mxu0 %v6848
      %6880 = vmatprep.subr.mxu0 0.0
      %6881 = vmatpush1.msra.mxu0 %v6849
      %6882 = vmatprep.subr.mxu0 0.0
      %6883 = vmatpush1.msra.mxu0 %v6850
      %6884 = vmatprep.subr.mxu0 0.0
      %6885 = vmatpush1.msra.mxu0 %v6851
      %6886 = vmatprep.subr.mxu0 0.0
      %6887 = vmatpush1.msra.mxu0 %v6852
      %6888 = vmatprep.subr.mxu0 0.0
      %6889 = vmatpush1.msra.mxu0 %v6853
      %6890 = vmatprep.subr.mxu0 0.0
      %6891 = vmatpush1.msra.mxu0 %v6854
      %6892 = vmatprep.subr.mxu0 0.0
      %6893 = vmatpush1.msra.mxu0 %v6855
      %6894 = vmatprep.subr.mxu0 0.0
      %6895 = vmatpush1.msra.mxu0 %v6856
      %6896 = vmatprep.subr.mxu0 0.0
      %6897 = vmatpush1.msra.mxu0 %v6857
      %6898 = vmatprep.subr.mxu0 0.0
      %6899 = vmatpush1.msra.mxu0 %v6864
      %6900 = vmatprep.subr.mxu0 0.0
      %6901 = vmatpush1.msra.mxu0 0.0
      %6902 = vmatprep.subr.mxu0 0.0
      %6903 = vmatpush1.msra.mxu0 0.0
      %6904 = vmatprep.subr.mxu0 0.0
      %6905 = vmatpush1.msra.mxu0 0.0
      %6906 = vmatprep.subr.mxu0 0.0
      %6907 = vmatpush1.msra.mxu0 0.0
      %6908 = vmatprep.subr.mxu0 0.0
      %6909 = vmatpush1.msra.mxu0 0.0
      %6910 = vmatprep.subr.mxu0 0.0
      %6911 = vmatpush1.msra.mxu0 0.0
      %6912 = vmatprep.subr.mxu0 0.0
      %6913 = vmatpush1.msra.mxu0 0.0
      %6914 = vmatprep.subr.mxu0 0.0
      %6915 = vmatpush1.msra.mxu0 0.0
      %6916 = vmatprep.subr.mxu0 0.0
      %6917 = vmatpush1.msra.mxu0 0.0
      %6918 = vmatprep.subr.mxu0 0.0
      %6919 = vmatpush1.msra.mxu0 0.0
      %6920 = vmatprep.subr.mxu0 0.0
      %6921 = vmatpush1.msra.mxu0 0.0
      %6922 = vmatprep.subr.mxu0 0.0
      %6923 = vmatpush1.msra.mxu0 0.0
      %6924 = vmatprep.subr.mxu0 0.0
      %6925 = vmatpush1.msra.mxu0 0.0
      %6926 = vmatprep.subr.mxu0 0.0
      %6927 = vmatpush1.msra.mxu0 0.0
      %6928 = vmatprep.subr.mxu0 0.0
      %6929 = vmatpush1.msra.mxu0 0.0
      %6930 = vmatprep.mubr.f32.mxu0 %v6861
      %6931 = vmatmul.mubr.f32.gmra.mrb[0].mxu0 %v6840
      %v6932 = vpop.f32.mrb[0].mxu0
      %v6933 = vadd.f32 0.0, %v6932
      %v6934 = vpop.f32.mrb[0].mxu0
      %6935 = vdwg.mxu0
      %6937 = vrot.lane.b32.xlu0 %v6933, 96
      %v6938 = vpop.permute.xlu0 %6937
      %v6940 = vmax.f32 %v6933, %v6938
      %6942 = vrot.lane.b32.xlu0 %v6940, 112
      %v6943 = vpop.permute.xlu0 %6942
      %v6945 = vmax.f32 %v6940, %v6943
      %6947 = vrot.lane.b32.xlu0 %v6945, 120
      %v6948 = vpop.permute.xlu0 %6947
      %v6950 = vmax.f32 %v6945, %v6948
      %v6951 = vld [vmem:[%s8] sm:$0xff]
      %v6952 = vld [vmem:[%s8 + $0x8] sm:$0xff]
      %v6953 = vld [vmem:[%s8 + $0x10] sm:$0xff]
      %v6954 = vld [vmem:[%s8 + $0x18] sm:$0xff]
      %v6955 = vld [vmem:[%s8 + $0x20] sm:$0xff]
      %v6956 = vld [vmem:[%s8 + $0x28] sm:$0xff]
      %v6957 = vld [vmem:[%s8 + $0x30] sm:$0xff]
      %v6958 = vld [vmem:[%s8 + $0x38] sm:$0xff]
      %vm6959 = vcmask 31744
      %v6961 = vsel %vm6959, %v6951, 0
      %v6964 = vsel %vm6959, %v6952, 0
      %v6967 = vsel %vm6959, %v6953, 0
      %v6970 = vsel %vm6959, %v6954, 0
      %v6973 = vsel %vm6959, %v6955, 0
      %v6976 = vsel %vm6959, %v6956, 0
      %v6979 = vsel %vm6959, %v6957, 0
      %v6982 = vsel %vm6959, %v6958, 0
      %vm6984 = vcmask 1043456
      %v6986 = vsel %vm6984, %v6950, 0
      %6988 = vmatprep.subr.mxu0 0.0
      %6989 = vmatpush1.msra.mxu0 %v6986
      %6990 = vmatprep.subr.mxu0 0.0
      %6991 = vmatpush1.msra.mxu0 0.0
      %6992 = vmatprep.subr.mxu0 0.0
      %6993 = vmatpush1.msra.mxu0 0.0
      %6994 = vmatprep.subr.mxu0 0.0
      %6995 = vmatpush1.msra.mxu0 0.0
      %6996 = vmatprep.subr.mxu0 0.0
      %6997 = vmatpush1.msra.mxu0 0.0
      %6998 = vmatprep.subr.mxu0 0.0
      %6999 = vmatpush1.msra.mxu0 0.0
      %7000 = vmatprep.subr.mxu0 0.0
      %7001 = vmatpush1.msra.mxu0 0.0
      %7002 = vmatprep.subr.mxu0 0.0
      %7003 = vmatpush1.msra.mxu0 0.0
      %7004 = vmatprep.subr.mxu0 0.0
      %7005 = vmatpush1.msra.mxu0 0.0
      %7006 = vmatprep.subr.mxu0 0.0
      %7007 = vmatpush1.msra.mxu0 0.0
      %7008 = vmatprep.subr.mxu0 0.0
      %7009 = vmatpush1.msra.mxu0 0.0
      %7010 = vmatprep.subr.mxu0 0.0
      %7011 = vmatpush1.msra.mxu0 0.0
      %7012 = vmatprep.subr.mxu0 0.0
      %7013 = vmatpush1.msra.mxu0 0.0
      %7014 = vmatprep.subr.mxu0 0.0
      %7015 = vmatpush1.msra.mxu0 0.0
      %7016 = vmatprep.subr.mxu0 0.0
      %7017 = vmatpush1.msra.mxu0 0.0
      %7018 = vmatprep.subr.mxu0 0.0
      %7019 = vmatpush1.msra.mxu0 0.0
      %7020 = vmatprep.subr.mxu0 0.0
      %7021 = vmatpush1.msra.mxu0 0.0
      %7022 = vmatprep.subr.mxu0 0.0
      %7023 = vmatpush1.msra.mxu0 0.0
      %7024 = vmatprep.subr.mxu0 0.0
      %7025 = vmatpush1.msra.mxu0 0.0
      %7026 = vmatprep.subr.mxu0 0.0
      %7027 = vmatpush1.msra.mxu0 0.0
      %7028 = vmatprep.subr.mxu0 0.0
      %7029 = vmatpush1.msra.mxu0 0.0
      %7030 = vmatprep.subr.mxu0 0.0
      %7031 = vmatpush1.msra.mxu0 0.0
      %7032 = vmatprep.subr.mxu0 0.0
      %7033 = vmatpush1.msra.mxu0 0.0
      %7034 = vmatprep.subr.mxu0 0.0
      %7035 = vmatpush1.msra.mxu0 0.0
      %7036 = vmatprep.subr.mxu0 0.0
      %7037 = vmatpush1.msra.mxu0 0.0
      %7038 = vmatprep.subr.mxu0 0.0
      %7039 = vmatpush1.msra.mxu0 0.0
      %7040 = vmatprep.subr.mxu0 0.0
      %7041 = vmatpush1.msra.mxu0 0.0
      %7042 = vmatprep.subr.mxu0 0.0
      %7043 = vmatpush1.msra.mxu0 0.0
      %7044 = vmatprep.subr.mxu0 0.0
      %7045 = vmatpush1.msra.mxu0 0.0
      %7046 = vmatprep.subr.mxu0 0.0
      %7047 = vmatpush1.msra.mxu0 0.0
      %7048 = vmatprep.subr.mxu0 0.0
      %7049 = vmatpush1.msra.mxu0 0.0
      %7050 = vmatprep.subr.mxu0 0.0
      %7051 = vmatpush1.msra.mxu0 0.0
      %7052 = vmatprep.mubr.f32.mxu0 0.0
      %7053 = vmatmul.mubr.f32.gmra.mrb[0].mxu0 %v6961
      %v7054 = vpop.f32.mrb[0].mxu0
      %v7055 = vadd.f32 0.0, %v7054
      %v7056 = vpop.f32.mrb[0].mxu0
      %7057 = vmatprep.mubr.f32.mxu0 0.0
      %7058 = vmatmul.mubr.f32.gmra.mrb[0].mxu0 %v6964
      %v7059 = vpop.f32.mrb[0].mxu0
      %v7060 = vadd.f32 0.0, %v7059
      %v7061 = vpop.f32.mrb[0].mxu0
      %7062 = vmatprep.mubr.f32.mxu0 0.0
      %7063 = vmatmul.mubr.f32.gmra.mrb[0].mxu0 %v6967
      %v7064 = vpop.f32.mrb[0].mxu0
      %v7065 = vadd.f32 0.0, %v7064
      %v7066 = vpop.f32.mrb[0].mxu0
      %7067 = vmatprep.mubr.f32.mxu0 0.0
      %7068 = vmatmul.mubr.f32.gmra.mrb[0].mxu0 %v6970
      %v7069 = vpop.f32.mrb[0].mxu0
      %v7070 = vadd.f32 0.0, %v7069
      %v7071 = vpop.f32.mrb[0].mxu0
      %7072 = vmatprep.mubr.f32.mxu0 0.0
      %7073 = vmatmul.mubr.f32.gmra.mrb[0].mxu0 %v6973
      %v7074 = vpop.f32.mrb[0].mxu0
      %v7075 = vadd.f32 0.0, %v7074
      %v7076 = vpop.f32.mrb[0].mxu0
      %7077 = vmatprep.mubr.f32.mxu0 0.0
      %7078 = vmatmul.mubr.f32.gmra.mrb[0].mxu0 %v6976
      %v7079 = vpop.f32.mrb[0].mxu0
      %v7080 = vadd.f32 0.0, %v7079
      %v7081 = vpop.f32.mrb[0].mxu0
      %7082 = vmatprep.mubr.f32.mxu0 0.0
      %7083 = vmatmul.mubr.f32.gmra.mrb[0].mxu0 %v6979
      %v7084 = vpop.f32.mrb[0].mxu0
      %v7085 = vadd.f32 0.0, %v7084
      %v7086 = vpop.f32.mrb[0].mxu0
      %7087 = vmatprep.mubr.f32.mxu0 0.0
      %7088 = vmatmul.mubr.f32.gmra.mrb[0].mxu0 %v6982
      %v7089 = vpop.f32.mrb[0].mxu0
      %v7090 = vadd.f32 0.0, %v7089
      %v7091 = vpop.f32.mrb[0].mxu0
      %7092 = vdwg.mxu0
      %v7093 = vld [vmem:[%s10] sm:$0xff]
      %s7094 = scalar_lea.vmem %s10, 8
      %v7095 = vld [vmem:[%s7094] sm:$0xff]
      %v7097 = vsel %vm2902, %v7060, 0
      %7099 = vmatprep.subr.mxu0 0.0
      %7100 = vmatpush1.msra.mxu0 %v7095
      %7101 = vmatprep.subr.mxu0 0.0
      %7102 = vmatpush1.msra.mxu0 0.0
      %7103 = vmatprep.subr.mxu0 0.0
      %7104 = vmatpush1.msra.mxu0 0.0
      %7105 = vmatprep.subr.mxu0 0.0
      %7106 = vmatpush1.msra.mxu0 0.0
      %7107 = vmatprep.subr.mxu0 0.0
      %7108 = vmatpush1.msra.mxu0 0.0
      %7109 = vmatprep.subr.mxu0 0.0
      %7110 = vmatpush1.msra.mxu0 0.0
      %7111 = vmatprep.subr.mxu0 0.0
      %7112 = vmatpush1.msra.mxu0 0.0
      %7113 = vmatprep.subr.mxu0 0.0
      %7114 = vmatpush1.msra.mxu0 0.0
      %7115 = vmatprep.subr.mxu0 0.0
      %7116 = vmatpush1.msra.mxu0 0.0
      %7117 = vmatprep.subr.mxu0 0.0
      %7118 = vmatpush1.msra.mxu0 0.0
      %7119 = vmatprep.subr.mxu0 0.0
      %7120 = vmatpush1.msra.mxu0 0.0
      %7121 = vmatprep.subr.mxu0 0.0
      %7122 = vmatpush1.msra.mxu0 0.0
      %7123 = vmatprep.subr.mxu0 0.0
      %7124 = vmatpush1.msra.mxu0 0.0
      %7125 = vmatprep.subr.mxu0 0.0
      %7126 = vmatpush1.msra.mxu0 0.0
      %7127 = vmatprep.subr.mxu0 0.0
      %7128 = vmatpush1.msra.mxu0 0.0
      %7129 = vmatprep.subr.mxu0 0.0
      %7130 = vmatpush1.msra.mxu0 0.0
      %7131 = vmatprep.subr.mxu0 0.0
      %7132 = vmatpush1.msra.mxu0 0.0
      %7133 = vmatprep.subr.mxu0 0.0
      %7134 = vmatpush1.msra.mxu0 0.0
      %7135 = vmatprep.subr.mxu0 0.0
      %7136 = vmatpush1.msra.mxu0 0.0
      %7137 = vmatprep.subr.mxu0 0.0
      %7138 = vmatpush1.msra.mxu0 0.0
      %7139 = vmatprep.subr.mxu0 0.0
      %7140 = vmatpush1.msra.mxu0 0.0
      %7141 = vmatprep.subr.mxu0 0.0
      %7142 = vmatpush1.msra.mxu0 0.0
      %7143 = vmatprep.subr.mxu0 0.0
      %7144 = vmatpush1.msra.mxu0 0.0
      %7145 = vmatprep.subr.mxu0 0.0
      %7146 = vmatpush1.msra.mxu0 0.0
      %7147 = vmatprep.subr.mxu0 0.0
      %7148 = vmatpush1.msra.mxu0 0.0
      %7149 = vmatprep.subr.mxu0 0.0
      %7150 = vmatpush1.msra.mxu0 0.0
      %7151 = vmatprep.subr.mxu0 0.0
      %7152 = vmatpush1.msra.mxu0 0.0
      %7153 = vmatprep.subr.mxu0 0.0
      %7154 = vmatpush1.msra.mxu0 0.0
      %7155 = vmatprep.subr.mxu0 0.0
      %7156 = vmatpush1.msra.mxu0 0.0
      %7157 = vmatprep.subr.mxu0 0.0
      %7158 = vmatpush1.msra.mxu0 0.0
      %7159 = vmatprep.subr.mxu0 0.0
      %7160 = vmatpush1.msra.mxu0 0.0
      %7161 = vmatprep.subr.mxu0 0.0
      %7162 = vmatpush1.msra.mxu0 0.0
      %7163 = vmatprep.mubr.f32.mxu0 0.0
      %7164 = vmatmul.mubr.f32.gmra.mrb[0].mxu0 %v7097
      %v7165 = vpop.f32.mrb[0].mxu0
      %v7166 = vadd.f32 0.0, %v7165
      %v7167 = vpop.f32.mrb[0].mxu0
      %7168 = vdwg.mxu0
      %v7170 = vsel %vm2902, %v7055, 0
      %7172 = vmatprep.subr.mxu0 0.0
      %7173 = vmatpush1.msra.mxu0 %v7093
      %7174 = vmatprep.subr.mxu0 0.0
      %7175 = vmatpush1.msra.mxu0 0.0
      %7176 = vmatprep.subr.mxu0 0.0
      %7177 = vmatpush1.msra.mxu0 0.0
      %7178 = vmatprep.subr.mxu0 0.0
      %7179 = vmatpush1.msra.mxu0 0.0
      %7180 = vmatprep.subr.mxu0 0.0
      %7181 = vmatpush1.msra.mxu0 0.0
      %7182 = vmatprep.subr.mxu0 0.0
      %7183 = vmatpush1.msra.mxu0 0.0
      %7184 = vmatprep.subr.mxu0 0.0
      %7185 = vmatpush1.msra.mxu0 0.0
      %7186 = vmatprep.subr.mxu0 0.0
      %7187 = vmatpush1.msra.mxu0 0.0
      %7188 = vmatprep.subr.mxu0 0.0
      %7189 = vmatpush1.msra.mxu0 0.0
      %7190 = vmatprep.subr.mxu0 0.0
      %7191 = vmatpush1.msra.mxu0 0.0
      %7192 = vmatprep.subr.mxu0 0.0
      %7193 = vmatpush1.msra.mxu0 0.0
      %7194 = vmatprep.subr.mxu0 0.0
      %7195 = vmatpush1.msra.mxu0 0.0
      %7196 = vmatprep.subr.mxu0 0.0
      %7197 = vmatpush1.msra.mxu0 0.0
      %7198 = vmatprep.subr.mxu0 0.0
      %7199 = vmatpush1.msra.mxu0 0.0
      %7200 = vmatprep.subr.mxu0 0.0
      %7201 = vmatpush1.msra.mxu0 0.0
      %7202 = vmatprep.subr.mxu0 0.0
      %7203 = vmatpush1.msra.mxu0 0.0
      %7204 = vmatprep.subr.mxu0 0.0
      %7205 = vmatpush1.msra.mxu0 0.0
      %7206 = vmatprep.subr.mxu0 0.0
      %7207 = vmatpush1.msra.mxu0 0.0
      %7208 = vmatprep.subr.mxu0 0.0
      %7209 = vmatpush1.msra.mxu0 0.0
      %7210 = vmatprep.subr.mxu0 0.0
      %7211 = vmatpush1.msra.mxu0 0.0
      %7212 = vmatprep.subr.mxu0 0.0
      %7213 = vmatpush1.msra.mxu0 0.0
      %7214 = vmatprep.subr.mxu0 0.0
      %7215 = vmatpush1.msra.mxu0 0.0
      %7216 = vmatprep.subr.mxu0 0.0
      %7217 = vmatpush1.msra.mxu0 0.0
      %7218 = vmatprep.subr.mxu0 0.0
      %7219 = vmatpush1.msra.mxu0 0.0
      %7220 = vmatprep.subr.mxu0 0.0
      %7221 = vmatpush1.msra.mxu0 0.0
      %7222 = vmatprep.subr.mxu0 0.0
      %7223 = vmatpush1.msra.mxu0 0.0
      %7224 = vmatprep.subr.mxu0 0.0
      %7225 = vmatpush1.msra.mxu0 0.0
      %7226 = vmatprep.subr.mxu0 0.0
      %7227 = vmatpush1.msra.mxu0 0.0
      %7228 = vmatprep.subr.mxu0 0.0
      %7229 = vmatpush1.msra.mxu0 0.0
      %7230 = vmatprep.subr.mxu0 0.0
      %7231 = vmatpush1.msra.mxu0 0.0
      %7232 = vmatprep.subr.mxu0 0.0
      %7233 = vmatpush1.msra.mxu0 0.0
      %7234 = vmatprep.subr.mxu0 0.0
      %7235 = vmatpush1.msra.mxu0 0.0
      %7236 = vmatprep.mubr.f32.mxu0 0.0
      %7237 = vmatmul.mubr.f32.gmra.mrb[0].mxu0 %v7170
      %v7238 = vpop.f32.mrb[0].mxu0
      %v7239 = vadd.f32 %v7166, %v7238
      %v7240 = vpop.f32.mrb[0].mxu0
      %7241 = vdwg.mxu0
      %s7242 = scalar_lea.vmem %s10, 16
      %v7243 = vld [vmem:[%s7242] sm:$0xff]
      %v7245 = vsel %vm2902, %v7065, 0
      %7247 = vmatprep.subr.mxu0 0.0
      %7248 = vmatpush1.msra.mxu0 %v7243
      %7249 = vmatprep.subr.mxu0 0.0
      %7250 = vmatpush1.msra.mxu0 0.0
      %7251 = vmatprep.subr.mxu0 0.0
      %7252 = vmatpush1.msra.mxu0 0.0
      %7253 = vmatprep.subr.mxu0 0.0
      %7254 = vmatpush1.msra.mxu0 0.0
      %7255 = vmatprep.subr.mxu0 0.0
      %7256 = vmatpush1.msra.mxu0 0.0
      %7257 = vmatprep.subr.mxu0 0.0
      %7258 = vmatpush1.msra.mxu0 0.0
      %7259 = vmatprep.subr.mxu0 0.0
      %7260 = vmatpush1.msra.mxu0 0.0
      %7261 = vmatprep.subr.mxu0 0.0
      %7262 = vmatpush1.msra.mxu0 0.0
      %7263 = vmatprep.subr.mxu0 0.0
      %7264 = vmatpush1.msra.mxu0 0.0
      %7265 = vmatprep.subr.mxu0 0.0
      %7266 = vmatpush1.msra.mxu0 0.0
      %7267 = vmatprep.subr.mxu0 0.0
      %7268 = vmatpush1.msra.mxu0 0.0
      %7269 = vmatprep.subr.mxu0 0.0
      %7270 = vmatpush1.msra.mxu0 0.0
      %7271 = vmatprep.subr.mxu0 0.0
      %7272 = vmatpush1.msra.mxu0 0.0
      %7273 = vmatprep.subr.mxu0 0.0
      %7274 = vmatpush1.msra.mxu0 0.0
      %7275 = vmatprep.subr.mxu0 0.0
      %7276 = vmatpush1.msra.mxu0 0.0
      %7277 = vmatprep.subr.mxu0 0.0
      %7278 = vmatpush1.msra.mxu0 0.0
      %7279 = vmatprep.subr.mxu0 0.0
      %7280 = vmatpush1.msra.mxu0 0.0
      %7281 = vmatprep.subr.mxu0 0.0
      %7282 = vmatpush1.msra.mxu0 0.0
      %7283 = vmatprep.subr.mxu0 0.0
      %7284 = vmatpush1.msra.mxu0 0.0
      %7285 = vmatprep.subr.mxu0 0.0
      %7286 = vmatpush1.msra.mxu0 0.0
      %7287 = vmatprep.subr.mxu0 0.0
      %7288 = vmatpush1.msra.mxu0 0.0
      %7289 = vmatprep.subr.mxu0 0.0
      %7290 = vmatpush1.msra.mxu0 0.0
      %7291 = vmatprep.subr.mxu0 0.0
      %7292 = vmatpush1.msra.mxu0 0.0
      %7293 = vmatprep.subr.mxu0 0.0
      %7294 = vmatpush1.msra.mxu0 0.0
      %7295 = vmatprep.subr.mxu0 0.0
      %7296 = vmatpush1.msra.mxu0 0.0
      %7297 = vmatprep.subr.mxu0 0.0
      %7298 = vmatpush1.msra.mxu0 0.0
      %7299 = vmatprep.subr.mxu0 0.0
      %7300 = vmatpush1.msra.mxu0 0.0
      %7301 = vmatprep.subr.mxu0 0.0
      %7302 = vmatpush1.msra.mxu0 0.0
      %7303 = vmatprep.subr.mxu0 0.0
      %7304 = vmatpush1.msra.mxu0 0.0
      %7305 = vmatprep.subr.mxu0 0.0
      %7306 = vmatpush1.msra.mxu0 0.0
      %7307 = vmatprep.subr.mxu0 0.0
      %7308 = vmatpush1.msra.mxu0 0.0
      %7309 = vmatprep.subr.mxu0 0.0
      %7310 = vmatpush1.msra.mxu0 0.0
      %7311 = vmatprep.mubr.f32.mxu0 0.0
      %7312 = vmatmul.mubr.f32.gmra.mrb[0].mxu0 %v7245
      %v7313 = vpop.f32.mrb[0].mxu0
      %v7314 = vadd.f32 0.0, %v7313
      %v7315 = vpop.f32.mrb[0].mxu0
      %7316 = vdwg.mxu0
      %v7317 = vadd.f32 %v7239, %v7314
      %s7318 = scalar_lea.vmem %s10, 24
      %v7319 = vld [vmem:[%s7318] sm:$0xff]
      %v7321 = vsel %vm2902, %v7070, 0
      %7323 = vmatprep.subr.mxu0 0.0
      %7324 = vmatpush1.msra.mxu0 %v7319
      %7325 = vmatprep.subr.mxu0 0.0
      %7326 = vmatpush1.msra.mxu0 0.0
      %7327 = vmatprep.subr.mxu0 0.0
      %7328 = vmatpush1.msra.mxu0 0.0
      %7329 = vmatprep.subr.mxu0 0.0
      %7330 = vmatpush1.msra.mxu0 0.0
      %7331 = vmatprep.subr.mxu0 0.0
      %7332 = vmatpush1.msra.mxu0 0.0
      %7333 = vmatprep.subr.mxu0 0.0
      %7334 = vmatpush1.msra.mxu0 0.0
      %7335 = vmatprep.subr.mxu0 0.0
      %7336 = vmatpush1.msra.mxu0 0.0
      %7337 = vmatprep.subr.mxu0 0.0
      %7338 = vmatpush1.msra.mxu0 0.0
      %7339 = vmatprep.subr.mxu0 0.0
      %7340 = vmatpush1.msra.mxu0 0.0
      %7341 = vmatprep.subr.mxu0 0.0
      %7342 = vmatpush1.msra.mxu0 0.0
      %7343 = vmatprep.subr.mxu0 0.0
      %7344 = vmatpush1.msra.mxu0 0.0
      %7345 = vmatprep.subr.mxu0 0.0
      %7346 = vmatpush1.msra.mxu0 0.0
      %7347 = vmatprep.subr.mxu0 0.0
      %7348 = vmatpush1.msra.mxu0 0.0
      %7349 = vmatprep.subr.mxu0 0.0
      %7350 = vmatpush1.msra.mxu0 0.0
      %7351 = vmatprep.subr.mxu0 0.0
      %7352 = vmatpush1.msra.mxu0 0.0
      %7353 = vmatprep.subr.mxu0 0.0
      %7354 = vmatpush1.msra.mxu0 0.0
      %7355 = vmatprep.subr.mxu0 0.0
      %7356 = vmatpush1.msra.mxu0 0.0
      %7357 = vmatprep.subr.mxu0 0.0
      %7358 = vmatpush1.msra.mxu0 0.0
      %7359 = vmatprep.subr.mxu0 0.0
      %7360 = vmatpush1.msra.mxu0 0.0
      %7361 = vmatprep.subr.mxu0 0.0
      %7362 = vmatpush1.msra.mxu0 0.0
      %7363 = vmatprep.subr.mxu0 0.0
      %7364 = vmatpush1.msra.mxu0 0.0
      %7365 = vmatprep.subr.mxu0 0.0
      %7366 = vmatpush1.msra.mxu0 0.0
      %7367 = vmatprep.subr.mxu0 0.0
      %7368 = vmatpush1.msra.mxu0 0.0
      %7369 = vmatprep.subr.mxu0 0.0
      %7370 = vmatpush1.msra.mxu0 0.0
      %7371 = vmatprep.subr.mxu0 0.0
      %7372 = vmatpush1.msra.mxu0 0.0
      %7373 = vmatprep.subr.mxu0 0.0
      %7374 = vmatpush1.msra.mxu0 0.0
      %7375 = vmatprep.subr.mxu0 0.0
      %7376 = vmatpush1.msra.mxu0 0.0
      %7377 = vmatprep.subr.mxu0 0.0
      %7378 = vmatpush1.msra.mxu0 0.0
      %7379 = vmatprep.subr.mxu0 0.0
      %7380 = vmatpush1.msra.mxu0 0.0
      %7381 = vmatprep.subr.mxu0 0.0
      %7382 = vmatpush1.msra.mxu0 0.0
      %7383 = vmatprep.subr.mxu0 0.0
      %7384 = vmatpush1.msra.mxu0 0.0
      %7385 = vmatprep.subr.mxu0 0.0
      %7386 = vmatpush1.msra.mxu0 0.0
      %7387 = vmatprep.mubr.f32.mxu0 0.0
      %7388 = vmatmul.mubr.f32.gmra.mrb[0].mxu0 %v7321
      %v7389 = vpop.f32.mrb[0].mxu0
      %v7390 = vadd.f32 0.0, %v7389
      %v7391 = vpop.f32.mrb[0].mxu0
      %7392 = vdwg.mxu0
      %v7393 = vadd.f32 %v7317, %v7390
      %s7394 = scalar_lea.vmem %s10, 32
      %v7395 = vld [vmem:[%s7394] sm:$0xff]
      %v7397 = vsel %vm2902, %v7075, 0
      %7399 = vmatprep.subr.mxu0 0.0
      %7400 = vmatpush1.msra.mxu0 %v7395
      %7401 = vmatprep.subr.mxu0 0.0
      %7402 = vmatpush1.msra.mxu0 0.0
      %7403 = vmatprep.subr.mxu0 0.0
      %7404 = vmatpush1.msra.mxu0 0.0
      %7405 = vmatprep.subr.mxu0 0.0
      %7406 = vmatpush1.msra.mxu0 0.0
      %7407 = vmatprep.subr.mxu0 0.0
      %7408 = vmatpush1.msra.mxu0 0.0
      %7409 = vmatprep.subr.mxu0 0.0
      %7410 = vmatpush1.msra.mxu0 0.0
      %7411 = vmatprep.subr.mxu0 0.0
      %7412 = vmatpush1.msra.mxu0 0.0
      %7413 = vmatprep.subr.mxu0 0.0
      %7414 = vmatpush1.msra.mxu0 0.0
      %7415 = vmatprep.subr.mxu0 0.0
      %7416 = vmatpush1.msra.mxu0 0.0
      %7417 = vmatprep.subr.mxu0 0.0
      %7418 = vmatpush1.msra.mxu0 0.0
      %7419 = vmatprep.subr.mxu0 0.0
      %7420 = vmatpush1.msra.mxu0 0.0
      %7421 = vmatprep.subr.mxu0 0.0
      %7422 = vmatpush1.msra.mxu0 0.0
      %7423 = vmatprep.subr.mxu0 0.0
      %7424 = vmatpush1.msra.mxu0 0.0
      %7425 = vmatprep.subr.mxu0 0.0
      %7426 = vmatpush1.msra.mxu0 0.0
      %7427 = vmatprep.subr.mxu0 0.0
      %7428 = vmatpush1.msra.mxu0 0.0
      %7429 = vmatprep.subr.mxu0 0.0
      %7430 = vmatpush1.msra.mxu0 0.0
      %7431 = vmatprep.subr.mxu0 0.0
      %7432 = vmatpush1.msra.mxu0 0.0
      %7433 = vmatprep.subr.mxu0 0.0
      %7434 = vmatpush1.msra.mxu0 0.0
      %7435 = vmatprep.subr.mxu0 0.0
      %7436 = vmatpush1.msra.mxu0 0.0
      %7437 = vmatprep.subr.mxu0 0.0
      %7438 = vmatpush1.msra.mxu0 0.0
      %7439 = vmatprep.subr.mxu0 0.0
      %7440 = vmatpush1.msra.mxu0 0.0
      %7441 = vmatprep.subr.mxu0 0.0
      %7442 = vmatpush1.msra.mxu0 0.0
      %7443 = vmatprep.subr.mxu0 0.0
      %7444 = vmatpush1.msra.mxu0 0.0
      %7445 = vmatprep.subr.mxu0 0.0
      %7446 = vmatpush1.msra.mxu0 0.0
      %7447 = vmatprep.subr.mxu0 0.0
      %7448 = vmatpush1.msra.mxu0 0.0
      %7449 = vmatprep.subr.mxu0 0.0
      %7450 = vmatpush1.msra.mxu0 0.0
      %7451 = vmatprep.subr.mxu0 0.0
      %7452 = vmatpush1.msra.mxu0 0.0
      %7453 = vmatprep.subr.mxu0 0.0
      %7454 = vmatpush1.msra.mxu0 0.0
      %7455 = vmatprep.subr.mxu0 0.0
      %7456 = vmatpush1.msra.mxu0 0.0
      %7457 = vmatprep.subr.mxu0 0.0
      %7458 = vmatpush1.msra.mxu0 0.0
      %7459 = vmatprep.subr.mxu0 0.0
      %7460 = vmatpush1.msra.mxu0 0.0
      %7461 = vmatprep.subr.mxu0 0.0
      %7462 = vmatpush1.msra.mxu0 0.0
      %7463 = vmatprep.mubr.f32.mxu0 0.0
      %7464 = vmatmul.mubr.f32.gmra.mrb[0].mxu0 %v7397
      %v7465 = vpop.f32.mrb[0].mxu0
      %v7466 = vadd.f32 0.0, %v7465
      %v7467 = vpop.f32.mrb[0].mxu0
      %7468 = vdwg.mxu0
      %v7469 = vadd.f32 %v7393, %v7466
      %s7470 = scalar_lea.vmem %s10, 40
      %v7471 = vld [vmem:[%s7470] sm:$0xff]
      %v7473 = vsel %vm2902, %v7080, 0
      %7475 = vmatprep.subr.mxu0 0.0
      %7476 = vmatpush1.msra.mxu0 %v7471
      %7477 = vmatprep.subr.mxu0 0.0
      %7478 = vmatpush1.msra.mxu0 0.0
      %7479 = vmatprep.subr.mxu0 0.0
      %7480 = vmatpush1.msra.mxu0 0.0
      %7481 = vmatprep.subr.mxu0 0.0
      %7482 = vmatpush1.msra.mxu0 0.0
      %7483 = vmatprep.subr.mxu0 0.0
      %7484 = vmatpush1.msra.mxu0 0.0
      %7485 = vmatprep.subr.mxu0 0.0
      %7486 = vmatpush1.msra.mxu0 0.0
      %7487 = vmatprep.subr.mxu0 0.0
      %7488 = vmatpush1.msra.mxu0 0.0
      %7489 = vmatprep.subr.mxu0 0.0
      %7490 = vmatpush1.msra.mxu0 0.0
      %7491 = vmatprep.subr.mxu0 0.0
      %7492 = vmatpush1.msra.mxu0 0.0
      %7493 = vmatprep.subr.mxu0 0.0
      %7494 = vmatpush1.msra.mxu0 0.0
      %7495 = vmatprep.subr.mxu0 0.0
      %7496 = vmatpush1.msra.mxu0 0.0
      %7497 = vmatprep.subr.mxu0 0.0
      %7498 = vmatpush1.msra.mxu0 0.0
      %7499 = vmatprep.subr.mxu0 0.0
      %7500 = vmatpush1.msra.mxu0 0.0
      %7501 = vmatprep.subr.mxu0 0.0
      %7502 = vmatpush1.msra.mxu0 0.0
      %7503 = vmatprep.subr.mxu0 0.0
      %7504 = vmatpush1.msra.mxu0 0.0
      %7505 = vmatprep.subr.mxu0 0.0
      %7506 = vmatpush1.msra.mxu0 0.0
      %7507 = vmatprep.subr.mxu0 0.0
      %7508 = vmatpush1.msra.mxu0 0.0
      %7509 = vmatprep.subr.mxu0 0.0
      %7510 = vmatpush1.msra.mxu0 0.0
      %7511 = vmatprep.subr.mxu0 0.0
      %7512 = vmatpush1.msra.mxu0 0.0
      %7513 = vmatprep.subr.mxu0 0.0
      %7514 = vmatpush1.msra.mxu0 0.0
      %7515 = vmatprep.subr.mxu0 0.0
      %7516 = vmatpush1.msra.mxu0 0.0
      %7517 = vmatprep.subr.mxu0 0.0
      %7518 = vmatpush1.msra.mxu0 0.0
      %7519 = vmatprep.subr.mxu0 0.0
      %7520 = vmatpush1.msra.mxu0 0.0
      %7521 = vmatprep.subr.mxu0 0.0
      %7522 = vmatpush1.msra.mxu0 0.0
      %7523 = vmatprep.subr.mxu0 0.0
      %7524 = vmatpush1.msra.mxu0 0.0
      %7525 = vmatprep.subr.mxu0 0.0
      %7526 = vmatpush1.msra.mxu0 0.0
      %7527 = vmatprep.subr.mxu0 0.0
      %7528 = vmatpush1.msra.mxu0 0.0
      %7529 = vmatprep.subr.mxu0 0.0
      %7530 = vmatpush1.msra.mxu0 0.0
      %7531 = vmatprep.subr.mxu0 0.0
      %7532 = vmatpush1.msra.mxu0 0.0
      %7533 = vmatprep.subr.mxu0 0.0
      %7534 = vmatpush1.msra.mxu0 0.0
      %7535 = vmatprep.subr.mxu0 0.0
      %7536 = vmatpush1.msra.mxu0 0.0
      %7537 = vmatprep.subr.mxu0 0.0
      %7538 = vmatpush1.msra.mxu0 0.0
      %7539 = vmatprep.mubr.f32.mxu0 0.0
      %7540 = vmatmul.mubr.f32.gmra.mrb[0].mxu0 %v7473
      %v7541 = vpop.f32.mrb[0].mxu0
      %v7542 = vadd.f32 0.0, %v7541
      %v7543 = vpop.f32.mrb[0].mxu0
      %7544 = vdwg.mxu0
      %v7545 = vadd.f32 %v7469, %v7542
      %s7546 = scalar_lea.vmem %s10, 48
      %v7547 = vld [vmem:[%s7546] sm:$0xff]
      %v7549 = vsel %vm2902, %v7085, 0
      %7551 = vmatprep.subr.mxu0 0.0
      %7552 = vmatpush1.msra.mxu0 %v7547
      %7553 = vmatprep.subr.mxu0 0.0
      %7554 = vmatpush1.msra.mxu0 0.0
      %7555 = vmatprep.subr.mxu0 0.0
      %7556 = vmatpush1.msra.mxu0 0.0
      %7557 = vmatprep.subr.mxu0 0.0
      %7558 = vmatpush1.msra.mxu0 0.0
      %7559 = vmatprep.subr.mxu0 0.0
      %7560 = vmatpush1.msra.mxu0 0.0
      %7561 = vmatprep.subr.mxu0 0.0
      %7562 = vmatpush1.msra.mxu0 0.0
      %7563 = vmatprep.subr.mxu0 0.0
      %7564 = vmatpush1.msra.mxu0 0.0
      %7565 = vmatprep.subr.mxu0 0.0
      %7566 = vmatpush1.msra.mxu0 0.0
      %7567 = vmatprep.subr.mxu0 0.0
      %7568 = vmatpush1.msra.mxu0 0.0
      %7569 = vmatprep.subr.mxu0 0.0
      %7570 = vmatpush1.msra.mxu0 0.0
      %7571 = vmatprep.subr.mxu0 0.0
      %7572 = vmatpush1.msra.mxu0 0.0
      %7573 = vmatprep.subr.mxu0 0.0
      %7574 = vmatpush1.msra.mxu0 0.0
      %7575 = vmatprep.subr.mxu0 0.0
      %7576 = vmatpush1.msra.mxu0 0.0
      %7577 = vmatprep.subr.mxu0 0.0
      %7578 = vmatpush1.msra.mxu0 0.0
      %7579 = vmatprep.subr.mxu0 0.0
      %7580 = vmatpush1.msra.mxu0 0.0
      %7581 = vmatprep.subr.mxu0 0.0
      %7582 = vmatpush1.msra.mxu0 0.0
      %7583 = vmatprep.subr.mxu0 0.0
      %7584 = vmatpush1.msra.mxu0 0.0
      %7585 = vmatprep.subr.mxu0 0.0
      %7586 = vmatpush1.msra.mxu0 0.0
      %7587 = vmatprep.subr.mxu0 0.0
      %7588 = vmatpush1.msra.mxu0 0.0
      %7589 = vmatprep.subr.mxu0 0.0
      %7590 = vmatpush1.msra.mxu0 0.0
      %7591 = vmatprep.subr.mxu0 0.0
      %7592 = vmatpush1.msra.mxu0 0.0
      %7593 = vmatprep.subr.mxu0 0.0
      %7594 = vmatpush1.msra.mxu0 0.0
      %7595 = vmatprep.subr.mxu0 0.0
      %7596 = vmatpush1.msra.mxu0 0.0
      %7597 = vmatprep.subr.mxu0 0.0
      %7598 = vmatpush1.msra.mxu0 0.0
      %7599 = vmatprep.subr.mxu0 0.0
      %7600 = vmatpush1.msra.mxu0 0.0
      %7601 = vmatprep.subr.mxu0 0.0
      %7602 = vmatpush1.msra.mxu0 0.0
      %7603 = vmatprep.subr.mxu0 0.0
      %7604 = vmatpush1.msra.mxu0 0.0
      %7605 = vmatprep.subr.mxu0 0.0
      %7606 = vmatpush1.msra.mxu0 0.0
      %7607 = vmatprep.subr.mxu0 0.0
      %7608 = vmatpush1.msra.mxu0 0.0
      %7609 = vmatprep.subr.mxu0 0.0
      %7610 = vmatpush1.msra.mxu0 0.0
      %7611 = vmatprep.subr.mxu0 0.0
      %7612 = vmatpush1.msra.mxu0 0.0
      %7613 = vmatprep.subr.mxu0 0.0
      %7614 = vmatpush1.msra.mxu0 0.0
      %7615 = vmatprep.mubr.f32.mxu0 0.0
      %7616 = vmatmul.mubr.f32.gmra.mrb[0].mxu0 %v7549
      %v7617 = vpop.f32.mrb[0].mxu0
      %v7618 = vadd.f32 0.0, %v7617
      %v7619 = vpop.f32.mrb[0].mxu0
      %7620 = vdwg.mxu0
      %v7621 = vadd.f32 %v7545, %v7618
      %s7622 = scalar_lea.vmem %s10, 56
      %v7623 = vld [vmem:[%s7622] sm:$0xff]
      %v7625 = vsel %vm2902, %v7090, 0
      %7627 = vmatprep.subr.mxu0 0.0
      %7628 = vmatpush1.msra.mxu0 %v7623
      %7629 = vmatprep.subr.mxu0 0.0
      %7630 = vmatpush1.msra.mxu0 0.0
      %7631 = vmatprep.subr.mxu0 0.0
      %7632 = vmatpush1.msra.mxu0 0.0
      %7633 = vmatprep.subr.mxu0 0.0
      %7634 = vmatpush1.msra.mxu0 0.0
      %7635 = vmatprep.subr.mxu0 0.0
      %7636 = vmatpush1.msra.mxu0 0.0
      %7637 = vmatprep.subr.mxu0 0.0
      %7638 = vmatpush1.msra.mxu0 0.0
      %7639 = vmatprep.subr.mxu0 0.0
      %7640 = vmatpush1.msra.mxu0 0.0
      %7641 = vmatprep.subr.mxu0 0.0
      %7642 = vmatpush1.msra.mxu0 0.0
      %7643 = vmatprep.subr.mxu0 0.0
      %7644 = vmatpush1.msra.mxu0 0.0
      %7645 = vmatprep.subr.mxu0 0.0
      %7646 = vmatpush1.msra.mxu0 0.0
      %7647 = vmatprep.subr.mxu0 0.0
      %7648 = vmatpush1.msra.mxu0 0.0
      %7649 = vmatprep.subr.mxu0 0.0
      %7650 = vmatpush1.msra.mxu0 0.0
      %7651 = vmatprep.subr.mxu0 0.0
      %7652 = vmatpush1.msra.mxu0 0.0
      %7653 = vmatprep.subr.mxu0 0.0
      %7654 = vmatpush1.msra.mxu0 0.0
      %7655 = vmatprep.subr.mxu0 0.0
      %7656 = vmatpush1.msra.mxu0 0.0
      %7657 = vmatprep.subr.mxu0 0.0
      %7658 = vmatpush1.msra.mxu0 0.0
      %7659 = vmatprep.subr.mxu0 0.0
      %7660 = vmatpush1.msra.mxu0 0.0
      %7661 = vmatprep.subr.mxu0 0.0
      %7662 = vmatpush1.msra.mxu0 0.0
      %7663 = vmatprep.subr.mxu0 0.0
      %7664 = vmatpush1.msra.mxu0 0.0
      %7665 = vmatprep.subr.mxu0 0.0
      %7666 = vmatpush1.msra.mxu0 0.0
      %7667 = vmatprep.subr.mxu0 0.0
      %7668 = vmatpush1.msra.mxu0 0.0
      %7669 = vmatprep.subr.mxu0 0.0
      %7670 = vmatpush1.msra.mxu0 0.0
      %7671 = vmatprep.subr.mxu0 0.0
      %7672 = vmatpush1.msra.mxu0 0.0
      %7673 = vmatprep.subr.mxu0 0.0
      %7674 = vmatpush1.msra.mxu0 0.0
      %7675 = vmatprep.subr.mxu0 0.0
      %7676 = vmatpush1.msra.mxu0 0.0
      %7677 = vmatprep.subr.mxu0 0.0
      %7678 = vmatpush1.msra.mxu0 0.0
      %7679 = vmatprep.subr.mxu0 0.0
      %7680 = vmatpush1.msra.mxu0 0.0
      %7681 = vmatprep.subr.mxu0 0.0
      %7682 = vmatpush1.msra.mxu0 0.0
      %7683 = vmatprep.subr.mxu0 0.0
      %7684 = vmatpush1.msra.mxu0 0.0
      %7685 = vmatprep.subr.mxu0 0.0
      %7686 = vmatpush1.msra.mxu0 0.0
      %7687 = vmatprep.subr.mxu0 0.0
      %7688 = vmatpush1.msra.mxu0 0.0
      %7689 = vmatprep.subr.mxu0 0.0
      %7690 = vmatpush1.msra.mxu0 0.0
      %7691 = vmatprep.mubr.f32.mxu0 0.0
      %7692 = vmatmul.mubr.f32.gmra.mrb[0].mxu0 %v7625
      %v7693 = vpop.f32.mrb[0].mxu0
      %v7694 = vadd.f32 0.0, %v7693
      %v7695 = vpop.f32.mrb[0].mxu0
      %7696 = vdwg.mxu0
      %v7697 = vadd.f32 %v7621, %v7694
      %v7698 = vld [vmem:[%s9] sm:$0xff]
      %7700 = vset.pattern.permute.xlu0 0
      %7701 = vperm.xlu0 %7700, %v7698
      %v7702 = vpop.permute.xlu0 %7701
      %v7704 = vadd.f32 %v7697, %v7702
      %v7705 = vmax.f32 %v7704, 0.0
      %v7706 = vld [vmem:[%s11] sm:$0xff]
      %v7707 = vld [vmem:[%s11 + $0x8] sm:$0xff]
      %v7708 = vld [vmem:[%s11 + $0x10] sm:$0xff]
      %v7709 = vld [vmem:[%s11 + $0x18] sm:$0xff]
      %v7710 = vld [vmem:[%s11 + $0x20] sm:$0xff]
      %v7711 = vld [vmem:[%s11 + $0x28] sm:$0xff]
      %v7712 = vld [vmem:[%s11 + $0x30] sm:$0xff]
      %v7713 = vld [vmem:[%s11 + $0x38] sm:$0xff]
      %v7714 = vld [vmem:[%s11 + $0x40] sm:$0xff]
      %v7715 = vld [vmem:[%s11 + $0x48] sm:$0xff]
      %v7716 = vld [vmem:[%s11 + $0x50] sm:$0xff]
      %v7717 = vld [vmem:[%s11 + $0x58] sm:$0xff]
      %v7718 = vld [vmem:[%s11 + $0x60] sm:$0xff]
      %v7719 = vld [vmem:[%s11 + $0x68] sm:$0xff]
      %v7720 = vld [vmem:[%s11 + $0x70] sm:$0xff]
      %v7721 = vld [vmem:[%s11 + $0x78] sm:$0xff]
      %v7723 = vsel %vm2902, %v7706, 0
      %v7726 = vsel %vm2902, %v7707, 0
      %v7729 = vsel %vm2902, %v7708, 0
      %v7732 = vsel %vm2902, %v7709, 0
      %v7735 = vsel %vm2902, %v7710, 0
      %v7738 = vsel %vm2902, %v7711, 0
      %v7741 = vsel %vm2902, %v7712, 0
      %v7744 = vsel %vm2902, %v7713, 0
      %v7747 = vsel %vm2902, %v7714, 0
      %v7750 = vsel %vm2902, %v7715, 0
      %v7753 = vsel %vm2902, %v7716, 0
      %v7756 = vsel %vm2902, %v7717, 0
      %v7759 = vsel %vm2902, %v7718, 0
      %v7762 = vsel %vm2902, %v7719, 0
      %v7765 = vsel %vm2902, %v7720, 0
      %v7768 = vsel %vm2902, %v7721, 0
      %7770 = vmatprep.subr.mxu0 0.0
      %7771 = vmatpush1.msra.mxu0 %v7705
      %7772 = vmatprep.subr.mxu0 0.0
      %7773 = vmatpush1.msra.mxu0 0.0
      %7774 = vmatprep.subr.mxu0 0.0
      %7775 = vmatpush1.msra.mxu0 0.0
      %7776 = vmatprep.subr.mxu0 0.0
      %7777 = vmatpush1.msra.mxu0 0.0
      %7778 = vmatprep.subr.mxu0 0.0
      %7779 = vmatpush1.msra.mxu0 0.0
      %7780 = vmatprep.subr.mxu0 0.0
      %7781 = vmatpush1.msra.mxu0 0.0
      %7782 = vmatprep.subr.mxu0 0.0
      %7783 = vmatpush1.msra.mxu0 0.0
      %7784 = vmatprep.subr.mxu0 0.0
      %7785 = vmatpush1.msra.mxu0 0.0
      %7786 = vmatprep.subr.mxu0 0.0
      %7787 = vmatpush1.msra.mxu0 0.0
      %7788 = vmatprep.subr.mxu0 0.0
      %7789 = vmatpush1.msra.mxu0 0.0
      %7790 = vmatprep.subr.mxu0 0.0
      %7791 = vmatpush1.msra.mxu0 0.0
      %7792 = vmatprep.subr.mxu0 0.0
      %7793 = vmatpush1.msra.mxu0 0.0
      %7794 = vmatprep.subr.mxu0 0.0
      %7795 = vmatpush1.msra.mxu0 0.0
      %7796 = vmatprep.subr.mxu0 0.0
      %7797 = vmatpush1.msra.mxu0 0.0
      %7798 = vmatprep.subr.mxu0 0.0
      %7799 = vmatpush1.msra.mxu0 0.0
      %7800 = vmatprep.subr.mxu0 0.0
      %7801 = vmatpush1.msra.mxu0 0.0
      %7802 = vmatprep.subr.mxu0 0.0
      %7803 = vmatpush1.msra.mxu0 0.0
      %7804 = vmatprep.subr.mxu0 0.0
      %7805 = vmatpush1.msra.mxu0 0.0
      %7806 = vmatprep.subr.mxu0 0.0
      %7807 = vmatpush1.msra.mxu0 0.0
      %7808 = vmatprep.subr.mxu0 0.0
      %7809 = vmatpush1.msra.mxu0 0.0
      %7810 = vmatprep.subr.mxu0 0.0
      %7811 = vmatpush1.msra.mxu0 0.0
      %7812 = vmatprep.subr.mxu0 0.0
      %7813 = vmatpush1.msra.mxu0 0.0
      %7814 = vmatprep.subr.mxu0 0.0
      %7815 = vmatpush1.msra.mxu0 0.0
      %7816 = vmatprep.subr.mxu0 0.0
      %7817 = vmatpush1.msra.mxu0 0.0
      %7818 = vmatprep.subr.mxu0 0.0
      %7819 = vmatpush1.msra.mxu0 0.0
      %7820 = vmatprep.subr.mxu0 0.0
      %7821 = vmatpush1.msra.mxu0 0.0
      %7822 = vmatprep.subr.mxu0 0.0
      %7823 = vmatpush1.msra.mxu0 0.0
      %7824 = vmatprep.subr.mxu0 0.0
      %7825 = vmatpush1.msra.mxu0 0.0
      %7826 = vmatprep.subr.mxu0 0.0
      %7827 = vmatpush1.msra.mxu0 0.0
      %7828 = vmatprep.subr.mxu0 0.0
      %7829 = vmatpush1.msra.mxu0 0.0
      %7830 = vmatprep.subr.mxu0 0.0
      %7831 = vmatpush1.msra.mxu0 0.0
      %7832 = vmatprep.subr.mxu0 0.0
      %7833 = vmatpush1.msra.mxu0 0.0
      %7834 = vmatprep.mubr.f32.mxu0 0.0
      %7835 = vmatmul.mubr.f32.gmra.mrb[0].mxu0 %v7723
      %v7836 = vpop.f32.mrb[0].mxu0
      %v7837 = vadd.f32 0.0, %v7836
      %v7838 = vpop.f32.mrb[0].mxu0
      %7839 = vmatprep.mubr.f32.mxu0 0.0
      %7840 = vmatmul.mubr.f32.gmra.mrb[0].mxu0 %v7726
      %v7841 = vpop.f32.mrb[0].mxu0
      %v7842 = vadd.f32 0.0, %v7841
      %v7843 = vpop.f32.mrb[0].mxu0
      %7844 = vmatprep.mubr.f32.mxu0 0.0
      %7845 = vmatmul.mubr.f32.gmra.mrb[0].mxu0 %v7729
      %v7846 = vpop.f32.mrb[0].mxu0
      %v7847 = vadd.f32 0.0, %v7846
      %v7848 = vpop.f32.mrb[0].mxu0
      %7849 = vmatprep.mubr.f32.mxu0 0.0
      %7850 = vmatmul.mubr.f32.gmra.mrb[0].mxu0 %v7732
      %v7851 = vpop.f32.mrb[0].mxu0
      %v7852 = vadd.f32 0.0, %v7851
      %v7853 = vpop.f32.mrb[0].mxu0
      %7854 = vmatprep.mubr.f32.mxu0 0.0
      %7855 = vmatmul.mubr.f32.gmra.mrb[0].mxu0 %v7735
      %v7856 = vpop.f32.mrb[0].mxu0
      %v7857 = vadd.f32 0.0, %v7856
      %v7858 = vpop.f32.mrb[0].mxu0
      %7859 = vmatprep.mubr.f32.mxu0 0.0
      %7860 = vmatmul.mubr.f32.gmra.mrb[0].mxu0 %v7738
      %v7861 = vpop.f32.mrb[0].mxu0
      %v7862 = vadd.f32 0.0, %v7861
      %v7863 = vpop.f32.mrb[0].mxu0
      %7864 = vmatprep.mubr.f32.mxu0 0.0
      %7865 = vmatmul.mubr.f32.gmra.mrb[0].mxu0 %v7741
      %v7866 = vpop.f32.mrb[0].mxu0
      %v7867 = vadd.f32 0.0, %v7866
      %v7868 = vpop.f32.mrb[0].mxu0
      %7869 = vmatprep.mubr.f32.mxu0 0.0
      %7870 = vmatmul.mubr.f32.gmra.mrb[0].mxu0 %v7744
      %v7871 = vpop.f32.mrb[0].mxu0
      %v7872 = vadd.f32 0.0, %v7871
      %v7873 = vpop.f32.mrb[0].mxu0
      %7874 = vmatprep.mubr.f32.mxu0 0.0
      %7875 = vmatmul.mubr.f32.gmra.mrb[0].mxu0 %v7747
      %v7876 = vpop.f32.mrb[0].mxu0
      %v7877 = vadd.f32 0.0, %v7876
      %v7878 = vpop.f32.mrb[0].mxu0
      %7879 = vmatprep.mubr.f32.mxu0 0.0
      %7880 = vmatmul.mubr.f32.gmra.mrb[0].mxu0 %v7750
      %v7881 = vpop.f32.mrb[0].mxu0
      %v7882 = vadd.f32 0.0, %v7881
      %v7883 = vpop.f32.mrb[0].mxu0
      %7884 = vmatprep.mubr.f32.mxu0 0.0
      %7885 = vmatmul.mubr.f32.gmra.mrb[0].mxu0 %v7753
      %v7886 = vpop.f32.mrb[0].mxu0
      %v7887 = vadd.f32 0.0, %v7886
      %v7888 = vpop.f32.mrb[0].mxu0
      %7889 = vmatprep.mubr.f32.mxu0 0.0
      %7890 = vmatmul.mubr.f32.gmra.mrb[0].mxu0 %v7756
      %v7891 = vpop.f32.mrb[0].mxu0
      %v7892 = vadd.f32 0.0, %v7891
      %v7893 = vpop.f32.mrb[0].mxu0
      %7894 = vmatprep.mubr.f32.mxu0 0.0
      %7895 = vmatmul.mubr.f32.gmra.mrb[0].mxu0 %v7759
      %v7896 = vpop.f32.mrb[0].mxu0
      %v7897 = vadd.f32 0.0, %v7896
      %v7898 = vpop.f32.mrb[0].mxu0
      %7899 = vmatprep.mubr.f32.mxu0 0.0
      %7900 = vmatmul.mubr.f32.gmra.mrb[0].mxu0 %v7762
      %v7901 = vpop.f32.mrb[0].mxu0
      %v7902 = vadd.f32 0.0, %v7901
      %v7903 = vpop.f32.mrb[0].mxu0
      %7904 = vmatprep.mubr.f32.mxu0 0.0
      %7905 = vmatmul.mubr.f32.gmra.mrb[0].mxu0 %v7765
      %v7906 = vpop.f32.mrb[0].mxu0
      %v7907 = vadd.f32 0.0, %v7906
      %v7908 = vpop.f32.mrb[0].mxu0
      %7909 = vmatprep.mubr.f32.mxu0 0.0
      %7910 = vmatmul.mubr.f32.gmra.mrb[0].mxu0 %v7768
      %v7911 = vpop.f32.mrb[0].mxu0
      %v7912 = vadd.f32 0.0, %v7911
      %v7913 = vpop.f32.mrb[0].mxu0
      %7914 = vdwg.mxu0
      %v7915 = vld [vmem:[%s13] sm:$0xff]
      %v7916 = vld [vmem:[%s13 + $0x8] sm:$0xff]
      %v7917 = vld [vmem:[%s13 + $0x10] sm:$0xff]
      %v7918 = vld [vmem:[%s13 + $0x18] sm:$0xff]
      %v7919 = vld [vmem:[%s13 + $0x20] sm:$0xff]
      %v7920 = vld [vmem:[%s13 + $0x28] sm:$0xff]
      %v7921 = vld [vmem:[%s13 + $0x30] sm:$0xff]
      %v7922 = vld [vmem:[%s13 + $0x38] sm:$0xff]
      %v7923 = vld [vmem:[%s13 + $0x40] sm:$0xff]
      %v7924 = vld [vmem:[%s13 + $0x48] sm:$0xff]
      %v7925 = vld [vmem:[%s13 + $0x50] sm:$0xff]
      %v7926 = vld [vmem:[%s13 + $0x58] sm:$0xff]
      %v7927 = vld [vmem:[%s13 + $0x60] sm:$0xff]
      %v7928 = vld [vmem:[%s13 + $0x68] sm:$0xff]
      %v7929 = vld [vmem:[%s13 + $0x70] sm:$0xff]
      %v7930 = vld [vmem:[%s13 + $0x78] sm:$0xff]
      %v7931 = vld [vmem:[%s13 + $0x80] sm:$0xff]
      %v7932 = vld [vmem:[%s13 + $0x88] sm:$0xff]
      %v7933 = vld [vmem:[%s13 + $0x90] sm:$0xff]
      %v7934 = vld [vmem:[%s13 + $0x98] sm:$0xff]
      %v7935 = vld [vmem:[%s13 + $0xa0] sm:$0xff]
      %v7936 = vld [vmem:[%s13 + $0xa8] sm:$0xff]
      %v7937 = vld [vmem:[%s13 + $0xb0] sm:$0xff]
      %v7938 = vld [vmem:[%s13 + $0xb8] sm:$0xff]
      %v7939 = vld [vmem:[%s13 + $0xc0] sm:$0xff]
      %v7940 = vld [vmem:[%s13 + $0xc8] sm:$0xff]
      %v7941 = vld [vmem:[%s13 + $0xd0] sm:$0xff]
      %v7942 = vld [vmem:[%s13 + $0xd8] sm:$0xff]
      %v7943 = vld [vmem:[%s13 + $0xe0] sm:$0xff]
      %v7944 = vld [vmem:[%s13 + $0xe8] sm:$0xff]
      %v7945 = vld [vmem:[%s13 + $0xf0] sm:$0xff]
      %v7946 = vld [vmem:[%s13 + $0xf8] sm:$0xff]
      %s7947 = scalar_lea.vmem %s13, 256
      %v7948 = vld [vmem:[%s7947] sm:$0xff]
      %v7949 = vld [vmem:[%s7947 + $0x8] sm:$0xff]
      %v7950 = vld [vmem:[%s7947 + $0x10] sm:$0xff]
      %v7951 = vld [vmem:[%s7947 + $0x18] sm:$0xff]
      %v7952 = vld [vmem:[%s7947 + $0x20] sm:$0xff]
      %v7953 = vld [vmem:[%s7947 + $0x28] sm:$0xff]
      %v7954 = vld [vmem:[%s7947 + $0x30] sm:$0xff]
      %v7955 = vld [vmem:[%s7947 + $0x38] sm:$0xff]
      %v7956 = vld [vmem:[%s7947 + $0x40] sm:$0xff]
      %v7957 = vld [vmem:[%s7947 + $0x48] sm:$0xff]
      %v7958 = vld [vmem:[%s7947 + $0x50] sm:$0xff]
      %v7959 = vld [vmem:[%s7947 + $0x58] sm:$0xff]
      %v7960 = vld [vmem:[%s7947 + $0x60] sm:$0xff]
      %v7961 = vld [vmem:[%s7947 + $0x68] sm:$0xff]
      %v7962 = vld [vmem:[%s7947 + $0x70] sm:$0xff]
      %v7963 = vld [vmem:[%s7947 + $0x78] sm:$0xff]
      %v7964 = vld [vmem:[%s7947 + $0x80] sm:$0xff]
      %v7965 = vld [vmem:[%s7947 + $0x88] sm:$0xff]
      %v7966 = vld [vmem:[%s7947 + $0x90] sm:$0xff]
      %v7967 = vld [vmem:[%s7947 + $0x98] sm:$0xff]
      %v7968 = vld [vmem:[%s7947 + $0xa0] sm:$0xff]
      %v7969 = vld [vmem:[%s7947 + $0xa8] sm:$0xff]
      %v7970 = vld [vmem:[%s7947 + $0xb0] sm:$0xff]
      %v7971 = vld [vmem:[%s7947 + $0xb8] sm:$0xff]
      %v7972 = vld [vmem:[%s7947 + $0xc0] sm:$0xff]
      %v7973 = vld [vmem:[%s7947 + $0xc8] sm:$0xff]
      %v7974 = vld [vmem:[%s7947 + $0xd0] sm:$0xff]
      %v7975 = vld [vmem:[%s7947 + $0xd8] sm:$0xff]
      %v7976 = vld [vmem:[%s7947 + $0xe0] sm:$0xff]
      %v7977 = vld [vmem:[%s7947 + $0xe8] sm:$0xff]
      %v7978 = vld [vmem:[%s7947 + $0xf0] sm:$0xff]
      %v7979 = vld [vmem:[%s7947 + $0xf8] sm:$0xff]
      %v7981 = vsel %vm5702, %v7847, 0
      %v7984 = vsel %vm5702, %v7852, 0
      %7986 = vmatprep.subr.mxu0 %v7949
      %7987 = vmatpush1.msra.mxu0 %v7948
      %7988 = vmatprep.subr.mxu0 %v7953
      %7989 = vmatpush1.msra.mxu0 %v7952
      %7990 = vmatprep.subr.mxu0 %v7957
      %7991 = vmatpush1.msra.mxu0 %v7956
      %7992 = vmatprep.subr.mxu0 %v7961
      %7993 = vmatpush1.msra.mxu0 %v7960
      %7994 = vmatprep.subr.mxu0 %v7965
      %7995 = vmatpush1.msra.mxu0 %v7964
      %7996 = vmatprep.subr.mxu0 %v7969
      %7997 = vmatpush1.msra.mxu0 %v7968
      %7998 = vmatprep.subr.mxu0 %v7973
      %7999 = vmatpush1.msra.mxu0 %v7972
      %8000 = vmatprep.subr.mxu0 %v7977
      %8001 = vmatpush1.msra.mxu0 %v7976
      %8002 = vmatprep.subr.mxu0 0.0
      %8003 = vmatpush1.msra.mxu0 0.0
      %8004 = vmatprep.subr.mxu0 0.0
      %8005 = vmatpush1.msra.mxu0 0.0
      %8006 = vmatprep.subr.mxu0 0.0
      %8007 = vmatpush1.msra.mxu0 0.0
      %8008 = vmatprep.subr.mxu0 0.0
      %8009 = vmatpush1.msra.mxu0 0.0
      %8010 = vmatprep.subr.mxu0 0.0
      %8011 = vmatpush1.msra.mxu0 0.0
      %8012 = vmatprep.subr.mxu0 0.0
      %8013 = vmatpush1.msra.mxu0 0.0
      %8014 = vmatprep.subr.mxu0 0.0
      %8015 = vmatpush1.msra.mxu0 0.0
      %8016 = vmatprep.subr.mxu0 0.0
      %8017 = vmatpush1.msra.mxu0 0.0
      %8018 = vmatprep.subr.mxu0 0.0
      %8019 = vmatpush1.msra.mxu0 0.0
      %8020 = vmatprep.subr.mxu0 0.0
      %8021 = vmatpush1.msra.mxu0 0.0
      %8022 = vmatprep.subr.mxu0 0.0
      %8023 = vmatpush1.msra.mxu0 0.0
      %8024 = vmatprep.subr.mxu0 0.0
      %8025 = vmatpush1.msra.mxu0 0.0
      %8026 = vmatprep.subr.mxu0 0.0
      %8027 = vmatpush1.msra.mxu0 0.0
      %8028 = vmatprep.subr.mxu0 0.0
      %8029 = vmatpush1.msra.mxu0 0.0
      %8030 = vmatprep.subr.mxu0 0.0
      %8031 = vmatpush1.msra.mxu0 0.0
      %8032 = vmatprep.subr.mxu0 0.0
      %8033 = vmatpush1.msra.mxu0 0.0
      %8034 = vmatprep.subr.mxu0 0.0
      %8035 = vmatpush1.msra.mxu0 0.0
      %8036 = vmatprep.subr.mxu0 0.0
      %8037 = vmatpush1.msra.mxu0 0.0
      %8038 = vmatprep.subr.mxu0 0.0
      %8039 = vmatpush1.msra.mxu0 0.0
      %8040 = vmatprep.subr.mxu0 0.0
      %8041 = vmatpush1.msra.mxu0 0.0
      %8042 = vmatprep.subr.mxu0 0.0
      %8043 = vmatpush1.msra.mxu0 0.0
      %8044 = vmatprep.subr.mxu0 0.0
      %8045 = vmatpush1.msra.mxu0 0.0
      %8046 = vmatprep.subr.mxu0 0.0
      %8047 = vmatpush1.msra.mxu0 0.0
      %8048 = vmatprep.subr.mxu0 0.0
      %8049 = vmatpush1.msra.mxu0 0.0
      %8050 = vmatprep.mubr.f32.mxu0 0.0
      %8051 = vmatmul.mubr.f32.gmra.mrb[0].mxu0 %v7981
      %v8052 = vpop.f32.mrb[0].mxu0
      %v8053 = vadd.f32 0.0, %v8052
      %v8054 = vpop.f32.mrb[0].mxu0
      %v8055 = vadd.f32 0.0, %v8054
      %8056 = vmatprep.mubr.f32.mxu0 0.0
      %8057 = vmatmul.mubr.f32.gmra.mrb[0].mxu0 %v7984
      %v8058 = vpop.f32.mrb[0].mxu0
      %v8059 = vadd.f32 0.0, %v8058
      %v8060 = vpop.f32.mrb[0].mxu0
      %v8061 = vadd.f32 0.0, %v8060
      %8062 = vdwg.mxu0
      %8063 = vmatprep.subr.mxu0 %v7951
      %8064 = vmatpush1.msra.mxu0 %v7950
      %8065 = vmatprep.subr.mxu0 %v7955
      %8066 = vmatpush1.msra.mxu0 %v7954
      %8067 = vmatprep.subr.mxu0 %v7959
      %8068 = vmatpush1.msra.mxu0 %v7958
      %8069 = vmatprep.subr.mxu0 %v7963
      %8070 = vmatpush1.msra.mxu0 %v7962
      %8071 = vmatprep.subr.mxu0 %v7967
      %8072 = vmatpush1.msra.mxu0 %v7966
      %8073 = vmatprep.subr.mxu0 %v7971
      %8074 = vmatpush1.msra.mxu0 %v7970
      %8075 = vmatprep.subr.mxu0 %v7975
      %8076 = vmatpush1.msra.mxu0 %v7974
      %8077 = vmatprep.subr.mxu0 %v7979
      %8078 = vmatpush1.msra.mxu0 %v7978
      %8079 = vmatprep.subr.mxu0 0.0
      %8080 = vmatpush1.msra.mxu0 0.0
      %8081 = vmatprep.subr.mxu0 0.0
      %8082 = vmatpush1.msra.mxu0 0.0
      %8083 = vmatprep.subr.mxu0 0.0
      %8084 = vmatpush1.msra.mxu0 0.0
      %8085 = vmatprep.subr.mxu0 0.0
      %8086 = vmatpush1.msra.mxu0 0.0
      %8087 = vmatprep.subr.mxu0 0.0
      %8088 = vmatpush1.msra.mxu0 0.0
      %8089 = vmatprep.subr.mxu0 0.0
      %8090 = vmatpush1.msra.mxu0 0.0
      %8091 = vmatprep.subr.mxu0 0.0
      %8092 = vmatpush1.msra.mxu0 0.0
      %8093 = vmatprep.subr.mxu0 0.0
      %8094 = vmatpush1.msra.mxu0 0.0
      %8095 = vmatprep.subr.mxu0 0.0
      %8096 = vmatpush1.msra.mxu0 0.0
      %8097 = vmatprep.subr.mxu0 0.0
      %8098 = vmatpush1.msra.mxu0 0.0
      %8099 = vmatprep.subr.mxu0 0.0
      %8100 = vmatpush1.msra.mxu0 0.0
      %8101 = vmatprep.subr.mxu0 0.0
      %8102 = vmatpush1.msra.mxu0 0.0
      %8103 = vmatprep.subr.mxu0 0.0
      %8104 = vmatpush1.msra.mxu0 0.0
      %8105 = vmatprep.subr.mxu0 0.0
      %8106 = vmatpush1.msra.mxu0 0.0
      %8107 = vmatprep.subr.mxu0 0.0
      %8108 = vmatpush1.msra.mxu0 0.0
      %8109 = vmatprep.subr.mxu0 0.0
      %8110 = vmatpush1.msra.mxu0 0.0
      %8111 = vmatprep.subr.mxu0 0.0
      %8112 = vmatpush1.msra.mxu0 0.0
      %8113 = vmatprep.subr.mxu0 0.0
      %8114 = vmatpush1.msra.mxu0 0.0
      %8115 = vmatprep.subr.mxu0 0.0
      %8116 = vmatpush1.msra.mxu0 0.0
      %8117 = vmatprep.subr.mxu0 0.0
      %8118 = vmatpush1.msra.mxu0 0.0
      %8119 = vmatprep.subr.mxu0 0.0
      %8120 = vmatpush1.msra.mxu0 0.0
      %8121 = vmatprep.subr.mxu0 0.0
      %8122 = vmatpush1.msra.mxu0 0.0
      %8123 = vmatprep.subr.mxu0 0.0
      %8124 = vmatpush1.msra.mxu0 0.0
      %8125 = vmatprep.subr.mxu0 0.0
      %8126 = vmatpush1.msra.mxu0 0.0
      %8127 = vmatprep.mubr.f32.mxu0 0.0
      %8128 = vmatmul.mubr.f32.gmra.mrb[0].mxu0 %v7981
      %v8129 = vpop.f32.mrb[0].mxu0
      %v8130 = vadd.f32 0.0, %v8129
      %v8131 = vpop.f32.mrb[0].mxu0
      %v8132 = vadd.f32 0.0, %v8131
      %8133 = vmatprep.mubr.f32.mxu0 0.0
      %8134 = vmatmul.mubr.f32.gmra.mrb[0].mxu0 %v7984
      %v8135 = vpop.f32.mrb[0].mxu0
      %v8136 = vadd.f32 0.0, %v8135
      %v8137 = vpop.f32.mrb[0].mxu0
      %v8138 = vadd.f32 0.0, %v8137
      %8139 = vdwg.mxu0
      %v8141 = vsel %vm5702, %v7837, 0
      %v8144 = vsel %vm5702, %v7842, 0
      %8146 = vmatprep.subr.mxu0 %v7916
      %8147 = vmatpush1.msra.mxu0 %v7915
      %8148 = vmatprep.subr.mxu0 %v7920
      %8149 = vmatpush1.msra.mxu0 %v7919
      %8150 = vmatprep.subr.mxu0 %v7924
      %8151 = vmatpush1.msra.mxu0 %v7923
      %8152 = vmatprep.subr.mxu0 %v7928
      %8153 = vmatpush1.msra.mxu0 %v7927
      %8154 = vmatprep.subr.mxu0 %v7932
      %8155 = vmatpush1.msra.mxu0 %v7931
      %8156 = vmatprep.subr.mxu0 %v7936
      %8157 = vmatpush1.msra.mxu0 %v7935
      %8158 = vmatprep.subr.mxu0 %v7940
      %8159 = vmatpush1.msra.mxu0 %v7939
      %8160 = vmatprep.subr.mxu0 %v7944
      %8161 = vmatpush1.msra.mxu0 %v7943
      %8162 = vmatprep.subr.mxu0 0.0
      %8163 = vmatpush1.msra.mxu0 0.0
      %8164 = vmatprep.subr.mxu0 0.0
      %8165 = vmatpush1.msra.mxu0 0.0
      %8166 = vmatprep.subr.mxu0 0.0
      %8167 = vmatpush1.msra.mxu0 0.0
      %8168 = vmatprep.subr.mxu0 0.0
      %8169 = vmatpush1.msra.mxu0 0.0
      %8170 = vmatprep.subr.mxu0 0.0
      %8171 = vmatpush1.msra.mxu0 0.0
      %8172 = vmatprep.subr.mxu0 0.0
      %8173 = vmatpush1.msra.mxu0 0.0
      %8174 = vmatprep.subr.mxu0 0.0
      %8175 = vmatpush1.msra.mxu0 0.0
      %8176 = vmatprep.subr.mxu0 0.0
      %8177 = vmatpush1.msra.mxu0 0.0
      %8178 = vmatprep.subr.mxu0 0.0
      %8179 = vmatpush1.msra.mxu0 0.0
      %8180 = vmatprep.subr.mxu0 0.0
      %8181 = vmatpush1.msra.mxu0 0.0
      %8182 = vmatprep.subr.mxu0 0.0
      %8183 = vmatpush1.msra.mxu0 0.0
      %8184 = vmatprep.subr.mxu0 0.0
      %8185 = vmatpush1.msra.mxu0 0.0
      %8186 = vmatprep.subr.mxu0 0.0
      %8187 = vmatpush1.msra.mxu0 0.0
      %8188 = vmatprep.subr.mxu0 0.0
      %8189 = vmatpush1.msra.mxu0 0.0
      %8190 = vmatprep.subr.mxu0 0.0
      %8191 = vmatpush1.msra.mxu0 0.0
      %8192 = vmatprep.subr.mxu0 0.0
      %8193 = vmatpush1.msra.mxu0 0.0
      %8194 = vmatprep.subr.mxu0 0.0
      %8195 = vmatpush1.msra.mxu0 0.0
      %8196 = vmatprep.subr.mxu0 0.0
      %8197 = vmatpush1.msra.mxu0 0.0
      %8198 = vmatprep.subr.mxu0 0.0
      %8199 = vmatpush1.msra.mxu0 0.0
      %8200 = vmatprep.subr.mxu0 0.0
      %8201 = vmatpush1.msra.mxu0 0.0
      %8202 = vmatprep.subr.mxu0 0.0
      %8203 = vmatpush1.msra.mxu0 0.0
      %8204 = vmatprep.subr.mxu0 0.0
      %8205 = vmatpush1.msra.mxu0 0.0
      %8206 = vmatprep.subr.mxu0 0.0
      %8207 = vmatpush1.msra.mxu0 0.0
      %8208 = vmatprep.subr.mxu0 0.0
      %8209 = vmatpush1.msra.mxu0 0.0
      %8210 = vmatprep.mubr.f32.mxu0 0.0
      %8211 = vmatmul.mubr.f32.gmra.mrb[0].mxu0 %v8141
      %v8212 = vpop.f32.mrb[0].mxu0
      %v8213 = vadd.f32 %v8053, %v8212
      %v8214 = vpop.f32.mrb[0].mxu0
      %v8215 = vadd.f32 %v8055, %v8214
      %8216 = vmatprep.mubr.f32.mxu0 0.0
      %8217 = vmatmul.mubr.f32.gmra.mrb[0].mxu0 %v8144
      %v8218 = vpop.f32.mrb[0].mxu0
      %v8219 = vadd.f32 %v8059, %v8218
      %v8220 = vpop.f32.mrb[0].mxu0
      %v8221 = vadd.f32 %v8061, %v8220
      %8222 = vdwg.mxu0
      %8223 = vmatprep.subr.mxu0 %v7918
      %8224 = vmatpush1.msra.mxu0 %v7917
      %8225 = vmatprep.subr.mxu0 %v7922
      %8226 = vmatpush1.msra.mxu0 %v7921
      %8227 = vmatprep.subr.mxu0 %v7926
      %8228 = vmatpush1.msra.mxu0 %v7925
      %8229 = vmatprep.subr.mxu0 %v7930
      %8230 = vmatpush1.msra.mxu0 %v7929
      %8231 = vmatprep.subr.mxu0 %v7934
      %8232 = vmatpush1.msra.mxu0 %v7933
      %8233 = vmatprep.subr.mxu0 %v7938
      %8234 = vmatpush1.msra.mxu0 %v7937
      %8235 = vmatprep.subr.mxu0 %v7942
      %8236 = vmatpush1.msra.mxu0 %v7941
      %8237 = vmatprep.subr.mxu0 %v7946
      %8238 = vmatpush1.msra.mxu0 %v7945
      %8239 = vmatprep.subr.mxu0 0.0
      %8240 = vmatpush1.msra.mxu0 0.0
      %8241 = vmatprep.subr.mxu0 0.0
      %8242 = vmatpush1.msra.mxu0 0.0
      %8243 = vmatprep.subr.mxu0 0.0
      %8244 = vmatpush1.msra.mxu0 0.0
      %8245 = vmatprep.subr.mxu0 0.0
      %8246 = vmatpush1.msra.mxu0 0.0
      %8247 = vmatprep.subr.mxu0 0.0
      %8248 = vmatpush1.msra.mxu0 0.0
      %8249 = vmatprep.subr.mxu0 0.0
      %8250 = vmatpush1.msra.mxu0 0.0
      %8251 = vmatprep.subr.mxu0 0.0
      %8252 = vmatpush1.msra.mxu0 0.0
      %8253 = vmatprep.subr.mxu0 0.0
      %8254 = vmatpush1.msra.mxu0 0.0
      %8255 = vmatprep.subr.mxu0 0.0
      %8256 = vmatpush1.msra.mxu0 0.0
      %8257 = vmatprep.subr.mxu0 0.0
      %8258 = vmatpush1.msra.mxu0 0.0
      %8259 = vmatprep.subr.mxu0 0.0
      %8260 = vmatpush1.msra.mxu0 0.0
      %8261 = vmatprep.subr.mxu0 0.0
      %8262 = vmatpush1.msra.mxu0 0.0
      %8263 = vmatprep.subr.mxu0 0.0
      %8264 = vmatpush1.msra.mxu0 0.0
      %8265 = vmatprep.subr.mxu0 0.0
      %8266 = vmatpush1.msra.mxu0 0.0
      %8267 = vmatprep.subr.mxu0 0.0
      %8268 = vmatpush1.msra.mxu0 0.0
      %8269 = vmatprep.subr.mxu0 0.0
      %8270 = vmatpush1.msra.mxu0 0.0
      %8271 = vmatprep.subr.mxu0 0.0
      %8272 = vmatpush1.msra.mxu0 0.0
      %8273 = vmatprep.subr.mxu0 0.0
      %8274 = vmatpush1.msra.mxu0 0.0
      %8275 = vmatprep.subr.mxu0 0.0
      %8276 = vmatpush1.msra.mxu0 0.0
      %8277 = vmatprep.subr.mxu0 0.0
      %8278 = vmatpush1.msra.mxu0 0.0
      %8279 = vmatprep.subr.mxu0 0.0
      %8280 = vmatpush1.msra.mxu0 0.0
      %8281 = vmatprep.subr.mxu0 0.0
      %8282 = vmatpush1.msra.mxu0 0.0
      %8283 = vmatprep.subr.mxu0 0.0
      %8284 = vmatpush1.msra.mxu0 0.0
      %8285 = vmatprep.subr.mxu0 0.0
      %8286 = vmatpush1.msra.mxu0 0.0
      %8287 = vmatprep.mubr.f32.mxu0 0.0
      %8288 = vmatmul.mubr.f32.gmra.mrb[0].mxu0 %v8141
      %v8289 = vpop.f32.mrb[0].mxu0
      %v8290 = vadd.f32 %v8130, %v8289
      %v8291 = vpop.f32.mrb[0].mxu0
      %v8292 = vadd.f32 %v8132, %v8291
      %8293 = vmatprep.mubr.f32.mxu0 0.0
      %8294 = vmatmul.mubr.f32.gmra.mrb[0].mxu0 %v8144
      %v8295 = vpop.f32.mrb[0].mxu0
      %v8296 = vadd.f32 %v8136, %v8295
      %v8297 = vpop.f32.mrb[0].mxu0
      %v8298 = vadd.f32 %v8138, %v8297
      %8299 = vdwg.mxu0
      %s8300 = scalar_lea.vmem %s13, 512
      %v8301 = vld [vmem:[%s8300] sm:$0xff]
      %v8302 = vld [vmem:[%s8300 + $0x8] sm:$0xff]
      %v8303 = vld [vmem:[%s8300 + $0x10] sm:$0xff]
      %v8304 = vld [vmem:[%s8300 + $0x18] sm:$0xff]
      %v8305 = vld [vmem:[%s8300 + $0x20] sm:$0xff]
      %v8306 = vld [vmem:[%s8300 + $0x28] sm:$0xff]
      %v8307 = vld [vmem:[%s8300 + $0x30] sm:$0xff]
      %v8308 = vld [vmem:[%s8300 + $0x38] sm:$0xff]
      %v8309 = vld [vmem:[%s8300 + $0x40] sm:$0xff]
      %v8310 = vld [vmem:[%s8300 + $0x48] sm:$0xff]
      %v8311 = vld [vmem:[%s8300 + $0x50] sm:$0xff]
      %v8312 = vld [vmem:[%s8300 + $0x58] sm:$0xff]
      %v8313 = vld [vmem:[%s8300 + $0x60] sm:$0xff]
      %v8314 = vld [vmem:[%s8300 + $0x68] sm:$0xff]
      %v8315 = vld [vmem:[%s8300 + $0x70] sm:$0xff]
      %v8316 = vld [vmem:[%s8300 + $0x78] sm:$0xff]
      %v8317 = vld [vmem:[%s8300 + $0x80] sm:$0xff]
      %v8318 = vld [vmem:[%s8300 + $0x88] sm:$0xff]
      %v8319 = vld [vmem:[%s8300 + $0x90] sm:$0xff]
      %v8320 = vld [vmem:[%s8300 + $0x98] sm:$0xff]
      %v8321 = vld [vmem:[%s8300 + $0xa0] sm:$0xff]
      %v8322 = vld [vmem:[%s8300 + $0xa8] sm:$0xff]
      %v8323 = vld [vmem:[%s8300 + $0xb0] sm:$0xff]
      %v8324 = vld [vmem:[%s8300 + $0xb8] sm:$0xff]
      %v8325 = vld [vmem:[%s8300 + $0xc0] sm:$0xff]
      %v8326 = vld [vmem:[%s8300 + $0xc8] sm:$0xff]
      %v8327 = vld [vmem:[%s8300 + $0xd0] sm:$0xff]
      %v8328 = vld [vmem:[%s8300 + $0xd8] sm:$0xff]
      %v8329 = vld [vmem:[%s8300 + $0xe0] sm:$0xff]
      %v8330 = vld [vmem:[%s8300 + $0xe8] sm:$0xff]
      %v8331 = vld [vmem:[%s8300 + $0xf0] sm:$0xff]
      %v8332 = vld [vmem:[%s8300 + $0xf8] sm:$0xff]
      %v8334 = vsel %vm5702, %v7857, 0
      %v8337 = vsel %vm5702, %v7862, 0
      %8339 = vmatprep.subr.mxu0 %v8302
      %8340 = vmatpush1.msra.mxu0 %v8301
      %8341 = vmatprep.subr.mxu0 %v8306
      %8342 = vmatpush1.msra.mxu0 %v8305
      %8343 = vmatprep.subr.mxu0 %v8310
      %8344 = vmatpush1.msra.mxu0 %v8309
      %8345 = vmatprep.subr.mxu0 %v8314
      %8346 = vmatpush1.msra.mxu0 %v8313
      %8347 = vmatprep.subr.mxu0 %v8318
      %8348 = vmatpush1.msra.mxu0 %v8317
      %8349 = vmatprep.subr.mxu0 %v8322
      %8350 = vmatpush1.msra.mxu0 %v8321
      %8351 = vmatprep.subr.mxu0 %v8326
      %8352 = vmatpush1.msra.mxu0 %v8325
      %8353 = vmatprep.subr.mxu0 %v8330
      %8354 = vmatpush1.msra.mxu0 %v8329
      %8355 = vmatprep.subr.mxu0 0.0
      %8356 = vmatpush1.msra.mxu0 0.0
      %8357 = vmatprep.subr.mxu0 0.0
      %8358 = vmatpush1.msra.mxu0 0.0
      %8359 = vmatprep.subr.mxu0 0.0
      %8360 = vmatpush1.msra.mxu0 0.0
      %8361 = vmatprep.subr.mxu0 0.0
      %8362 = vmatpush1.msra.mxu0 0.0
      %8363 = vmatprep.subr.mxu0 0.0
      %8364 = vmatpush1.msra.mxu0 0.0
      %8365 = vmatprep.subr.mxu0 0.0
      %8366 = vmatpush1.msra.mxu0 0.0
      %8367 = vmatprep.subr.mxu0 0.0
      %8368 = vmatpush1.msra.mxu0 0.0
      %8369 = vmatprep.subr.mxu0 0.0
      %8370 = vmatpush1.msra.mxu0 0.0
      %8371 = vmatprep.subr.mxu0 0.0
      %8372 = vmatpush1.msra.mxu0 0.0
      %8373 = vmatprep.subr.mxu0 0.0
      %8374 = vmatpush1.msra.mxu0 0.0
      %8375 = vmatprep.subr.mxu0 0.0
      %8376 = vmatpush1.msra.mxu0 0.0
      %8377 = vmatprep.subr.mxu0 0.0
      %8378 = vmatpush1.msra.mxu0 0.0
      %8379 = vmatprep.subr.mxu0 0.0
      %8380 = vmatpush1.msra.mxu0 0.0
      %8381 = vmatprep.subr.mxu0 0.0
      %8382 = vmatpush1.msra.mxu0 0.0
      %8383 = vmatprep.subr.mxu0 0.0
      %8384 = vmatpush1.msra.mxu0 0.0
      %8385 = vmatprep.subr.mxu0 0.0
      %8386 = vmatpush1.msra.mxu0 0.0
      %8387 = vmatprep.subr.mxu0 0.0
      %8388 = vmatpush1.msra.mxu0 0.0
      %8389 = vmatprep.subr.mxu0 0.0
      %8390 = vmatpush1.msra.mxu0 0.0
      %8391 = vmatprep.subr.mxu0 0.0
      %8392 = vmatpush1.msra.mxu0 0.0
      %8393 = vmatprep.subr.mxu0 0.0
      %8394 = vmatpush1.msra.mxu0 0.0
      %8395 = vmatprep.subr.mxu0 0.0
      %8396 = vmatpush1.msra.mxu0 0.0
      %8397 = vmatprep.subr.mxu0 0.0
      %8398 = vmatpush1.msra.mxu0 0.0
      %8399 = vmatprep.subr.mxu0 0.0
      %8400 = vmatpush1.msra.mxu0 0.0
      %8401 = vmatprep.subr.mxu0 0.0
      %8402 = vmatpush1.msra.mxu0 0.0
      %8403 = vmatprep.mubr.f32.mxu0 0.0
      %8404 = vmatmul.mubr.f32.gmra.mrb[0].mxu0 %v8334
      %v8405 = vpop.f32.mrb[0].mxu0
      %v8406 = vadd.f32 0.0, %v8405
      %v8407 = vpop.f32.mrb[0].mxu0
      %v8408 = vadd.f32 0.0, %v8407
      %8409 = vmatprep.mubr.f32.mxu0 0.0
      %8410 = vmatmul.mubr.f32.gmra.mrb[0].mxu0 %v8337
      %v8411 = vpop.f32.mrb[0].mxu0
      %v8412 = vadd.f32 0.0, %v8411
      %v8413 = vpop.f32.mrb[0].mxu0
      %v8414 = vadd.f32 0.0, %v8413
      %8415 = vdwg.mxu0
      %8416 = vmatprep.subr.mxu0 %v8304
      %8417 = vmatpush1.msra.mxu0 %v8303
      %8418 = vmatprep.subr.mxu0 %v8308
      %8419 = vmatpush1.msra.mxu0 %v8307
      %8420 = vmatprep.subr.mxu0 %v8312
      %8421 = vmatpush1.msra.mxu0 %v8311
      %8422 = vmatprep.subr.mxu0 %v8316
      %8423 = vmatpush1.msra.mxu0 %v8315
      %8424 = vmatprep.subr.mxu0 %v8320
      %8425 = vmatpush1.msra.mxu0 %v8319
      %8426 = vmatprep.subr.mxu0 %v8324
      %8427 = vmatpush1.msra.mxu0 %v8323
      %8428 = vmatprep.subr.mxu0 %v8328
      %8429 = vmatpush1.msra.mxu0 %v8327
      %8430 = vmatprep.subr.mxu0 %v8332
      %8431 = vmatpush1.msra.mxu0 %v8331
      %8432 = vmatprep.subr.mxu0 0.0
      %8433 = vmatpush1.msra.mxu0 0.0
      %8434 = vmatprep.subr.mxu0 0.0
      %8435 = vmatpush1.msra.mxu0 0.0
      %8436 = vmatprep.subr.mxu0 0.0
      %8437 = vmatpush1.msra.mxu0 0.0
      %8438 = vmatprep.subr.mxu0 0.0
      %8439 = vmatpush1.msra.mxu0 0.0
      %8440 = vmatprep.subr.mxu0 0.0
      %8441 = vmatpush1.msra.mxu0 0.0
      %8442 = vmatprep.subr.mxu0 0.0
      %8443 = vmatpush1.msra.mxu0 0.0
      %8444 = vmatprep.subr.mxu0 0.0
      %8445 = vmatpush1.msra.mxu0 0.0
      %8446 = vmatprep.subr.mxu0 0.0
      %8447 = vmatpush1.msra.mxu0 0.0
      %8448 = vmatprep.subr.mxu0 0.0
      %8449 = vmatpush1.msra.mxu0 0.0
      %8450 = vmatprep.subr.mxu0 0.0
      %8451 = vmatpush1.msra.mxu0 0.0
      %8452 = vmatprep.subr.mxu0 0.0
      %8453 = vmatpush1.msra.mxu0 0.0
      %8454 = vmatprep.subr.mxu0 0.0
      %8455 = vmatpush1.msra.mxu0 0.0
      %8456 = vmatprep.subr.mxu0 0.0
      %8457 = vmatpush1.msra.mxu0 0.0
      %8458 = vmatprep.subr.mxu0 0.0
      %8459 = vmatpush1.msra.mxu0 0.0
      %8460 = vmatprep.subr.mxu0 0.0
      %8461 = vmatpush1.msra.mxu0 0.0
      %8462 = vmatprep.subr.mxu0 0.0
      %8463 = vmatpush1.msra.mxu0 0.0
      %8464 = vmatprep.subr.mxu0 0.0
      %8465 = vmatpush1.msra.mxu0 0.0
      %8466 = vmatprep.subr.mxu0 0.0
      %8467 = vmatpush1.msra.mxu0 0.0
      %8468 = vmatprep.subr.mxu0 0.0
      %8469 = vmatpush1.msra.mxu0 0.0
      %8470 = vmatprep.subr.mxu0 0.0
      %8471 = vmatpush1.msra.mxu0 0.0
      %8472 = vmatprep.subr.mxu0 0.0
      %8473 = vmatpush1.msra.mxu0 0.0
      %8474 = vmatprep.subr.mxu0 0.0
      %8475 = vmatpush1.msra.mxu0 0.0
      %8476 = vmatprep.subr.mxu0 0.0
      %8477 = vmatpush1.msra.mxu0 0.0
      %8478 = vmatprep.subr.mxu0 0.0
      %8479 = vmatpush1.msra.mxu0 0.0
      %8480 = vmatprep.mubr.f32.mxu0 0.0
      %8481 = vmatmul.mubr.f32.gmra.mrb[0].mxu0 %v8334
      %v8482 = vpop.f32.mrb[0].mxu0
      %v8483 = vadd.f32 0.0, %v8482
      %v8484 = vpop.f32.mrb[0].mxu0
      %v8485 = vadd.f32 0.0, %v8484
      %8486 = vmatprep.mubr.f32.mxu0 0.0
      %8487 = vmatmul.mubr.f32.gmra.mrb[0].mxu0 %v8337
      %v8488 = vpop.f32.mrb[0].mxu0
      %v8489 = vadd.f32 0.0, %v8488
      %v8490 = vpop.f32.mrb[0].mxu0
      %v8491 = vadd.f32 0.0, %v8490
      %8492 = vdwg.mxu0
      %v8493 = vadd.f32 %v8213, %v8406
      %v8494 = vadd.f32 %v8215, %v8408
      %v8495 = vadd.f32 %v8290, %v8483
      %v8496 = vadd.f32 %v8292, %v8485
      %v8497 = vadd.f32 %v8219, %v8412
      %v8498 = vadd.f32 %v8221, %v8414
      %v8499 = vadd.f32 %v8296, %v8489
      %v8500 = vadd.f32 %v8298, %v8491
      %s8501 = scalar_lea.vmem %s13, 768
      %v8502 = vld [vmem:[%s8501] sm:$0xff]
      %v8503 = vld [vmem:[%s8501 + $0x8] sm:$0xff]
      %v8504 = vld [vmem:[%s8501 + $0x10] sm:$0xff]
      %v8505 = vld [vmem:[%s8501 + $0x18] sm:$0xff]
      %v8506 = vld [vmem:[%s8501 + $0x20] sm:$0xff]
      %v8507 = vld [vmem:[%s8501 + $0x28] sm:$0xff]
      %v8508 = vld [vmem:[%s8501 + $0x30] sm:$0xff]
      %v8509 = vld [vmem:[%s8501 + $0x38] sm:$0xff]
      %v8510 = vld [vmem:[%s8501 + $0x40] sm:$0xff]
      %v8511 = vld [vmem:[%s8501 + $0x48] sm:$0xff]
      %v8512 = vld [vmem:[%s8501 + $0x50] sm:$0xff]
      %v8513 = vld [vmem:[%s8501 + $0x58] sm:$0xff]
      %v8514 = vld [vmem:[%s8501 + $0x60] sm:$0xff]
      %v8515 = vld [vmem:[%s8501 + $0x68] sm:$0xff]
      %v8516 = vld [vmem:[%s8501 + $0x70] sm:$0xff]
      %v8517 = vld [vmem:[%s8501 + $0x78] sm:$0xff]
      %v8518 = vld [vmem:[%s8501 + $0x80] sm:$0xff]
      %v8519 = vld [vmem:[%s8501 + $0x88] sm:$0xff]
      %v8520 = vld [vmem:[%s8501 + $0x90] sm:$0xff]
      %v8521 = vld [vmem:[%s8501 + $0x98] sm:$0xff]
      %v8522 = vld [vmem:[%s8501 + $0xa0] sm:$0xff]
      %v8523 = vld [vmem:[%s8501 + $0xa8] sm:$0xff]
      %v8524 = vld [vmem:[%s8501 + $0xb0] sm:$0xff]
      %v8525 = vld [vmem:[%s8501 + $0xb8] sm:$0xff]
      %v8526 = vld [vmem:[%s8501 + $0xc0] sm:$0xff]
      %v8527 = vld [vmem:[%s8501 + $0xc8] sm:$0xff]
      %v8528 = vld [vmem:[%s8501 + $0xd0] sm:$0xff]
      %v8529 = vld [vmem:[%s8501 + $0xd8] sm:$0xff]
      %v8530 = vld [vmem:[%s8501 + $0xe0] sm:$0xff]
      %v8531 = vld [vmem:[%s8501 + $0xe8] sm:$0xff]
      %v8532 = vld [vmem:[%s8501 + $0xf0] sm:$0xff]
      %v8533 = vld [vmem:[%s8501 + $0xf8] sm:$0xff]
      %v8535 = vsel %vm5702, %v7867, 0
      %v8538 = vsel %vm5702, %v7872, 0
      %8540 = vmatprep.subr.mxu0 %v8503
      %8541 = vmatpush1.msra.mxu0 %v8502
      %8542 = vmatprep.subr.mxu0 %v8507
      %8543 = vmatpush1.msra.mxu0 %v8506
      %8544 = vmatprep.subr.mxu0 %v8511
      %8545 = vmatpush1.msra.mxu0 %v8510
      %8546 = vmatprep.subr.mxu0 %v8515
      %8547 = vmatpush1.msra.mxu0 %v8514
      %8548 = vmatprep.subr.mxu0 %v8519
      %8549 = vmatpush1.msra.mxu0 %v8518
      %8550 = vmatprep.subr.mxu0 %v8523
      %8551 = vmatpush1.msra.mxu0 %v8522
      %8552 = vmatprep.subr.mxu0 %v8527
      %8553 = vmatpush1.msra.mxu0 %v8526
      %8554 = vmatprep.subr.mxu0 %v8531
      %8555 = vmatpush1.msra.mxu0 %v8530
      %8556 = vmatprep.subr.mxu0 0.0
      %8557 = vmatpush1.msra.mxu0 0.0
      %8558 = vmatprep.subr.mxu0 0.0
      %8559 = vmatpush1.msra.mxu0 0.0
      %8560 = vmatprep.subr.mxu0 0.0
      %8561 = vmatpush1.msra.mxu0 0.0
      %8562 = vmatprep.subr.mxu0 0.0
      %8563 = vmatpush1.msra.mxu0 0.0
      %8564 = vmatprep.subr.mxu0 0.0
      %8565 = vmatpush1.msra.mxu0 0.0
      %8566 = vmatprep.subr.mxu0 0.0
      %8567 = vmatpush1.msra.mxu0 0.0
      %8568 = vmatprep.subr.mxu0 0.0
      %8569 = vmatpush1.msra.mxu0 0.0
      %8570 = vmatprep.subr.mxu0 0.0
      %8571 = vmatpush1.msra.mxu0 0.0
      %8572 = vmatprep.subr.mxu0 0.0
      %8573 = vmatpush1.msra.mxu0 0.0
      %8574 = vmatprep.subr.mxu0 0.0
      %8575 = vmatpush1.msra.mxu0 0.0
      %8576 = vmatprep.subr.mxu0 0.0
      %8577 = vmatpush1.msra.mxu0 0.0
      %8578 = vmatprep.subr.mxu0 0.0
      %8579 = vmatpush1.msra.mxu0 0.0
      %8580 = vmatprep.subr.mxu0 0.0
      %8581 = vmatpush1.msra.mxu0 0.0
      %8582 = vmatprep.subr.mxu0 0.0
      %8583 = vmatpush1.msra.mxu0 0.0
      %8584 = vmatprep.subr.mxu0 0.0
      %8585 = vmatpush1.msra.mxu0 0.0
      %8586 = vmatprep.subr.mxu0 0.0
      %8587 = vmatpush1.msra.mxu0 0.0
      %8588 = vmatprep.subr.mxu0 0.0
      %8589 = vmatpush1.msra.mxu0 0.0
      %8590 = vmatprep.subr.mxu0 0.0
      %8591 = vmatpush1.msra.mxu0 0.0
      %8592 = vmatprep.subr.mxu0 0.0
      %8593 = vmatpush1.msra.mxu0 0.0
      %8594 = vmatprep.subr.mxu0 0.0
      %8595 = vmatpush1.msra.mxu0 0.0
      %8596 = vmatprep.subr.mxu0 0.0
      %8597 = vmatpush1.msra.mxu0 0.0
      %8598 = vmatprep.subr.mxu0 0.0
      %8599 = vmatpush1.msra.mxu0 0.0
      %8600 = vmatprep.subr.mxu0 0.0
      %8601 = vmatpush1.msra.mxu0 0.0
      %8602 = vmatprep.subr.mxu0 0.0
      %8603 = vmatpush1.msra.mxu0 0.0
      %8604 = vmatprep.mubr.f32.mxu0 0.0
      %8605 = vmatmul.mubr.f32.gmra.mrb[0].mxu0 %v8535
      %v8606 = vpop.f32.mrb[0].mxu0
      %v8607 = vadd.f32 0.0, %v8606
      %v8608 = vpop.f32.mrb[0].mxu0
      %v8609 = vadd.f32 0.0, %v8608
      %8610 = vmatprep.mubr.f32.mxu0 0.0
      %8611 = vmatmul.mubr.f32.gmra.mrb[0].mxu0 %v8538
      %v8612 = vpop.f32.mrb[0].mxu0
      %v8613 = vadd.f32 0.0, %v8612
      %v8614 = vpop.f32.mrb[0].mxu0
      %v8615 = vadd.f32 0.0, %v8614
      %8616 = vdwg.mxu0
      %8617 = vmatprep.subr.mxu0 %v8505
      %8618 = vmatpush1.msra.mxu0 %v8504
      %8619 = vmatprep.subr.mxu0 %v8509
      %8620 = vmatpush1.msra.mxu0 %v8508
      %8621 = vmatprep.subr.mxu0 %v8513
      %8622 = vmatpush1.msra.mxu0 %v8512
      %8623 = vmatprep.subr.mxu0 %v8517
      %8624 = vmatpush1.msra.mxu0 %v8516
      %8625 = vmatprep.subr.mxu0 %v8521
      %8626 = vmatpush1.msra.mxu0 %v8520
      %8627 = vmatprep.subr.mxu0 %v8525
      %8628 = vmatpush1.msra.mxu0 %v8524
      %8629 = vmatprep.subr.mxu0 %v8529
      %8630 = vmatpush1.msra.mxu0 %v8528
      %8631 = vmatprep.subr.mxu0 %v8533
      %8632 = vmatpush1.msra.mxu0 %v8532
      %8633 = vmatprep.subr.mxu0 0.0
      %8634 = vmatpush1.msra.mxu0 0.0
      %8635 = vmatprep.subr.mxu0 0.0
      %8636 = vmatpush1.msra.mxu0 0.0
      %8637 = vmatprep.subr.mxu0 0.0
      %8638 = vmatpush1.msra.mxu0 0.0
      %8639 = vmatprep.subr.mxu0 0.0
      %8640 = vmatpush1.msra.mxu0 0.0
      %8641 = vmatprep.subr.mxu0 0.0
      %8642 = vmatpush1.msra.mxu0 0.0
      %8643 = vmatprep.subr.mxu0 0.0
      %8644 = vmatpush1.msra.mxu0 0.0
      %8645 = vmatprep.subr.mxu0 0.0
      %8646 = vmatpush1.msra.mxu0 0.0
      %8647 = vmatprep.subr.mxu0 0.0
      %8648 = vmatpush1.msra.mxu0 0.0
      %8649 = vmatprep.subr.mxu0 0.0
      %8650 = vmatpush1.msra.mxu0 0.0
      %8651 = vmatprep.subr.mxu0 0.0
      %8652 = vmatpush1.msra.mxu0 0.0
      %8653 = vmatprep.subr.mxu0 0.0
      %8654 = vmatpush1.msra.mxu0 0.0
      %8655 = vmatprep.subr.mxu0 0.0
      %8656 = vmatpush1.msra.mxu0 0.0
      %8657 = vmatprep.subr.mxu0 0.0
      %8658 = vmatpush1.msra.mxu0 0.0
      %8659 = vmatprep.subr.mxu0 0.0
      %8660 = vmatpush1.msra.mxu0 0.0
      %8661 = vmatprep.subr.mxu0 0.0
      %8662 = vmatpush1.msra.mxu0 0.0
      %8663 = vmatprep.subr.mxu0 0.0
      %8664 = vmatpush1.msra.mxu0 0.0
      %8665 = vmatprep.subr.mxu0 0.0
      %8666 = vmatpush1.msra.mxu0 0.0
      %8667 = vmatprep.subr.mxu0 0.0
      %8668 = vmatpush1.msra.mxu0 0.0
      %8669 = vmatprep.subr.mxu0 0.0
      %8670 = vmatpush1.msra.mxu0 0.0
      %8671 = vmatprep.subr.mxu0 0.0
      %8672 = vmatpush1.msra.mxu0 0.0
      %8673 = vmatprep.subr.mxu0 0.0
      %8674 = vmatpush1.msra.mxu0 0.0
      %8675 = vmatprep.subr.mxu0 0.0
      %8676 = vmatpush1.msra.mxu0 0.0
      %8677 = vmatprep.subr.mxu0 0.0
      %8678 = vmatpush1.msra.mxu0 0.0
      %8679 = vmatprep.subr.mxu0 0.0
      %8680 = vmatpush1.msra.mxu0 0.0
      %8681 = vmatprep.mubr.f32.mxu0 0.0
      %8682 = vmatmul.mubr.f32.gmra.mrb[0].mxu0 %v8535
      %v8683 = vpop.f32.mrb[0].mxu0
      %v8684 = vadd.f32 0.0, %v8683
      %v8685 = vpop.f32.mrb[0].mxu0
      %v8686 = vadd.f32 0.0, %v8685
      %8687 = vmatprep.mubr.f32.mxu0 0.0
      %8688 = vmatmul.mubr.f32.gmra.mrb[0].mxu0 %v8538
      %v8689 = vpop.f32.mrb[0].mxu0
      %v8690 = vadd.f32 0.0, %v8689
      %v8691 = vpop.f32.mrb[0].mxu0
      %v8692 = vadd.f32 0.0, %v8691
      %8693 = vdwg.mxu0
      %v8694 = vadd.f32 %v8493, %v8607
      %v8695 = vadd.f32 %v8494, %v8609
      %v8696 = vadd.f32 %v8495, %v8684
      %v8697 = vadd.f32 %v8496, %v8686
      %v8698 = vadd.f32 %v8497, %v8613
      %v8699 = vadd.f32 %v8498, %v8615
      %v8700 = vadd.f32 %v8499, %v8690
      %v8701 = vadd.f32 %v8500, %v8692
      %s8702 = scalar_lea.vmem %s13, 1024
      %v8703 = vld [vmem:[%s8702] sm:$0xff]
      %v8704 = vld [vmem:[%s8702 + $0x8] sm:$0xff]
      %v8705 = vld [vmem:[%s8702 + $0x10] sm:$0xff]
      %v8706 = vld [vmem:[%s8702 + $0x18] sm:$0xff]
      %v8707 = vld [vmem:[%s8702 + $0x20] sm:$0xff]
      %v8708 = vld [vmem:[%s8702 + $0x28] sm:$0xff]
      %v8709 = vld [vmem:[%s8702 + $0x30] sm:$0xff]
      %v8710 = vld [vmem:[%s8702 + $0x38] sm:$0xff]
      %v8711 = vld [vmem:[%s8702 + $0x40] sm:$0xff]
      %v8712 = vld [vmem:[%s8702 + $0x48] sm:$0xff]
      %v8713 = vld [vmem:[%s8702 + $0x50] sm:$0xff]
      %v8714 = vld [vmem:[%s8702 + $0x58] sm:$0xff]
      %v8715 = vld [vmem:[%s8702 + $0x60] sm:$0xff]
      %v8716 = vld [vmem:[%s8702 + $0x68] sm:$0xff]
      %v8717 = vld [vmem:[%s8702 + $0x70] sm:$0xff]
      %v8718 = vld [vmem:[%s8702 + $0x78] sm:$0xff]
      %v8719 = vld [vmem:[%s8702 + $0x80] sm:$0xff]
      %v8720 = vld [vmem:[%s8702 + $0x88] sm:$0xff]
      %v8721 = vld [vmem:[%s8702 + $0x90] sm:$0xff]
      %v8722 = vld [vmem:[%s8702 + $0x98] sm:$0xff]
      %v8723 = vld [vmem:[%s8702 + $0xa0] sm:$0xff]
      %v8724 = vld [vmem:[%s8702 + $0xa8] sm:$0xff]
      %v8725 = vld [vmem:[%s8702 + $0xb0] sm:$0xff]
      %v8726 = vld [vmem:[%s8702 + $0xb8] sm:$0xff]
      %v8727 = vld [vmem:[%s8702 + $0xc0] sm:$0xff]
      %v8728 = vld [vmem:[%s8702 + $0xc8] sm:$0xff]
      %v8729 = vld [vmem:[%s8702 + $0xd0] sm:$0xff]
      %v8730 = vld [vmem:[%s8702 + $0xd8] sm:$0xff]
      %v8731 = vld [vmem:[%s8702 + $0xe0] sm:$0xff]
      %v8732 = vld [vmem:[%s8702 + $0xe8] sm:$0xff]
      %v8733 = vld [vmem:[%s8702 + $0xf0] sm:$0xff]
      %v8734 = vld [vmem:[%s8702 + $0xf8] sm:$0xff]
      %v8736 = vsel %vm5702, %v7877, 0
      %v8739 = vsel %vm5702, %v7882, 0
      %8741 = vmatprep.subr.mxu0 %v8704
      %8742 = vmatpush1.msra.mxu0 %v8703
      %8743 = vmatprep.subr.mxu0 %v8708
      %8744 = vmatpush1.msra.mxu0 %v8707
      %8745 = vmatprep.subr.mxu0 %v8712
      %8746 = vmatpush1.msra.mxu0 %v8711
      %8747 = vmatprep.subr.mxu0 %v8716
      %8748 = vmatpush1.msra.mxu0 %v8715
      %8749 = vmatprep.subr.mxu0 %v8720
      %8750 = vmatpush1.msra.mxu0 %v8719
      %8751 = vmatprep.subr.mxu0 %v8724
      %8752 = vmatpush1.msra.mxu0 %v8723
      %8753 = vmatprep.subr.mxu0 %v8728
      %8754 = vmatpush1.msra.mxu0 %v8727
      %8755 = vmatprep.subr.mxu0 %v8732
      %8756 = vmatpush1.msra.mxu0 %v8731
      %8757 = vmatprep.subr.mxu0 0.0
      %8758 = vmatpush1.msra.mxu0 0.0
      %8759 = vmatprep.subr.mxu0 0.0
      %8760 = vmatpush1.msra.mxu0 0.0
      %8761 = vmatprep.subr.mxu0 0.0
      %8762 = vmatpush1.msra.mxu0 0.0
      %8763 = vmatprep.subr.mxu0 0.0
      %8764 = vmatpush1.msra.mxu0 0.0
      %8765 = vmatprep.subr.mxu0 0.0
      %8766 = vmatpush1.msra.mxu0 0.0
      %8767 = vmatprep.subr.mxu0 0.0
      %8768 = vmatpush1.msra.mxu0 0.0
      %8769 = vmatprep.subr.mxu0 0.0
      %8770 = vmatpush1.msra.mxu0 0.0
      %8771 = vmatprep.subr.mxu0 0.0
      %8772 = vmatpush1.msra.mxu0 0.0
      %8773 = vmatprep.subr.mxu0 0.0
      %8774 = vmatpush1.msra.mxu0 0.0
      %8775 = vmatprep.subr.mxu0 0.0
      %8776 = vmatpush1.msra.mxu0 0.0
      %8777 = vmatprep.subr.mxu0 0.0
      %8778 = vmatpush1.msra.mxu0 0.0
      %8779 = vmatprep.subr.mxu0 0.0
      %8780 = vmatpush1.msra.mxu0 0.0
      %8781 = vmatprep.subr.mxu0 0.0
      %8782 = vmatpush1.msra.mxu0 0.0
      %8783 = vmatprep.subr.mxu0 0.0
      %8784 = vmatpush1.msra.mxu0 0.0
      %8785 = vmatprep.subr.mxu0 0.0
      %8786 = vmatpush1.msra.mxu0 0.0
      %8787 = vmatprep.subr.mxu0 0.0
      %8788 = vmatpush1.msra.mxu0 0.0
      %8789 = vmatprep.subr.mxu0 0.0
      %8790 = vmatpush1.msra.mxu0 0.0
      %8791 = vmatprep.subr.mxu0 0.0
      %8792 = vmatpush1.msra.mxu0 0.0
      %8793 = vmatprep.subr.mxu0 0.0
      %8794 = vmatpush1.msra.mxu0 0.0
      %8795 = vmatprep.subr.mxu0 0.0
      %8796 = vmatpush1.msra.mxu0 0.0
      %8797 = vmatprep.subr.mxu0 0.0
      %8798 = vmatpush1.msra.mxu0 0.0
      %8799 = vmatprep.subr.mxu0 0.0
      %8800 = vmatpush1.msra.mxu0 0.0
      %8801 = vmatprep.subr.mxu0 0.0
      %8802 = vmatpush1.msra.mxu0 0.0
      %8803 = vmatprep.subr.mxu0 0.0
      %8804 = vmatpush1.msra.mxu0 0.0
      %8805 = vmatprep.mubr.f32.mxu0 0.0
      %8806 = vmatmul.mubr.f32.gmra.mrb[0].mxu0 %v8736
      %v8807 = vpop.f32.mrb[0].mxu0
      %v8808 = vadd.f32 0.0, %v8807
      %v8809 = vpop.f32.mrb[0].mxu0
      %v8810 = vadd.f32 0.0, %v8809
      %8811 = vmatprep.mubr.f32.mxu0 0.0
      %8812 = vmatmul.mubr.f32.gmra.mrb[0].mxu0 %v8739
      %v8813 = vpop.f32.mrb[0].mxu0
      %v8814 = vadd.f32 0.0, %v8813
      %v8815 = vpop.f32.mrb[0].mxu0
      %v8816 = vadd.f32 0.0, %v8815
      %8817 = vdwg.mxu0
      %8818 = vmatprep.subr.mxu0 %v8706
      %8819 = vmatpush1.msra.mxu0 %v8705
      %8820 = vmatprep.subr.mxu0 %v8710
      %8821 = vmatpush1.msra.mxu0 %v8709
      %8822 = vmatprep.subr.mxu0 %v8714
      %8823 = vmatpush1.msra.mxu0 %v8713
      %8824 = vmatprep.subr.mxu0 %v8718
      %8825 = vmatpush1.msra.mxu0 %v8717
      %8826 = vmatprep.subr.mxu0 %v8722
      %8827 = vmatpush1.msra.mxu0 %v8721
      %8828 = vmatprep.subr.mxu0 %v8726
      %8829 = vmatpush1.msra.mxu0 %v8725
      %8830 = vmatprep.subr.mxu0 %v8730
      %8831 = vmatpush1.msra.mxu0 %v8729
      %8832 = vmatprep.subr.mxu0 %v8734
      %8833 = vmatpush1.msra.mxu0 %v8733
      %8834 = vmatprep.subr.mxu0 0.0
      %8835 = vmatpush1.msra.mxu0 0.0
      %8836 = vmatprep.subr.mxu0 0.0
      %8837 = vmatpush1.msra.mxu0 0.0
      %8838 = vmatprep.subr.mxu0 0.0
      %8839 = vmatpush1.msra.mxu0 0.0
      %8840 = vmatprep.subr.mxu0 0.0
      %8841 = vmatpush1.msra.mxu0 0.0
      %8842 = vmatprep.subr.mxu0 0.0
      %8843 = vmatpush1.msra.mxu0 0.0
      %8844 = vmatprep.subr.mxu0 0.0
      %8845 = vmatpush1.msra.mxu0 0.0
      %8846 = vmatprep.subr.mxu0 0.0
      %8847 = vmatpush1.msra.mxu0 0.0
      %8848 = vmatprep.subr.mxu0 0.0
      %8849 = vmatpush1.msra.mxu0 0.0
      %8850 = vmatprep.subr.mxu0 0.0
      %8851 = vmatpush1.msra.mxu0 0.0
      %8852 = vmatprep.subr.mxu0 0.0
      %8853 = vmatpush1.msra.mxu0 0.0
      %8854 = vmatprep.subr.mxu0 0.0
      %8855 = vmatpush1.msra.mxu0 0.0
      %8856 = vmatprep.subr.mxu0 0.0
      %8857 = vmatpush1.msra.mxu0 0.0
      %8858 = vmatprep.subr.mxu0 0.0
      %8859 = vmatpush1.msra.mxu0 0.0
      %8860 = vmatprep.subr.mxu0 0.0
      %8861 = vmatpush1.msra.mxu0 0.0
      %8862 = vmatprep.subr.mxu0 0.0
      %8863 = vmatpush1.msra.mxu0 0.0
      %8864 = vmatprep.subr.mxu0 0.0
      %8865 = vmatpush1.msra.mxu0 0.0
      %8866 = vmatprep.subr.mxu0 0.0
      %8867 = vmatpush1.msra.mxu0 0.0
      %8868 = vmatprep.subr.mxu0 0.0
      %8869 = vmatpush1.msra.mxu0 0.0
      %8870 = vmatprep.subr.mxu0 0.0
      %8871 = vmatpush1.msra.mxu0 0.0
      %8872 = vmatprep.subr.mxu0 0.0
      %8873 = vmatpush1.msra.mxu0 0.0
      %8874 = vmatprep.subr.mxu0 0.0
      %8875 = vmatpush1.msra.mxu0 0.0
      %8876 = vmatprep.subr.mxu0 0.0
      %8877 = vmatpush1.msra.mxu0 0.0
      %8878 = vmatprep.subr.mxu0 0.0
      %8879 = vmatpush1.msra.mxu0 0.0
      %8880 = vmatprep.subr.mxu0 0.0
      %8881 = vmatpush1.msra.mxu0 0.0
      %8882 = vmatprep.mubr.f32.mxu0 0.0
      %8883 = vmatmul.mubr.f32.gmra.mrb[0].mxu0 %v8736
      %v8884 = vpop.f32.mrb[0].mxu0
      %v8885 = vadd.f32 0.0, %v8884
      %v8886 = vpop.f32.mrb[0].mxu0
      %v8887 = vadd.f32 0.0, %v8886
      %8888 = vmatprep.mubr.f32.mxu0 0.0
      %8889 = vmatmul.mubr.f32.gmra.mrb[0].mxu0 %v8739
      %v8890 = vpop.f32.mrb[0].mxu0
      %v8891 = vadd.f32 0.0, %v8890
      %v8892 = vpop.f32.mrb[0].mxu0
      %v8893 = vadd.f32 0.0, %v8892
      %8894 = vdwg.mxu0
      %v8895 = vadd.f32 %v8694, %v8808
      %v8896 = vadd.f32 %v8695, %v8810
      %v8897 = vadd.f32 %v8696, %v8885
      %v8898 = vadd.f32 %v8697, %v8887
      %v8899 = vadd.f32 %v8698, %v8814
      %v8900 = vadd.f32 %v8699, %v8816
      %v8901 = vadd.f32 %v8700, %v8891
      %v8902 = vadd.f32 %v8701, %v8893
      %s8903 = scalar_lea.vmem %s13, 1280
      %v8904 = vld [vmem:[%s8903] sm:$0xff]
      %v8905 = vld [vmem:[%s8903 + $0x8] sm:$0xff]
      %v8906 = vld [vmem:[%s8903 + $0x10] sm:$0xff]
      %v8907 = vld [vmem:[%s8903 + $0x18] sm:$0xff]
      %v8908 = vld [vmem:[%s8903 + $0x20] sm:$0xff]
      %v8909 = vld [vmem:[%s8903 + $0x28] sm:$0xff]
      %v8910 = vld [vmem:[%s8903 + $0x30] sm:$0xff]
      %v8911 = vld [vmem:[%s8903 + $0x38] sm:$0xff]
      %v8912 = vld [vmem:[%s8903 + $0x40] sm:$0xff]
      %v8913 = vld [vmem:[%s8903 + $0x48] sm:$0xff]
      %v8914 = vld [vmem:[%s8903 + $0x50] sm:$0xff]
      %v8915 = vld [vmem:[%s8903 + $0x58] sm:$0xff]
      %v8916 = vld [vmem:[%s8903 + $0x60] sm:$0xff]
      %v8917 = vld [vmem:[%s8903 + $0x68] sm:$0xff]
      %v8918 = vld [vmem:[%s8903 + $0x70] sm:$0xff]
      %v8919 = vld [vmem:[%s8903 + $0x78] sm:$0xff]
      %v8920 = vld [vmem:[%s8903 + $0x80] sm:$0xff]
      %v8921 = vld [vmem:[%s8903 + $0x88] sm:$0xff]
      %v8922 = vld [vmem:[%s8903 + $0x90] sm:$0xff]
      %v8923 = vld [vmem:[%s8903 + $0x98] sm:$0xff]
      %v8924 = vld [vmem:[%s8903 + $0xa0] sm:$0xff]
      %v8925 = vld [vmem:[%s8903 + $0xa8] sm:$0xff]
      %v8926 = vld [vmem:[%s8903 + $0xb0] sm:$0xff]
      %v8927 = vld [vmem:[%s8903 + $0xb8] sm:$0xff]
      %v8928 = vld [vmem:[%s8903 + $0xc0] sm:$0xff]
      %v8929 = vld [vmem:[%s8903 + $0xc8] sm:$0xff]
      %v8930 = vld [vmem:[%s8903 + $0xd0] sm:$0xff]
      %v8931 = vld [vmem:[%s8903 + $0xd8] sm:$0xff]
      %v8932 = vld [vmem:[%s8903 + $0xe0] sm:$0xff]
      %v8933 = vld [vmem:[%s8903 + $0xe8] sm:$0xff]
      %v8934 = vld [vmem:[%s8903 + $0xf0] sm:$0xff]
      %v8935 = vld [vmem:[%s8903 + $0xf8] sm:$0xff]
      %v8937 = vsel %vm5702, %v7887, 0
      %v8940 = vsel %vm5702, %v7892, 0
      %8942 = vmatprep.subr.mxu0 %v8905
      %8943 = vmatpush1.msra.mxu0 %v8904
      %8944 = vmatprep.subr.mxu0 %v8909
      %8945 = vmatpush1.msra.mxu0 %v8908
      %8946 = vmatprep.subr.mxu0 %v8913
      %8947 = vmatpush1.msra.mxu0 %v8912
      %8948 = vmatprep.subr.mxu0 %v8917
      %8949 = vmatpush1.msra.mxu0 %v8916
      %8950 = vmatprep.subr.mxu0 %v8921
      %8951 = vmatpush1.msra.mxu0 %v8920
      %8952 = vmatprep.subr.mxu0 %v8925
      %8953 = vmatpush1.msra.mxu0 %v8924
      %8954 = vmatprep.subr.mxu0 %v8929
      %8955 = vmatpush1.msra.mxu0 %v8928
      %8956 = vmatprep.subr.mxu0 %v8933
      %8957 = vmatpush1.msra.mxu0 %v8932
      %8958 = vmatprep.subr.mxu0 0.0
      %8959 = vmatpush1.msra.mxu0 0.0
      %8960 = vmatprep.subr.mxu0 0.0
      %8961 = vmatpush1.msra.mxu0 0.0
      %8962 = vmatprep.subr.mxu0 0.0
      %8963 = vmatpush1.msra.mxu0 0.0
      %8964 = vmatprep.subr.mxu0 0.0
      %8965 = vmatpush1.msra.mxu0 0.0
      %8966 = vmatprep.subr.mxu0 0.0
      %8967 = vmatpush1.msra.mxu0 0.0
      %8968 = vmatprep.subr.mxu0 0.0
      %8969 = vmatpush1.msra.mxu0 0.0
      %8970 = vmatprep.subr.mxu0 0.0
      %8971 = vmatpush1.msra.mxu0 0.0
      %8972 = vmatprep.subr.mxu0 0.0
      %8973 = vmatpush1.msra.mxu0 0.0
      %8974 = vmatprep.subr.mxu0 0.0
      %8975 = vmatpush1.msra.mxu0 0.0
      %8976 = vmatprep.subr.mxu0 0.0
      %8977 = vmatpush1.msra.mxu0 0.0
      %8978 = vmatprep.subr.mxu0 0.0
      %8979 = vmatpush1.msra.mxu0 0.0
      %8980 = vmatprep.subr.mxu0 0.0
      %8981 = vmatpush1.msra.mxu0 0.0
      %8982 = vmatprep.subr.mxu0 0.0
      %8983 = vmatpush1.msra.mxu0 0.0
      %8984 = vmatprep.subr.mxu0 0.0
      %8985 = vmatpush1.msra.mxu0 0.0
      %8986 = vmatprep.subr.mxu0 0.0
      %8987 = vmatpush1.msra.mxu0 0.0
      %8988 = vmatprep.subr.mxu0 0.0
      %8989 = vmatpush1.msra.mxu0 0.0
      %8990 = vmatprep.subr.mxu0 0.0
      %8991 = vmatpush1.msra.mxu0 0.0
      %8992 = vmatprep.subr.mxu0 0.0
      %8993 = vmatpush1.msra.mxu0 0.0
      %8994 = vmatprep.subr.mxu0 0.0
      %8995 = vmatpush1.msra.mxu0 0.0
      %8996 = vmatprep.subr.mxu0 0.0
      %8997 = vmatpush1.msra.mxu0 0.0
      %8998 = vmatprep.subr.mxu0 0.0
      %8999 = vmatpush1.msra.mxu0 0.0
      %9000 = vmatprep.subr.mxu0 0.0
      %9001 = vmatpush1.msra.mxu0 0.0
      %9002 = vmatprep.subr.mxu0 0.0
      %9003 = vmatpush1.msra.mxu0 0.0
      %9004 = vmatprep.subr.mxu0 0.0
      %9005 = vmatpush1.msra.mxu0 0.0
      %9006 = vmatprep.mubr.f32.mxu0 0.0
      %9007 = vmatmul.mubr.f32.gmra.mrb[0].mxu0 %v8937
      %v9008 = vpop.f32.mrb[0].mxu0
      %v9009 = vadd.f32 0.0, %v9008
      %v9010 = vpop.f32.mrb[0].mxu0
      %v9011 = vadd.f32 0.0, %v9010
      %9012 = vmatprep.mubr.f32.mxu0 0.0
      %9013 = vmatmul.mubr.f32.gmra.mrb[0].mxu0 %v8940
      %v9014 = vpop.f32.mrb[0].mxu0
      %v9015 = vadd.f32 0.0, %v9014
      %v9016 = vpop.f32.mrb[0].mxu0
      %v9017 = vadd.f32 0.0, %v9016
      %9018 = vdwg.mxu0
      %9019 = vmatprep.subr.mxu0 %v8907
      %9020 = vmatpush1.msra.mxu0 %v8906
      %9021 = vmatprep.subr.mxu0 %v8911
      %9022 = vmatpush1.msra.mxu0 %v8910
      %9023 = vmatprep.subr.mxu0 %v8915
      %9024 = vmatpush1.msra.mxu0 %v8914
      %9025 = vmatprep.subr.mxu0 %v8919
      %9026 = vmatpush1.msra.mxu0 %v8918
      %9027 = vmatprep.subr.mxu0 %v8923
      %9028 = vmatpush1.msra.mxu0 %v8922
      %9029 = vmatprep.subr.mxu0 %v8927
      %9030 = vmatpush1.msra.mxu0 %v8926
      %9031 = vmatprep.subr.mxu0 %v8931
      %9032 = vmatpush1.msra.mxu0 %v8930
      %9033 = vmatprep.subr.mxu0 %v8935
      %9034 = vmatpush1.msra.mxu0 %v8934
      %9035 = vmatprep.subr.mxu0 0.0
      %9036 = vmatpush1.msra.mxu0 0.0
      %9037 = vmatprep.subr.mxu0 0.0
      %9038 = vmatpush1.msra.mxu0 0.0
      %9039 = vmatprep.subr.mxu0 0.0
      %9040 = vmatpush1.msra.mxu0 0.0
      %9041 = vmatprep.subr.mxu0 0.0
      %9042 = vmatpush1.msra.mxu0 0.0
      %9043 = vmatprep.subr.mxu0 0.0
      %9044 = vmatpush1.msra.mxu0 0.0
      %9045 = vmatprep.subr.mxu0 0.0
      %9046 = vmatpush1.msra.mxu0 0.0
      %9047 = vmatprep.subr.mxu0 0.0
      %9048 = vmatpush1.msra.mxu0 0.0
      %9049 = vmatprep.subr.mxu0 0.0
      %9050 = vmatpush1.msra.mxu0 0.0
      %9051 = vmatprep.subr.mxu0 0.0
      %9052 = vmatpush1.msra.mxu0 0.0
      %9053 = vmatprep.subr.mxu0 0.0
      %9054 = vmatpush1.msra.mxu0 0.0
      %9055 = vmatprep.subr.mxu0 0.0
      %9056 = vmatpush1.msra.mxu0 0.0
      %9057 = vmatprep.subr.mxu0 0.0
      %9058 = vmatpush1.msra.mxu0 0.0
      %9059 = vmatprep.subr.mxu0 0.0
      %9060 = vmatpush1.msra.mxu0 0.0
      %9061 = vmatprep.subr.mxu0 0.0
      %9062 = vmatpush1.msra.mxu0 0.0
      %9063 = vmatprep.subr.mxu0 0.0
      %9064 = vmatpush1.msra.mxu0 0.0
      %9065 = vmatprep.subr.mxu0 0.0
      %9066 = vmatpush1.msra.mxu0 0.0
      %9067 = vmatprep.subr.mxu0 0.0
      %9068 = vmatpush1.msra.mxu0 0.0
      %9069 = vmatprep.subr.mxu0 0.0
      %9070 = vmatpush1.msra.mxu0 0.0
      %9071 = vmatprep.subr.mxu0 0.0
      %9072 = vmatpush1.msra.mxu0 0.0
      %9073 = vmatprep.subr.mxu0 0.0
      %9074 = vmatpush1.msra.mxu0 0.0
      %9075 = vmatprep.subr.mxu0 0.0
      %9076 = vmatpush1.msra.mxu0 0.0
      %9077 = vmatprep.subr.mxu0 0.0
      %9078 = vmatpush1.msra.mxu0 0.0
      %9079 = vmatprep.subr.mxu0 0.0
      %9080 = vmatpush1.msra.mxu0 0.0
      %9081 = vmatprep.subr.mxu0 0.0
      %9082 = vmatpush1.msra.mxu0 0.0
      %9083 = vmatprep.mubr.f32.mxu0 0.0
      %9084 = vmatmul.mubr.f32.gmra.mrb[0].mxu0 %v8937
      %v9085 = vpop.f32.mrb[0].mxu0
      %v9086 = vadd.f32 0.0, %v9085
      %v9087 = vpop.f32.mrb[0].mxu0
      %v9088 = vadd.f32 0.0, %v9087
      %9089 = vmatprep.mubr.f32.mxu0 0.0
      %9090 = vmatmul.mubr.f32.gmra.mrb[0].mxu0 %v8940
      %v9091 = vpop.f32.mrb[0].mxu0
      %v9092 = vadd.f32 0.0, %v9091
      %v9093 = vpop.f32.mrb[0].mxu0
      %v9094 = vadd.f32 0.0, %v9093
      %9095 = vdwg.mxu0
      %v9096 = vadd.f32 %v8895, %v9009
      %v9097 = vadd.f32 %v8896, %v9011
      %v9098 = vadd.f32 %v8897, %v9086
      %v9099 = vadd.f32 %v8898, %v9088
      %v9100 = vadd.f32 %v8899, %v9015
      %v9101 = vadd.f32 %v8900, %v9017
      %v9102 = vadd.f32 %v8901, %v9092
      %v9103 = vadd.f32 %v8902, %v9094
      %s9104 = scalar_lea.vmem %s13, 1536
      %v9105 = vld [vmem:[%s9104] sm:$0xff]
      %v9106 = vld [vmem:[%s9104 + $0x8] sm:$0xff]
      %v9107 = vld [vmem:[%s9104 + $0x10] sm:$0xff]
      %v9108 = vld [vmem:[%s9104 + $0x18] sm:$0xff]
      %v9109 = vld [vmem:[%s9104 + $0x20] sm:$0xff]
      %v9110 = vld [vmem:[%s9104 + $0x28] sm:$0xff]
      %v9111 = vld [vmem:[%s9104 + $0x30] sm:$0xff]
      %v9112 = vld [vmem:[%s9104 + $0x38] sm:$0xff]
      %v9113 = vld [vmem:[%s9104 + $0x40] sm:$0xff]
      %v9114 = vld [vmem:[%s9104 + $0x48] sm:$0xff]
      %v9115 = vld [vmem:[%s9104 + $0x50] sm:$0xff]
      %v9116 = vld [vmem:[%s9104 + $0x58] sm:$0xff]
      %v9117 = vld [vmem:[%s9104 + $0x60] sm:$0xff]
      %v9118 = vld [vmem:[%s9104 + $0x68] sm:$0xff]
      %v9119 = vld [vmem:[%s9104 + $0x70] sm:$0xff]
      %v9120 = vld [vmem:[%s9104 + $0x78] sm:$0xff]
      %v9121 = vld [vmem:[%s9104 + $0x80] sm:$0xff]
      %v9122 = vld [vmem:[%s9104 + $0x88] sm:$0xff]
      %v9123 = vld [vmem:[%s9104 + $0x90] sm:$0xff]
      %v9124 = vld [vmem:[%s9104 + $0x98] sm:$0xff]
      %v9125 = vld [vmem:[%s9104 + $0xa0] sm:$0xff]
      %v9126 = vld [vmem:[%s9104 + $0xa8] sm:$0xff]
      %v9127 = vld [vmem:[%s9104 + $0xb0] sm:$0xff]
      %v9128 = vld [vmem:[%s9104 + $0xb8] sm:$0xff]
      %v9129 = vld [vmem:[%s9104 + $0xc0] sm:$0xff]
      %v9130 = vld [vmem:[%s9104 + $0xc8] sm:$0xff]
      %v9131 = vld [vmem:[%s9104 + $0xd0] sm:$0xff]
      %v9132 = vld [vmem:[%s9104 + $0xd8] sm:$0xff]
      %v9133 = vld [vmem:[%s9104 + $0xe0] sm:$0xff]
      %v9134 = vld [vmem:[%s9104 + $0xe8] sm:$0xff]
      %v9135 = vld [vmem:[%s9104 + $0xf0] sm:$0xff]
      %v9136 = vld [vmem:[%s9104 + $0xf8] sm:$0xff]
      %v9138 = vsel %vm5702, %v7897, 0
      %v9141 = vsel %vm5702, %v7902, 0
      %9143 = vmatprep.subr.mxu0 %v9106
      %9144 = vmatpush1.msra.mxu0 %v9105
      %9145 = vmatprep.subr.mxu0 %v9110
      %9146 = vmatpush1.msra.mxu0 %v9109
      %9147 = vmatprep.subr.mxu0 %v9114
      %9148 = vmatpush1.msra.mxu0 %v9113
      %9149 = vmatprep.subr.mxu0 %v9118
      %9150 = vmatpush1.msra.mxu0 %v9117
      %9151 = vmatprep.subr.mxu0 %v9122
      %9152 = vmatpush1.msra.mxu0 %v9121
      %9153 = vmatprep.subr.mxu0 %v9126
      %9154 = vmatpush1.msra.mxu0 %v9125
      %9155 = vmatprep.subr.mxu0 %v9130
      %9156 = vmatpush1.msra.mxu0 %v9129
      %9157 = vmatprep.subr.mxu0 %v9134
      %9158 = vmatpush1.msra.mxu0 %v9133
      %9159 = vmatprep.subr.mxu0 0.0
      %9160 = vmatpush1.msra.mxu0 0.0
      %9161 = vmatprep.subr.mxu0 0.0
      %9162 = vmatpush1.msra.mxu0 0.0
      %9163 = vmatprep.subr.mxu0 0.0
      %9164 = vmatpush1.msra.mxu0 0.0
      %9165 = vmatprep.subr.mxu0 0.0
      %9166 = vmatpush1.msra.mxu0 0.0
      %9167 = vmatprep.subr.mxu0 0.0
      %9168 = vmatpush1.msra.mxu0 0.0
      %9169 = vmatprep.subr.mxu0 0.0
      %9170 = vmatpush1.msra.mxu0 0.0
      %9171 = vmatprep.subr.mxu0 0.0
      %9172 = vmatpush1.msra.mxu0 0.0
      %9173 = vmatprep.subr.mxu0 0.0
      %9174 = vmatpush1.msra.mxu0 0.0
      %9175 = vmatprep.subr.mxu0 0.0
      %9176 = vmatpush1.msra.mxu0 0.0
      %9177 = vmatprep.subr.mxu0 0.0
      %9178 = vmatpush1.msra.mxu0 0.0
      %9179 = vmatprep.subr.mxu0 0.0
      %9180 = vmatpush1.msra.mxu0 0.0
      %9181 = vmatprep.subr.mxu0 0.0
      %9182 = vmatpush1.msra.mxu0 0.0
      %9183 = vmatprep.subr.mxu0 0.0
      %9184 = vmatpush1.msra.mxu0 0.0
      %9185 = vmatprep.subr.mxu0 0.0
      %9186 = vmatpush1.msra.mxu0 0.0
      %9187 = vmatprep.subr.mxu0 0.0
      %9188 = vmatpush1.msra.mxu0 0.0
      %9189 = vmatprep.subr.mxu0 0.0
      %9190 = vmatpush1.msra.mxu0 0.0
      %9191 = vmatprep.subr.mxu0 0.0
      %9192 = vmatpush1.msra.mxu0 0.0
      %9193 = vmatprep.subr.mxu0 0.0
      %9194 = vmatpush1.msra.mxu0 0.0
      %9195 = vmatprep.subr.mxu0 0.0
      %9196 = vmatpush1.msra.mxu0 0.0
      %9197 = vmatprep.subr.mxu0 0.0
      %9198 = vmatpush1.msra.mxu0 0.0
      %9199 = vmatprep.subr.mxu0 0.0
      %9200 = vmatpush1.msra.mxu0 0.0
      %9201 = vmatprep.subr.mxu0 0.0
      %9202 = vmatpush1.msra.mxu0 0.0
      %9203 = vmatprep.subr.mxu0 0.0
      %9204 = vmatpush1.msra.mxu0 0.0
      %9205 = vmatprep.subr.mxu0 0.0
      %9206 = vmatpush1.msra.mxu0 0.0
      %9207 = vmatprep.mubr.f32.mxu0 0.0
      %9208 = vmatmul.mubr.f32.gmra.mrb[0].mxu0 %v9138
      %v9209 = vpop.f32.mrb[0].mxu0
      %v9210 = vadd.f32 0.0, %v9209
      %v9211 = vpop.f32.mrb[0].mxu0
      %v9212 = vadd.f32 0.0, %v9211
      %9213 = vmatprep.mubr.f32.mxu0 0.0
      %9214 = vmatmul.mubr.f32.gmra.mrb[0].mxu0 %v9141
      %v9215 = vpop.f32.mrb[0].mxu0
      %v9216 = vadd.f32 0.0, %v9215
      %v9217 = vpop.f32.mrb[0].mxu0
      %v9218 = vadd.f32 0.0, %v9217
      %9219 = vdwg.mxu0
      %9220 = vmatprep.subr.mxu0 %v9108
      %9221 = vmatpush1.msra.mxu0 %v9107
      %9222 = vmatprep.subr.mxu0 %v9112
      %9223 = vmatpush1.msra.mxu0 %v9111
      %9224 = vmatprep.subr.mxu0 %v9116
      %9225 = vmatpush1.msra.mxu0 %v9115
      %9226 = vmatprep.subr.mxu0 %v9120
      %9227 = vmatpush1.msra.mxu0 %v9119
      %9228 = vmatprep.subr.mxu0 %v9124
      %9229 = vmatpush1.msra.mxu0 %v9123
      %9230 = vmatprep.subr.mxu0 %v9128
      %9231 = vmatpush1.msra.mxu0 %v9127
      %9232 = vmatprep.subr.mxu0 %v9132
      %9233 = vmatpush1.msra.mxu0 %v9131
      %9234 = vmatprep.subr.mxu0 %v9136
      %9235 = vmatpush1.msra.mxu0 %v9135
      %9236 = vmatprep.subr.mxu0 0.0
      %9237 = vmatpush1.msra.mxu0 0.0
      %9238 = vmatprep.subr.mxu0 0.0
      %9239 = vmatpush1.msra.mxu0 0.0
      %9240 = vmatprep.subr.mxu0 0.0
      %9241 = vmatpush1.msra.mxu0 0.0
      %9242 = vmatprep.subr.mxu0 0.0
      %9243 = vmatpush1.msra.mxu0 0.0
      %9244 = vmatprep.subr.mxu0 0.0
      %9245 = vmatpush1.msra.mxu0 0.0
      %9246 = vmatprep.subr.mxu0 0.0
      %9247 = vmatpush1.msra.mxu0 0.0
      %9248 = vmatprep.subr.mxu0 0.0
      %9249 = vmatpush1.msra.mxu0 0.0
      %9250 = vmatprep.subr.mxu0 0.0
      %9251 = vmatpush1.msra.mxu0 0.0
      %9252 = vmatprep.subr.mxu0 0.0
      %9253 = vmatpush1.msra.mxu0 0.0
      %9254 = vmatprep.subr.mxu0 0.0
      %9255 = vmatpush1.msra.mxu0 0.0
      %9256 = vmatprep.subr.mxu0 0.0
      %9257 = vmatpush1.msra.mxu0 0.0
      %9258 = vmatprep.subr.mxu0 0.0
      %9259 = vmatpush1.msra.mxu0 0.0
      %9260 = vmatprep.subr.mxu0 0.0
      %9261 = vmatpush1.msra.mxu0 0.0
      %9262 = vmatprep.subr.mxu0 0.0
      %9263 = vmatpush1.msra.mxu0 0.0
      %9264 = vmatprep.subr.mxu0 0.0
      %9265 = vmatpush1.msra.mxu0 0.0
      %9266 = vmatprep.subr.mxu0 0.0
      %9267 = vmatpush1.msra.mxu0 0.0
      %9268 = vmatprep.subr.mxu0 0.0
      %9269 = vmatpush1.msra.mxu0 0.0
      %9270 = vmatprep.subr.mxu0 0.0
      %9271 = vmatpush1.msra.mxu0 0.0
      %9272 = vmatprep.subr.mxu0 0.0
      %9273 = vmatpush1.msra.mxu0 0.0
      %9274 = vmatprep.subr.mxu0 0.0
      %9275 = vmatpush1.msra.mxu0 0.0
      %9276 = vmatprep.subr.mxu0 0.0
      %9277 = vmatpush1.msra.mxu0 0.0
      %9278 = vmatprep.subr.mxu0 0.0
      %9279 = vmatpush1.msra.mxu0 0.0
      %9280 = vmatprep.subr.mxu0 0.0
      %9281 = vmatpush1.msra.mxu0 0.0
      %9282 = vmatprep.subr.mxu0 0.0
      %9283 = vmatpush1.msra.mxu0 0.0
      %9284 = vmatprep.mubr.f32.mxu0 0.0
      %9285 = vmatmul.mubr.f32.gmra.mrb[0].mxu0 %v9138
      %v9286 = vpop.f32.mrb[0].mxu0
      %v9287 = vadd.f32 0.0, %v9286
      %v9288 = vpop.f32.mrb[0].mxu0
      %v9289 = vadd.f32 0.0, %v9288
      %9290 = vmatprep.mubr.f32.mxu0 0.0
      %9291 = vmatmul.mubr.f32.gmra.mrb[0].mxu0 %v9141
      %v9292 = vpop.f32.mrb[0].mxu0
      %v9293 = vadd.f32 0.0, %v9292
      %v9294 = vpop.f32.mrb[0].mxu0
      %v9295 = vadd.f32 0.0, %v9294
      %9296 = vdwg.mxu0
      %v9297 = vadd.f32 %v9096, %v9210
      %v9298 = vadd.f32 %v9097, %v9212
      %v9299 = vadd.f32 %v9098, %v9287
      %v9300 = vadd.f32 %v9099, %v9289
      %v9301 = vadd.f32 %v9100, %v9216
      %v9302 = vadd.f32 %v9101, %v9218
      %v9303 = vadd.f32 %v9102, %v9293
      %v9304 = vadd.f32 %v9103, %v9295
      %s9305 = scalar_lea.vmem %s13, 1792
      %v9306 = vld [vmem:[%s9305] sm:$0xff]
      %v9307 = vld [vmem:[%s9305 + $0x8] sm:$0xff]
      %v9308 = vld [vmem:[%s9305 + $0x10] sm:$0xff]
      %v9309 = vld [vmem:[%s9305 + $0x18] sm:$0xff]
      %v9310 = vld [vmem:[%s9305 + $0x20] sm:$0xff]
      %v9311 = vld [vmem:[%s9305 + $0x28] sm:$0xff]
      %v9312 = vld [vmem:[%s9305 + $0x30] sm:$0xff]
      %v9313 = vld [vmem:[%s9305 + $0x38] sm:$0xff]
      %v9314 = vld [vmem:[%s9305 + $0x40] sm:$0xff]
      %v9315 = vld [vmem:[%s9305 + $0x48] sm:$0xff]
      %v9316 = vld [vmem:[%s9305 + $0x50] sm:$0xff]
      %v9317 = vld [vmem:[%s9305 + $0x58] sm:$0xff]
      %v9318 = vld [vmem:[%s9305 + $0x60] sm:$0xff]
      %v9319 = vld [vmem:[%s9305 + $0x68] sm:$0xff]
      %v9320 = vld [vmem:[%s9305 + $0x70] sm:$0xff]
      %v9321 = vld [vmem:[%s9305 + $0x78] sm:$0xff]
      %v9322 = vld [vmem:[%s9305 + $0x80] sm:$0xff]
      %v9323 = vld [vmem:[%s9305 + $0x88] sm:$0xff]
      %v9324 = vld [vmem:[%s9305 + $0x90] sm:$0xff]
      %v9325 = vld [vmem:[%s9305 + $0x98] sm:$0xff]
      %v9326 = vld [vmem:[%s9305 + $0xa0] sm:$0xff]
      %v9327 = vld [vmem:[%s9305 + $0xa8] sm:$0xff]
      %v9328 = vld [vmem:[%s9305 + $0xb0] sm:$0xff]
      %v9329 = vld [vmem:[%s9305 + $0xb8] sm:$0xff]
      %v9330 = vld [vmem:[%s9305 + $0xc0] sm:$0xff]
      %v9331 = vld [vmem:[%s9305 + $0xc8] sm:$0xff]
      %v9332 = vld [vmem:[%s9305 + $0xd0] sm:$0xff]
      %v9333 = vld [vmem:[%s9305 + $0xd8] sm:$0xff]
      %v9334 = vld [vmem:[%s9305 + $0xe0] sm:$0xff]
      %v9335 = vld [vmem:[%s9305 + $0xe8] sm:$0xff]
      %v9336 = vld [vmem:[%s9305 + $0xf0] sm:$0xff]
      %v9337 = vld [vmem:[%s9305 + $0xf8] sm:$0xff]
      %v9339 = vsel %vm5702, %v7907, 0
      %v9342 = vsel %vm5702, %v7912, 0
      %9344 = vmatprep.subr.mxu0 %v9307
      %9345 = vmatpush1.msra.mxu0 %v9306
      %9346 = vmatprep.subr.mxu0 %v9311
      %9347 = vmatpush1.msra.mxu0 %v9310
      %9348 = vmatprep.subr.mxu0 %v9315
      %9349 = vmatpush1.msra.mxu0 %v9314
      %9350 = vmatprep.subr.mxu0 %v9319
      %9351 = vmatpush1.msra.mxu0 %v9318
      %9352 = vmatprep.subr.mxu0 %v9323
      %9353 = vmatpush1.msra.mxu0 %v9322
      %9354 = vmatprep.subr.mxu0 %v9327
      %9355 = vmatpush1.msra.mxu0 %v9326
      %9356 = vmatprep.subr.mxu0 %v9331
      %9357 = vmatpush1.msra.mxu0 %v9330
      %9358 = vmatprep.subr.mxu0 %v9335
      %9359 = vmatpush1.msra.mxu0 %v9334
      %9360 = vmatprep.subr.mxu0 0.0
      %9361 = vmatpush1.msra.mxu0 0.0
      %9362 = vmatprep.subr.mxu0 0.0
      %9363 = vmatpush1.msra.mxu0 0.0
      %9364 = vmatprep.subr.mxu0 0.0
      %9365 = vmatpush1.msra.mxu0 0.0
      %9366 = vmatprep.subr.mxu0 0.0
      %9367 = vmatpush1.msra.mxu0 0.0
      %9368 = vmatprep.subr.mxu0 0.0
      %9369 = vmatpush1.msra.mxu0 0.0
      %9370 = vmatprep.subr.mxu0 0.0
      %9371 = vmatpush1.msra.mxu0 0.0
      %9372 = vmatprep.subr.mxu0 0.0
      %9373 = vmatpush1.msra.mxu0 0.0
      %9374 = vmatprep.subr.mxu0 0.0
      %9375 = vmatpush1.msra.mxu0 0.0
      %9376 = vmatprep.subr.mxu0 0.0
      %9377 = vmatpush1.msra.mxu0 0.0
      %9378 = vmatprep.subr.mxu0 0.0
      %9379 = vmatpush1.msra.mxu0 0.0
      %9380 = vmatprep.subr.mxu0 0.0
      %9381 = vmatpush1.msra.mxu0 0.0
      %9382 = vmatprep.subr.mxu0 0.0
      %9383 = vmatpush1.msra.mxu0 0.0
      %9384 = vmatprep.subr.mxu0 0.0
      %9385 = vmatpush1.msra.mxu0 0.0
      %9386 = vmatprep.subr.mxu0 0.0
      %9387 = vmatpush1.msra.mxu0 0.0
      %9388 = vmatprep.subr.mxu0 0.0
      %9389 = vmatpush1.msra.mxu0 0.0
      %9390 = vmatprep.subr.mxu0 0.0
      %9391 = vmatpush1.msra.mxu0 0.0
      %9392 = vmatprep.subr.mxu0 0.0
      %9393 = vmatpush1.msra.mxu0 0.0
      %9394 = vmatprep.subr.mxu0 0.0
      %9395 = vmatpush1.msra.mxu0 0.0
      %9396 = vmatprep.subr.mxu0 0.0
      %9397 = vmatpush1.msra.mxu0 0.0
      %9398 = vmatprep.subr.mxu0 0.0
      %9399 = vmatpush1.msra.mxu0 0.0
      %9400 = vmatprep.subr.mxu0 0.0
      %9401 = vmatpush1.msra.mxu0 0.0
      %9402 = vmatprep.subr.mxu0 0.0
      %9403 = vmatpush1.msra.mxu0 0.0
      %9404 = vmatprep.subr.mxu0 0.0
      %9405 = vmatpush1.msra.mxu0 0.0
      %9406 = vmatprep.subr.mxu0 0.0
      %9407 = vmatpush1.msra.mxu0 0.0
      %9408 = vmatprep.mubr.f32.mxu0 0.0
      %9409 = vmatmul.mubr.f32.gmra.mrb[0].mxu0 %v9339
      %v9410 = vpop.f32.mrb[0].mxu0
      %v9411 = vadd.f32 0.0, %v9410
      %v9412 = vpop.f32.mrb[0].mxu0
      %v9413 = vadd.f32 0.0, %v9412
      %9414 = vmatprep.mubr.f32.mxu0 0.0
      %9415 = vmatmul.mubr.f32.gmra.mrb[0].mxu0 %v9342
      %v9416 = vpop.f32.mrb[0].mxu0
      %v9417 = vadd.f32 0.0, %v9416
      %v9418 = vpop.f32.mrb[0].mxu0
      %v9419 = vadd.f32 0.0, %v9418
      %9420 = vdwg.mxu0
      %9421 = vmatprep.subr.mxu0 %v9309
      %9422 = vmatpush1.msra.mxu0 %v9308
      %9423 = vmatprep.subr.mxu0 %v9313
      %9424 = vmatpush1.msra.mxu0 %v9312
      %9425 = vmatprep.subr.mxu0 %v9317
      %9426 = vmatpush1.msra.mxu0 %v9316
      %9427 = vmatprep.subr.mxu0 %v9321
      %9428 = vmatpush1.msra.mxu0 %v9320
      %9429 = vmatprep.subr.mxu0 %v9325
      %9430 = vmatpush1.msra.mxu0 %v9324
      %9431 = vmatprep.subr.mxu0 %v9329
      %9432 = vmatpush1.msra.mxu0 %v9328
      %9433 = vmatprep.subr.mxu0 %v9333
      %9434 = vmatpush1.msra.mxu0 %v9332
      %9435 = vmatprep.subr.mxu0 %v9337
      %9436 = vmatpush1.msra.mxu0 %v9336
      %9437 = vmatprep.subr.mxu0 0.0
      %9438 = vmatpush1.msra.mxu0 0.0
      %9439 = vmatprep.subr.mxu0 0.0
      %9440 = vmatpush1.msra.mxu0 0.0
      %9441 = vmatprep.subr.mxu0 0.0
      %9442 = vmatpush1.msra.mxu0 0.0
      %9443 = vmatprep.subr.mxu0 0.0
      %9444 = vmatpush1.msra.mxu0 0.0
      %9445 = vmatprep.subr.mxu0 0.0
      %9446 = vmatpush1.msra.mxu0 0.0
      %9447 = vmatprep.subr.mxu0 0.0
      %9448 = vmatpush1.msra.mxu0 0.0
      %9449 = vmatprep.subr.mxu0 0.0
      %9450 = vmatpush1.msra.mxu0 0.0
      %9451 = vmatprep.subr.mxu0 0.0
      %9452 = vmatpush1.msra.mxu0 0.0
      %9453 = vmatprep.subr.mxu0 0.0
      %9454 = vmatpush1.msra.mxu0 0.0
      %9455 = vmatprep.subr.mxu0 0.0
      %9456 = vmatpush1.msra.mxu0 0.0
      %9457 = vmatprep.subr.mxu0 0.0
      %9458 = vmatpush1.msra.mxu0 0.0
      %9459 = vmatprep.subr.mxu0 0.0
      %9460 = vmatpush1.msra.mxu0 0.0
      %9461 = vmatprep.subr.mxu0 0.0
      %9462 = vmatpush1.msra.mxu0 0.0
      %9463 = vmatprep.subr.mxu0 0.0
      %9464 = vmatpush1.msra.mxu0 0.0
      %9465 = vmatprep.subr.mxu0 0.0
      %9466 = vmatpush1.msra.mxu0 0.0
      %9467 = vmatprep.subr.mxu0 0.0
      %9468 = vmatpush1.msra.mxu0 0.0
      %9469 = vmatprep.subr.mxu0 0.0
      %9470 = vmatpush1.msra.mxu0 0.0
      %9471 = vmatprep.subr.mxu0 0.0
      %9472 = vmatpush1.msra.mxu0 0.0
      %9473 = vmatprep.subr.mxu0 0.0
      %9474 = vmatpush1.msra.mxu0 0.0
      %9475 = vmatprep.subr.mxu0 0.0
      %9476 = vmatpush1.msra.mxu0 0.0
      %9477 = vmatprep.subr.mxu0 0.0
      %9478 = vmatpush1.msra.mxu0 0.0
      %9479 = vmatprep.subr.mxu0 0.0
      %9480 = vmatpush1.msra.mxu0 0.0
      %9481 = vmatprep.subr.mxu0 0.0
      %9482 = vmatpush1.msra.mxu0 0.0
      %9483 = vmatprep.subr.mxu0 0.0
      %9484 = vmatpush1.msra.mxu0 0.0
      %9485 = vmatprep.mubr.f32.mxu0 0.0
      %9486 = vmatmul.mubr.f32.gmra.mrb[0].mxu0 %v9339
      %v9487 = vpop.f32.mrb[0].mxu0
      %v9488 = vadd.f32 0.0, %v9487
      %v9489 = vpop.f32.mrb[0].mxu0
      %v9490 = vadd.f32 0.0, %v9489
      %9491 = vmatprep.mubr.f32.mxu0 0.0
      %9492 = vmatmul.mubr.f32.gmra.mrb[0].mxu0 %v9342
      %v9493 = vpop.f32.mrb[0].mxu0
      %v9494 = vadd.f32 0.0, %v9493
      %v9495 = vpop.f32.mrb[0].mxu0
      %v9496 = vadd.f32 0.0, %v9495
      %9497 = vdwg.mxu0
      %v9498 = vadd.f32 %v9297, %v9411
      %v9499 = vadd.f32 %v9298, %v9413
      %v9500 = vadd.f32 %v9299, %v9488
      %v9501 = vadd.f32 %v9300, %v9490
      %v9502 = vadd.f32 %v9301, %v9417
      %v9503 = vadd.f32 %v9302, %v9419
      %v9504 = vadd.f32 %v9303, %v9494
      %v9505 = vadd.f32 %v9304, %v9496
      %v9506 = vld [vmem:[%s12] sm:$0xff]
      %v9507 = vld [vmem:[%s12 + $0x8] sm:$0x3f]
      %9509 = vset.pattern.permute.xlu0 0
      %9510 = vperm.xlu0 %9509, %v9506
      %v9511 = vpop.permute.xlu0 %9510
      %9514 = vset.pattern.permute.xlu0 0
      %9515 = vperm.xlu0 %9514, %v9507
      %v9516 = vpop.permute.xlu0 %9515
      %v9518 = vadd.f32 %v9498, %v9511
      %v9519 = vadd.f32 %v9499, %v9511
      %v9520 = vadd.f32 %v9500, %v9511
      %v9521 = vadd.f32 %v9501, %v9511
      %v9522 = vadd.f32 %v9502, %v9516
      %v9523 = vadd.f32 %v9503, %v9516
      %v9524 = vadd.f32 %v9504, %v9516
      %v9525 = vadd.f32 %v9505, %v9516
      %v9526 = vmul.f32 %v9518, 0.5
      %v9527 = vmul.f32 %v9519, 0.5
      %v9528 = vmul.f32 %v9520, 0.5
      %v9529 = vmul.f32 %v9521, 0.5
      %v9530 = vmul.f32 %v9522, 0.5
      %v9531 = vmul.f32 %v9523, 0.5
      %v9532 = vmul.f32 %v9524, 0.5
      %v9533 = vmul.f32 %v9525, 0.5
      %v9534 = vtanh.pop %v9526
      %v9535 = vtanh.pop %v9527
      %v9536 = vtanh.pop %v9528
      %v9537 = vtanh.pop %v9529
      %v9538 = vtanh.pop %v9530
      %v9539 = vtanh.pop %v9531
      %v9540 = vtanh.pop %v9532
      %v9541 = vtanh.pop %v9533
      %v9542 = vadd.f32 %v9534, 1.0
      %v9543 = vadd.f32 %v9535, 1.0
      %v9544 = vadd.f32 %v9536, 1.0
      %v9545 = vadd.f32 %v9537, 1.0
      %v9546 = vadd.f32 %v9538, 1.0
      %v9547 = vadd.f32 %v9539, 1.0
      %v9548 = vadd.f32 %v9540, 1.0
      %v9549 = vadd.f32 %v9541, 1.0
      %v9550 = vmul.f32 %v9542, 0.5
      %v9551 = vmul.f32 %v9543, 0.5
      %v9552 = vmul.f32 %v9544, 0.5
      %v9553 = vmul.f32 %v9545, 0.5
      %v9554 = vmul.f32 %v9546, 0.5
      %v9555 = vmul.f32 %v9547, 0.5
      %v9556 = vmul.f32 %v9548, 0.5
      %v9557 = vmul.f32 %v9549, 0.5
      %9558 = vst [vmem:[%s467] sm:$0xff] %v9550
      %9559 = vst [vmem:[%s467 + $0x8] sm:$0xff] %v9551
      %9560 = vst [vmem:[%s467 + $0x10] sm:$0xff] %v9552
      %9561 = vst [vmem:[%s467 + $0x18] sm:$0xff] %v9553
      %9562 = vst [vmem:[%s467 + $0x20] sm:$0x3f] %v9554
      %9563 = vst [vmem:[%s467 + $0x28] sm:$0x3f] %v9555
      %9564 = vst [vmem:[%s467 + $0x30] sm:$0x3f] %v9556
      %9565 = vst [vmem:[%s467 + $0x38] sm:$0x3f] %v9557
      %p9566 = scmp.lt.s32.totalorder %s25, 1
      %s9567 = scalar_select %p9566, %s25, 1
      %s9568 = smul.addr %s9567, 8
      %s9569 = smul.addr %s9568, 8
      %s9570 = scalar_lea.vmem %s14, %s9569
      // Predicated region
      $region77: #{conv_ae_forward.1} parent=75 // pred_check
        %p9571 = pneg %p342
      $region78: #{conv_ae_forward.1} parent=75 // pred_check_branch
        %9573 = sbr.rel (%p9571) target = $region80
      $region79: #{conv_ae_forward.1} parent=75 // pred_region
        _
      $region80: #{conv_ae_forward.1} parent=75 // pred_fallthru
        _
    $region76: #{conv_ae_forward.1} parent=5 // pred_fallthru
      _
    %p9574 = scmp.le.s32.totalorder 2, %s20
    // Predicated region
    $region81: #{conv_ae_forward.1} parent=5 // pred_check
      %p9575 = pneg %p9574
    $region82: #{conv_ae_forward.1} parent=5 // pred_check_branch
      %9577 = sbr.rel (%p9575) target = $region84
    $region83: #{conv_ae_forward.1} parent=5 // pred_region
      %s9578 = ssub.s32 %s20, 2
      // Predicated region
      $region85: #{conv_ae_forward.1} parent=83 // pred_check
        %p9579 = pneg %p348
      $region86: #{conv_ae_forward.1} parent=83 // pred_check_branch
        %9581 = sbr.rel (%p9579) target = $region88
      $region87: #{conv_ae_forward.1} parent=83 // pred_region
        %p9582 = scmp.lt.s32.totalorder %s26, 1
        %s9583 = scalar_select %p9582, %s26, 1
        %s9584 = smul.addr %s9583, 8
        %s9585 = smul.addr %s9584, 8
        %s9586 = scalar_lea.vmem %s14, %s9585
      $region88: #{conv_ae_forward.1} parent=83 // pred_fallthru
        _
    $region84: #{conv_ae_forward.1} parent=5 // pred_fallthru
      _
  $region6: #{conv_ae_forward.1} parent=0 // loop_footer
    %s24 = sadd.s32 1, %s20
  $region7: #{conv_ae_forward.1} parent=0 // loop_footer_branch
    %19 = sbr.rel target = $region3
  $region8: #{conv_ae_forward.1} parent=0 // loop_exit
    _

</llo_original>
